<compile_context>
chip_gen: v7x
topology: tpu7x:2x2x1
jax: 0.10.0
libtpu: 0.0.40
codegen_flags: <defaults>
</compile_context>

<pallas_src>
import functools

import jax
import jax.numpy as jnp
from jax.experimental import pallas as pl
from jax.experimental.pallas import tpu as pltpu


# ---------------------------------------------------------------------------
# Fused Pallas kernel: conv1+BN+ReLU -> conv2+BN+residual+ReLU for one
# (batch, row-tile) grid step.
# ---------------------------------------------------------------------------
def _basic_block_kernel(x_hbm, w1_ref, b1_ref, w2_ref, b2_ref, o_ref,
                        x32_ref, xbf_ref, mid_ref, dma_sem,
                        *, th, W, Wpad, Cpad):
    # x_hbm   : (N, H+4, Wpad, Cpad) f32 in HBM (2-row halo, >=1-col halo)
    # w*_ref  : (3, 3*Cpad, Cpad)    bf16  per-kh weights, kw folded into K
    # b*_ref  : (1, Cpad)            f32   folded BN bias
    # o_ref   : (th, W, Cpad)        bf16  output tile
    # x32_ref : (th+4, Wpad, Cpad)   f32   scratch: this tile's input window
    # xbf_ref : (th+4, Wpad, Cpad)   bf16  scratch: bf16 cast of x32
    # mid_ref : (th+2, Wpad, Cpad)   bf16  scratch: conv1 output (+pad cols)
    n = pl.program_id(0)
    t = pl.program_id(1)
    nt = pl.num_programs(1)
    TH2 = th + 2  # conv1 output rows incl. 1-row halo on each side

    # ---- fetch this tile's (th+4)-row halo window from HBM ----
    cp = pltpu.make_async_copy(
        x_hbm.at[n, pl.ds(t * th, th + 4)], x32_ref, dma_sem)
    cp.start()

    # While the DMA is in flight: zero mid's border columns (conv2 zero pad).
    mid_ref[:, 0:1, :] = jnp.zeros((TH2, 1, Cpad), jnp.bfloat16)
    mid_ref[:, 1 + W:, :] = jnp.zeros((TH2, Wpad - 1 - W, Cpad), jnp.bfloat16)

    cp.wait()

    # Single f32 -> bf16 cast pass for the MXU operands.
    xbf_ref[...] = x32_ref[...].astype(jnp.bfloat16)

    # ---- conv1 (+ folded BN) + ReLU over output rows [-1 .. th] ----
    acc1 = None
    for kh in range(3):
        patch = jnp.concatenate(
            [xbf_ref[kh:kh + TH2, kw:kw + W, :] for kw in range(3)], axis=-1)
        patch = patch.reshape(TH2 * W, 3 * Cpad)
        p = jnp.dot(patch, w1_ref[kh], preferred_element_type=jnp.float32)
        acc1 = p if acc1 is None else acc1 + p
    y1 = jnp.maximum(acc1 + b1_ref[...], 0.0)
    mid_ref[:, 1:1 + W, :] = y1.reshape(TH2, W, Cpad).astype(jnp.bfloat16)

    # conv1-output halo rows that fall outside the real image must be zero
    # (conv2 sees zero padding there) -- only at the image boundary tiles.
    @pl.when(t == 0)
    def _():
        mid_ref[0:1, :, :] = jnp.zeros((1, Wpad, Cpad), jnp.bfloat16)

    @pl.when(t == nt - 1)
    def _():
        mid_ref[TH2 - 1:TH2, :, :] = jnp.zeros((1, Wpad, Cpad), jnp.bfloat16)

    # ---- conv2 (+ folded BN) + residual (f32) + ReLU ----
    acc2 = None
    for kh in range(3):
        patch = jnp.concatenate(
            [mid_ref[kh:kh + th, kw:kw + W, :] for kw in range(3)], axis=-1)
        patch = patch.reshape(th * W, 3 * Cpad)
        p = jnp.dot(patch, w2_ref[kh], preferred_element_type=jnp.float32)
        acc2 = p if acc2 is None else acc2 + p

    resid = x32_ref[2:2 + th, 1:1 + W, :].reshape(th * W, Cpad)
    y2 = jnp.maximum(acc2 + b2_ref[...] + resid, 0.0)
    o_ref[...] = y2.reshape(th, W, Cpad).astype(o_ref.dtype)


# ---------------------------------------------------------------------------
# Tiling / VMEM heuristics
# ---------------------------------------------------------------------------
def _round_up(x, m):
    return ((x + m - 1) // m) * m


def _vmem_capacity_bytes():
    try:
        return int(pltpu.get_tpu_info().vmem_capacity_bytes)
    except Exception:
        return 64 * 1024 * 1024  # conservative fallback (v7x per-TC VMEM)


def _pick_row_tile(H, W, Wpad, Cpad, n_batch, vmem_budget):
    """Largest divisor of H whose working set fits the budget; only shrink for
    extra grid steps if the tile stays >= 8 rows (halo tax)."""
    def working_set(th):
        x32 = (th + 4) * Wpad * Cpad * 4
        xbf = (th + 4) * Wpad * Cpad * 2
        mid = (th + 2) * Wpad * Cpad * 2
        weights = 2 * (2 * 9 * Cpad * Cpad * 2)    # double-buffered bf16
        out = 2 * th * W * Cpad * 2                # double-buffered bf16
        patch = (th + 2) * W * 3 * Cpad * 2        # live K-concat patch
        accs = 2 * (th + 2) * W * Cpad * 4         # live f32 accumulators
        return x32 + xbf + mid + weights + out + patch + accs

    divisors = [d for d in range(1, H + 1) if H % d == 0]
    fits = [d for d in divisors if working_set(d) <= vmem_budget] or [1]
    th = max(fits)
    if n_batch * (H // th) < 2:
        smaller = [d for d in fits if d < th and d >= 8]
        if smaller:
            th = max(smaller)
    return th


# ---------------------------------------------------------------------------
# Plain-JAX glue: layout, channel padding, BN folding
# ---------------------------------------------------------------------------
def _prep_conv_bn(w_oihw, gamma, beta, mean, var, cin, cout, cpad, eps=1e-5):
    """Fold eval-mode BN into the conv weight and a bias; fold the kw taps into
    the contraction axis: returns bf16 (3, 3*Cpad, Cpad) weight + f32 bias."""
    scale = gamma * jax.lax.rsqrt(var + eps)               # (cout,)
    bias = beta - mean * scale                              # (cout,)
    w = jnp.transpose(w_oihw, (2, 3, 1, 0))                 # (kh, kw, cin, cout)
    w = w * scale[None, None, None, :]                      # fold BN scale (f32)
    w = jnp.pad(w, ((0, 0), (0, 0), (0, cpad - cin), (0, cpad - cout)))
    w = w.reshape(3, 3 * cpad, cpad).astype(jnp.bfloat16)   # K index = kw*Cpad+cin
    b = jnp.pad(bias, (0, cpad - cout)).reshape(1, cpad).astype(jnp.float32)
    return w, b


def basic_block_forward(x_nchw, params):
    """BasicBlock forward, stride=1, downsample=None. Input/output are NCHW f32."""
    N, C, H, W = x_nchw.shape
    planes = params["conv1_w"].shape[0]
    assert planes == C, "downsample=None requires inplanes == planes"

    Cpad = _round_up(max(C, 128), 128)
    Wpad = _round_up(W + 2, 8)          # width incl. conv padding, sublane-rounded

    vmem_cap = _vmem_capacity_bytes()
    th = _pick_row_tile(H, W, Wpad, Cpad, N, vmem_budget=int(0.4 * vmem_cap))
    nt = H // th

    # NCHW -> NHWC (f32); one pad op: 2 halo rows top/bottom, 1 zero col left
    # + rest of the rounded width right, channels to lane-dense Cpad.
    x_nhwc = jnp.transpose(x_nchw, (0, 2, 3, 1)).astype(jnp.float32)
    xp = jnp.pad(x_nhwc, ((0, 0), (2, 2), (1, Wpad - W - 1), (0, Cpad - C)))

    w1, b1 = _prep_conv_bn(params["conv1_w"], params["bn1_gamma"],
                           params["bn1_beta"], params["bn1_mean"],
                           params["bn1_var"], C, planes, Cpad)
    w2, b2 = _prep_conv_bn(params["conv2_w"], params["bn2_gamma"],
                           params["bn2_beta"], params["bn2_mean"],
                           params["bn2_var"], planes, planes, Cpad)

    kernel = functools.partial(_basic_block_kernel,
                               th=th, W=W, Wpad=Wpad, Cpad=Cpad)

    M = N * H * W
    flops = 2 * (2 * M * (9 * Cpad) * Cpad)                 # two 3x3 convs
    bytes_accessed = (xp.size * 4 + w1.size * 2 + w2.size * 2
                      + b1.size * 4 + b2.size * 4 + M * Cpad * 2)

    out = pl.pallas_call(
        kernel,
        out_shape=jax.ShapeDtypeStruct((N, H, W, Cpad), jnp.bfloat16),
        grid=(N, nt),
        in_specs=[
            pl.BlockSpec(memory_space=pl.ANY),                          # xp in HBM
            pl.BlockSpec((3, 3 * Cpad, Cpad), lambda n, t: (0, 0, 0)),  # w1
            pl.BlockSpec((1, Cpad), lambda n, t: (0, 0)),               # b1
            pl.BlockSpec((3, 3 * Cpad, Cpad), lambda n, t: (0, 0, 0)),  # w2
            pl.BlockSpec((1, Cpad), lambda n, t: (0, 0)),               # b2
        ],
        out_specs=pl.BlockSpec((None, th, W, Cpad), lambda n, t: (n, t, 0, 0)),
        scratch_shapes=[
            pltpu.VMEM((th + 4, Wpad, Cpad), jnp.float32),   # f32 input window
            pltpu.VMEM((th + 4, Wpad, Cpad), jnp.bfloat16),  # bf16 cast of it
            pltpu.VMEM((th + 2, Wpad, Cpad), jnp.bfloat16),  # conv1 output + pad
            pltpu.SemaphoreType.DMA,
        ],
        compiler_params=pltpu.CompilerParams(
            dimension_semantics=("parallel", "parallel"),
            vmem_limit_bytes=min(int(0.9 * vmem_cap), 128 * 1024 * 1024)),
        cost_estimate=pl.CostEstimate(flops=flops, transcendentals=0,
                                      bytes_accessed=bytes_accessed),
    )(xp, w1, b1, w2, b2)

    out = out[..., :C].astype(jnp.float32)                  # drop channel padding
    return jnp.transpose(out, (0, 3, 1, 2))                 # back to NCHW


# ---------------------------------------------------------------------------
# Pure-JAX (XLA) reference for correctness checking
# ---------------------------------------------------------------------------
def basic_block_reference(x_nchw, params, eps=1e-5):
    def conv(x, w):
        return jax.lax.conv_general_dilated(
            x, w, window_strides=(1, 1), padding=((1, 1), (1, 1)),
            dimension_numbers=("NCHW", "OIHW", "NCHW"))

    def bn(x, g, b, m, v):
        g = g[None, :, None, None]
        b = b[None, :, None, None]
        m = m[None, :, None, None]
        v = v[None, :, None, None]
        return (x - m) * g / jnp.sqrt(v + eps) + b

    out = conv(x_nchw, params["conv1_w"])
    out = bn(out, params["bn1_gamma"], params["bn1_beta"],
             params["bn1_mean"], params["bn1_var"])
    out = jax.nn.relu(out)
    out = conv(out, params["conv2_w"])
    out = bn(out, params["bn2_gamma"], params["bn2_beta"],
             params["bn2_mean"], params["bn2_var"])
    out = out + x_nchw
    return jax.nn.relu(out)


# ---------------------------------------------------------------------------
# Deterministic parameter construction + driver
# ---------------------------------------------------------------------------
def make_params(key, inplanes, planes):
    ks = jax.random.split(key, 10)
    return {
        "conv1_w": 0.1 * jax.random.normal(ks[0], (planes, inplanes, 3, 3), jnp.float32),
        "conv2_w": 0.1 * jax.random.normal(ks[1], (planes, planes, 3, 3), jnp.float32),
        "bn1_gamma": jax.random.uniform(ks[2], (planes,), jnp.float32, 0.5, 1.5),
        "bn1_beta": 0.1 * jax.random.normal(ks[3], (planes,), jnp.float32),
        "bn1_mean": 0.1 * jax.random.normal(ks[4], (planes,), jnp.float32),
        "bn1_var": jax.random.uniform(ks[5], (planes,), jnp.float32, 0.5, 1.5),
        "bn2_gamma": jax.random.uniform(ks[6], (planes,), jnp.float32, 0.5, 1.5),
        "bn2_beta": 0.1 * jax.random.normal(ks[7], (planes,), jnp.float32),
        "bn2_mean": 0.1 * jax.random.normal(ks[8], (planes,), jnp.float32),
        "bn2_var": jax.random.uniform(ks[9], (planes,), jnp.float32, 0.5, 1.5),
    }


if __name__ == "__main__":
    key = jax.random.PRNGKey(0)
    k_x, k_p = jax.random.split(key)

    N, C, H, W = 2, 4, 16, 16           # inplanes == planes == 4, stride=1
    x = jax.random.normal(k_x, (N, C, H, W), jnp.float32)
    params = make_params(k_p, C, C)

    out = jax.jit(basic_block_forward)(x, params)
    out = jax.block_until_ready(out)

    ref = jax.block_until_ready(basic_block_reference(x, params))
    assert out.shape == (N, C, H, W)
    # bf16 matmul operands / bf16 output (f32 accumulation + f32 residual)
    # -> loosened tolerance vs the f32 reference.
    assert jnp.allclose(out, ref, rtol=5e-2, atol=5e-2), "mismatch vs XLA reference"

    print("KERNEL_OK")
</pallas_src>

<mosaic_0001>
module attributes {stable_mosaic.version = 11 : i64} {
  func.func @_basic_block_kernel(%arg0: i32, %arg1: i32, %arg2: memref<2x20x24x128xf32, #tpu.memory_space<any>>, %arg3: memref<3x384x128xbf16, #tpu.memory_space<vmem>>, %arg4: memref<1x128xf32, #tpu.memory_space<vmem>>, %arg5: memref<3x384x128xbf16, #tpu.memory_space<vmem>>, %arg6: memref<1x128xf32, #tpu.memory_space<vmem>>, %arg7: memref<1x16x16x128xbf16, #tpu.memory_space<vmem>>, %arg8: memref<20x24x128xf32, #tpu.memory_space<vmem>>, %arg9: memref<20x24x128xbf16, #tpu.memory_space<vmem>>, %arg10: memref<18x24x128xbf16, #tpu.memory_space<vmem>>, %arg11: memref<!tpu.dma_semaphore, #tpu.memory_space<semaphore_mem>>) attributes {dimension_semantics = [#tpu.dimension_semantics<parallel>, #tpu.dimension_semantics<parallel>], iteration_bounds = array<i64: 2, 1>, scalar_prefetch = 0 : i64, scratch_operands = 4 : i64, tpu.core_type = #tpu.core_type<tc>, window_params = [{}, {pipeline_mode = #tpu.pipeline_mode<synchronous>, transform_indices = @transform_1, window_bounds = array<i64: 3, 384, 128>}, {pipeline_mode = #tpu.pipeline_mode<synchronous>, transform_indices = @transform_2, window_bounds = array<i64: 1, 128>}, {pipeline_mode = #tpu.pipeline_mode<synchronous>, transform_indices = @transform_3, window_bounds = array<i64: 3, 384, 128>}, {pipeline_mode = #tpu.pipeline_mode<synchronous>, transform_indices = @transform_4, window_bounds = array<i64: 1, 128>}, {transform_indices = @transform_5, window_bounds = array<i64: 1, 16, 16, 128>}]} {
    %c16_i32 = arith.constant 16 : i32
    %0 = arith.muli %arg1, %c16_i32 : i32
    %c0_i32 = arith.constant 0 : i32
    %c0_i32_0 = arith.constant 0 : i32
    %1 = tpu.memref_slice %arg2[%arg0, %0, %c0_i32, %c0_i32_0] : memref<2x20x24x128xf32, #tpu.memory_space<any>> -> memref<1x20x24x128xf32, #tpu.memory_space<any>>
    %2 = tpu.memref_squeeze %1 : memref<1x20x24x128xf32, #tpu.memory_space<any>> -> memref<20x24x128xf32, #tpu.memory_space<any>>
    tpu.enqueue_dma source(%2 : memref<20x24x128xf32, #tpu.memory_space<any>>) target(%arg8 : memref<20x24x128xf32, #tpu.memory_space<vmem>>) target_semaphore(%arg11 : memref<!tpu.dma_semaphore, #tpu.memory_space<semaphore_mem>>)
    %cst = arith.constant 0.000000e+00 : bf16
    %3 = vector.broadcast %cst : bf16 to vector<18x1x128xbf16>
    %c0 = arith.constant 0 : index
    %c0_1 = arith.constant 0 : index
    %c0_2 = arith.constant 0 : index
    %4 = vector.load %arg10[%c0, %c0_1, %c0_2] : memref<18x24x128xbf16, #tpu.memory_space<vmem>>, vector<18x1x128xbf16>
    tpu.vector_store %arg10[%c0, %c0_1, %c0_2], %3 {strides = array<i32>} : memref<18x24x128xbf16, #tpu.memory_space<vmem>>, vector<18x1x128xbf16>,
    %cst_3 = arith.constant 0.000000e+00 : bf16
    %5 = vector.broadcast %cst_3 : bf16 to vector<18x7x128xbf16>
    %c0_4 = arith.constant 0 : index
    %c17 = arith.constant 17 : index
    %c0_5 = arith.constant 0 : index
    %6 = vector.load %arg10[%c0_4, %c17, %c0_5] : memref<18x24x128xbf16, #tpu.memory_space<vmem>>, vector<18x7x128xbf16>
    tpu.vector_store %arg10[%c0_4, %c17, %c0_5], %5 {strides = array<i32>} : memref<18x24x128xbf16, #tpu.memory_space<vmem>>, vector<18x7x128xbf16>,
    %c0_i32_6 = arith.constant 0 : i32
    %c0_i32_7 = arith.constant 0 : i32
    %7 = tpu.memref_slice %arg2[%arg0, %0, %c0_i32_6, %c0_i32_7] : memref<2x20x24x128xf32, #tpu.memory_space<any>> -> memref<1x20x24x128xf32, #tpu.memory_space<any>>
    %8 = tpu.memref_squeeze %7 : memref<1x20x24x128xf32, #tpu.memory_space<any>> -> memref<20x24x128xf32, #tpu.memory_space<any>>
    tpu.wait_dma2 semaphore(%arg11 : memref<!tpu.dma_semaphore, #tpu.memory_space<semaphore_mem>>) src(%8 : memref<20x24x128xf32, #tpu.memory_space<any>>) dst(%arg8 : memref<20x24x128xf32, #tpu.memory_space<vmem>>)
    %c0_8 = arith.constant 0 : index
    %c0_9 = arith.constant 0 : index
    %c0_10 = arith.constant 0 : index
    %9 = vector.load %arg8[%c0_8, %c0_9, %c0_10] : memref<20x24x128xf32, #tpu.memory_space<vmem>>, vector<20x24x128xf32>
    %10 = arith.truncf %9 : vector<20x24x128xf32> to vector<20x24x128xbf16>
    %c0_11 = arith.constant 0 : index
    %c0_12 = arith.constant 0 : index
    %c0_13 = arith.constant 0 : index
    %11 = vector.load %arg9[%c0_11, %c0_12, %c0_13] : memref<20x24x128xbf16, #tpu.memory_space<vmem>>, vector<20x24x128xbf16>
    tpu.vector_store %arg9[%c0_11, %c0_12, %c0_13], %10 {strides = array<i32>} : memref<20x24x128xbf16, #tpu.memory_space<vmem>>, vector<20x24x128xbf16>,
    %c0_14 = arith.constant 0 : index
    %c0_15 = arith.constant 0 : index
    %c0_16 = arith.constant 0 : index
    %12 = vector.load %arg9[%c0_14, %c0_15, %c0_16] : memref<20x24x128xbf16, #tpu.memory_space<vmem>>, vector<18x16x128xbf16>
    %c0_17 = arith.constant 0 : index
    %c1 = arith.constant 1 : index
    %c0_18 = arith.constant 0 : index
    %13 = vector.load %arg9[%c0_17, %c1, %c0_18] : memref<20x24x128xbf16, #tpu.memory_space<vmem>>, vector<18x16x128xbf16>
    %c0_19 = arith.constant 0 : index
    %c2 = arith.constant 2 : index
    %c0_20 = arith.constant 0 : index
    %14 = vector.load %arg9[%c0_19, %c2, %c0_20] : memref<20x24x128xbf16, #tpu.memory_space<vmem>>, vector<18x16x128xbf16>
    %15 = tpu.concatenate %12, %13, %14 in 2 : vector<18x16x128xbf16>, vector<18x16x128xbf16>, vector<18x16x128xbf16> -> vector<18x16x384xbf16>
    %16 = vector.shape_cast %15 : vector<18x16x384xbf16> to vector<288x384xbf16>
    %c0_21 = arith.constant 0 : index
    %c0_22 = arith.constant 0 : index
    %c0_23 = arith.constant 0 : index
    %17 = vector.load %arg3[%c0_21, %c0_22, %c0_23] : memref<3x384x128xbf16, #tpu.memory_space<vmem>>, vector<1x384x128xbf16>
    %18 = vector.shape_cast %17 : vector<1x384x128xbf16> to vector<384x128xbf16>
    %cst_24 = arith.constant dense<0.000000e+00> : vector<288x128xf32>
    %19 = tpu.matmul %16, %18, %cst_24 {dimension_numbers = #tpu.dot_dimension_numbers<[1], [0], [0], [1], [0, 0, 1, 1], [], []>} : vector<288x384xbf16>, vector<384x128xbf16>, vector<288x128xf32> -> vector<288x128xf32>
    %c1_25 = arith.constant 1 : index
    %c0_26 = arith.constant 0 : index
    %c0_27 = arith.constant 0 : index
    %20 = vector.load %arg9[%c1_25, %c0_26, %c0_27] : memref<20x24x128xbf16, #tpu.memory_space<vmem>>, vector<18x16x128xbf16>
    %c1_28 = arith.constant 1 : index
    %c1_29 = arith.constant 1 : index
    %c0_30 = arith.constant 0 : index
    %21 = vector.load %arg9[%c1_28, %c1_29, %c0_30] : memref<20x24x128xbf16, #tpu.memory_space<vmem>>, vector<18x16x128xbf16>
    %c1_31 = arith.constant 1 : index
    %c2_32 = arith.constant 2 : index
    %c0_33 = arith.constant 0 : index
    %22 = vector.load %arg9[%c1_31, %c2_32, %c0_33] : memref<20x24x128xbf16, #tpu.memory_space<vmem>>, vector<18x16x128xbf16>
    %23 = tpu.concatenate %20, %21, %22 in 2 : vector<18x16x128xbf16>, vector<18x16x128xbf16>, vector<18x16x128xbf16> -> vector<18x16x384xbf16>
    %24 = vector.shape_cast %23 : vector<18x16x384xbf16> to vector<288x384xbf16>
    %c1_34 = arith.constant 1 : index
    %c0_35 = arith.constant 0 : index
    %c0_36 = arith.constant 0 : index
    %25 = vector.load %arg3[%c1_34, %c0_35, %c0_36] : memref<3x384x128xbf16, #tpu.memory_space<vmem>>, vector<1x384x128xbf16>
    %26 = vector.shape_cast %25 : vector<1x384x128xbf16> to vector<384x128xbf16>
    %cst_37 = arith.constant dense<0.000000e+00> : vector<288x128xf32>
    %27 = tpu.matmul %24, %26, %cst_37 {dimension_numbers = #tpu.dot_dimension_numbers<[1], [0], [0], [1], [0, 0, 1, 1], [], []>} : vector<288x384xbf16>, vector<384x128xbf16>, vector<288x128xf32> -> vector<288x128xf32>
    %28 = arith.addf %19, %27 : vector<288x128xf32>
    %c2_38 = arith.constant 2 : index
    %c0_39 = arith.constant 0 : index
    %c0_40 = arith.constant 0 : index
    %29 = vector.load %arg9[%c2_38, %c0_39, %c0_40] : memref<20x24x128xbf16, #tpu.memory_space<vmem>>, vector<18x16x128xbf16>
    %c2_41 = arith.constant 2 : index
    %c1_42 = arith.constant 1 : index
    %c0_43 = arith.constant 0 : index
    %30 = vector.load %arg9[%c2_41, %c1_42, %c0_43] : memref<20x24x128xbf16, #tpu.memory_space<vmem>>, vector<18x16x128xbf16>
    %c2_44 = arith.constant 2 : index
    %c2_45 = arith.constant 2 : index
    %c0_46 = arith.constant 0 : index
    %31 = vector.load %arg9[%c2_44, %c2_45, %c0_46] : memref<20x24x128xbf16, #tpu.memory_space<vmem>>, vector<18x16x128xbf16>
    %32 = tpu.concatenate %29, %30, %31 in 2 : vector<18x16x128xbf16>, vector<18x16x128xbf16>, vector<18x16x128xbf16> -> vector<18x16x384xbf16>
    %33 = vector.shape_cast %32 : vector<18x16x384xbf16> to vector<288x384xbf16>
    %c2_47 = arith.constant 2 : index
    %c0_48 = arith.constant 0 : index
    %c0_49 = arith.constant 0 : index
    %34 = vector.load %arg3[%c2_47, %c0_48, %c0_49] : memref<3x384x128xbf16, #tpu.memory_space<vmem>>, vector<1x384x128xbf16>
    %35 = vector.shape_cast %34 : vector<1x384x128xbf16> to vector<384x128xbf16>
    %cst_50 = arith.constant dense<0.000000e+00> : vector<288x128xf32>
    %36 = tpu.matmul %33, %35, %cst_50 {dimension_numbers = #tpu.dot_dimension_numbers<[1], [0], [0], [1], [0, 0, 1, 1], [], []>} : vector<288x384xbf16>, vector<384x128xbf16>, vector<288x128xf32> -> vector<288x128xf32>
    %37 = arith.addf %28, %36 : vector<288x128xf32>
    %c0_51 = arith.constant 0 : index
    %c0_52 = arith.constant 0 : index
    %38 = vector.load %arg4[%c0_51, %c0_52] : memref<1x128xf32, #tpu.memory_space<vmem>>, vector<1x128xf32>
    %39 = vector.broadcast %38 : vector<1x128xf32> to vector<288x128xf32>
    %40 = arith.addf %37, %39 : vector<288x128xf32>
    %cst_53 = arith.constant 0.000000e+00 : f32
    %41 = vector.broadcast %cst_53 : f32 to vector<288x128xf32>
    %42 = arith.maximumf %40, %41 : vector<288x128xf32>
    %43 = vector.shape_cast %42 : vector<288x128xf32> to vector<18x16x128xf32>
    %44 = arith.truncf %43 : vector<18x16x128xf32> to vector<18x16x128xbf16>
    %c0_54 = arith.constant 0 : index
    %c1_55 = arith.constant 1 : index
    %c0_56 = arith.constant 0 : index
    %45 = vector.load %arg10[%c0_54, %c1_55, %c0_56] : memref<18x24x128xbf16, #tpu.memory_space<vmem>>, vector<18x16x128xbf16>
    tpu.vector_store %arg10[%c0_54, %c1_55, %c0_56], %44 {strides = array<i32>} : memref<18x24x128xbf16, #tpu.memory_space<vmem>>, vector<18x16x128xbf16>,
    %c0_i32_57 = arith.constant 0 : i32
    %46 = arith.cmpi eq, %arg1, %c0_i32_57 : i32
    %47 = arith.extui %46 : i1 to i32
    %c0_i32_58 = arith.constant 0 : i32
    %48 = arith.cmpi ne, %47, %c0_i32_58 : i32
    scf.if %48 {
      %cst_110 = arith.constant 0.000000e+00 : bf16
      %91 = vector.broadcast %cst_110 : bf16 to vector<1x24x128xbf16>
      %c0_111 = arith.constant 0 : index
      %c0_112 = arith.constant 0 : index
      %c0_113 = arith.constant 0 : index
      %92 = vector.load %arg10[%c0_111, %c0_112, %c0_113] : memref<18x24x128xbf16, #tpu.memory_space<vmem>>, vector<1x24x128xbf16>
      tpu.vector_store %arg10[%c0_111, %c0_112, %c0_113], %91 {strides = array<i32>} : memref<18x24x128xbf16, #tpu.memory_space<vmem>>, vector<1x24x128xbf16>,
    } else {
    }
    %c0_i32_59 = arith.constant 0 : i32
    %49 = arith.cmpi eq, %arg1, %c0_i32_59 : i32
    %50 = arith.extui %49 : i1 to i32
    %c0_i32_60 = arith.constant 0 : i32
    %51 = arith.cmpi ne, %50, %c0_i32_60 : i32
    scf.if %51 {
      %cst_110 = arith.constant 0.000000e+00 : bf16
      %91 = vector.broadcast %cst_110 : bf16 to vector<1x24x128xbf16>
      %c17_111 = arith.constant 17 : index
      %c0_112 = arith.constant 0 : index
      %c0_113 = arith.constant 0 : index
      %92 = vector.load %arg10[%c17_111, %c0_112, %c0_113] : memref<18x24x128xbf16, #tpu.memory_space<vmem>>, vector<1x24x128xbf16>
      tpu.vector_store %arg10[%c17_111, %c0_112, %c0_113], %91 {strides = array<i32>} : memref<18x24x128xbf16, #tpu.memory_space<vmem>>, vector<1x24x128xbf16>,
    } else {
    }
    %c0_61 = arith.constant 0 : index
    %c0_62 = arith.constant 0 : index
    %c0_63 = arith.constant 0 : index
    %52 = vector.load %arg10[%c0_61, %c0_62, %c0_63] : memref<18x24x128xbf16, #tpu.memory_space<vmem>>, vector<16x16x128xbf16>
    %c0_64 = arith.constant 0 : index
    %c1_65 = arith.constant 1 : index
    %c0_66 = arith.constant 0 : index
    %53 = vector.load %arg10[%c0_64, %c1_65, %c0_66] : memref<18x24x128xbf16, #tpu.memory_space<vmem>>, vector<16x16x128xbf16>
    %c0_67 = arith.constant 0 : index
    %c2_68 = arith.constant 2 : index
    %c0_69 = arith.constant 0 : index
    %54 = vector.load %arg10[%c0_67, %c2_68, %c0_69] : memref<18x24x128xbf16, #tpu.memory_space<vmem>>, vector<16x16x128xbf16>
    %55 = tpu.concatenate %52, %53, %54 in 2 : vector<16x16x128xbf16>, vector<16x16x128xbf16>, vector<16x16x128xbf16> -> vector<16x16x384xbf16>
    %56 = vector.shape_cast %55 : vector<16x16x384xbf16> to vector<256x384xbf16>
    %c0_70 = arith.constant 0 : index
    %c0_71 = arith.constant 0 : index
    %c0_72 = arith.constant 0 : index
    %57 = vector.load %arg5[%c0_70, %c0_71, %c0_72] : memref<3x384x128xbf16, #tpu.memory_space<vmem>>, vector<1x384x128xbf16>
    %58 = vector.shape_cast %57 : vector<1x384x128xbf16> to vector<384x128xbf16>
    %cst_73 = arith.constant dense<0.000000e+00> : vector<256x128xf32>
    %59 = tpu.matmul %56, %58, %cst_73 {dimension_numbers = #tpu.dot_dimension_numbers<[1], [0], [0], [1], [0, 0, 1, 1], [], []>} : vector<256x384xbf16>, vector<384x128xbf16>, vector<256x128xf32> -> vector<256x128xf32>
    %c1_74 = arith.constant 1 : index
    %c0_75 = arith.constant 0 : index
    %c0_76 = arith.constant 0 : index
    %60 = vector.load %arg10[%c1_74, %c0_75, %c0_76] : memref<18x24x128xbf16, #tpu.memory_space<vmem>>, vector<16x16x128xbf16>
    %c1_77 = arith.constant 1 : index
    %c1_78 = arith.constant 1 : index
    %c0_79 = arith.constant 0 : index
    %61 = vector.load %arg10[%c1_77, %c1_78, %c0_79] : memref<18x24x128xbf16, #tpu.memory_space<vmem>>, vector<16x16x128xbf16>
    %c1_80 = arith.constant 1 : index
    %c2_81 = arith.constant 2 : index
    %c0_82 = arith.constant 0 : index
    %62 = vector.load %arg10[%c1_80, %c2_81, %c0_82] : memref<18x24x128xbf16, #tpu.memory_space<vmem>>, vector<16x16x128xbf16>
    %63 = tpu.concatenate %60, %61, %62 in 2 : vector<16x16x128xbf16>, vector<16x16x128xbf16>, vector<16x16x128xbf16> -> vector<16x16x384xbf16>
    %64 = vector.shape_cast %63 : vector<16x16x384xbf16> to vector<256x384xbf16>
    %c1_83 = arith.constant 1 : index
    %c0_84 = arith.constant 0 : index
    %c0_85 = arith.constant 0 : index
    %65 = vector.load %arg5[%c1_83, %c0_84, %c0_85] : memref<3x384x128xbf16, #tpu.memory_space<vmem>>, vector<1x384x128xbf16>
    %66 = vector.shape_cast %65 : vector<1x384x128xbf16> to vector<384x128xbf16>
    %cst_86 = arith.constant dense<0.000000e+00> : vector<256x128xf32>
    %67 = tpu.matmul %64, %66, %cst_86 {dimension_numbers = #tpu.dot_dimension_numbers<[1], [0], [0], [1], [0, 0, 1, 1], [], []>} : vector<256x384xbf16>, vector<384x128xbf16>, vector<256x128xf32> -> vector<256x128xf32>
    %68 = arith.addf %59, %67 : vector<256x128xf32>
    %c2_87 = arith.constant 2 : index
    %c0_88 = arith.constant 0 : index
    %c0_89 = arith.constant 0 : index
    %69 = vector.load %arg10[%c2_87, %c0_88, %c0_89] : memref<18x24x128xbf16, #tpu.memory_space<vmem>>, vector<16x16x128xbf16>
    %c2_90 = arith.constant 2 : index
    %c1_91 = arith.constant 1 : index
    %c0_92 = arith.constant 0 : index
    %70 = vector.load %arg10[%c2_90, %c1_91, %c0_92] : memref<18x24x128xbf16, #tpu.memory_space<vmem>>, vector<16x16x128xbf16>
    %c2_93 = arith.constant 2 : index
    %c2_94 = arith.constant 2 : index
    %c0_95 = arith.constant 0 : index
    %71 = vector.load %arg10[%c2_93, %c2_94, %c0_95] : memref<18x24x128xbf16, #tpu.memory_space<vmem>>, vector<16x16x128xbf16>
    %72 = tpu.concatenate %69, %70, %71 in 2 : vector<16x16x128xbf16>, vector<16x16x128xbf16>, vector<16x16x128xbf16> -> vector<16x16x384xbf16>
    %73 = vector.shape_cast %72 : vector<16x16x384xbf16> to vector<256x384xbf16>
    %c2_96 = arith.constant 2 : index
    %c0_97 = arith.constant 0 : index
    %c0_98 = arith.constant 0 : index
    %74 = vector.load %arg5[%c2_96, %c0_97, %c0_98] : memref<3x384x128xbf16, #tpu.memory_space<vmem>>, vector<1x384x128xbf16>
    %75 = vector.shape_cast %74 : vector<1x384x128xbf16> to vector<384x128xbf16>
    %cst_99 = arith.constant dense<0.000000e+00> : vector<256x128xf32>
    %76 = tpu.matmul %73, %75, %cst_99 {dimension_numbers = #tpu.dot_dimension_numbers<[1], [0], [0], [1], [0, 0, 1, 1], [], []>} : vector<256x384xbf16>, vector<384x128xbf16>, vector<256x128xf32> -> vector<256x128xf32>
    %77 = arith.addf %68, %76 : vector<256x128xf32>
    %c2_100 = arith.constant 2 : index
    %c1_101 = arith.constant 1 : index
    %c0_102 = arith.constant 0 : index
    %78 = vector.load %arg8[%c2_100, %c1_101, %c0_102] : memref<20x24x128xf32, #tpu.memory_space<vmem>>, vector<16x16x128xf32>
    %79 = vector.shape_cast %78 : vector<16x16x128xf32> to vector<256x128xf32>
    %c0_103 = arith.constant 0 : index
    %c0_104 = arith.constant 0 : index
    %80 = vector.load %arg6[%c0_103, %c0_104] : memref<1x128xf32, #tpu.memory_space<vmem>>, vector<1x128xf32>
    %81 = vector.broadcast %80 : vector<1x128xf32> to vector<256x128xf32>
    %82 = arith.addf %77, %81 : vector<256x128xf32>
    %83 = arith.addf %82, %79 : vector<256x128xf32>
    %cst_105 = arith.constant 0.000000e+00 : f32
    %84 = vector.broadcast %cst_105 : f32 to vector<256x128xf32>
    %85 = arith.maximumf %83, %84 : vector<256x128xf32>
    %86 = vector.shape_cast %85 : vector<256x128xf32> to vector<16x16x128xf32>
    %87 = arith.truncf %86 : vector<16x16x128xf32> to vector<16x16x128xbf16>
    %c0_106 = arith.constant 0 : index
    %c0_107 = arith.constant 0 : index
    %c0_108 = arith.constant 0 : index
    %c0_109 = arith.constant 0 : index
    %88 = vector.load %arg7[%c0_106, %c0_107, %c0_108, %c0_109] : memref<1x16x16x128xbf16, #tpu.memory_space<vmem>>, vector<1x16x16x128xbf16>
    %89 = vector.shape_cast %88 : vector<1x16x16x128xbf16> to vector<16x16x128xbf16>
    %90 = vector.shape_cast %87 : vector<16x16x128xbf16> to vector<1x16x16x128xbf16>
    tpu.vector_store %arg7[%c0_106, %c0_107, %c0_108, %c0_109], %90 {strides = array<i32>} : memref<1x16x16x128xbf16, #tpu.memory_space<vmem>>, vector<1x16x16x128xbf16>,
    return
  }
  func.func @transform_1(%arg0: i32, %arg1: i32) -> (i32, i32, i32) {
    %c0_i32 = arith.constant 0 : i32
    %c0_i32_0 = arith.constant 0 : i32
    %c0_i32_1 = arith.constant 0 : i32
    %c0_i32_2 = arith.constant 0 : i32
    return %c0_i32, %c0_i32_0, %c0_i32_1 : i32, i32, i32
  }
  func.func @transform_2(%arg0: i32, %arg1: i32) -> (i32, i32) {
    %c0_i32 = arith.constant 0 : i32
    %c0_i32_0 = arith.constant 0 : i32
    %c0_i32_1 = arith.constant 0 : i32
    return %c0_i32, %c0_i32_0 : i32, i32
  }
  func.func @transform_3(%arg0: i32, %arg1: i32) -> (i32, i32, i32) {
    %c0_i32 = arith.constant 0 : i32
    %c0_i32_0 = arith.constant 0 : i32
    %c0_i32_1 = arith.constant 0 : i32
    %c0_i32_2 = arith.constant 0 : i32
    return %c0_i32, %c0_i32_0, %c0_i32_1 : i32, i32, i32
  }
  func.func @transform_4(%arg0: i32, %arg1: i32) -> (i32, i32) {
    %c0_i32 = arith.constant 0 : i32
    %c0_i32_0 = arith.constant 0 : i32
    %c0_i32_1 = arith.constant 0 : i32
    return %c0_i32, %c0_i32_0 : i32, i32
  }
  func.func @transform_5(%arg0: i32, %arg1: i32) -> (i32, i32, i32, i32) {
    %c0_i32 = arith.constant 0 : i32
    %c0_i32_0 = arith.constant 0 : i32
    %c0_i32_1 = arith.constant 0 : i32
    return %arg0, %arg1, %c0_i32, %c0_i32_0 : i32, i32, i32, i32
  }
}

</mosaic_0001>

<llo_original>
// kernel: basic_block_forward.1
$region0: #{basic_block_forward.1}
  #allocation0 [shape = 'u32[]', space=smem, size = 0x4, offset = 0x4, fixed_abs, tag = 'smem constant byte address 0x4 - core index']
  #allocation1 [shape = 'u32[144,128]{1,0:T(1,128)}', space=vmem, size = 0x12000, scoped, tag = 'internal scratch']
  #allocation2 [shape = 'f32[20,24,128]{2,1,0:T(8,128)}', space=vmem, size = 0x3c000, scoped, tag = 'scratch operand']
  #allocation3 [shape = 'bf16[20,24,128]{2,1,0:T(8,128)(2,1)}', space=vmem, size = 0x1e000, scoped, tag = 'scratch operand']
  #allocation4 [shape = 'bf16[18,24,128]{2,1,0:T(8,128)(2,1)}', space=vmem, size = 0x1b000, scoped, tag = 'scratch operand']
  #allocation5 [shape = 's32[1]{0}', space=sflag, size = 0x4, scoped, tag = 'scratch operand']
  #allocation6 [shape = 's32[]', space=sflag, size = 0x4, offset = 0, fixed_abs, tag = 'sflag constant byte address 0x0 - dummy sync flag']
  %s0 = inlined_call_operand.vmem [shape: f32[2,20,24,128], index: 0, kind: input, shape index: {}]
  %s1 = inlined_call_operand.vmem [shape: bf16[3,384,128], index: 1, kind: input, shape index: {}]
  %s2 = inlined_call_operand.vmem [shape: f32[1,128], index: 2, kind: input, shape index: {}]
  %s3 = inlined_call_operand.vmem [shape: bf16[3,384,128], index: 3, kind: input, shape index: {}]
  %s4 = inlined_call_operand.vmem [shape: f32[1,128], index: 4, kind: input, shape index: {}]
  %s5 = inlined_call_operand.vmem [shape: bf16[2,16,16,128], index: 5, kind: output, shape index: {}]
  %s6 = sld [smem:[#allocation0]]
  $region87: #{basic_block_forward.1} parent=0
    _
  %s8 = ssub.s32 1, %s6
  %s9 = scalar_select 0, %s8, %s6
  loop: start=0, step=1, limit=4
  $region2: #{basic_block_forward.1} parent=0 // loop_pre_header
    _
  $region3: #{basic_block_forward.1} parent=0 // loop_header
    %s11 = sphi 0, %s15
    %p12 = scmp.ge.s32.totalorder %s11, 4
    %s18 = sphi 0, %s30
    %s19 = sphi 0, %s26
    %s20 = sphi 0, %s18
    %s21 = sphi 0, %s19
    %s22 = sphi 0, %s20
    %s23 = sphi 0, %s21
    %s31 = sphi 0, %s31
    %s33 = sphi 0, %s31
    %s34 = sphi 0, %s33
    %s48 = sphi 0, %s34
    %s52 = sphi 0, %s52
    %s54 = sphi 0, %s52
    %s55 = sphi 0, %s54
    %s69 = sphi 0, %s55
    %s73 = sphi 0, %s73
    %s75 = sphi 0, %s73
    %s76 = sphi 0, %s75
    %s90 = sphi 0, %s76
    %s94 = sphi 0, %s94
    %s96 = sphi 0, %s94
    %s97 = sphi 0, %s96
    %s111 = sphi 0, %s97
    %s119 = sphi 0, %s121
    %s122 = sphi 0, %s119
    %s123 = sphi 0, %s122
    %s139 = sphi 0, %s123
  $region4: #{basic_block_forward.1} parent=0 // loop_header_branch
    %14 = sbr.rel (%p12) target = $region8
  $region5: #{basic_block_forward.1} parent=0 // loop_body
    %s16 = ssub.s32 %s11, 1
    %s17 = ssub.s32 %s11, 2
    %s24 = sadd.s32 1, %s19
    %p25 = scmp.ge.s32.totalorder %s24, 1
    %s26 = scalar_select %p25, 0, %s24
    %s27 = sadd.s32 1, %s18
    %s28 = scalar_select %p25, %s27, %s18
    %p29 = scmp.ge.s32.totalorder %s28, 2
    %s30 = scalar_select %p29, 0, %s28
    %s32 = sadd.s32 %s31, 1
    %p35 = scmp.eq.s32.totalorder %s11, 1
    %p36 = scmp.ne.s32.totalorder %s31, %s33
    %p37 = scmp.eq.s32.totalorder %s11, 0
    %p38 = por %p36, %p37
    %p39 = scmp.ne.s32.totalorder %s31, %s33
    %p40 = scmp.eq.s32.totalorder %s16, 1
    %p41 = por %p39, %p40
    %p42 = scmp.ne.s32.totalorder %s33, %s34
    %p43 = scmp.eq.s32.totalorder %s16, 0
    %p44 = por %p42, %p43
    %p45 = scmp.ne.s32.totalorder %s33, %s34
    %p46 = scmp.eq.s32.totalorder %s17, 1
    %p47 = por %p45, %p46
    %p49 = scmp.ne.s32.totalorder %s34, %s48
    %p50 = scmp.eq.s32.totalorder %s17, 0
    %p51 = por %p49, %p50
    %s53 = sadd.s32 %s52, 1
    %p56 = scmp.eq.s32.totalorder %s11, 1
    %p57 = scmp.ne.s32.totalorder %s52, %s54
    %p58 = scmp.eq.s32.totalorder %s11, 0
    %p59 = por %p57, %p58
    %p60 = scmp.ne.s32.totalorder %s52, %s54
    %p61 = scmp.eq.s32.totalorder %s16, 1
    %p62 = por %p60, %p61
    %p63 = scmp.ne.s32.totalorder %s54, %s55
    %p64 = scmp.eq.s32.totalorder %s16, 0
    %p65 = por %p63, %p64
    %p66 = scmp.ne.s32.totalorder %s54, %s55
    %p67 = scmp.eq.s32.totalorder %s17, 1
    %p68 = por %p66, %p67
    %p70 = scmp.ne.s32.totalorder %s55, %s69
    %p71 = scmp.eq.s32.totalorder %s17, 0
    %p72 = por %p70, %p71
    %s74 = sadd.s32 %s73, 1
    %p77 = scmp.eq.s32.totalorder %s11, 1
    %p78 = scmp.ne.s32.totalorder %s73, %s75
    %p79 = scmp.eq.s32.totalorder %s11, 0
    %p80 = por %p78, %p79
    %p81 = scmp.ne.s32.totalorder %s73, %s75
    %p82 = scmp.eq.s32.totalorder %s16, 1
    %p83 = por %p81, %p82
    %p84 = scmp.ne.s32.totalorder %s75, %s76
    %p85 = scmp.eq.s32.totalorder %s16, 0
    %p86 = por %p84, %p85
    %p87 = scmp.ne.s32.totalorder %s75, %s76
    %p88 = scmp.eq.s32.totalorder %s17, 1
    %p89 = por %p87, %p88
    %p91 = scmp.ne.s32.totalorder %s76, %s90
    %p92 = scmp.eq.s32.totalorder %s17, 0
    %p93 = por %p91, %p92
    %s95 = sadd.s32 %s94, 1
    %p98 = scmp.eq.s32.totalorder %s11, 1
    %p99 = scmp.ne.s32.totalorder %s94, %s96
    %p100 = scmp.eq.s32.totalorder %s11, 0
    %p101 = por %p99, %p100
    %p102 = scmp.ne.s32.totalorder %s94, %s96
    %p103 = scmp.eq.s32.totalorder %s16, 1
    %p104 = por %p102, %p103
    %p105 = scmp.ne.s32.totalorder %s96, %s97
    %p106 = scmp.eq.s32.totalorder %s16, 0
    %p107 = por %p105, %p106
    %p108 = scmp.ne.s32.totalorder %s96, %s97
    %p109 = scmp.eq.s32.totalorder %s17, 1
    %p110 = por %p108, %p109
    %p112 = scmp.ne.s32.totalorder %s97, %s111
    %p113 = scmp.eq.s32.totalorder %s17, 0
    %p114 = por %p112, %p113
    %s115 = ssub.s32 %s18, %s30
    %s116 = ssub.s32 %s19, %s26
    %s117 = sor.u32 %s115, %s116
    %p118 = scmp.eq.s32.totalorder %s117, 0
    %s120 = sadd.s32 %s119, 1
    %s121 = scalar_select %p118, %s119, %s120
    %p124 = pneg %p118
    %p125 = scmp.eq.s32.totalorder %s11, 1
    %p126 = por %p124, %p125
    %p127 = scmp.ne.s32.totalorder %s119, %s122
    %p128 = scmp.eq.s32.totalorder %s11, 0
    %p129 = por %p127, %p128
    %p130 = scmp.ne.s32.totalorder %s119, %s122
    %p131 = scmp.eq.s32.totalorder %s16, 1
    %p132 = por %p130, %p131
    %p133 = scmp.ne.s32.totalorder %s122, %s123
    %p134 = scmp.eq.s32.totalorder %s16, 0
    %p135 = por %p133, %p134
    %p136 = scmp.ne.s32.totalorder %s122, %s123
    %p137 = scmp.eq.s32.totalorder %s17, 1
    %p138 = por %p136, %p137
    %p140 = scmp.ne.s32.totalorder %s123, %s139
    %p141 = scmp.eq.s32.totalorder %s17, 0
    %p142 = por %p140, %p141
    %p143 = scmp.le.s32.totalorder 1, %s11
    %p144 = scmp.lt.s32.totalorder %s11, 3
    %p145 = pnand %p143, %p144
    %p146 = pneg %p145
    // Predicated region
    $region9: #{basic_block_forward.1} parent=5 // pred_check
      _
    $region10: #{basic_block_forward.1} parent=5 // pred_check_branch
      %148 = sbr.rel (%p145) target = $region12
    $region11: #{basic_block_forward.1} parent=5 // pred_region
      %s149 = ssub.s32 %s11, 1
      // Predicated region
      $region13: #{basic_block_forward.1} parent=11 // pred_check
        %p150 = pneg %p44
      $region14: #{basic_block_forward.1} parent=11 // pred_check_branch
        %152 = sbr.rel (%p150) target = $region16
      $region15: #{basic_block_forward.1} parent=11 // pred_region
        _
      $region16: #{basic_block_forward.1} parent=11 // pred_fallthru
        _
      // Predicated region
      $region17: #{basic_block_forward.1} parent=11 // pred_check
        %p153 = pneg %p65
      $region18: #{basic_block_forward.1} parent=11 // pred_check_branch
        %155 = sbr.rel (%p153) target = $region20
      $region19: #{basic_block_forward.1} parent=11 // pred_region
        _
      $region20: #{basic_block_forward.1} parent=11 // pred_fallthru
        _
      // Predicated region
      $region21: #{basic_block_forward.1} parent=11 // pred_check
        %p156 = pneg %p86
      $region22: #{basic_block_forward.1} parent=11 // pred_check_branch
        %158 = sbr.rel (%p156) target = $region24
      $region23: #{basic_block_forward.1} parent=11 // pred_region
        _
      $region24: #{basic_block_forward.1} parent=11 // pred_fallthru
        _
      // Predicated region
      $region25: #{basic_block_forward.1} parent=11 // pred_check
        %p159 = pneg %p107
      $region26: #{basic_block_forward.1} parent=11 // pred_check_branch
        %161 = sbr.rel (%p159) target = $region28
      $region27: #{basic_block_forward.1} parent=11 // pred_region
        _
      $region28: #{basic_block_forward.1} parent=11 // pred_fallthru
        _
    $region12: #{basic_block_forward.1} parent=5 // pred_fallthru
      _
    %p162 = scmp.lt.s32.totalorder %s11, 2
    // Predicated region
    $region29: #{basic_block_forward.1} parent=5 // pred_check
      %p163 = pneg %p162
    $region30: #{basic_block_forward.1} parent=5 // pred_check_branch
      %165 = sbr.rel (%p163) target = $region32
    $region31: #{basic_block_forward.1} parent=5 // pred_region
      _
    $region32: #{basic_block_forward.1} parent=5 // pred_fallthru
      _
    %p166 = scmp.le.s32.totalorder 1, %s11
    %p167 = scmp.lt.s32.totalorder %s11, 3
    %p168 = pnand %p166, %p167
    %p169 = pneg %p168
    // Predicated region
    $region33: #{basic_block_forward.1} parent=5 // pred_check
      _
    $region34: #{basic_block_forward.1} parent=5 // pred_check_branch
      %171 = sbr.rel (%p168) target = $region36
    $region35: #{basic_block_forward.1} parent=5 // pred_region
      %s172 = ssub.s32 %s11, 1
      %p173 = pneg %p44
      %p174 = pneg %p41
      %p175 = pneg %p65
      %p176 = pneg %p62
      %p177 = pneg %p86
      %p178 = pneg %p83
      %p179 = pneg %p107
      %p180 = pneg %p104
      %p181 = pneg %p135
      %p182 = pneg %p132
      %s183 = smul.u32 16, %s21
      %p184 = scmp.lt.s32.totalorder %s20, 1
      %s185 = scalar_select %p184, %s20, 1
      %p186 = scmp.lt.s32.totalorder %s183, 15
      %s187 = scalar_select %p186, %s183, 15
      %s188 = smul.addr %s187, 2
      %s189 = smul.addr %s185, 32
      %s190 = sadd.s32 %s188, %s189
      %s191 = smul.addr %s190, 4
      %s192 = scalar_lea.vmem %s5, %s191
      %s193 = smul.u32 16, %s21
      %p194 = scmp.lt.s32.totalorder %s20, 1
      %s195 = scalar_select %p194, %s20, 1
      %p196 = scmp.lt.s32.totalorder %s193, 15
      %s197 = scalar_select %p196, %s193, 15
      %s198 = smul.addr %s197, 2
      %s199 = smul.addr %s195, 32
      %s200 = sadd.s32 %s198, %s199
      %s201 = smul.addr %s200, 4
      %s202 = scalar_lea.vmem %s5, %s201
      %s203 = smul.u32 16, %s21
      %s205 = smul.u32 %s21, 16
      %s206 = smul.u32 %s205, 24
      %s207 = smul.u32 %s20, 480
      %s208 = sadd.s32 %s206, %s207
      %s209 = scalar_lea.vmem %s0, %s208
      %p211 = scmp.lt.u32.totalorder 480, 8
      %p212 = pneg %p211
      // Predicated region
      $region37: #{basic_block_forward.1} parent=35 // pred_check
        _
      $region38: #{basic_block_forward.1} parent=35 // pred_check_branch
        %214 = sbr.rel (%p211) target = $region40
      $region39: #{basic_block_forward.1} parent=35 // pred_region
        %s229 = sand.u32 480, 7
        %p230 = scmp.eq.s32.totalorder %s229, 0
        // Predicated region
        $region52: #{basic_block_forward.1} parent=39 // pred_check
          %p231 = pneg %p230
        $region53: #{basic_block_forward.1} parent=39 // pred_check_branch
          %233 = sbr.rel (%p231) target = $region55
        $region54: #{basic_block_forward.1} parent=39 // pred_region
          loop: start=0, step=1, limit=1
          $region56: #{basic_block_forward.1} parent=54 // loop_pre_header
            _
          $region57: #{basic_block_forward.1} parent=54 // loop_header
            %s235 = sphi 0, %s239
            %p236 = scmp.ge.s32.totalorder %s235, 1
            %s240 = sphi %s209, %s209
            %s241 = sphi [#allocation2], [#allocation2]
          $region58: #{basic_block_forward.1} parent=54 // loop_header_branch
            %238 = sbr.rel (%p236) target = $region62
          $region59: #{basic_block_forward.1} parent=54 // loop_body
            %v242 = vld [vmem:[%s240] sm:$0xff]
            %243 = vst [vmem:[%s241] sm:$0xff] %v242
            %v244 = vld [vmem:[%s240 + $0x8] sm:$0xff]
            %245 = vst [vmem:[%s241 + $0x8] sm:$0xff] %v244
            %v246 = vld [vmem:[%s240 + $0x10] sm:$0xff]
            %247 = vst [vmem:[%s241 + $0x10] sm:$0xff] %v246
            %v248 = vld [vmem:[%s240 + $0x18] sm:$0xff]
            %249 = vst [vmem:[%s241 + $0x18] sm:$0xff] %v248
            %v250 = vld [vmem:[%s240 + $0x20] sm:$0xff]
            %251 = vst [vmem:[%s241 + $0x20] sm:$0xff] %v250
            %v252 = vld [vmem:[%s240 + $0x28] sm:$0xff]
            %253 = vst [vmem:[%s241 + $0x28] sm:$0xff] %v252
            %v254 = vld [vmem:[%s240 + $0x30] sm:$0xff]
            %255 = vst [vmem:[%s241 + $0x30] sm:$0xff] %v254
            %v256 = vld [vmem:[%s240 + $0x38] sm:$0xff]
            %257 = vst [vmem:[%s241 + $0x38] sm:$0xff] %v256
            %v258 = vld [vmem:[%s240 + $0x40] sm:$0xff]
            %259 = vst [vmem:[%s241 + $0x40] sm:$0xff] %v258
            %v260 = vld [vmem:[%s240 + $0x48] sm:$0xff]
            %261 = vst [vmem:[%s241 + $0x48] sm:$0xff] %v260
            %v262 = vld [vmem:[%s240 + $0x50] sm:$0xff]
            %263 = vst [vmem:[%s241 + $0x50] sm:$0xff] %v262
            %v264 = vld [vmem:[%s240 + $0x58] sm:$0xff]
            %265 = vst [vmem:[%s241 + $0x58] sm:$0xff] %v264
            %v266 = vld [vmem:[%s240 + $0x60] sm:$0xff]
            %267 = vst [vmem:[%s241 + $0x60] sm:$0xff] %v266
            %v268 = vld [vmem:[%s240 + $0x68] sm:$0xff]
            %269 = vst [vmem:[%s241 + $0x68] sm:$0xff] %v268
            %v270 = vld [vmem:[%s240 + $0x70] sm:$0xff]
            %271 = vst [vmem:[%s241 + $0x70] sm:$0xff] %v270
            %v272 = vld [vmem:[%s240 + $0x78] sm:$0xff]
            %273 = vst [vmem:[%s241 + $0x78] sm:$0xff] %v272
            %v274 = vld [vmem:[%s240 + $0x80] sm:$0xff]
            %275 = vst [vmem:[%s241 + $0x80] sm:$0xff] %v274
            %v276 = vld [vmem:[%s240 + $0x88] sm:$0xff]
            %277 = vst [vmem:[%s241 + $0x88] sm:$0xff] %v276
            %v278 = vld [vmem:[%s240 + $0x90] sm:$0xff]
            %279 = vst [vmem:[%s241 + $0x90] sm:$0xff] %v278
            %v280 = vld [vmem:[%s240 + $0x98] sm:$0xff]
            %281 = vst [vmem:[%s241 + $0x98] sm:$0xff] %v280
            %v282 = vld [vmem:[%s240 + $0xa0] sm:$0xff]
            %283 = vst [vmem:[%s241 + $0xa0] sm:$0xff] %v282
            %v284 = vld [vmem:[%s240 + $0xa8] sm:$0xff]
            %285 = vst [vmem:[%s241 + $0xa8] sm:$0xff] %v284
            %v286 = vld [vmem:[%s240 + $0xb0] sm:$0xff]
            %287 = vst [vmem:[%s241 + $0xb0] sm:$0xff] %v286
            %v288 = vld [vmem:[%s240 + $0xb8] sm:$0xff]
            %289 = vst [vmem:[%s241 + $0xb8] sm:$0xff] %v288
            %v290 = vld [vmem:[%s240 + $0xc0] sm:$0xff]
            %291 = vst [vmem:[%s241 + $0xc0] sm:$0xff] %v290
            %v292 = vld [vmem:[%s240 + $0xc8] sm:$0xff]
            %293 = vst [vmem:[%s241 + $0xc8] sm:$0xff] %v292
            %v294 = vld [vmem:[%s240 + $0xd0] sm:$0xff]
            %295 = vst [vmem:[%s241 + $0xd0] sm:$0xff] %v294
            %v296 = vld [vmem:[%s240 + $0xd8] sm:$0xff]
            %297 = vst [vmem:[%s241 + $0xd8] sm:$0xff] %v296
            %v298 = vld [vmem:[%s240 + $0xe0] sm:$0xff]
            %299 = vst [vmem:[%s241 + $0xe0] sm:$0xff] %v298
            %v300 = vld [vmem:[%s240 + $0xe8] sm:$0xff]
            %301 = vst [vmem:[%s241 + $0xe8] sm:$0xff] %v300
            %v302 = vld [vmem:[%s240 + $0xf0] sm:$0xff]
            %303 = vst [vmem:[%s241 + $0xf0] sm:$0xff] %v302
            %v304 = vld [vmem:[%s240 + $0xf8] sm:$0xff]
            %305 = vst [vmem:[%s241 + $0xf8] sm:$0xff] %v304
            %v306 = vld [vmem:[%s240 + $0x100] sm:$0xff]
            %307 = vst [vmem:[%s241 + $0x100] sm:$0xff] %v306
            %v308 = vld [vmem:[%s240 + $0x108] sm:$0xff]
            %309 = vst [vmem:[%s241 + $0x108] sm:$0xff] %v308
            %v310 = vld [vmem:[%s240 + $0x110] sm:$0xff]
            %311 = vst [vmem:[%s241 + $0x110] sm:$0xff] %v310
            %v312 = vld [vmem:[%s240 + $0x118] sm:$0xff]
            %313 = vst [vmem:[%s241 + $0x118] sm:$0xff] %v312
            %v314 = vld [vmem:[%s240 + $0x120] sm:$0xff]
            %315 = vst [vmem:[%s241 + $0x120] sm:$0xff] %v314
            %v316 = vld [vmem:[%s240 + $0x128] sm:$0xff]
            %317 = vst [vmem:[%s241 + $0x128] sm:$0xff] %v316
            %v318 = vld [vmem:[%s240 + $0x130] sm:$0xff]
            %319 = vst [vmem:[%s241 + $0x130] sm:$0xff] %v318
            %v320 = vld [vmem:[%s240 + $0x138] sm:$0xff]
            %321 = vst [vmem:[%s241 + $0x138] sm:$0xff] %v320
            %v322 = vld [vmem:[%s240 + $0x140] sm:$0xff]
            %323 = vst [vmem:[%s241 + $0x140] sm:$0xff] %v322
            %v324 = vld [vmem:[%s240 + $0x148] sm:$0xff]
            %325 = vst [vmem:[%s241 + $0x148] sm:$0xff] %v324
            %v326 = vld [vmem:[%s240 + $0x150] sm:$0xff]
            %327 = vst [vmem:[%s241 + $0x150] sm:$0xff] %v326
            %v328 = vld [vmem:[%s240 + $0x158] sm:$0xff]
            %329 = vst [vmem:[%s241 + $0x158] sm:$0xff] %v328
            %v330 = vld [vmem:[%s240 + $0x160] sm:$0xff]
            %331 = vst [vmem:[%s241 + $0x160] sm:$0xff] %v330
            %v332 = vld [vmem:[%s240 + $0x168] sm:$0xff]
            %333 = vst [vmem:[%s241 + $0x168] sm:$0xff] %v332
            %v334 = vld [vmem:[%s240 + $0x170] sm:$0xff]
            %335 = vst [vmem:[%s241 + $0x170] sm:$0xff] %v334
            %v336 = vld [vmem:[%s240 + $0x178] sm:$0xff]
            %337 = vst [vmem:[%s241 + $0x178] sm:$0xff] %v336
            %v338 = vld [vmem:[%s240 + $0x180] sm:$0xff]
            %339 = vst [vmem:[%s241 + $0x180] sm:$0xff] %v338
            %v340 = vld [vmem:[%s240 + $0x188] sm:$0xff]
            %341 = vst [vmem:[%s241 + $0x188] sm:$0xff] %v340
            %v342 = vld [vmem:[%s240 + $0x190] sm:$0xff]
            %343 = vst [vmem:[%s241 + $0x190] sm:$0xff] %v342
            %v344 = vld [vmem:[%s240 + $0x198] sm:$0xff]
            %345 = vst [vmem:[%s241 + $0x198] sm:$0xff] %v344
            %v346 = vld [vmem:[%s240 + $0x1a0] sm:$0xff]
            %347 = vst [vmem:[%s241 + $0x1a0] sm:$0xff] %v346
            %v348 = vld [vmem:[%s240 + $0x1a8] sm:$0xff]
            %349 = vst [vmem:[%s241 + $0x1a8] sm:$0xff] %v348
            %v350 = vld [vmem:[%s240 + $0x1b0] sm:$0xff]
            %351 = vst [vmem:[%s241 + $0x1b0] sm:$0xff] %v350
            %v352 = vld [vmem:[%s240 + $0x1b8] sm:$0xff]
            %353 = vst [vmem:[%s241 + $0x1b8] sm:$0xff] %v352
            %v354 = vld [vmem:[%s240 + $0x1c0] sm:$0xff]
            %355 = vst [vmem:[%s241 + $0x1c0] sm:$0xff] %v354
            %v356 = vld [vmem:[%s240 + $0x1c8] sm:$0xff]
            %357 = vst [vmem:[%s241 + $0x1c8] sm:$0xff] %v356
            %v358 = vld [vmem:[%s240 + $0x1d0] sm:$0xff]
            %359 = vst [vmem:[%s241 + $0x1d0] sm:$0xff] %v358
            %v360 = vld [vmem:[%s240 + $0x1d8] sm:$0xff]
            %361 = vst [vmem:[%s241 + $0x1d8] sm:$0xff] %v360
          $region60: #{basic_block_forward.1} parent=54 // loop_footer
            %s239 = sadd.s32 1, %s235
          $region61: #{basic_block_forward.1} parent=54 // loop_footer_branch
            %234 = sbr.rel target = $region57
          $region62: #{basic_block_forward.1} parent=54 // loop_exit
            _
        $region55: #{basic_block_forward.1} parent=39 // pred_fallthru
          _
        %p362 = pneg %p230
        // Predicated region
        $region63: #{basic_block_forward.1} parent=39 // pred_check
          _
        $region64: #{basic_block_forward.1} parent=39 // pred_check_branch
          %364 = sbr.rel (%p230) target = $region66
        $region65: #{basic_block_forward.1} parent=39 // pred_region
          %s365 = sand.u32 480, 7
        $region66: #{basic_block_forward.1} parent=39 // pred_fallthru
          _
      $region40: #{basic_block_forward.1} parent=35 // pred_fallthru
        _
      // Predicated region
      $region41: #{basic_block_forward.1} parent=35 // pred_check
        %p215 = pneg %p211
      $region42: #{basic_block_forward.1} parent=35 // pred_check_branch
        %217 = sbr.rel (%p215) target = $region44
      $region43: #{basic_block_forward.1} parent=35 // pred_region
        %s218 = sshllo.u32 0, 480
        loop: start=0, step=1, limit=1
        $region45: #{basic_block_forward.1} parent=43 // loop_pre_header
          _
        $region46: #{basic_block_forward.1} parent=43 // loop_header
          %s220 = sphi 0, %s224
          %p221 = scmp.ge.s32.totalorder %s220, 1
          %s225 = sphi %s209, %s209
          %s226 = sphi [#allocation2], [#allocation2]
        $region47: #{basic_block_forward.1} parent=43 // loop_header_branch
          %223 = sbr.rel (%p221) target = $region51
        $region48: #{basic_block_forward.1} parent=43 // loop_body
          %v227 = vld [vmem:[%s225] sm:%s218]
          %228 = vst [vmem:[%s226] sm:%s218] %v227
        $region49: #{basic_block_forward.1} parent=43 // loop_footer
          %s224 = sadd.s32 1, %s220
        $region50: #{basic_block_forward.1} parent=43 // loop_footer_branch
          %219 = sbr.rel target = $region46
        $region51: #{basic_block_forward.1} parent=43 // loop_exit
          _
      $region44: #{basic_block_forward.1} parent=35 // pred_fallthru
        _
      // Predicated region
      $region67: #{basic_block_forward.1} parent=35 // pred_check
        _
      $region68: #{basic_block_forward.1} parent=35 // pred_check_branch
        %368 = sbr.rel (0) target = $region70
      $region69: #{basic_block_forward.1} parent=35 // pred_region
        %369 = vsyncadd [#allocation5], 7680
      $region70: #{basic_block_forward.1} parent=35 // pred_fallthru
        _
      %vm370 = vcmask 1040384
      %vm371 = vsmask.f32 256
      %vm372 = vmand %vm370, %vm371
      %v373 = vld [vmem:[#allocation4] sm:$0x1]
      %v374 = vsel %vm372, 0, %v373
      %375 = vst [vmem:[#allocation4] sm:$0x1] %v374
      %v376 = vld [vmem:[#allocation4 + $0xc] sm:$0x1]
      %v377 = vsel %vm372, 0, %v376
      %378 = vst [vmem:[#allocation4 + $0xc] sm:$0x1] %v377
      %v379 = vld [vmem:[#allocation4 + $0x18] sm:$0x1]
      %v380 = vsel %vm372, 0, %v379
      %381 = vst [vmem:[#allocation4 + $0x18] sm:$0x1] %v380
      %v382 = vld [vmem:[#allocation4 + $0x24] sm:$0x1]
      %v383 = vsel %vm372, 0, %v382
      %384 = vst [vmem:[#allocation4 + $0x24] sm:$0x1] %v383
      %v385 = vld [vmem:[#allocation4 + $0x30] sm:$0x1]
      %v386 = vsel %vm372, 0, %v385
      %387 = vst [vmem:[#allocation4 + $0x30] sm:$0x1] %v386
      %v388 = vld [vmem:[#allocation4 + $0x3c] sm:$0x1]
      %v389 = vsel %vm372, 0, %v388
      %390 = vst [vmem:[#allocation4 + $0x3c] sm:$0x1] %v389
      %v391 = vld [vmem:[#allocation4 + $0x48] sm:$0x1]
      %v392 = vsel %vm372, 0, %v391
      %393 = vst [vmem:[#allocation4 + $0x48] sm:$0x1] %v392
      %v394 = vld [vmem:[#allocation4 + $0x54] sm:$0x1]
      %v395 = vsel %vm372, 0, %v394
      %396 = vst [vmem:[#allocation4 + $0x54] sm:$0x1] %v395
      %v397 = vld [vmem:[#allocation4 + $0x60] sm:$0x1]
      %v398 = vsel %vm372, 0, %v397
      %399 = vst [vmem:[#allocation4 + $0x60] sm:$0x1] %v398
      %v400 = vld [vmem:[#allocation4 + $0x6c] sm:$0x1]
      %v401 = vsel %vm372, 0, %v400
      %402 = vst [vmem:[#allocation4 + $0x6c] sm:$0x1] %v401
      %v403 = vld [vmem:[#allocation4 + $0x78] sm:$0x1]
      %v404 = vsel %vm372, 0, %v403
      %405 = vst [vmem:[#allocation4 + $0x78] sm:$0x1] %v404
      %v406 = vld [vmem:[#allocation4 + $0x84] sm:$0x1]
      %v407 = vsel %vm372, 0, %v406
      %408 = vst [vmem:[#allocation4 + $0x84] sm:$0x1] %v407
      %v409 = vld [vmem:[#allocation4 + $0x90] sm:$0x1]
      %v410 = vsel %vm372, 0, %v409
      %411 = vst [vmem:[#allocation4 + $0x90] sm:$0x1] %v410
      %v412 = vld [vmem:[#allocation4 + $0x9c] sm:$0x1]
      %v413 = vsel %vm372, 0, %v412
      %414 = vst [vmem:[#allocation4 + $0x9c] sm:$0x1] %v413
      %v415 = vld [vmem:[#allocation4 + $0xa8] sm:$0x1]
      %v416 = vsel %vm372, 0, %v415
      %417 = vst [vmem:[#allocation4 + $0xa8] sm:$0x1] %v416
      %v418 = vld [vmem:[#allocation4 + $0xb4] sm:$0x1]
      %v419 = vsel %vm372, 0, %v418
      %420 = vst [vmem:[#allocation4 + $0xb4] sm:$0x1] %v419
      %v421 = vld [vmem:[#allocation4 + $0xc0] sm:$0x1]
      %v422 = vsel %vm372, 0, %v421
      %423 = vst [vmem:[#allocation4 + $0xc0] sm:$0x1] %v422
      %v424 = vld [vmem:[#allocation4 + $0xcc] sm:$0x1]
      %v425 = vsel %vm372, 0, %v424
      %426 = vst [vmem:[#allocation4 + $0xcc] sm:$0x1] %v425
      %vm427 = vcmask 1043456
      %vm428 = vsmask.f32 7938
      %vm429 = vmand %vm427, %vm428
      %v430 = vld [vmem:[#allocation4 + $0x8] sm:$0xf]
      %v431 = vsel %vm429, 0, %v430
      %432 = vst [vmem:[#allocation4 + $0x8] sm:$0xf] %v431
      %v433 = vld [vmem:[#allocation4 + $0x14] sm:$0xf]
      %v434 = vsel %vm429, 0, %v433
      %435 = vst [vmem:[#allocation4 + $0x14] sm:$0xf] %v434
      %v436 = vld [vmem:[#allocation4 + $0x20] sm:$0xf]
      %v437 = vsel %vm429, 0, %v436
      %438 = vst [vmem:[#allocation4 + $0x20] sm:$0xf] %v437
      %v439 = vld [vmem:[#allocation4 + $0x2c] sm:$0xf]
      %v440 = vsel %vm429, 0, %v439
      %441 = vst [vmem:[#allocation4 + $0x2c] sm:$0xf] %v440
      %v442 = vld [vmem:[#allocation4 + $0x38] sm:$0xf]
      %v443 = vsel %vm429, 0, %v442
      %444 = vst [vmem:[#allocation4 + $0x38] sm:$0xf] %v443
      %v445 = vld [vmem:[#allocation4 + $0x44] sm:$0xf]
      %v446 = vsel %vm429, 0, %v445
      %447 = vst [vmem:[#allocation4 + $0x44] sm:$0xf] %v446
      %v448 = vld [vmem:[#allocation4 + $0x50] sm:$0xf]
      %v449 = vsel %vm429, 0, %v448
      %450 = vst [vmem:[#allocation4 + $0x50] sm:$0xf] %v449
      %v451 = vld [vmem:[#allocation4 + $0x5c] sm:$0xf]
      %v452 = vsel %vm429, 0, %v451
      %453 = vst [vmem:[#allocation4 + $0x5c] sm:$0xf] %v452
      %v454 = vld [vmem:[#allocation4 + $0x68] sm:$0xf]
      %v455 = vsel %vm429, 0, %v454
      %456 = vst [vmem:[#allocation4 + $0x68] sm:$0xf] %v455
      %v457 = vld [vmem:[#allocation4 + $0x74] sm:$0xf]
      %v458 = vsel %vm429, 0, %v457
      %459 = vst [vmem:[#allocation4 + $0x74] sm:$0xf] %v458
      %v460 = vld [vmem:[#allocation4 + $0x80] sm:$0xf]
      %v461 = vsel %vm429, 0, %v460
      %462 = vst [vmem:[#allocation4 + $0x80] sm:$0xf] %v461
      %v463 = vld [vmem:[#allocation4 + $0x8c] sm:$0xf]
      %v464 = vsel %vm429, 0, %v463
      %465 = vst [vmem:[#allocation4 + $0x8c] sm:$0xf] %v464
      %v466 = vld [vmem:[#allocation4 + $0x98] sm:$0xf]
      %v467 = vsel %vm429, 0, %v466
      %468 = vst [vmem:[#allocation4 + $0x98] sm:$0xf] %v467
      %v469 = vld [vmem:[#allocation4 + $0xa4] sm:$0xf]
      %v470 = vsel %vm429, 0, %v469
      %471 = vst [vmem:[#allocation4 + $0xa4] sm:$0xf] %v470
      %v472 = vld [vmem:[#allocation4 + $0xb0] sm:$0xf]
      %v473 = vsel %vm429, 0, %v472
      %474 = vst [vmem:[#allocation4 + $0xb0] sm:$0xf] %v473
      %v475 = vld [vmem:[#allocation4 + $0xbc] sm:$0xf]
      %v476 = vsel %vm429, 0, %v475
      %477 = vst [vmem:[#allocation4 + $0xbc] sm:$0xf] %v476
      %v478 = vld [vmem:[#allocation4 + $0xc8] sm:$0xf]
      %v479 = vsel %vm429, 0, %v478
      %480 = vst [vmem:[#allocation4 + $0xc8] sm:$0xf] %v479
      %v481 = vld [vmem:[#allocation4 + $0xd4] sm:$0xf]
      %v482 = vsel %vm429, 0, %v481
      %483 = vst [vmem:[#allocation4 + $0xd4] sm:$0xf] %v482
      %s484 = smul.u32 20, 24
      %s485 = smul.u32 %s484, 1
      %s486 = sshll.u32 %s485, 4
      %487 = dma.done [#allocation5], %s486
      %v488 = vld [vmem:[#allocation2] sm:$0xff]
      %v489 = vld [vmem:[#allocation2 + $0x8] sm:$0xff]
      %v490 = vld [vmem:[#allocation2 + $0x10] sm:$0xff]
      %v491 = vld [vmem:[#allocation2 + $0x18] sm:$0xff]
      %v492 = vld [vmem:[#allocation2 + $0x20] sm:$0xff]
      %v493 = vld [vmem:[#allocation2 + $0x28] sm:$0xff]
      %v494 = vld [vmem:[#allocation2 + $0x30] sm:$0xff]
      %v495 = vld [vmem:[#allocation2 + $0x38] sm:$0xff]
      %v496 = vld [vmem:[#allocation2 + $0x40] sm:$0xff]
      %v497 = vld [vmem:[#allocation2 + $0x48] sm:$0xff]
      %v498 = vld [vmem:[#allocation2 + $0x50] sm:$0xff]
      %v499 = vld [vmem:[#allocation2 + $0x58] sm:$0xff]
      %v500 = vld [vmem:[#allocation2 + $0x60] sm:$0xff]
      %v501 = vld [vmem:[#allocation2 + $0x68] sm:$0xff]
      %v502 = vld [vmem:[#allocation2 + $0x70] sm:$0xff]
      %v503 = vld [vmem:[#allocation2 + $0x78] sm:$0xff]
      %v504 = vld [vmem:[#allocation2 + $0x80] sm:$0xff]
      %v505 = vld [vmem:[#allocation2 + $0x88] sm:$0xff]
      %v506 = vld [vmem:[#allocation2 + $0x90] sm:$0xff]
      %v507 = vld [vmem:[#allocation2 + $0x98] sm:$0xff]
      %v508 = vld [vmem:[#allocation2 + $0xa0] sm:$0xff]
      %v509 = vld [vmem:[#allocation2 + $0xa8] sm:$0xff]
      %v510 = vld [vmem:[#allocation2 + $0xb0] sm:$0xff]
      %v511 = vld [vmem:[#allocation2 + $0xb8] sm:$0xff]
      %v512 = vld [vmem:[#allocation2 + $0xc0] sm:$0xff]
      %v513 = vld [vmem:[#allocation2 + $0xc8] sm:$0xff]
      %v514 = vld [vmem:[#allocation2 + $0xd0] sm:$0xff]
      %v515 = vld [vmem:[#allocation2 + $0xd8] sm:$0xff]
      %v516 = vld [vmem:[#allocation2 + $0xe0] sm:$0xff]
      %v517 = vld [vmem:[#allocation2 + $0xe8] sm:$0xff]
      %v518 = vld [vmem:[#allocation2 + $0xf0] sm:$0xff]
      %v519 = vld [vmem:[#allocation2 + $0xf8] sm:$0xff]
      %v520 = vld [vmem:[#allocation2 + $0x100] sm:$0xff]
      %v521 = vld [vmem:[#allocation2 + $0x108] sm:$0xff]
      %v522 = vld [vmem:[#allocation2 + $0x110] sm:$0xff]
      %v523 = vld [vmem:[#allocation2 + $0x118] sm:$0xff]
      %v524 = vld [vmem:[#allocation2 + $0x120] sm:$0xff]
      %v525 = vld [vmem:[#allocation2 + $0x128] sm:$0xff]
      %v526 = vld [vmem:[#allocation2 + $0x130] sm:$0xff]
      %v527 = vld [vmem:[#allocation2 + $0x138] sm:$0xff]
      %v528 = vld [vmem:[#allocation2 + $0x140] sm:$0xff]
      %v529 = vld [vmem:[#allocation2 + $0x148] sm:$0xff]
      %v530 = vld [vmem:[#allocation2 + $0x150] sm:$0xff]
      %v531 = vld [vmem:[#allocation2 + $0x158] sm:$0xff]
      %v532 = vld [vmem:[#allocation2 + $0x160] sm:$0xff]
      %v533 = vld [vmem:[#allocation2 + $0x168] sm:$0xff]
      %v534 = vld [vmem:[#allocation2 + $0x170] sm:$0xff]
      %v535 = vld [vmem:[#allocation2 + $0x178] sm:$0xff]
      %v536 = vld [vmem:[#allocation2 + $0x180] sm:$0xff]
      %v537 = vld [vmem:[#allocation2 + $0x188] sm:$0xff]
      %v538 = vld [vmem:[#allocation2 + $0x190] sm:$0xff]
      %v539 = vld [vmem:[#allocation2 + $0x198] sm:$0xff]
      %v540 = vld [vmem:[#allocation2 + $0x1a0] sm:$0xff]
      %v541 = vld [vmem:[#allocation2 + $0x1a8] sm:$0xff]
      %v542 = vld [vmem:[#allocation2 + $0x1b0] sm:$0xff]
      %v543 = vld [vmem:[#allocation2 + $0x1b8] sm:$0xff]
      %v544 = vld [vmem:[#allocation2 + $0x1c0] sm:$0xff]
      %v545 = vld [vmem:[#allocation2 + $0x1c8] sm:$0xff]
      %v546 = vld [vmem:[#allocation2 + $0x1d0] sm:$0xff]
      %v547 = vld [vmem:[#allocation2 + $0x1d8] sm:$0xff]
      %v548 = vpack.c.bf16 %v489, %v488
      %v549 = vpack.c.bf16 %v490, %v490
      %v550 = vpack.c.bf16 %v492, %v491
      %v551 = vpack.c.bf16 %v493, %v493
      %v552 = vpack.c.bf16 %v495, %v494
      %v553 = vpack.c.bf16 %v496, %v496
      %v554 = vpack.c.bf16 %v498, %v497
      %v555 = vpack.c.bf16 %v499, %v499
      %v556 = vpack.c.bf16 %v501, %v500
      %v557 = vpack.c.bf16 %v502, %v502
      %v558 = vpack.c.bf16 %v504, %v503
      %v559 = vpack.c.bf16 %v505, %v505
      %v560 = vpack.c.bf16 %v507, %v506
      %v561 = vpack.c.bf16 %v508, %v508
      %v562 = vpack.c.bf16 %v510, %v509
      %v563 = vpack.c.bf16 %v511, %v511
      %v564 = vpack.c.bf16 %v513, %v512
      %v565 = vpack.c.bf16 %v514, %v514
      %v566 = vpack.c.bf16 %v516, %v515
      %v567 = vpack.c.bf16 %v517, %v517
      %v568 = vpack.c.bf16 %v519, %v518
      %v569 = vpack.c.bf16 %v520, %v520
      %v570 = vpack.c.bf16 %v522, %v521
      %v571 = vpack.c.bf16 %v523, %v523
      %v572 = vpack.c.bf16 %v525, %v524
      %v573 = vpack.c.bf16 %v526, %v526
      %v574 = vpack.c.bf16 %v528, %v527
      %v575 = vpack.c.bf16 %v529, %v529
      %v576 = vpack.c.bf16 %v531, %v530
      %v577 = vpack.c.bf16 %v532, %v532
      %v578 = vpack.c.bf16 %v534, %v533
      %v579 = vpack.c.bf16 %v535, %v535
      %v580 = vpack.c.bf16 %v537, %v536
      %v581 = vpack.c.bf16 %v538, %v538
      %v582 = vpack.c.bf16 %v540, %v539
      %v583 = vpack.c.bf16 %v541, %v541
      %v584 = vpack.c.bf16 %v543, %v542
      %v585 = vpack.c.bf16 %v544, %v544
      %v586 = vpack.c.bf16 %v546, %v545
      %v587 = vpack.c.bf16 %v547, %v547
      %v628 = vunpack.c.l.b16 %v548
      %v629 = vunpack.c.h.b16 %v548
      %v630 = vunpack.c.l.b16 %v549
      %v631 = vunpack.c.l.b16 %v550
      %v632 = vunpack.c.h.b16 %v550
      %v633 = vunpack.c.l.b16 %v551
      %v634 = vunpack.c.l.b16 %v552
      %v635 = vunpack.c.h.b16 %v552
      %v636 = vunpack.c.l.b16 %v553
      %v637 = vunpack.c.l.b16 %v554
      %v638 = vunpack.c.h.b16 %v554
      %v639 = vunpack.c.l.b16 %v555
      %v640 = vunpack.c.l.b16 %v556
      %v641 = vunpack.c.h.b16 %v556
      %v642 = vunpack.c.l.b16 %v557
      %v643 = vunpack.c.l.b16 %v558
      %v644 = vunpack.c.h.b16 %v558
      %v645 = vunpack.c.l.b16 %v559
      %v646 = vunpack.c.l.b16 %v560
      %v647 = vunpack.c.h.b16 %v560
      %v648 = vunpack.c.l.b16 %v561
      %v649 = vunpack.c.l.b16 %v562
      %v650 = vunpack.c.h.b16 %v562
      %v651 = vunpack.c.l.b16 %v563
      %v652 = vunpack.c.l.b16 %v564
      %v653 = vunpack.c.h.b16 %v564
      %v654 = vunpack.c.l.b16 %v565
      %v655 = vunpack.c.l.b16 %v566
      %v656 = vunpack.c.h.b16 %v566
      %v657 = vunpack.c.l.b16 %v567
      %v658 = vunpack.c.l.b16 %v568
      %v659 = vunpack.c.h.b16 %v568
      %v660 = vunpack.c.l.b16 %v569
      %v661 = vunpack.c.l.b16 %v570
      %v662 = vunpack.c.h.b16 %v570
      %v663 = vunpack.c.l.b16 %v571
      %v664 = vunpack.c.l.b16 %v572
      %v665 = vunpack.c.h.b16 %v572
      %v666 = vunpack.c.l.b16 %v573
      %v667 = vunpack.c.l.b16 %v574
      %v668 = vunpack.c.h.b16 %v574
      %v669 = vunpack.c.l.b16 %v575
      %v670 = vunpack.c.l.b16 %v576
      %v671 = vunpack.c.h.b16 %v576
      %v672 = vunpack.c.l.b16 %v577
      %v673 = vunpack.c.l.b16 %v578
      %v674 = vunpack.c.h.b16 %v578
      %v675 = vunpack.c.l.b16 %v579
      %v676 = vunpack.c.l.b16 %v580
      %v677 = vunpack.c.h.b16 %v580
      %v678 = vunpack.c.l.b16 %v581
      %v679 = vunpack.c.l.b16 %v582
      %v680 = vunpack.c.h.b16 %v582
      %v681 = vunpack.c.l.b16 %v583
      %v682 = vunpack.c.l.b16 %v584
      %v683 = vunpack.c.h.b16 %v584
      %v684 = vunpack.c.l.b16 %v585
      %v685 = vunpack.c.l.b16 %v586
      %v686 = vunpack.c.h.b16 %v586
      %v687 = vunpack.c.l.b16 %v587
      %v688 = vpack.c.b16 %v628, %v628
      %v689 = vpack.c.b16 %v629, %v629
      %v690 = vpack.c.b16 %v630, %v630
      %v691 = vpack.c.b16 %v631, %v631
      %v692 = vpack.c.b16 %v632, %v632
      %v693 = vpack.c.b16 %v633, %v633
      %v694 = vpack.c.b16 %v634, %v634
      %v695 = vpack.c.b16 %v635, %v635
      %v696 = vpack.c.b16 %v636, %v636
      %v697 = vpack.c.b16 %v637, %v637
      %v698 = vpack.c.b16 %v638, %v638
      %v699 = vpack.c.b16 %v639, %v639
      %v700 = vpack.c.b16 %v640, %v640
      %v701 = vpack.c.b16 %v641, %v641
      %v702 = vpack.c.b16 %v642, %v642
      %v703 = vpack.c.b16 %v643, %v643
      %v704 = vpack.c.b16 %v644, %v644
      %v705 = vpack.c.b16 %v645, %v645
      %v706 = vpack.c.b16 %v646, %v646
      %v707 = vpack.c.b16 %v647, %v647
      %v708 = vpack.c.b16 %v648, %v648
      %v709 = vpack.c.b16 %v649, %v649
      %v710 = vpack.c.b16 %v650, %v650
      %v711 = vpack.c.b16 %v651, %v651
      %v712 = vpack.c.b16 %v652, %v652
      %v713 = vpack.c.b16 %v653, %v653
      %v714 = vpack.c.b16 %v654, %v654
      %v715 = vpack.c.b16 %v655, %v655
      %v716 = vpack.c.b16 %v656, %v656
      %v717 = vpack.c.b16 %v657, %v657
      %v718 = vpack.c.b16 %v658, %v658
      %v719 = vpack.c.b16 %v659, %v659
      %v720 = vpack.c.b16 %v660, %v660
      %v721 = vpack.c.b16 %v661, %v661
      %v722 = vpack.c.b16 %v662, %v662
      %v723 = vpack.c.b16 %v663, %v663
      %v724 = vpack.c.b16 %v664, %v664
      %v725 = vpack.c.b16 %v665, %v665
      %v726 = vpack.c.b16 %v666, %v666
      %v727 = vpack.c.b16 %v667, %v667
      %v728 = vpack.c.b16 %v668, %v668
      %v729 = vpack.c.b16 %v669, %v669
      %v730 = vpack.c.b16 %v670, %v670
      %v731 = vpack.c.b16 %v671, %v671
      %v732 = vpack.c.b16 %v672, %v672
      %v733 = vpack.c.b16 %v673, %v673
      %v734 = vpack.c.b16 %v674, %v674
      %v735 = vpack.c.b16 %v675, %v675
      %v736 = vpack.c.b16 %v676, %v676
      %v737 = vpack.c.b16 %v677, %v677
      %v738 = vpack.c.b16 %v678, %v678
      %v739 = vpack.c.b16 %v679, %v679
      %v740 = vpack.c.b16 %v680, %v680
      %v741 = vpack.c.b16 %v681, %v681
      %v742 = vpack.c.b16 %v682, %v682
      %v743 = vpack.c.b16 %v683, %v683
      %v744 = vpack.c.b16 %v684, %v684
      %v745 = vpack.c.b16 %v685, %v685
      %v746 = vpack.c.b16 %v686, %v686
      %v747 = vpack.c.b16 %v687, %v687
      %808 = vst [vmem:[#allocation3] sm:$0xf] %v688
      %809 = vst [vmem:[#allocation3 + $0x4] sm:$0xf] %v689
      %810 = vst [vmem:[#allocation3 + $0x8] sm:$0xf] %v690
      %811 = vst [vmem:[#allocation3 + $0xc] sm:$0xf] %v691
      %812 = vst [vmem:[#allocation3 + $0x10] sm:$0xf] %v692
      %813 = vst [vmem:[#allocation3 + $0x14] sm:$0xf] %v693
      %814 = vst [vmem:[#allocation3 + $0x18] sm:$0xf] %v694
      %815 = vst [vmem:[#allocation3 + $0x1c] sm:$0xf] %v695
      %816 = vst [vmem:[#allocation3 + $0x20] sm:$0xf] %v696
      %817 = vst [vmem:[#allocation3 + $0x24] sm:$0xf] %v697
      %818 = vst [vmem:[#allocation3 + $0x28] sm:$0xf] %v698
      %819 = vst [vmem:[#allocation3 + $0x2c] sm:$0xf] %v699
      %820 = vst [vmem:[#allocation3 + $0x30] sm:$0xf] %v700
      %821 = vst [vmem:[#allocation3 + $0x34] sm:$0xf] %v701
      %822 = vst [vmem:[#allocation3 + $0x38] sm:$0xf] %v702
      %823 = vst [vmem:[#allocation3 + $0x3c] sm:$0xf] %v703
      %824 = vst [vmem:[#allocation3 + $0x40] sm:$0xf] %v704
      %825 = vst [vmem:[#allocation3 + $0x44] sm:$0xf] %v705
      %826 = vst [vmem:[#allocation3 + $0x48] sm:$0xf] %v706
      %827 = vst [vmem:[#allocation3 + $0x4c] sm:$0xf] %v707
      %828 = vst [vmem:[#allocation3 + $0x50] sm:$0xf] %v708
      %829 = vst [vmem:[#allocation3 + $0x54] sm:$0xf] %v709
      %830 = vst [vmem:[#allocation3 + $0x58] sm:$0xf] %v710
      %831 = vst [vmem:[#allocation3 + $0x5c] sm:$0xf] %v711
      %832 = vst [vmem:[#allocation3 + $0x60] sm:$0xf] %v712
      %833 = vst [vmem:[#allocation3 + $0x64] sm:$0xf] %v713
      %834 = vst [vmem:[#allocation3 + $0x68] sm:$0xf] %v714
      %835 = vst [vmem:[#allocation3 + $0x6c] sm:$0xf] %v715
      %836 = vst [vmem:[#allocation3 + $0x70] sm:$0xf] %v716
      %837 = vst [vmem:[#allocation3 + $0x74] sm:$0xf] %v717
      %838 = vst [vmem:[#allocation3 + $0x78] sm:$0xf] %v718
      %839 = vst [vmem:[#allocation3 + $0x7c] sm:$0xf] %v719
      %840 = vst [vmem:[#allocation3 + $0x80] sm:$0xf] %v720
      %841 = vst [vmem:[#allocation3 + $0x84] sm:$0xf] %v721
      %842 = vst [vmem:[#allocation3 + $0x88] sm:$0xf] %v722
      %843 = vst [vmem:[#allocation3 + $0x8c] sm:$0xf] %v723
      %844 = vst [vmem:[#allocation3 + $0x90] sm:$0xf] %v724
      %845 = vst [vmem:[#allocation3 + $0x94] sm:$0xf] %v725
      %846 = vst [vmem:[#allocation3 + $0x98] sm:$0xf] %v726
      %847 = vst [vmem:[#allocation3 + $0x9c] sm:$0xf] %v727
      %848 = vst [vmem:[#allocation3 + $0xa0] sm:$0xf] %v728
      %849 = vst [vmem:[#allocation3 + $0xa4] sm:$0xf] %v729
      %850 = vst [vmem:[#allocation3 + $0xa8] sm:$0xf] %v730
      %851 = vst [vmem:[#allocation3 + $0xac] sm:$0xf] %v731
      %852 = vst [vmem:[#allocation3 + $0xb0] sm:$0xf] %v732
      %853 = vst [vmem:[#allocation3 + $0xb4] sm:$0xf] %v733
      %854 = vst [vmem:[#allocation3 + $0xb8] sm:$0xf] %v734
      %855 = vst [vmem:[#allocation3 + $0xbc] sm:$0xf] %v735
      %856 = vst [vmem:[#allocation3 + $0xc0] sm:$0xf] %v736
      %857 = vst [vmem:[#allocation3 + $0xc4] sm:$0xf] %v737
      %858 = vst [vmem:[#allocation3 + $0xc8] sm:$0xf] %v738
      %859 = vst [vmem:[#allocation3 + $0xcc] sm:$0xf] %v739
      %860 = vst [vmem:[#allocation3 + $0xd0] sm:$0xf] %v740
      %861 = vst [vmem:[#allocation3 + $0xd4] sm:$0xf] %v741
      %862 = vst [vmem:[#allocation3 + $0xd8] sm:$0xf] %v742
      %863 = vst [vmem:[#allocation3 + $0xdc] sm:$0xf] %v743
      %864 = vst [vmem:[#allocation3 + $0xe0] sm:$0xf] %v744
      %865 = vst [vmem:[#allocation3 + $0xe4] sm:$0xf] %v745
      %866 = vst [vmem:[#allocation3 + $0xe8] sm:$0xf] %v746
      %867 = vst [vmem:[#allocation3 + $0xec] sm:$0xf] %v747
      %v868 = vld [vmem:[#allocation3] sm:$0xf]
      %v869 = vld [vmem:[#allocation3 + $0x4] sm:$0xf]
      %v870 = vld [vmem:[#allocation3 + $0xc] sm:$0xf]
      %v871 = vld [vmem:[#allocation3 + $0x10] sm:$0xf]
      %v872 = vld [vmem:[#allocation3 + $0x18] sm:$0xf]
      %v873 = vld [vmem:[#allocation3 + $0x1c] sm:$0xf]
      %v874 = vld [vmem:[#allocation3 + $0x24] sm:$0xf]
      %v875 = vld [vmem:[#allocation3 + $0x28] sm:$0xf]
      %v876 = vld [vmem:[#allocation3 + $0x30] sm:$0xf]
      %v877 = vld [vmem:[#allocation3 + $0x34] sm:$0xf]
      %v878 = vld [vmem:[#allocation3 + $0x3c] sm:$0xf]
      %v879 = vld [vmem:[#allocation3 + $0x40] sm:$0xf]
      %v880 = vld [vmem:[#allocation3 + $0x48] sm:$0xf]
      %v881 = vld [vmem:[#allocation3 + $0x4c] sm:$0xf]
      %v882 = vld [vmem:[#allocation3 + $0x54] sm:$0xf]
      %v883 = vld [vmem:[#allocation3 + $0x58] sm:$0xf]
      %v884 = vld [vmem:[#allocation3 + $0x60] sm:$0xf]
      %v885 = vld [vmem:[#allocation3 + $0x64] sm:$0xf]
      %v886 = vld [vmem:[#allocation3 + $0x6c] sm:$0xf]
      %v887 = vld [vmem:[#allocation3 + $0x70] sm:$0xf]
      %v888 = vld [vmem:[#allocation3 + $0x78] sm:$0xf]
      %v889 = vld [vmem:[#allocation3 + $0x7c] sm:$0xf]
      %v890 = vld [vmem:[#allocation3 + $0x84] sm:$0xf]
      %v891 = vld [vmem:[#allocation3 + $0x88] sm:$0xf]
      %v892 = vld [vmem:[#allocation3 + $0x90] sm:$0xf]
      %v893 = vld [vmem:[#allocation3 + $0x94] sm:$0xf]
      %v894 = vld [vmem:[#allocation3 + $0x9c] sm:$0xf]
      %v895 = vld [vmem:[#allocation3 + $0xa0] sm:$0xf]
      %v896 = vld [vmem:[#allocation3 + $0xa8] sm:$0xf]
      %v897 = vld [vmem:[#allocation3 + $0xac] sm:$0xf]
      %v898 = vld [vmem:[#allocation3 + $0xb4] sm:$0xf]
      %v899 = vld [vmem:[#allocation3 + $0xb8] sm:$0xf]
      %v900 = vld [vmem:[#allocation3 + $0xc0] sm:$0xf]
      %v901 = vld [vmem:[#allocation3 + $0xc4] sm:$0xf]
      %v902 = vld [vmem:[#allocation3 + $0xcc] sm:$0xf]
      %v903 = vld [vmem:[#allocation3 + $0xd0] sm:$0xf]
      %v904 = vld [vmem:[#allocation3 + $0x8] sm:$0x1]
      %v905 = vld [vmem:[#allocation3 + $0x14] sm:$0x1]
      %v906 = vld [vmem:[#allocation3 + $0x20] sm:$0x1]
      %v907 = vld [vmem:[#allocation3 + $0x2c] sm:$0x1]
      %v908 = vld [vmem:[#allocation3 + $0x38] sm:$0x1]
      %v909 = vld [vmem:[#allocation3 + $0x44] sm:$0x1]
      %v910 = vld [vmem:[#allocation3 + $0x50] sm:$0x1]
      %v911 = vld [vmem:[#allocation3 + $0x5c] sm:$0x1]
      %v912 = vld [vmem:[#allocation3 + $0x68] sm:$0x1]
      %v913 = vld [vmem:[#allocation3 + $0x74] sm:$0x1]
      %v914 = vld [vmem:[#allocation3 + $0x80] sm:$0x1]
      %v915 = vld [vmem:[#allocation3 + $0x8c] sm:$0x1]
      %v916 = vld [vmem:[#allocation3 + $0x98] sm:$0x1]
      %v917 = vld [vmem:[#allocation3 + $0xa4] sm:$0x1]
      %v918 = vld [vmem:[#allocation3 + $0xb0] sm:$0x1]
      %v919 = vld [vmem:[#allocation3 + $0xbc] sm:$0x1]
      %v920 = vld [vmem:[#allocation3 + $0xc8] sm:$0x1]
      %v921 = vld [vmem:[#allocation3 + $0xd4] sm:$0x1]
      %v922 = vld [vmem:[#allocation3] sm:$0xe]
      %v923 = vld [vmem:[#allocation3 + $0xc] sm:$0xe]
      %v924 = vld [vmem:[#allocation3 + $0x18] sm:$0xe]
      %v925 = vld [vmem:[#allocation3 + $0x24] sm:$0xe]
      %v926 = vld [vmem:[#allocation3 + $0x30] sm:$0xe]
      %v927 = vld [vmem:[#allocation3 + $0x3c] sm:$0xe]
      %v928 = vld [vmem:[#allocation3 + $0x48] sm:$0xe]
      %v929 = vld [vmem:[#allocation3 + $0x54] sm:$0xe]
      %v930 = vld [vmem:[#allocation3 + $0x60] sm:$0xe]
      %v931 = vld [vmem:[#allocation3 + $0x6c] sm:$0xe]
      %v932 = vld [vmem:[#allocation3 + $0x78] sm:$0xe]
      %v933 = vld [vmem:[#allocation3 + $0x84] sm:$0xe]
      %v934 = vld [vmem:[#allocation3 + $0x90] sm:$0xe]
      %v935 = vld [vmem:[#allocation3 + $0x9c] sm:$0xe]
      %v936 = vld [vmem:[#allocation3 + $0xa8] sm:$0xe]
      %v937 = vld [vmem:[#allocation3 + $0xb4] sm:$0xe]
      %v938 = vld [vmem:[#allocation3 + $0xc0] sm:$0xe]
      %v939 = vld [vmem:[#allocation3 + $0xcc] sm:$0xe]
      %v976 = vunpack.c.l.b16 %v868
      %v977 = vunpack.c.l.b16 %v869
      %v978 = vunpack.c.l.b16 %v870
      %v979 = vunpack.c.l.b16 %v871
      %v980 = vunpack.c.l.b16 %v872
      %v981 = vunpack.c.l.b16 %v873
      %v982 = vunpack.c.l.b16 %v874
      %v983 = vunpack.c.l.b16 %v875
      %v984 = vunpack.c.l.b16 %v876
      %v985 = vunpack.c.l.b16 %v877
      %v986 = vunpack.c.l.b16 %v878
      %v987 = vunpack.c.l.b16 %v879
      %v988 = vunpack.c.l.b16 %v880
      %v989 = vunpack.c.l.b16 %v881
      %v990 = vunpack.c.l.b16 %v882
      %v991 = vunpack.c.l.b16 %v883
      %v992 = vunpack.c.l.b16 %v884
      %v993 = vunpack.c.l.b16 %v885
      %v994 = vunpack.c.l.b16 %v886
      %v995 = vunpack.c.l.b16 %v887
      %v996 = vunpack.c.l.b16 %v888
      %v997 = vunpack.c.l.b16 %v889
      %v998 = vunpack.c.l.b16 %v890
      %v999 = vunpack.c.l.b16 %v891
      %v1000 = vunpack.c.l.b16 %v892
      %v1001 = vunpack.c.l.b16 %v893
      %v1002 = vunpack.c.l.b16 %v894
      %v1003 = vunpack.c.l.b16 %v895
      %v1004 = vunpack.c.l.b16 %v896
      %v1005 = vunpack.c.l.b16 %v897
      %v1006 = vunpack.c.l.b16 %v898
      %v1007 = vunpack.c.l.b16 %v899
      %v1008 = vunpack.c.l.b16 %v900
      %v1009 = vunpack.c.l.b16 %v901
      %v1010 = vunpack.c.l.b16 %v902
      %v1011 = vunpack.c.l.b16 %v903
      %v1012 = vpack.c.b16 %v977, %v976
      %v1013 = vpack.c.b16 %v979, %v978
      %v1014 = vpack.c.b16 %v981, %v980
      %v1015 = vpack.c.b16 %v983, %v982
      %v1016 = vpack.c.b16 %v985, %v984
      %v1017 = vpack.c.b16 %v987, %v986
      %v1018 = vpack.c.b16 %v989, %v988
      %v1019 = vpack.c.b16 %v991, %v990
      %v1020 = vpack.c.b16 %v993, %v992
      %v1021 = vpack.c.b16 %v995, %v994
      %v1022 = vpack.c.b16 %v997, %v996
      %v1023 = vpack.c.b16 %v999, %v998
      %v1024 = vpack.c.b16 %v1001, %v1000
      %v1025 = vpack.c.b16 %v1003, %v1002
      %v1026 = vpack.c.b16 %v1005, %v1004
      %v1027 = vpack.c.b16 %v1007, %v1006
      %v1028 = vpack.c.b16 %v1009, %v1008
      %v1029 = vpack.c.b16 %v1011, %v1010
      %v1066 = vunpack.c.l.b16 %v904
      %v1067 = vunpack.c.l.b16 %v905
      %v1068 = vunpack.c.l.b16 %v906
      %v1069 = vunpack.c.l.b16 %v907
      %v1070 = vunpack.c.l.b16 %v908
      %v1071 = vunpack.c.l.b16 %v909
      %v1072 = vunpack.c.l.b16 %v910
      %v1073 = vunpack.c.l.b16 %v911
      %v1074 = vunpack.c.l.b16 %v912
      %v1075 = vunpack.c.l.b16 %v913
      %v1076 = vunpack.c.l.b16 %v914
      %v1077 = vunpack.c.l.b16 %v915
      %v1078 = vunpack.c.l.b16 %v916
      %v1079 = vunpack.c.l.b16 %v917
      %v1080 = vunpack.c.l.b16 %v918
      %v1081 = vunpack.c.l.b16 %v919
      %v1082 = vunpack.c.l.b16 %v920
      %v1083 = vunpack.c.l.b16 %v921
      %v1084 = vpack.c.b16 %v1066, %v1066
      %v1085 = vpack.c.b16 %v1067, %v1067
      %v1086 = vpack.c.b16 %v1068, %v1068
      %v1087 = vpack.c.b16 %v1069, %v1069
      %v1088 = vpack.c.b16 %v1070, %v1070
      %v1089 = vpack.c.b16 %v1071, %v1071
      %v1090 = vpack.c.b16 %v1072, %v1072
      %v1091 = vpack.c.b16 %v1073, %v1073
      %v1092 = vpack.c.b16 %v1074, %v1074
      %v1093 = vpack.c.b16 %v1075, %v1075
      %v1094 = vpack.c.b16 %v1076, %v1076
      %v1095 = vpack.c.b16 %v1077, %v1077
      %v1096 = vpack.c.b16 %v1078, %v1078
      %v1097 = vpack.c.b16 %v1079, %v1079
      %v1098 = vpack.c.b16 %v1080, %v1080
      %v1099 = vpack.c.b16 %v1081, %v1081
      %v1100 = vpack.c.b16 %v1082, %v1082
      %v1101 = vpack.c.b16 %v1083, %v1083
      %vm1102 = vsmask.f32 7424
      %v1104 = vshrl.u32 %v1012, 16
      %v1106 = vshll.u32 %v1012, 16
      %v1108 = vrot.slane %v1106, 1
      %v1109 = vor.u32 %v1104, %v1108
      %v1111 = vshll.u32 %v1084, 16
      %v1113 = vrot.slane %v1111, 1
      %v1114 = vsel %vm1102, %v1109, %v1113
      %v1116 = vshrl.u32 %v1013, 16
      %v1118 = vshll.u32 %v1013, 16
      %v1120 = vrot.slane %v1118, 1
      %v1121 = vor.u32 %v1116, %v1120
      %v1123 = vshll.u32 %v1085, 16
      %v1125 = vrot.slane %v1123, 1
      %v1126 = vsel %vm1102, %v1121, %v1125
      %v1128 = vshrl.u32 %v1014, 16
      %v1130 = vshll.u32 %v1014, 16
      %v1132 = vrot.slane %v1130, 1
      %v1133 = vor.u32 %v1128, %v1132
      %v1135 = vshll.u32 %v1086, 16
      %v1137 = vrot.slane %v1135, 1
      %v1138 = vsel %vm1102, %v1133, %v1137
      %v1140 = vshrl.u32 %v1015, 16
      %v1142 = vshll.u32 %v1015, 16
      %v1144 = vrot.slane %v1142, 1
      %v1145 = vor.u32 %v1140, %v1144
      %v1147 = vshll.u32 %v1087, 16
      %v1149 = vrot.slane %v1147, 1
      %v1150 = vsel %vm1102, %v1145, %v1149
      %v1152 = vshrl.u32 %v1016, 16
      %v1154 = vshll.u32 %v1016, 16
      %v1156 = vrot.slane %v1154, 1
      %v1157 = vor.u32 %v1152, %v1156
      %v1159 = vshll.u32 %v1088, 16
      %v1161 = vrot.slane %v1159, 1
      %v1162 = vsel %vm1102, %v1157, %v1161
      %v1164 = vshrl.u32 %v1017, 16
      %v1166 = vshll.u32 %v1017, 16
      %v1168 = vrot.slane %v1166, 1
      %v1169 = vor.u32 %v1164, %v1168
      %v1171 = vshll.u32 %v1089, 16
      %v1173 = vrot.slane %v1171, 1
      %v1174 = vsel %vm1102, %v1169, %v1173
      %v1176 = vshrl.u32 %v1018, 16
      %v1178 = vshll.u32 %v1018, 16
      %v1180 = vrot.slane %v1178, 1
      %v1181 = vor.u32 %v1176, %v1180
      %v1183 = vshll.u32 %v1090, 16
      %v1185 = vrot.slane %v1183, 1
      %v1186 = vsel %vm1102, %v1181, %v1185
      %v1188 = vshrl.u32 %v1019, 16
      %v1190 = vshll.u32 %v1019, 16
      %v1192 = vrot.slane %v1190, 1
      %v1193 = vor.u32 %v1188, %v1192
      %v1195 = vshll.u32 %v1091, 16
      %v1197 = vrot.slane %v1195, 1
      %v1198 = vsel %vm1102, %v1193, %v1197
      %v1200 = vshrl.u32 %v1020, 16
      %v1202 = vshll.u32 %v1020, 16
      %v1204 = vrot.slane %v1202, 1
      %v1205 = vor.u32 %v1200, %v1204
      %v1207 = vshll.u32 %v1092, 16
      %v1209 = vrot.slane %v1207, 1
      %v1210 = vsel %vm1102, %v1205, %v1209
      %v1212 = vshrl.u32 %v1021, 16
      %v1214 = vshll.u32 %v1021, 16
      %v1216 = vrot.slane %v1214, 1
      %v1217 = vor.u32 %v1212, %v1216
      %v1219 = vshll.u32 %v1093, 16
      %v1221 = vrot.slane %v1219, 1
      %v1222 = vsel %vm1102, %v1217, %v1221
      %v1224 = vshrl.u32 %v1022, 16
      %v1226 = vshll.u32 %v1022, 16
      %v1228 = vrot.slane %v1226, 1
      %v1229 = vor.u32 %v1224, %v1228
      %v1231 = vshll.u32 %v1094, 16
      %v1233 = vrot.slane %v1231, 1
      %v1234 = vsel %vm1102, %v1229, %v1233
      %v1236 = vshrl.u32 %v1023, 16
      %v1238 = vshll.u32 %v1023, 16
      %v1240 = vrot.slane %v1238, 1
      %v1241 = vor.u32 %v1236, %v1240
      %v1243 = vshll.u32 %v1095, 16
      %v1245 = vrot.slane %v1243, 1
      %v1246 = vsel %vm1102, %v1241, %v1245
      %v1248 = vshrl.u32 %v1024, 16
      %v1250 = vshll.u32 %v1024, 16
      %v1252 = vrot.slane %v1250, 1
      %v1253 = vor.u32 %v1248, %v1252
      %v1255 = vshll.u32 %v1096, 16
      %v1257 = vrot.slane %v1255, 1
      %v1258 = vsel %vm1102, %v1253, %v1257
      %v1260 = vshrl.u32 %v1025, 16
      %v1262 = vshll.u32 %v1025, 16
      %v1264 = vrot.slane %v1262, 1
      %v1265 = vor.u32 %v1260, %v1264
      %v1267 = vshll.u32 %v1097, 16
      %v1269 = vrot.slane %v1267, 1
      %v1270 = vsel %vm1102, %v1265, %v1269
      %v1272 = vshrl.u32 %v1026, 16
      %v1274 = vshll.u32 %v1026, 16
      %v1276 = vrot.slane %v1274, 1
      %v1277 = vor.u32 %v1272, %v1276
      %v1279 = vshll.u32 %v1098, 16
      %v1281 = vrot.slane %v1279, 1
      %v1282 = vsel %vm1102, %v1277, %v1281
      %v1284 = vshrl.u32 %v1027, 16
      %v1286 = vshll.u32 %v1027, 16
      %v1288 = vrot.slane %v1286, 1
      %v1289 = vor.u32 %v1284, %v1288
      %v1291 = vshll.u32 %v1099, 16
      %v1293 = vrot.slane %v1291, 1
      %v1294 = vsel %vm1102, %v1289, %v1293
      %v1296 = vshrl.u32 %v1028, 16
      %v1298 = vshll.u32 %v1028, 16
      %v1300 = vrot.slane %v1298, 1
      %v1301 = vor.u32 %v1296, %v1300
      %v1303 = vshll.u32 %v1100, 16
      %v1305 = vrot.slane %v1303, 1
      %v1306 = vsel %vm1102, %v1301, %v1305
      %v1308 = vshrl.u32 %v1029, 16
      %v1310 = vshll.u32 %v1029, 16
      %v1312 = vrot.slane %v1310, 1
      %v1313 = vor.u32 %v1308, %v1312
      %v1315 = vshll.u32 %v1101, 16
      %v1317 = vrot.slane %v1315, 1
      %v1318 = vsel %vm1102, %v1313, %v1317
      %v1355 = vunpack.c.l.b16 %v922
      %v1356 = vunpack.c.l.b16 %v923
      %v1357 = vunpack.c.l.b16 %v924
      %v1358 = vunpack.c.l.b16 %v925
      %v1359 = vunpack.c.l.b16 %v926
      %v1360 = vunpack.c.l.b16 %v927
      %v1361 = vunpack.c.l.b16 %v928
      %v1362 = vunpack.c.l.b16 %v929
      %v1363 = vunpack.c.l.b16 %v930
      %v1364 = vunpack.c.l.b16 %v931
      %v1365 = vunpack.c.l.b16 %v932
      %v1366 = vunpack.c.l.b16 %v933
      %v1367 = vunpack.c.l.b16 %v934
      %v1368 = vunpack.c.l.b16 %v935
      %v1369 = vunpack.c.l.b16 %v936
      %v1370 = vunpack.c.l.b16 %v937
      %v1371 = vunpack.c.l.b16 %v938
      %v1372 = vunpack.c.l.b16 %v939
      %v1373 = vpack.c.b16 %v977, %v1355
      %v1374 = vpack.c.b16 %v979, %v1356
      %v1375 = vpack.c.b16 %v981, %v1357
      %v1376 = vpack.c.b16 %v983, %v1358
      %v1377 = vpack.c.b16 %v985, %v1359
      %v1378 = vpack.c.b16 %v987, %v1360
      %v1379 = vpack.c.b16 %v989, %v1361
      %v1380 = vpack.c.b16 %v991, %v1362
      %v1381 = vpack.c.b16 %v993, %v1363
      %v1382 = vpack.c.b16 %v995, %v1364
      %v1383 = vpack.c.b16 %v997, %v1365
      %v1384 = vpack.c.b16 %v999, %v1366
      %v1385 = vpack.c.b16 %v1001, %v1367
      %v1386 = vpack.c.b16 %v1003, %v1368
      %v1387 = vpack.c.b16 %v1005, %v1369
      %v1388 = vpack.c.b16 %v1007, %v1370
      %v1389 = vpack.c.b16 %v1009, %v1371
      %v1390 = vpack.c.b16 %v1011, %v1372
      %vm1391 = vcmask 1046528
      %v1392 = vrot.slane %v1373, 1
      %v1393 = vrot.slane %v1084, 1
      %v1394 = vsel %vm1391, %v1392, %v1393
      %v1395 = vrot.slane %v1374, 1
      %v1396 = vrot.slane %v1085, 1
      %v1397 = vsel %vm1391, %v1395, %v1396
      %v1398 = vrot.slane %v1375, 1
      %v1399 = vrot.slane %v1086, 1
      %v1400 = vsel %vm1391, %v1398, %v1399
      %v1401 = vrot.slane %v1376, 1
      %v1402 = vrot.slane %v1087, 1
      %v1403 = vsel %vm1391, %v1401, %v1402
      %v1404 = vrot.slane %v1377, 1
      %v1405 = vrot.slane %v1088, 1
      %v1406 = vsel %vm1391, %v1404, %v1405
      %v1407 = vrot.slane %v1378, 1
      %v1408 = vrot.slane %v1089, 1
      %v1409 = vsel %vm1391, %v1407, %v1408
      %v1410 = vrot.slane %v1379, 1
      %v1411 = vrot.slane %v1090, 1
      %v1412 = vsel %vm1391, %v1410, %v1411
      %v1413 = vrot.slane %v1380, 1
      %v1414 = vrot.slane %v1091, 1
      %v1415 = vsel %vm1391, %v1413, %v1414
      %v1416 = vrot.slane %v1381, 1
      %v1417 = vrot.slane %v1092, 1
      %v1418 = vsel %vm1391, %v1416, %v1417
      %v1419 = vrot.slane %v1382, 1
      %v1420 = vrot.slane %v1093, 1
      %v1421 = vsel %vm1391, %v1419, %v1420
      %v1422 = vrot.slane %v1383, 1
      %v1423 = vrot.slane %v1094, 1
      %v1424 = vsel %vm1391, %v1422, %v1423
      %v1425 = vrot.slane %v1384, 1
      %v1426 = vrot.slane %v1095, 1
      %v1427 = vsel %vm1391, %v1425, %v1426
      %v1428 = vrot.slane %v1385, 1
      %v1429 = vrot.slane %v1096, 1
      %v1430 = vsel %vm1391, %v1428, %v1429
      %v1431 = vrot.slane %v1386, 1
      %v1432 = vrot.slane %v1097, 1
      %v1433 = vsel %vm1391, %v1431, %v1432
      %v1434 = vrot.slane %v1387, 1
      %v1435 = vrot.slane %v1098, 1
      %v1436 = vsel %vm1391, %v1434, %v1435
      %v1437 = vrot.slane %v1388, 1
      %v1438 = vrot.slane %v1099, 1
      %v1439 = vsel %vm1391, %v1437, %v1438
      %v1440 = vrot.slane %v1389, 1
      %v1441 = vrot.slane %v1100, 1
      %v1442 = vsel %vm1391, %v1440, %v1441
      %v1443 = vrot.slane %v1390, 1
      %v1444 = vrot.slane %v1101, 1
      %v1445 = vsel %vm1391, %v1443, %v1444
      %v1464 = vld [vmem:[%s1] sm:$0xf]
      %v1465 = vld [vmem:[%s1 + $0x4] sm:$0xf]
      %v1466 = vld [vmem:[%s1 + $0x8] sm:$0xf]
      %v1467 = vld [vmem:[%s1 + $0xc] sm:$0xf]
      %v1468 = vld [vmem:[%s1 + $0x10] sm:$0xf]
      %v1469 = vld [vmem:[%s1 + $0x14] sm:$0xf]
      %v1470 = vld [vmem:[%s1 + $0x18] sm:$0xf]
      %v1471 = vld [vmem:[%s1 + $0x1c] sm:$0xf]
      %v1472 = vld [vmem:[%s1 + $0x20] sm:$0xf]
      %v1473 = vld [vmem:[%s1 + $0x24] sm:$0xf]
      %v1474 = vld [vmem:[%s1 + $0x28] sm:$0xf]
      %v1475 = vld [vmem:[%s1 + $0x2c] sm:$0xf]
      %v1476 = vld [vmem:[%s1 + $0x30] sm:$0xf]
      %v1477 = vld [vmem:[%s1 + $0x34] sm:$0xf]
      %v1478 = vld [vmem:[%s1 + $0x38] sm:$0xf]
      %v1479 = vld [vmem:[%s1 + $0x3c] sm:$0xf]
      %v1480 = vld [vmem:[%s1 + $0x40] sm:$0xf]
      %v1481 = vld [vmem:[%s1 + $0x44] sm:$0xf]
      %v1482 = vld [vmem:[%s1 + $0x48] sm:$0xf]
      %v1483 = vld [vmem:[%s1 + $0x4c] sm:$0xf]
      %v1484 = vld [vmem:[%s1 + $0x50] sm:$0xf]
      %v1485 = vld [vmem:[%s1 + $0x54] sm:$0xf]
      %v1486 = vld [vmem:[%s1 + $0x58] sm:$0xf]
      %v1487 = vld [vmem:[%s1 + $0x5c] sm:$0xf]
      %v1488 = vld [vmem:[%s1 + $0x60] sm:$0xf]
      %v1489 = vld [vmem:[%s1 + $0x64] sm:$0xf]
      %v1490 = vld [vmem:[%s1 + $0x68] sm:$0xf]
      %v1491 = vld [vmem:[%s1 + $0x6c] sm:$0xf]
      %v1492 = vld [vmem:[%s1 + $0x70] sm:$0xf]
      %v1493 = vld [vmem:[%s1 + $0x74] sm:$0xf]
      %v1494 = vld [vmem:[%s1 + $0x78] sm:$0xf]
      %v1495 = vld [vmem:[%s1 + $0x7c] sm:$0xf]
      %v1496 = vld [vmem:[%s1 + $0x80] sm:$0xf]
      %v1497 = vld [vmem:[%s1 + $0x84] sm:$0xf]
      %v1498 = vld [vmem:[%s1 + $0x88] sm:$0xf]
      %v1499 = vld [vmem:[%s1 + $0x8c] sm:$0xf]
      %v1500 = vld [vmem:[%s1 + $0x90] sm:$0xf]
      %v1501 = vld [vmem:[%s1 + $0x94] sm:$0xf]
      %v1502 = vld [vmem:[%s1 + $0x98] sm:$0xf]
      %v1503 = vld [vmem:[%s1 + $0x9c] sm:$0xf]
      %v1504 = vld [vmem:[%s1 + $0xa0] sm:$0xf]
      %v1505 = vld [vmem:[%s1 + $0xa4] sm:$0xf]
      %v1506 = vld [vmem:[%s1 + $0xa8] sm:$0xf]
      %v1507 = vld [vmem:[%s1 + $0xac] sm:$0xf]
      %v1508 = vld [vmem:[%s1 + $0xb0] sm:$0xf]
      %v1509 = vld [vmem:[%s1 + $0xb4] sm:$0xf]
      %v1510 = vld [vmem:[%s1 + $0xb8] sm:$0xf]
      %v1511 = vld [vmem:[%s1 + $0xbc] sm:$0xf]
      %s1512 = scalar_lea.vmem [#allocation3], 12
      %v1513 = vld [vmem:[%s1512] sm:$0xf]
      %v1514 = vld [vmem:[%s1512 + $0x4] sm:$0xf]
      %v1515 = vld [vmem:[%s1512 + $0xc] sm:$0xf]
      %v1516 = vld [vmem:[%s1512 + $0x10] sm:$0xf]
      %v1517 = vld [vmem:[%s1512 + $0x18] sm:$0xf]
      %v1518 = vld [vmem:[%s1512 + $0x1c] sm:$0xf]
      %v1519 = vld [vmem:[%s1512 + $0x24] sm:$0xf]
      %v1520 = vld [vmem:[%s1512 + $0x28] sm:$0xf]
      %v1521 = vld [vmem:[%s1512 + $0x30] sm:$0xf]
      %v1522 = vld [vmem:[%s1512 + $0x34] sm:$0xf]
      %v1523 = vld [vmem:[%s1512 + $0x3c] sm:$0xf]
      %v1524 = vld [vmem:[%s1512 + $0x40] sm:$0xf]
      %v1525 = vld [vmem:[%s1512 + $0x48] sm:$0xf]
      %v1526 = vld [vmem:[%s1512 + $0x4c] sm:$0xf]
      %v1527 = vld [vmem:[%s1512 + $0x54] sm:$0xf]
      %v1528 = vld [vmem:[%s1512 + $0x58] sm:$0xf]
      %v1529 = vld [vmem:[%s1512 + $0x60] sm:$0xf]
      %v1530 = vld [vmem:[%s1512 + $0x64] sm:$0xf]
      %v1531 = vld [vmem:[%s1512 + $0x6c] sm:$0xf]
      %v1532 = vld [vmem:[%s1512 + $0x70] sm:$0xf]
      %v1533 = vld [vmem:[%s1512 + $0x78] sm:$0xf]
      %v1534 = vld [vmem:[%s1512 + $0x7c] sm:$0xf]
      %v1535 = vld [vmem:[%s1512 + $0x84] sm:$0xf]
      %v1536 = vld [vmem:[%s1512 + $0x88] sm:$0xf]
      %v1537 = vld [vmem:[%s1512 + $0x90] sm:$0xf]
      %v1538 = vld [vmem:[%s1512 + $0x94] sm:$0xf]
      %v1539 = vld [vmem:[%s1512 + $0x9c] sm:$0xf]
      %v1540 = vld [vmem:[%s1512 + $0xa0] sm:$0xf]
      %v1541 = vld [vmem:[%s1512 + $0xa8] sm:$0xf]
      %v1542 = vld [vmem:[%s1512 + $0xac] sm:$0xf]
      %v1543 = vld [vmem:[%s1512 + $0xb4] sm:$0xf]
      %v1544 = vld [vmem:[%s1512 + $0xb8] sm:$0xf]
      %v1545 = vld [vmem:[%s1512 + $0xc0] sm:$0xf]
      %v1546 = vld [vmem:[%s1512 + $0xc4] sm:$0xf]
      %v1547 = vld [vmem:[%s1512 + $0xcc] sm:$0xf]
      %v1548 = vld [vmem:[%s1512 + $0xd0] sm:$0xf]
      %v1549 = vld [vmem:[%s1512 + $0x8] sm:$0x1]
      %v1550 = vld [vmem:[%s1512 + $0x14] sm:$0x1]
      %v1551 = vld [vmem:[%s1512 + $0x20] sm:$0x1]
      %v1552 = vld [vmem:[%s1512 + $0x2c] sm:$0x1]
      %v1553 = vld [vmem:[%s1512 + $0x38] sm:$0x1]
      %v1554 = vld [vmem:[%s1512 + $0x44] sm:$0x1]
      %v1555 = vld [vmem:[%s1512 + $0x50] sm:$0x1]
      %v1556 = vld [vmem:[%s1512 + $0x5c] sm:$0x1]
      %v1557 = vld [vmem:[%s1512 + $0x68] sm:$0x1]
      %v1558 = vld [vmem:[%s1512 + $0x74] sm:$0x1]
      %v1559 = vld [vmem:[%s1512 + $0x80] sm:$0x1]
      %v1560 = vld [vmem:[%s1512 + $0x8c] sm:$0x1]
      %v1561 = vld [vmem:[%s1512 + $0x98] sm:$0x1]
      %v1562 = vld [vmem:[%s1512 + $0xa4] sm:$0x1]
      %v1563 = vld [vmem:[%s1512 + $0xb0] sm:$0x1]
      %v1564 = vld [vmem:[%s1512 + $0xbc] sm:$0x1]
      %v1565 = vld [vmem:[%s1512 + $0xc8] sm:$0x1]
      %v1566 = vld [vmem:[%s1512 + $0xd4] sm:$0x1]
      %v1567 = vld [vmem:[%s1512] sm:$0xe]
      %v1568 = vld [vmem:[%s1512 + $0xc] sm:$0xe]
      %v1569 = vld [vmem:[%s1512 + $0x18] sm:$0xe]
      %v1570 = vld [vmem:[%s1512 + $0x24] sm:$0xe]
      %v1571 = vld [vmem:[%s1512 + $0x30] sm:$0xe]
      %v1572 = vld [vmem:[%s1512 + $0x3c] sm:$0xe]
      %v1573 = vld [vmem:[%s1512 + $0x48] sm:$0xe]
      %v1574 = vld [vmem:[%s1512 + $0x54] sm:$0xe]
      %v1575 = vld [vmem:[%s1512 + $0x60] sm:$0xe]
      %v1576 = vld [vmem:[%s1512 + $0x6c] sm:$0xe]
      %v1577 = vld [vmem:[%s1512 + $0x78] sm:$0xe]
      %v1578 = vld [vmem:[%s1512 + $0x84] sm:$0xe]
      %v1579 = vld [vmem:[%s1512 + $0x90] sm:$0xe]
      %v1580 = vld [vmem:[%s1512 + $0x9c] sm:$0xe]
      %v1581 = vld [vmem:[%s1512 + $0xa8] sm:$0xe]
      %v1582 = vld [vmem:[%s1512 + $0xb4] sm:$0xe]
      %v1583 = vld [vmem:[%s1512 + $0xc0] sm:$0xe]
      %v1584 = vld [vmem:[%s1512 + $0xcc] sm:$0xe]
      %v1621 = vunpack.c.l.b16 %v1513
      %v1622 = vunpack.c.l.b16 %v1514
      %v1623 = vunpack.c.l.b16 %v1515
      %v1624 = vunpack.c.l.b16 %v1516
      %v1625 = vunpack.c.l.b16 %v1517
      %v1626 = vunpack.c.l.b16 %v1518
      %v1627 = vunpack.c.l.b16 %v1519
      %v1628 = vunpack.c.l.b16 %v1520
      %v1629 = vunpack.c.l.b16 %v1521
      %v1630 = vunpack.c.l.b16 %v1522
      %v1631 = vunpack.c.l.b16 %v1523
      %v1632 = vunpack.c.l.b16 %v1524
      %v1633 = vunpack.c.l.b16 %v1525
      %v1634 = vunpack.c.l.b16 %v1526
      %v1635 = vunpack.c.l.b16 %v1527
      %v1636 = vunpack.c.l.b16 %v1528
      %v1637 = vunpack.c.l.b16 %v1529
      %v1638 = vunpack.c.l.b16 %v1530
      %v1639 = vunpack.c.l.b16 %v1531
      %v1640 = vunpack.c.l.b16 %v1532
      %v1641 = vunpack.c.l.b16 %v1533
      %v1642 = vunpack.c.l.b16 %v1534
      %v1643 = vunpack.c.l.b16 %v1535
      %v1644 = vunpack.c.l.b16 %v1536
      %v1645 = vunpack.c.l.b16 %v1537
      %v1646 = vunpack.c.l.b16 %v1538
      %v1647 = vunpack.c.l.b16 %v1539
      %v1648 = vunpack.c.l.b16 %v1540
      %v1649 = vunpack.c.l.b16 %v1541
      %v1650 = vunpack.c.l.b16 %v1542
      %v1651 = vunpack.c.l.b16 %v1543
      %v1652 = vunpack.c.l.b16 %v1544
      %v1653 = vunpack.c.l.b16 %v1545
      %v1654 = vunpack.c.l.b16 %v1546
      %v1655 = vunpack.c.l.b16 %v1547
      %v1656 = vunpack.c.l.b16 %v1548
      %v1657 = vpack.c.b16 %v1622, %v1621
      %v1658 = vpack.c.b16 %v1624, %v1623
      %v1659 = vpack.c.b16 %v1626, %v1625
      %v1660 = vpack.c.b16 %v1628, %v1627
      %v1661 = vpack.c.b16 %v1630, %v1629
      %v1662 = vpack.c.b16 %v1632, %v1631
      %v1663 = vpack.c.b16 %v1634, %v1633
      %v1664 = vpack.c.b16 %v1636, %v1635
      %v1665 = vpack.c.b16 %v1638, %v1637
      %v1666 = vpack.c.b16 %v1640, %v1639
      %v1667 = vpack.c.b16 %v1642, %v1641
      %v1668 = vpack.c.b16 %v1644, %v1643
      %v1669 = vpack.c.b16 %v1646, %v1645
      %v1670 = vpack.c.b16 %v1648, %v1647
      %v1671 = vpack.c.b16 %v1650, %v1649
      %v1672 = vpack.c.b16 %v1652, %v1651
      %v1673 = vpack.c.b16 %v1654, %v1653
      %v1674 = vpack.c.b16 %v1656, %v1655
      %v1711 = vunpack.c.l.b16 %v1549
      %v1712 = vunpack.c.l.b16 %v1550
      %v1713 = vunpack.c.l.b16 %v1551
      %v1714 = vunpack.c.l.b16 %v1552
      %v1715 = vunpack.c.l.b16 %v1553
      %v1716 = vunpack.c.l.b16 %v1554
      %v1717 = vunpack.c.l.b16 %v1555
      %v1718 = vunpack.c.l.b16 %v1556
      %v1719 = vunpack.c.l.b16 %v1557
      %v1720 = vunpack.c.l.b16 %v1558
      %v1721 = vunpack.c.l.b16 %v1559
      %v1722 = vunpack.c.l.b16 %v1560
      %v1723 = vunpack.c.l.b16 %v1561
      %v1724 = vunpack.c.l.b16 %v1562
      %v1725 = vunpack.c.l.b16 %v1563
      %v1726 = vunpack.c.l.b16 %v1564
      %v1727 = vunpack.c.l.b16 %v1565
      %v1728 = vunpack.c.l.b16 %v1566
      %v1729 = vpack.c.b16 %v1711, %v1711
      %v1730 = vpack.c.b16 %v1712, %v1712
      %v1731 = vpack.c.b16 %v1713, %v1713
      %v1732 = vpack.c.b16 %v1714, %v1714
      %v1733 = vpack.c.b16 %v1715, %v1715
      %v1734 = vpack.c.b16 %v1716, %v1716
      %v1735 = vpack.c.b16 %v1717, %v1717
      %v1736 = vpack.c.b16 %v1718, %v1718
      %v1737 = vpack.c.b16 %v1719, %v1719
      %v1738 = vpack.c.b16 %v1720, %v1720
      %v1739 = vpack.c.b16 %v1721, %v1721
      %v1740 = vpack.c.b16 %v1722, %v1722
      %v1741 = vpack.c.b16 %v1723, %v1723
      %v1742 = vpack.c.b16 %v1724, %v1724
      %v1743 = vpack.c.b16 %v1725, %v1725
      %v1744 = vpack.c.b16 %v1726, %v1726
      %v1745 = vpack.c.b16 %v1727, %v1727
      %v1746 = vpack.c.b16 %v1728, %v1728
      %v1748 = vshrl.u32 %v1657, 16
      %v1750 = vshll.u32 %v1657, 16
      %v1752 = vrot.slane %v1750, 1
      %v1753 = vor.u32 %v1748, %v1752
      %v1755 = vshll.u32 %v1729, 16
      %v1757 = vrot.slane %v1755, 1
      %v1758 = vsel %vm1102, %v1753, %v1757
      %v1760 = vshrl.u32 %v1658, 16
      %v1762 = vshll.u32 %v1658, 16
      %v1764 = vrot.slane %v1762, 1
      %v1765 = vor.u32 %v1760, %v1764
      %v1767 = vshll.u32 %v1730, 16
      %v1769 = vrot.slane %v1767, 1
      %v1770 = vsel %vm1102, %v1765, %v1769
      %v1772 = vshrl.u32 %v1659, 16
      %v1774 = vshll.u32 %v1659, 16
      %v1776 = vrot.slane %v1774, 1
      %v1777 = vor.u32 %v1772, %v1776
      %v1779 = vshll.u32 %v1731, 16
      %v1781 = vrot.slane %v1779, 1
      %v1782 = vsel %vm1102, %v1777, %v1781
      %v1784 = vshrl.u32 %v1660, 16
      %v1786 = vshll.u32 %v1660, 16
      %v1788 = vrot.slane %v1786, 1
      %v1789 = vor.u32 %v1784, %v1788
      %v1791 = vshll.u32 %v1732, 16
      %v1793 = vrot.slane %v1791, 1
      %v1794 = vsel %vm1102, %v1789, %v1793
      %v1796 = vshrl.u32 %v1661, 16
      %v1798 = vshll.u32 %v1661, 16
      %v1800 = vrot.slane %v1798, 1
      %v1801 = vor.u32 %v1796, %v1800
      %v1803 = vshll.u32 %v1733, 16
      %v1805 = vrot.slane %v1803, 1
      %v1806 = vsel %vm1102, %v1801, %v1805
      %v1808 = vshrl.u32 %v1662, 16
      %v1810 = vshll.u32 %v1662, 16
      %v1812 = vrot.slane %v1810, 1
      %v1813 = vor.u32 %v1808, %v1812
      %v1815 = vshll.u32 %v1734, 16
      %v1817 = vrot.slane %v1815, 1
      %v1818 = vsel %vm1102, %v1813, %v1817
      %v1820 = vshrl.u32 %v1663, 16
      %v1822 = vshll.u32 %v1663, 16
      %v1824 = vrot.slane %v1822, 1
      %v1825 = vor.u32 %v1820, %v1824
      %v1827 = vshll.u32 %v1735, 16
      %v1829 = vrot.slane %v1827, 1
      %v1830 = vsel %vm1102, %v1825, %v1829
      %v1832 = vshrl.u32 %v1664, 16
      %v1834 = vshll.u32 %v1664, 16
      %v1836 = vrot.slane %v1834, 1
      %v1837 = vor.u32 %v1832, %v1836
      %v1839 = vshll.u32 %v1736, 16
      %v1841 = vrot.slane %v1839, 1
      %v1842 = vsel %vm1102, %v1837, %v1841
      %v1844 = vshrl.u32 %v1665, 16
      %v1846 = vshll.u32 %v1665, 16
      %v1848 = vrot.slane %v1846, 1
      %v1849 = vor.u32 %v1844, %v1848
      %v1851 = vshll.u32 %v1737, 16
      %v1853 = vrot.slane %v1851, 1
      %v1854 = vsel %vm1102, %v1849, %v1853
      %v1856 = vshrl.u32 %v1666, 16
      %v1858 = vshll.u32 %v1666, 16
      %v1860 = vrot.slane %v1858, 1
      %v1861 = vor.u32 %v1856, %v1860
      %v1863 = vshll.u32 %v1738, 16
      %v1865 = vrot.slane %v1863, 1
      %v1866 = vsel %vm1102, %v1861, %v1865
      %v1868 = vshrl.u32 %v1667, 16
      %v1870 = vshll.u32 %v1667, 16
      %v1872 = vrot.slane %v1870, 1
      %v1873 = vor.u32 %v1868, %v1872
      %v1875 = vshll.u32 %v1739, 16
      %v1877 = vrot.slane %v1875, 1
      %v1878 = vsel %vm1102, %v1873, %v1877
      %v1880 = vshrl.u32 %v1668, 16
      %v1882 = vshll.u32 %v1668, 16
      %v1884 = vrot.slane %v1882, 1
      %v1885 = vor.u32 %v1880, %v1884
      %v1887 = vshll.u32 %v1740, 16
      %v1889 = vrot.slane %v1887, 1
      %v1890 = vsel %vm1102, %v1885, %v1889
      %v1892 = vshrl.u32 %v1669, 16
      %v1894 = vshll.u32 %v1669, 16
      %v1896 = vrot.slane %v1894, 1
      %v1897 = vor.u32 %v1892, %v1896
      %v1899 = vshll.u32 %v1741, 16
      %v1901 = vrot.slane %v1899, 1
      %v1902 = vsel %vm1102, %v1897, %v1901
      %v1904 = vshrl.u32 %v1670, 16
      %v1906 = vshll.u32 %v1670, 16
      %v1908 = vrot.slane %v1906, 1
      %v1909 = vor.u32 %v1904, %v1908
      %v1911 = vshll.u32 %v1742, 16
      %v1913 = vrot.slane %v1911, 1
      %v1914 = vsel %vm1102, %v1909, %v1913
      %v1916 = vshrl.u32 %v1671, 16
      %v1918 = vshll.u32 %v1671, 16
      %v1920 = vrot.slane %v1918, 1
      %v1921 = vor.u32 %v1916, %v1920
      %v1923 = vshll.u32 %v1743, 16
      %v1925 = vrot.slane %v1923, 1
      %v1926 = vsel %vm1102, %v1921, %v1925
      %v1928 = vshrl.u32 %v1672, 16
      %v1930 = vshll.u32 %v1672, 16
      %v1932 = vrot.slane %v1930, 1
      %v1933 = vor.u32 %v1928, %v1932
      %v1935 = vshll.u32 %v1744, 16
      %v1937 = vrot.slane %v1935, 1
      %v1938 = vsel %vm1102, %v1933, %v1937
      %v1940 = vshrl.u32 %v1673, 16
      %v1942 = vshll.u32 %v1673, 16
      %v1944 = vrot.slane %v1942, 1
      %v1945 = vor.u32 %v1940, %v1944
      %v1947 = vshll.u32 %v1745, 16
      %v1949 = vrot.slane %v1947, 1
      %v1950 = vsel %vm1102, %v1945, %v1949
      %v1952 = vshrl.u32 %v1674, 16
      %v1954 = vshll.u32 %v1674, 16
      %v1956 = vrot.slane %v1954, 1
      %v1957 = vor.u32 %v1952, %v1956
      %v1959 = vshll.u32 %v1746, 16
      %v1961 = vrot.slane %v1959, 1
      %v1962 = vsel %vm1102, %v1957, %v1961
      %v1999 = vunpack.c.l.b16 %v1567
      %v2000 = vunpack.c.l.b16 %v1568
      %v2001 = vunpack.c.l.b16 %v1569
      %v2002 = vunpack.c.l.b16 %v1570
      %v2003 = vunpack.c.l.b16 %v1571
      %v2004 = vunpack.c.l.b16 %v1572
      %v2005 = vunpack.c.l.b16 %v1573
      %v2006 = vunpack.c.l.b16 %v1574
      %v2007 = vunpack.c.l.b16 %v1575
      %v2008 = vunpack.c.l.b16 %v1576
      %v2009 = vunpack.c.l.b16 %v1577
      %v2010 = vunpack.c.l.b16 %v1578
      %v2011 = vunpack.c.l.b16 %v1579
      %v2012 = vunpack.c.l.b16 %v1580
      %v2013 = vunpack.c.l.b16 %v1581
      %v2014 = vunpack.c.l.b16 %v1582
      %v2015 = vunpack.c.l.b16 %v1583
      %v2016 = vunpack.c.l.b16 %v1584
      %v2017 = vpack.c.b16 %v1622, %v1999
      %v2018 = vpack.c.b16 %v1624, %v2000
      %v2019 = vpack.c.b16 %v1626, %v2001
      %v2020 = vpack.c.b16 %v1628, %v2002
      %v2021 = vpack.c.b16 %v1630, %v2003
      %v2022 = vpack.c.b16 %v1632, %v2004
      %v2023 = vpack.c.b16 %v1634, %v2005
      %v2024 = vpack.c.b16 %v1636, %v2006
      %v2025 = vpack.c.b16 %v1638, %v2007
      %v2026 = vpack.c.b16 %v1640, %v2008
      %v2027 = vpack.c.b16 %v1642, %v2009
      %v2028 = vpack.c.b16 %v1644, %v2010
      %v2029 = vpack.c.b16 %v1646, %v2011
      %v2030 = vpack.c.b16 %v1648, %v2012
      %v2031 = vpack.c.b16 %v1650, %v2013
      %v2032 = vpack.c.b16 %v1652, %v2014
      %v2033 = vpack.c.b16 %v1654, %v2015
      %v2034 = vpack.c.b16 %v1656, %v2016
      %v2035 = vrot.slane %v2017, 1
      %v2036 = vrot.slane %v1729, 1
      %v2037 = vsel %vm1391, %v2035, %v2036
      %v2038 = vrot.slane %v2018, 1
      %v2039 = vrot.slane %v1730, 1
      %v2040 = vsel %vm1391, %v2038, %v2039
      %v2041 = vrot.slane %v2019, 1
      %v2042 = vrot.slane %v1731, 1
      %v2043 = vsel %vm1391, %v2041, %v2042
      %v2044 = vrot.slane %v2020, 1
      %v2045 = vrot.slane %v1732, 1
      %v2046 = vsel %vm1391, %v2044, %v2045
      %v2047 = vrot.slane %v2021, 1
      %v2048 = vrot.slane %v1733, 1
      %v2049 = vsel %vm1391, %v2047, %v2048
      %v2050 = vrot.slane %v2022, 1
      %v2051 = vrot.slane %v1734, 1
      %v2052 = vsel %vm1391, %v2050, %v2051
      %v2053 = vrot.slane %v2023, 1
      %v2054 = vrot.slane %v1735, 1
      %v2055 = vsel %vm1391, %v2053, %v2054
      %v2056 = vrot.slane %v2024, 1
      %v2057 = vrot.slane %v1736, 1
      %v2058 = vsel %vm1391, %v2056, %v2057
      %v2059 = vrot.slane %v2025, 1
      %v2060 = vrot.slane %v1737, 1
      %v2061 = vsel %vm1391, %v2059, %v2060
      %v2062 = vrot.slane %v2026, 1
      %v2063 = vrot.slane %v1738, 1
      %v2064 = vsel %vm1391, %v2062, %v2063
      %v2065 = vrot.slane %v2027, 1
      %v2066 = vrot.slane %v1739, 1
      %v2067 = vsel %vm1391, %v2065, %v2066
      %v2068 = vrot.slane %v2028, 1
      %v2069 = vrot.slane %v1740, 1
      %v2070 = vsel %vm1391, %v2068, %v2069
      %v2071 = vrot.slane %v2029, 1
      %v2072 = vrot.slane %v1741, 1
      %v2073 = vsel %vm1391, %v2071, %v2072
      %v2074 = vrot.slane %v2030, 1
      %v2075 = vrot.slane %v1742, 1
      %v2076 = vsel %vm1391, %v2074, %v2075
      %v2077 = vrot.slane %v2031, 1
      %v2078 = vrot.slane %v1743, 1
      %v2079 = vsel %vm1391, %v2077, %v2078
      %v2080 = vrot.slane %v2032, 1
      %v2081 = vrot.slane %v1744, 1
      %v2082 = vsel %vm1391, %v2080, %v2081
      %v2083 = vrot.slane %v2033, 1
      %v2084 = vrot.slane %v1745, 1
      %v2085 = vsel %vm1391, %v2083, %v2084
      %v2086 = vrot.slane %v2034, 1
      %v2087 = vrot.slane %v1746, 1
      %v2088 = vsel %vm1391, %v2086, %v2087
      %s2107 = scalar_lea.vmem %s1, 192
      %v2108 = vld [vmem:[%s2107] sm:$0xf]
      %v2109 = vld [vmem:[%s2107 + $0x4] sm:$0xf]
      %v2110 = vld [vmem:[%s2107 + $0x8] sm:$0xf]
      %v2111 = vld [vmem:[%s2107 + $0xc] sm:$0xf]
      %v2112 = vld [vmem:[%s2107 + $0x10] sm:$0xf]
      %v2113 = vld [vmem:[%s2107 + $0x14] sm:$0xf]
      %v2114 = vld [vmem:[%s2107 + $0x18] sm:$0xf]
      %v2115 = vld [vmem:[%s2107 + $0x1c] sm:$0xf]
      %v2116 = vld [vmem:[%s2107 + $0x20] sm:$0xf]
      %v2117 = vld [vmem:[%s2107 + $0x24] sm:$0xf]
      %v2118 = vld [vmem:[%s2107 + $0x28] sm:$0xf]
      %v2119 = vld [vmem:[%s2107 + $0x2c] sm:$0xf]
      %v2120 = vld [vmem:[%s2107 + $0x30] sm:$0xf]
      %v2121 = vld [vmem:[%s2107 + $0x34] sm:$0xf]
      %v2122 = vld [vmem:[%s2107 + $0x38] sm:$0xf]
      %v2123 = vld [vmem:[%s2107 + $0x3c] sm:$0xf]
      %v2124 = vld [vmem:[%s2107 + $0x40] sm:$0xf]
      %v2125 = vld [vmem:[%s2107 + $0x44] sm:$0xf]
      %v2126 = vld [vmem:[%s2107 + $0x48] sm:$0xf]
      %v2127 = vld [vmem:[%s2107 + $0x4c] sm:$0xf]
      %v2128 = vld [vmem:[%s2107 + $0x50] sm:$0xf]
      %v2129 = vld [vmem:[%s2107 + $0x54] sm:$0xf]
      %v2130 = vld [vmem:[%s2107 + $0x58] sm:$0xf]
      %v2131 = vld [vmem:[%s2107 + $0x5c] sm:$0xf]
      %v2132 = vld [vmem:[%s2107 + $0x60] sm:$0xf]
      %v2133 = vld [vmem:[%s2107 + $0x64] sm:$0xf]
      %v2134 = vld [vmem:[%s2107 + $0x68] sm:$0xf]
      %v2135 = vld [vmem:[%s2107 + $0x6c] sm:$0xf]
      %v2136 = vld [vmem:[%s2107 + $0x70] sm:$0xf]
      %v2137 = vld [vmem:[%s2107 + $0x74] sm:$0xf]
      %v2138 = vld [vmem:[%s2107 + $0x78] sm:$0xf]
      %v2139 = vld [vmem:[%s2107 + $0x7c] sm:$0xf]
      %v2140 = vld [vmem:[%s2107 + $0x80] sm:$0xf]
      %v2141 = vld [vmem:[%s2107 + $0x84] sm:$0xf]
      %v2142 = vld [vmem:[%s2107 + $0x88] sm:$0xf]
      %v2143 = vld [vmem:[%s2107 + $0x8c] sm:$0xf]
      %v2144 = vld [vmem:[%s2107 + $0x90] sm:$0xf]
      %v2145 = vld [vmem:[%s2107 + $0x94] sm:$0xf]
      %v2146 = vld [vmem:[%s2107 + $0x98] sm:$0xf]
      %v2147 = vld [vmem:[%s2107 + $0x9c] sm:$0xf]
      %v2148 = vld [vmem:[%s2107 + $0xa0] sm:$0xf]
      %v2149 = vld [vmem:[%s2107 + $0xa4] sm:$0xf]
      %v2150 = vld [vmem:[%s2107 + $0xa8] sm:$0xf]
      %v2151 = vld [vmem:[%s2107 + $0xac] sm:$0xf]
      %v2152 = vld [vmem:[%s2107 + $0xb0] sm:$0xf]
      %v2153 = vld [vmem:[%s2107 + $0xb4] sm:$0xf]
      %v2154 = vld [vmem:[%s2107 + $0xb8] sm:$0xf]
      %v2155 = vld [vmem:[%s2107 + $0xbc] sm:$0xf]
      %v2204 = vunpack.c.l.b16 %v2108
      %v2205 = vunpack.c.l.b16 %v2109
      %v2206 = vunpack.c.l.b16 %v2110
      %v2207 = vunpack.c.l.b16 %v2111
      %v2208 = vunpack.c.l.b16 %v2112
      %v2209 = vunpack.c.l.b16 %v2113
      %v2210 = vunpack.c.l.b16 %v2114
      %v2211 = vunpack.c.l.b16 %v2115
      %v2212 = vunpack.c.l.b16 %v2116
      %v2213 = vunpack.c.l.b16 %v2117
      %v2214 = vunpack.c.l.b16 %v2118
      %v2215 = vunpack.c.l.b16 %v2119
      %v2216 = vunpack.c.l.b16 %v2120
      %v2217 = vunpack.c.l.b16 %v2121
      %v2218 = vunpack.c.l.b16 %v2122
      %v2219 = vunpack.c.l.b16 %v2123
      %v2220 = vunpack.c.l.b16 %v2124
      %v2221 = vunpack.c.l.b16 %v2125
      %v2222 = vunpack.c.l.b16 %v2126
      %v2223 = vunpack.c.l.b16 %v2127
      %v2224 = vunpack.c.l.b16 %v2128
      %v2225 = vunpack.c.l.b16 %v2129
      %v2226 = vunpack.c.l.b16 %v2130
      %v2227 = vunpack.c.l.b16 %v2131
      %v2228 = vunpack.c.l.b16 %v2132
      %v2229 = vunpack.c.l.b16 %v2133
      %v2230 = vunpack.c.l.b16 %v2134
      %v2231 = vunpack.c.l.b16 %v2135
      %v2232 = vunpack.c.l.b16 %v2136
      %v2233 = vunpack.c.l.b16 %v2137
      %v2234 = vunpack.c.l.b16 %v2138
      %v2235 = vunpack.c.l.b16 %v2139
      %v2236 = vunpack.c.l.b16 %v2140
      %v2237 = vunpack.c.l.b16 %v2141
      %v2238 = vunpack.c.l.b16 %v2142
      %v2239 = vunpack.c.l.b16 %v2143
      %v2240 = vunpack.c.l.b16 %v2144
      %v2241 = vunpack.c.l.b16 %v2145
      %v2242 = vunpack.c.l.b16 %v2146
      %v2243 = vunpack.c.l.b16 %v2147
      %v2244 = vunpack.c.l.b16 %v2148
      %v2245 = vunpack.c.l.b16 %v2149
      %v2246 = vunpack.c.l.b16 %v2150
      %v2247 = vunpack.c.l.b16 %v2151
      %v2248 = vunpack.c.l.b16 %v2152
      %v2249 = vunpack.c.l.b16 %v2153
      %v2250 = vunpack.c.l.b16 %v2154
      %v2251 = vunpack.c.l.b16 %v2155
      %v2252 = vpack.c.b16 %v2205, %v2204
      %v2253 = vpack.c.b16 %v2207, %v2206
      %v2254 = vpack.c.b16 %v2209, %v2208
      %v2255 = vpack.c.b16 %v2211, %v2210
      %v2256 = vpack.c.b16 %v2213, %v2212
      %v2257 = vpack.c.b16 %v2215, %v2214
      %v2258 = vpack.c.b16 %v2217, %v2216
      %v2259 = vpack.c.b16 %v2219, %v2218
      %v2260 = vpack.c.b16 %v2221, %v2220
      %v2261 = vpack.c.b16 %v2223, %v2222
      %v2262 = vpack.c.b16 %v2225, %v2224
      %v2263 = vpack.c.b16 %v2227, %v2226
      %v2264 = vpack.c.b16 %v2229, %v2228
      %v2265 = vpack.c.b16 %v2231, %v2230
      %v2266 = vpack.c.b16 %v2233, %v2232
      %v2267 = vpack.c.b16 %v2235, %v2234
      %v2268 = vpack.c.b16 %v2237, %v2236
      %v2269 = vpack.c.b16 %v2239, %v2238
      %v2270 = vpack.c.b16 %v2241, %v2240
      %v2271 = vpack.c.b16 %v2243, %v2242
      %v2272 = vpack.c.b16 %v2245, %v2244
      %v2273 = vpack.c.b16 %v2247, %v2246
      %v2274 = vpack.c.b16 %v2249, %v2248
      %v2275 = vpack.c.b16 %v2251, %v2250
      %2300 = vmatprep.subr.bf16.mxu0 0
      %2301 = vmatpush1.bf16.msra.mxu0 %v2252
      %2302 = vmatprep.subr.bf16.mxu0 0
      %2303 = vmatpush1.bf16.msra.mxu0 %v2253
      %2304 = vmatprep.subr.bf16.mxu0 0
      %2305 = vmatpush1.bf16.msra.mxu0 %v2254
      %2306 = vmatprep.subr.bf16.mxu0 0
      %2307 = vmatpush1.bf16.msra.mxu0 %v2255
      %2308 = vmatprep.subr.bf16.mxu0 0
      %2309 = vmatpush1.bf16.msra.mxu0 %v2256
      %2310 = vmatprep.subr.bf16.mxu0 0
      %2311 = vmatpush1.bf16.msra.mxu0 %v2257
      %2312 = vmatprep.subr.bf16.mxu0 0
      %2313 = vmatpush1.bf16.msra.mxu0 %v2258
      %2314 = vmatprep.subr.bf16.mxu0 0
      %2315 = vmatpush1.bf16.msra.mxu0 %v2259
      %2316 = vmatprep.subr.bf16.mxu0 0
      %2317 = vmatpush1.bf16.msra.mxu0 %v2260
      %2318 = vmatprep.subr.bf16.mxu0 0
      %2319 = vmatpush1.bf16.msra.mxu0 %v2261
      %2320 = vmatprep.subr.bf16.mxu0 0
      %2321 = vmatpush1.bf16.msra.mxu0 %v2262
      %2322 = vmatprep.subr.bf16.mxu0 0
      %2323 = vmatpush1.bf16.msra.mxu0 %v2263
      %2324 = vmatprep.subr.bf16.mxu0 0
      %2325 = vmatpush1.bf16.msra.mxu0 %v2264
      %2326 = vmatprep.subr.bf16.mxu0 0
      %2327 = vmatpush1.bf16.msra.mxu0 %v2265
      %2328 = vmatprep.subr.bf16.mxu0 0
      %2329 = vmatpush1.bf16.msra.mxu0 %v2266
      %2330 = vmatprep.subr.bf16.mxu0 0
      %2331 = vmatpush1.bf16.msra.mxu0 %v2267
      %2332 = vmatprep.mubr.bf16.mxu0 %v1758
      %2333 = vmatmul.mubr.bf16.gmra.mrb[0].mxu0 %v1657
      %v2334 = vpop.f32.mrb[0].mxu0
      %v2335 = vadd.f32 0.0, %v2334
      %v2336 = vpop.f32.mrb[0].mxu0
      %v2337 = vpop.f32.mrb[0].mxu0
      %v2338 = vadd.f32 0.0, %v2337
      %v2339 = vpop.f32.mrb[0].mxu0
      %2340 = vmatprep.mubr.bf16.mxu0 %v1770
      %2341 = vmatmul.mubr.bf16.gmra.mrb[0].mxu0 %v1658
      %v2342 = vpop.f32.mrb[0].mxu0
      %v2343 = vadd.f32 0.0, %v2342
      %v2344 = vpop.f32.mrb[0].mxu0
      %v2345 = vpop.f32.mrb[0].mxu0
      %v2346 = vadd.f32 0.0, %v2345
      %v2347 = vpop.f32.mrb[0].mxu0
      %2348 = vmatprep.mubr.bf16.mxu0 %v1782
      %2349 = vmatmul.mubr.bf16.gmra.mrb[0].mxu0 %v1659
      %v2350 = vpop.f32.mrb[0].mxu0
      %v2351 = vadd.f32 0.0, %v2350
      %v2352 = vpop.f32.mrb[0].mxu0
      %v2353 = vpop.f32.mrb[0].mxu0
      %v2354 = vadd.f32 0.0, %v2353
      %v2355 = vpop.f32.mrb[0].mxu0
      %2356 = vmatprep.mubr.bf16.mxu0 %v1794
      %2357 = vmatmul.mubr.bf16.gmra.mrb[0].mxu0 %v1660
      %v2358 = vpop.f32.mrb[0].mxu0
      %v2359 = vadd.f32 0.0, %v2358
      %v2360 = vpop.f32.mrb[0].mxu0
      %v2361 = vpop.f32.mrb[0].mxu0
      %v2362 = vadd.f32 0.0, %v2361
      %v2363 = vpop.f32.mrb[0].mxu0
      %2364 = vmatprep.mubr.bf16.mxu0 %v1806
      %2365 = vmatmul.mubr.bf16.gmra.mrb[0].mxu0 %v1661
      %v2366 = vpop.f32.mrb[0].mxu0
      %v2367 = vadd.f32 0.0, %v2366
      %v2368 = vpop.f32.mrb[0].mxu0
      %v2369 = vpop.f32.mrb[0].mxu0
      %v2370 = vadd.f32 0.0, %v2369
      %v2371 = vpop.f32.mrb[0].mxu0
      %2372 = vmatprep.mubr.bf16.mxu0 %v1818
      %2373 = vmatmul.mubr.bf16.gmra.mrb[0].mxu0 %v1662
      %v2374 = vpop.f32.mrb[0].mxu0
      %v2375 = vadd.f32 0.0, %v2374
      %v2376 = vpop.f32.mrb[0].mxu0
      %v2377 = vpop.f32.mrb[0].mxu0
      %v2378 = vadd.f32 0.0, %v2377
      %v2379 = vpop.f32.mrb[0].mxu0
      %2380 = vmatprep.mubr.bf16.mxu0 %v1830
      %2381 = vmatmul.mubr.bf16.gmra.mrb[0].mxu0 %v1663
      %v2382 = vpop.f32.mrb[0].mxu0
      %v2383 = vadd.f32 0.0, %v2382
      %v2384 = vpop.f32.mrb[0].mxu0
      %v2385 = vpop.f32.mrb[0].mxu0
      %v2386 = vadd.f32 0.0, %v2385
      %v2387 = vpop.f32.mrb[0].mxu0
      %2388 = vmatprep.mubr.bf16.mxu0 %v1842
      %2389 = vmatmul.mubr.bf16.gmra.mrb[0].mxu0 %v1664
      %v2390 = vpop.f32.mrb[0].mxu0
      %v2391 = vadd.f32 0.0, %v2390
      %v2392 = vpop.f32.mrb[0].mxu0
      %v2393 = vpop.f32.mrb[0].mxu0
      %v2394 = vadd.f32 0.0, %v2393
      %v2395 = vpop.f32.mrb[0].mxu0
      %2396 = vmatprep.mubr.bf16.mxu0 %v1854
      %2397 = vmatmul.mubr.bf16.gmra.mrb[0].mxu0 %v1665
      %v2398 = vpop.f32.mrb[0].mxu0
      %v2399 = vadd.f32 0.0, %v2398
      %v2400 = vpop.f32.mrb[0].mxu0
      %v2401 = vpop.f32.mrb[0].mxu0
      %v2402 = vadd.f32 0.0, %v2401
      %v2403 = vpop.f32.mrb[0].mxu0
      %2404 = vmatprep.mubr.bf16.mxu0 %v1866
      %2405 = vmatmul.mubr.bf16.gmra.mrb[0].mxu0 %v1666
      %v2406 = vpop.f32.mrb[0].mxu0
      %v2407 = vadd.f32 0.0, %v2406
      %v2408 = vpop.f32.mrb[0].mxu0
      %v2409 = vpop.f32.mrb[0].mxu0
      %v2410 = vadd.f32 0.0, %v2409
      %v2411 = vpop.f32.mrb[0].mxu0
      %2412 = vmatprep.mubr.bf16.mxu0 %v1878
      %2413 = vmatmul.mubr.bf16.gmra.mrb[0].mxu0 %v1667
      %v2414 = vpop.f32.mrb[0].mxu0
      %v2415 = vadd.f32 0.0, %v2414
      %v2416 = vpop.f32.mrb[0].mxu0
      %v2417 = vpop.f32.mrb[0].mxu0
      %v2418 = vadd.f32 0.0, %v2417
      %v2419 = vpop.f32.mrb[0].mxu0
      %2420 = vmatprep.mubr.bf16.mxu0 %v1890
      %2421 = vmatmul.mubr.bf16.gmra.mrb[0].mxu0 %v1668
      %v2422 = vpop.f32.mrb[0].mxu0
      %v2423 = vadd.f32 0.0, %v2422
      %v2424 = vpop.f32.mrb[0].mxu0
      %v2425 = vpop.f32.mrb[0].mxu0
      %v2426 = vadd.f32 0.0, %v2425
      %v2427 = vpop.f32.mrb[0].mxu0
      %2428 = vmatprep.mubr.bf16.mxu0 %v1902
      %2429 = vmatmul.mubr.bf16.gmra.mrb[0].mxu0 %v1669
      %v2430 = vpop.f32.mrb[0].mxu0
      %v2431 = vadd.f32 0.0, %v2430
      %v2432 = vpop.f32.mrb[0].mxu0
      %v2433 = vpop.f32.mrb[0].mxu0
      %v2434 = vadd.f32 0.0, %v2433
      %v2435 = vpop.f32.mrb[0].mxu0
      %2436 = vmatprep.mubr.bf16.mxu0 %v1914
      %2437 = vmatmul.mubr.bf16.gmra.mrb[0].mxu0 %v1670
      %v2438 = vpop.f32.mrb[0].mxu0
      %v2439 = vadd.f32 0.0, %v2438
      %v2440 = vpop.f32.mrb[0].mxu0
      %v2441 = vpop.f32.mrb[0].mxu0
      %v2442 = vadd.f32 0.0, %v2441
      %v2443 = vpop.f32.mrb[0].mxu0
      %2444 = vmatprep.mubr.bf16.mxu0 %v1926
      %2445 = vmatmul.mubr.bf16.gmra.mrb[0].mxu0 %v1671
      %v2446 = vpop.f32.mrb[0].mxu0
      %v2447 = vadd.f32 0.0, %v2446
      %v2448 = vpop.f32.mrb[0].mxu0
      %v2449 = vpop.f32.mrb[0].mxu0
      %v2450 = vadd.f32 0.0, %v2449
      %v2451 = vpop.f32.mrb[0].mxu0
      %2452 = vmatprep.mubr.bf16.mxu0 %v1938
      %2453 = vmatmul.mubr.bf16.gmra.mrb[0].mxu0 %v1672
      %v2454 = vpop.f32.mrb[0].mxu0
      %v2455 = vadd.f32 0.0, %v2454
      %v2456 = vpop.f32.mrb[0].mxu0
      %v2457 = vpop.f32.mrb[0].mxu0
      %v2458 = vadd.f32 0.0, %v2457
      %v2459 = vpop.f32.mrb[0].mxu0
      %2460 = vmatprep.mubr.bf16.mxu0 %v1950
      %2461 = vmatmul.mubr.bf16.gmra.mrb[0].mxu0 %v1673
      %v2462 = vpop.f32.mrb[0].mxu0
      %v2463 = vadd.f32 0.0, %v2462
      %v2464 = vpop.f32.mrb[0].mxu0
      %v2465 = vpop.f32.mrb[0].mxu0
      %v2466 = vadd.f32 0.0, %v2465
      %v2467 = vpop.f32.mrb[0].mxu0
      %2468 = vmatprep.mubr.bf16.mxu0 %v1962
      %2469 = vmatmul.mubr.bf16.gmra.mrb[0].mxu0 %v1674
      %v2470 = vpop.f32.mrb[0].mxu0
      %v2471 = vadd.f32 0.0, %v2470
      %v2472 = vpop.f32.mrb[0].mxu0
      %v2473 = vpop.f32.mrb[0].mxu0
      %v2474 = vadd.f32 0.0, %v2473
      %v2475 = vpop.f32.mrb[0].mxu0
      %2476 = vdwg.mxu0
      %2477 = vmatprep.subr.bf16.mxu0 0
      %2478 = vmatpush1.bf16.msra.mxu0 %v2268
      %2479 = vmatprep.subr.bf16.mxu0 0
      %2480 = vmatpush1.bf16.msra.mxu0 %v2269
      %2481 = vmatprep.subr.bf16.mxu0 0
      %2482 = vmatpush1.bf16.msra.mxu0 %v2270
      %2483 = vmatprep.subr.bf16.mxu0 0
      %2484 = vmatpush1.bf16.msra.mxu0 %v2271
      %2485 = vmatprep.subr.bf16.mxu0 0
      %2486 = vmatpush1.bf16.msra.mxu0 %v2272
      %2487 = vmatprep.subr.bf16.mxu0 0
      %2488 = vmatpush1.bf16.msra.mxu0 %v2273
      %2489 = vmatprep.subr.bf16.mxu0 0
      %2490 = vmatpush1.bf16.msra.mxu0 %v2274
      %2491 = vmatprep.subr.bf16.mxu0 0
      %2492 = vmatpush1.bf16.msra.mxu0 %v2275
      %2493 = vmatprep.subr.bf16.mxu0 0
      %2494 = vmatpush1.bf16.msra.mxu0 0
      %2495 = vmatprep.subr.bf16.mxu0 0
      %2496 = vmatpush1.bf16.msra.mxu0 0
      %2497 = vmatprep.subr.bf16.mxu0 0
      %2498 = vmatpush1.bf16.msra.mxu0 0
      %2499 = vmatprep.subr.bf16.mxu0 0
      %2500 = vmatpush1.bf16.msra.mxu0 0
      %2501 = vmatprep.subr.bf16.mxu0 0
      %2502 = vmatpush1.bf16.msra.mxu0 0
      %2503 = vmatprep.subr.bf16.mxu0 0
      %2504 = vmatpush1.bf16.msra.mxu0 0
      %2505 = vmatprep.subr.bf16.mxu0 0
      %2506 = vmatpush1.bf16.msra.mxu0 0
      %2507 = vmatprep.subr.bf16.mxu0 0
      %2508 = vmatpush1.bf16.msra.mxu0 0
      %2509 = vmatprep.mubr.bf16.mxu0 0
      %2510 = vmatmul.mubr.bf16.gmra.mrb[0].mxu0 %v2037
      %v2511 = vpop.f32.mrb[0].mxu0
      %v2512 = vadd.f32 %v2335, %v2511
      %v2513 = vpop.f32.mrb[0].mxu0
      %v2514 = vpop.f32.mrb[0].mxu0
      %v2515 = vadd.f32 %v2338, %v2514
      %v2516 = vpop.f32.mrb[0].mxu0
      %2517 = vmatprep.mubr.bf16.mxu0 0
      %2518 = vmatmul.mubr.bf16.gmra.mrb[0].mxu0 %v2040
      %v2519 = vpop.f32.mrb[0].mxu0
      %v2520 = vadd.f32 %v2343, %v2519
      %v2521 = vpop.f32.mrb[0].mxu0
      %v2522 = vpop.f32.mrb[0].mxu0
      %v2523 = vadd.f32 %v2346, %v2522
      %v2524 = vpop.f32.mrb[0].mxu0
      %2525 = vmatprep.mubr.bf16.mxu0 0
      %2526 = vmatmul.mubr.bf16.gmra.mrb[0].mxu0 %v2043
      %v2527 = vpop.f32.mrb[0].mxu0
      %v2528 = vadd.f32 %v2351, %v2527
      %v2529 = vpop.f32.mrb[0].mxu0
      %v2530 = vpop.f32.mrb[0].mxu0
      %v2531 = vadd.f32 %v2354, %v2530
      %v2532 = vpop.f32.mrb[0].mxu0
      %2533 = vmatprep.mubr.bf16.mxu0 0
      %2534 = vmatmul.mubr.bf16.gmra.mrb[0].mxu0 %v2046
      %v2535 = vpop.f32.mrb[0].mxu0
      %v2536 = vadd.f32 %v2359, %v2535
      %v2537 = vpop.f32.mrb[0].mxu0
      %v2538 = vpop.f32.mrb[0].mxu0
      %v2539 = vadd.f32 %v2362, %v2538
      %v2540 = vpop.f32.mrb[0].mxu0
      %2541 = vmatprep.mubr.bf16.mxu0 0
      %2542 = vmatmul.mubr.bf16.gmra.mrb[0].mxu0 %v2049
      %v2543 = vpop.f32.mrb[0].mxu0
      %v2544 = vadd.f32 %v2367, %v2543
      %v2545 = vpop.f32.mrb[0].mxu0
      %v2546 = vpop.f32.mrb[0].mxu0
      %v2547 = vadd.f32 %v2370, %v2546
      %v2548 = vpop.f32.mrb[0].mxu0
      %2549 = vmatprep.mubr.bf16.mxu0 0
      %2550 = vmatmul.mubr.bf16.gmra.mrb[0].mxu0 %v2052
      %v2551 = vpop.f32.mrb[0].mxu0
      %v2552 = vadd.f32 %v2375, %v2551
      %v2553 = vpop.f32.mrb[0].mxu0
      %v2554 = vpop.f32.mrb[0].mxu0
      %v2555 = vadd.f32 %v2378, %v2554
      %v2556 = vpop.f32.mrb[0].mxu0
      %2557 = vmatprep.mubr.bf16.mxu0 0
      %2558 = vmatmul.mubr.bf16.gmra.mrb[0].mxu0 %v2055
      %v2559 = vpop.f32.mrb[0].mxu0
      %v2560 = vadd.f32 %v2383, %v2559
      %v2561 = vpop.f32.mrb[0].mxu0
      %v2562 = vpop.f32.mrb[0].mxu0
      %v2563 = vadd.f32 %v2386, %v2562
      %v2564 = vpop.f32.mrb[0].mxu0
      %2565 = vmatprep.mubr.bf16.mxu0 0
      %2566 = vmatmul.mubr.bf16.gmra.mrb[0].mxu0 %v2058
      %v2567 = vpop.f32.mrb[0].mxu0
      %v2568 = vadd.f32 %v2391, %v2567
      %v2569 = vpop.f32.mrb[0].mxu0
      %v2570 = vpop.f32.mrb[0].mxu0
      %v2571 = vadd.f32 %v2394, %v2570
      %v2572 = vpop.f32.mrb[0].mxu0
      %2573 = vmatprep.mubr.bf16.mxu0 0
      %2574 = vmatmul.mubr.bf16.gmra.mrb[0].mxu0 %v2061
      %v2575 = vpop.f32.mrb[0].mxu0
      %v2576 = vadd.f32 %v2399, %v2575
      %v2577 = vpop.f32.mrb[0].mxu0
      %v2578 = vpop.f32.mrb[0].mxu0
      %v2579 = vadd.f32 %v2402, %v2578
      %v2580 = vpop.f32.mrb[0].mxu0
      %2581 = vmatprep.mubr.bf16.mxu0 0
      %2582 = vmatmul.mubr.bf16.gmra.mrb[0].mxu0 %v2064
      %v2583 = vpop.f32.mrb[0].mxu0
      %v2584 = vadd.f32 %v2407, %v2583
      %v2585 = vpop.f32.mrb[0].mxu0
      %v2586 = vpop.f32.mrb[0].mxu0
      %v2587 = vadd.f32 %v2410, %v2586
      %v2588 = vpop.f32.mrb[0].mxu0
      %2589 = vmatprep.mubr.bf16.mxu0 0
      %2590 = vmatmul.mubr.bf16.gmra.mrb[0].mxu0 %v2067
      %v2591 = vpop.f32.mrb[0].mxu0
      %v2592 = vadd.f32 %v2415, %v2591
      %v2593 = vpop.f32.mrb[0].mxu0
      %v2594 = vpop.f32.mrb[0].mxu0
      %v2595 = vadd.f32 %v2418, %v2594
      %v2596 = vpop.f32.mrb[0].mxu0
      %2597 = vmatprep.mubr.bf16.mxu0 0
      %2598 = vmatmul.mubr.bf16.gmra.mrb[0].mxu0 %v2070
      %v2599 = vpop.f32.mrb[0].mxu0
      %v2600 = vadd.f32 %v2423, %v2599
      %v2601 = vpop.f32.mrb[0].mxu0
      %v2602 = vpop.f32.mrb[0].mxu0
      %v2603 = vadd.f32 %v2426, %v2602
      %v2604 = vpop.f32.mrb[0].mxu0
      %2605 = vmatprep.mubr.bf16.mxu0 0
      %2606 = vmatmul.mubr.bf16.gmra.mrb[0].mxu0 %v2073
      %v2607 = vpop.f32.mrb[0].mxu0
      %v2608 = vadd.f32 %v2431, %v2607
      %v2609 = vpop.f32.mrb[0].mxu0
      %v2610 = vpop.f32.mrb[0].mxu0
      %v2611 = vadd.f32 %v2434, %v2610
      %v2612 = vpop.f32.mrb[0].mxu0
      %2613 = vmatprep.mubr.bf16.mxu0 0
      %2614 = vmatmul.mubr.bf16.gmra.mrb[0].mxu0 %v2076
      %v2615 = vpop.f32.mrb[0].mxu0
      %v2616 = vadd.f32 %v2439, %v2615
      %v2617 = vpop.f32.mrb[0].mxu0
      %v2618 = vpop.f32.mrb[0].mxu0
      %v2619 = vadd.f32 %v2442, %v2618
      %v2620 = vpop.f32.mrb[0].mxu0
      %2621 = vmatprep.mubr.bf16.mxu0 0
      %2622 = vmatmul.mubr.bf16.gmra.mrb[0].mxu0 %v2079
      %v2623 = vpop.f32.mrb[0].mxu0
      %v2624 = vadd.f32 %v2447, %v2623
      %v2625 = vpop.f32.mrb[0].mxu0
      %v2626 = vpop.f32.mrb[0].mxu0
      %v2627 = vadd.f32 %v2450, %v2626
      %v2628 = vpop.f32.mrb[0].mxu0
      %2629 = vmatprep.mubr.bf16.mxu0 0
      %2630 = vmatmul.mubr.bf16.gmra.mrb[0].mxu0 %v2082
      %v2631 = vpop.f32.mrb[0].mxu0
      %v2632 = vadd.f32 %v2455, %v2631
      %v2633 = vpop.f32.mrb[0].mxu0
      %v2634 = vpop.f32.mrb[0].mxu0
      %v2635 = vadd.f32 %v2458, %v2634
      %v2636 = vpop.f32.mrb[0].mxu0
      %2637 = vmatprep.mubr.bf16.mxu0 0
      %2638 = vmatmul.mubr.bf16.gmra.mrb[0].mxu0 %v2085
      %v2639 = vpop.f32.mrb[0].mxu0
      %v2640 = vadd.f32 %v2463, %v2639
      %v2641 = vpop.f32.mrb[0].mxu0
      %v2642 = vpop.f32.mrb[0].mxu0
      %v2643 = vadd.f32 %v2466, %v2642
      %v2644 = vpop.f32.mrb[0].mxu0
      %2645 = vmatprep.mubr.bf16.mxu0 0
      %2646 = vmatmul.mubr.bf16.gmra.mrb[0].mxu0 %v2088
      %v2647 = vpop.f32.mrb[0].mxu0
      %v2648 = vadd.f32 %v2471, %v2647
      %v2649 = vpop.f32.mrb[0].mxu0
      %v2650 = vpop.f32.mrb[0].mxu0
      %v2651 = vadd.f32 %v2474, %v2650
      %v2652 = vpop.f32.mrb[0].mxu0
      %2653 = vdwg.mxu0
      %v2702 = vunpack.c.l.b16 %v1464
      %v2703 = vunpack.c.l.b16 %v1465
      %v2704 = vunpack.c.l.b16 %v1466
      %v2705 = vunpack.c.l.b16 %v1467
      %v2706 = vunpack.c.l.b16 %v1468
      %v2707 = vunpack.c.l.b16 %v1469
      %v2708 = vunpack.c.l.b16 %v1470
      %v2709 = vunpack.c.l.b16 %v1471
      %v2710 = vunpack.c.l.b16 %v1472
      %v2711 = vunpack.c.l.b16 %v1473
      %v2712 = vunpack.c.l.b16 %v1474
      %v2713 = vunpack.c.l.b16 %v1475
      %v2714 = vunpack.c.l.b16 %v1476
      %v2715 = vunpack.c.l.b16 %v1477
      %v2716 = vunpack.c.l.b16 %v1478
      %v2717 = vunpack.c.l.b16 %v1479
      %v2718 = vunpack.c.l.b16 %v1480
      %v2719 = vunpack.c.l.b16 %v1481
      %v2720 = vunpack.c.l.b16 %v1482
      %v2721 = vunpack.c.l.b16 %v1483
      %v2722 = vunpack.c.l.b16 %v1484
      %v2723 = vunpack.c.l.b16 %v1485
      %v2724 = vunpack.c.l.b16 %v1486
      %v2725 = vunpack.c.l.b16 %v1487
      %v2726 = vunpack.c.l.b16 %v1488
      %v2727 = vunpack.c.l.b16 %v1489
      %v2728 = vunpack.c.l.b16 %v1490
      %v2729 = vunpack.c.l.b16 %v1491
      %v2730 = vunpack.c.l.b16 %v1492
      %v2731 = vunpack.c.l.b16 %v1493
      %v2732 = vunpack.c.l.b16 %v1494
      %v2733 = vunpack.c.l.b16 %v1495
      %v2734 = vunpack.c.l.b16 %v1496
      %v2735 = vunpack.c.l.b16 %v1497
      %v2736 = vunpack.c.l.b16 %v1498
      %v2737 = vunpack.c.l.b16 %v1499
      %v2738 = vunpack.c.l.b16 %v1500
      %v2739 = vunpack.c.l.b16 %v1501
      %v2740 = vunpack.c.l.b16 %v1502
      %v2741 = vunpack.c.l.b16 %v1503
      %v2742 = vunpack.c.l.b16 %v1504
      %v2743 = vunpack.c.l.b16 %v1505
      %v2744 = vunpack.c.l.b16 %v1506
      %v2745 = vunpack.c.l.b16 %v1507
      %v2746 = vunpack.c.l.b16 %v1508
      %v2747 = vunpack.c.l.b16 %v1509
      %v2748 = vunpack.c.l.b16 %v1510
      %v2749 = vunpack.c.l.b16 %v1511
      %v2750 = vpack.c.b16 %v2703, %v2702
      %v2751 = vpack.c.b16 %v2705, %v2704
      %v2752 = vpack.c.b16 %v2707, %v2706
      %v2753 = vpack.c.b16 %v2709, %v2708
      %v2754 = vpack.c.b16 %v2711, %v2710
      %v2755 = vpack.c.b16 %v2713, %v2712
      %v2756 = vpack.c.b16 %v2715, %v2714
      %v2757 = vpack.c.b16 %v2717, %v2716
      %v2758 = vpack.c.b16 %v2719, %v2718
      %v2759 = vpack.c.b16 %v2721, %v2720
      %v2760 = vpack.c.b16 %v2723, %v2722
      %v2761 = vpack.c.b16 %v2725, %v2724
      %v2762 = vpack.c.b16 %v2727, %v2726
      %v2763 = vpack.c.b16 %v2729, %v2728
      %v2764 = vpack.c.b16 %v2731, %v2730
      %v2765 = vpack.c.b16 %v2733, %v2732
      %v2766 = vpack.c.b16 %v2735, %v2734
      %v2767 = vpack.c.b16 %v2737, %v2736
      %v2768 = vpack.c.b16 %v2739, %v2738
      %v2769 = vpack.c.b16 %v2741, %v2740
      %v2770 = vpack.c.b16 %v2743, %v2742
      %v2771 = vpack.c.b16 %v2745, %v2744
      %v2772 = vpack.c.b16 %v2747, %v2746
      %v2773 = vpack.c.b16 %v2749, %v2748
      %2798 = vmatprep.subr.bf16.mxu0 0
      %2799 = vmatpush1.bf16.msra.mxu0 %v2750
      %2800 = vmatprep.subr.bf16.mxu0 0
      %2801 = vmatpush1.bf16.msra.mxu0 %v2751
      %2802 = vmatprep.subr.bf16.mxu0 0
      %2803 = vmatpush1.bf16.msra.mxu0 %v2752
      %2804 = vmatprep.subr.bf16.mxu0 0
      %2805 = vmatpush1.bf16.msra.mxu0 %v2753
      %2806 = vmatprep.subr.bf16.mxu0 0
      %2807 = vmatpush1.bf16.msra.mxu0 %v2754
      %2808 = vmatprep.subr.bf16.mxu0 0
      %2809 = vmatpush1.bf16.msra.mxu0 %v2755
      %2810 = vmatprep.subr.bf16.mxu0 0
      %2811 = vmatpush1.bf16.msra.mxu0 %v2756
      %2812 = vmatprep.subr.bf16.mxu0 0
      %2813 = vmatpush1.bf16.msra.mxu0 %v2757
      %2814 = vmatprep.subr.bf16.mxu0 0
      %2815 = vmatpush1.bf16.msra.mxu0 %v2758
      %2816 = vmatprep.subr.bf16.mxu0 0
      %2817 = vmatpush1.bf16.msra.mxu0 %v2759
      %2818 = vmatprep.subr.bf16.mxu0 0
      %2819 = vmatpush1.bf16.msra.mxu0 %v2760
      %2820 = vmatprep.subr.bf16.mxu0 0
      %2821 = vmatpush1.bf16.msra.mxu0 %v2761
      %2822 = vmatprep.subr.bf16.mxu0 0
      %2823 = vmatpush1.bf16.msra.mxu0 %v2762
      %2824 = vmatprep.subr.bf16.mxu0 0
      %2825 = vmatpush1.bf16.msra.mxu0 %v2763
      %2826 = vmatprep.subr.bf16.mxu0 0
      %2827 = vmatpush1.bf16.msra.mxu0 %v2764
      %2828 = vmatprep.subr.bf16.mxu0 0
      %2829 = vmatpush1.bf16.msra.mxu0 %v2765
      %2830 = vmatprep.mubr.bf16.mxu0 %v1114
      %2831 = vmatmul.mubr.bf16.gmra.mrb[0].mxu0 %v1012
      %v2832 = vpop.f32.mrb[0].mxu0
      %v2833 = vadd.f32 %v2512, %v2832
      %v2834 = vpop.f32.mrb[0].mxu0
      %v2835 = vpop.f32.mrb[0].mxu0
      %v2836 = vadd.f32 %v2515, %v2835
      %v2837 = vpop.f32.mrb[0].mxu0
      %2838 = vmatprep.mubr.bf16.mxu0 %v1126
      %2839 = vmatmul.mubr.bf16.gmra.mrb[0].mxu0 %v1013
      %v2840 = vpop.f32.mrb[0].mxu0
      %v2841 = vadd.f32 %v2520, %v2840
      %v2842 = vpop.f32.mrb[0].mxu0
      %v2843 = vpop.f32.mrb[0].mxu0
      %v2844 = vadd.f32 %v2523, %v2843
      %v2845 = vpop.f32.mrb[0].mxu0
      %2846 = vmatprep.mubr.bf16.mxu0 %v1138
      %2847 = vmatmul.mubr.bf16.gmra.mrb[0].mxu0 %v1014
      %v2848 = vpop.f32.mrb[0].mxu0
      %v2849 = vadd.f32 %v2528, %v2848
      %v2850 = vpop.f32.mrb[0].mxu0
      %v2851 = vpop.f32.mrb[0].mxu0
      %v2852 = vadd.f32 %v2531, %v2851
      %v2853 = vpop.f32.mrb[0].mxu0
      %2854 = vmatprep.mubr.bf16.mxu0 %v1150
      %2855 = vmatmul.mubr.bf16.gmra.mrb[0].mxu0 %v1015
      %v2856 = vpop.f32.mrb[0].mxu0
      %v2857 = vadd.f32 %v2536, %v2856
      %v2858 = vpop.f32.mrb[0].mxu0
      %v2859 = vpop.f32.mrb[0].mxu0
      %v2860 = vadd.f32 %v2539, %v2859
      %v2861 = vpop.f32.mrb[0].mxu0
      %2862 = vmatprep.mubr.bf16.mxu0 %v1162
      %2863 = vmatmul.mubr.bf16.gmra.mrb[0].mxu0 %v1016
      %v2864 = vpop.f32.mrb[0].mxu0
      %v2865 = vadd.f32 %v2544, %v2864
      %v2866 = vpop.f32.mrb[0].mxu0
      %v2867 = vpop.f32.mrb[0].mxu0
      %v2868 = vadd.f32 %v2547, %v2867
      %v2869 = vpop.f32.mrb[0].mxu0
      %2870 = vmatprep.mubr.bf16.mxu0 %v1174
      %2871 = vmatmul.mubr.bf16.gmra.mrb[0].mxu0 %v1017
      %v2872 = vpop.f32.mrb[0].mxu0
      %v2873 = vadd.f32 %v2552, %v2872
      %v2874 = vpop.f32.mrb[0].mxu0
      %v2875 = vpop.f32.mrb[0].mxu0
      %v2876 = vadd.f32 %v2555, %v2875
      %v2877 = vpop.f32.mrb[0].mxu0
      %2878 = vmatprep.mubr.bf16.mxu0 %v1186
      %2879 = vmatmul.mubr.bf16.gmra.mrb[0].mxu0 %v1018
      %v2880 = vpop.f32.mrb[0].mxu0
      %v2881 = vadd.f32 %v2560, %v2880
      %v2882 = vpop.f32.mrb[0].mxu0
      %v2883 = vpop.f32.mrb[0].mxu0
      %v2884 = vadd.f32 %v2563, %v2883
      %v2885 = vpop.f32.mrb[0].mxu0
      %2886 = vmatprep.mubr.bf16.mxu0 %v1198
      %2887 = vmatmul.mubr.bf16.gmra.mrb[0].mxu0 %v1019
      %v2888 = vpop.f32.mrb[0].mxu0
      %v2889 = vadd.f32 %v2568, %v2888
      %v2890 = vpop.f32.mrb[0].mxu0
      %v2891 = vpop.f32.mrb[0].mxu0
      %v2892 = vadd.f32 %v2571, %v2891
      %v2893 = vpop.f32.mrb[0].mxu0
      %2894 = vmatprep.mubr.bf16.mxu0 %v1210
      %2895 = vmatmul.mubr.bf16.gmra.mrb[0].mxu0 %v1020
      %v2896 = vpop.f32.mrb[0].mxu0
      %v2897 = vadd.f32 %v2576, %v2896
      %v2898 = vpop.f32.mrb[0].mxu0
      %v2899 = vpop.f32.mrb[0].mxu0
      %v2900 = vadd.f32 %v2579, %v2899
      %v2901 = vpop.f32.mrb[0].mxu0
      %2902 = vmatprep.mubr.bf16.mxu0 %v1222
      %2903 = vmatmul.mubr.bf16.gmra.mrb[0].mxu0 %v1021
      %v2904 = vpop.f32.mrb[0].mxu0
      %v2905 = vadd.f32 %v2584, %v2904
      %v2906 = vpop.f32.mrb[0].mxu0
      %v2907 = vpop.f32.mrb[0].mxu0
      %v2908 = vadd.f32 %v2587, %v2907
      %v2909 = vpop.f32.mrb[0].mxu0
      %2910 = vmatprep.mubr.bf16.mxu0 %v1234
      %2911 = vmatmul.mubr.bf16.gmra.mrb[0].mxu0 %v1022
      %v2912 = vpop.f32.mrb[0].mxu0
      %v2913 = vadd.f32 %v2592, %v2912
      %v2914 = vpop.f32.mrb[0].mxu0
      %v2915 = vpop.f32.mrb[0].mxu0
      %v2916 = vadd.f32 %v2595, %v2915
      %v2917 = vpop.f32.mrb[0].mxu0
      %2918 = vmatprep.mubr.bf16.mxu0 %v1246
      %2919 = vmatmul.mubr.bf16.gmra.mrb[0].mxu0 %v1023
      %v2920 = vpop.f32.mrb[0].mxu0
      %v2921 = vadd.f32 %v2600, %v2920
      %v2922 = vpop.f32.mrb[0].mxu0
      %v2923 = vpop.f32.mrb[0].mxu0
      %v2924 = vadd.f32 %v2603, %v2923
      %v2925 = vpop.f32.mrb[0].mxu0
      %2926 = vmatprep.mubr.bf16.mxu0 %v1258
      %2927 = vmatmul.mubr.bf16.gmra.mrb[0].mxu0 %v1024
      %v2928 = vpop.f32.mrb[0].mxu0
      %v2929 = vadd.f32 %v2608, %v2928
      %v2930 = vpop.f32.mrb[0].mxu0
      %v2931 = vpop.f32.mrb[0].mxu0
      %v2932 = vadd.f32 %v2611, %v2931
      %v2933 = vpop.f32.mrb[0].mxu0
      %2934 = vmatprep.mubr.bf16.mxu0 %v1270
      %2935 = vmatmul.mubr.bf16.gmra.mrb[0].mxu0 %v1025
      %v2936 = vpop.f32.mrb[0].mxu0
      %v2937 = vadd.f32 %v2616, %v2936
      %v2938 = vpop.f32.mrb[0].mxu0
      %v2939 = vpop.f32.mrb[0].mxu0
      %v2940 = vadd.f32 %v2619, %v2939
      %v2941 = vpop.f32.mrb[0].mxu0
      %2942 = vmatprep.mubr.bf16.mxu0 %v1282
      %2943 = vmatmul.mubr.bf16.gmra.mrb[0].mxu0 %v1026
      %v2944 = vpop.f32.mrb[0].mxu0
      %v2945 = vadd.f32 %v2624, %v2944
      %v2946 = vpop.f32.mrb[0].mxu0
      %v2947 = vpop.f32.mrb[0].mxu0
      %v2948 = vadd.f32 %v2627, %v2947
      %v2949 = vpop.f32.mrb[0].mxu0
      %2950 = vmatprep.mubr.bf16.mxu0 %v1294
      %2951 = vmatmul.mubr.bf16.gmra.mrb[0].mxu0 %v1027
      %v2952 = vpop.f32.mrb[0].mxu0
      %v2953 = vadd.f32 %v2632, %v2952
      %v2954 = vpop.f32.mrb[0].mxu0
      %v2955 = vpop.f32.mrb[0].mxu0
      %v2956 = vadd.f32 %v2635, %v2955
      %v2957 = vpop.f32.mrb[0].mxu0
      %2958 = vmatprep.mubr.bf16.mxu0 %v1306
      %2959 = vmatmul.mubr.bf16.gmra.mrb[0].mxu0 %v1028
      %v2960 = vpop.f32.mrb[0].mxu0
      %v2961 = vadd.f32 %v2640, %v2960
      %v2962 = vpop.f32.mrb[0].mxu0
      %v2963 = vpop.f32.mrb[0].mxu0
      %v2964 = vadd.f32 %v2643, %v2963
      %v2965 = vpop.f32.mrb[0].mxu0
      %2966 = vmatprep.mubr.bf16.mxu0 %v1318
      %2967 = vmatmul.mubr.bf16.gmra.mrb[0].mxu0 %v1029
      %v2968 = vpop.f32.mrb[0].mxu0
      %v2969 = vadd.f32 %v2648, %v2968
      %v2970 = vpop.f32.mrb[0].mxu0
      %v2971 = vpop.f32.mrb[0].mxu0
      %v2972 = vadd.f32 %v2651, %v2971
      %v2973 = vpop.f32.mrb[0].mxu0
      %2974 = vdwg.mxu0
      %2975 = vmatprep.subr.bf16.mxu0 0
      %2976 = vmatpush1.bf16.msra.mxu0 %v2766
      %2977 = vmatprep.subr.bf16.mxu0 0
      %2978 = vmatpush1.bf16.msra.mxu0 %v2767
      %2979 = vmatprep.subr.bf16.mxu0 0
      %2980 = vmatpush1.bf16.msra.mxu0 %v2768
      %2981 = vmatprep.subr.bf16.mxu0 0
      %2982 = vmatpush1.bf16.msra.mxu0 %v2769
      %2983 = vmatprep.subr.bf16.mxu0 0
      %2984 = vmatpush1.bf16.msra.mxu0 %v2770
      %2985 = vmatprep.subr.bf16.mxu0 0
      %2986 = vmatpush1.bf16.msra.mxu0 %v2771
      %2987 = vmatprep.subr.bf16.mxu0 0
      %2988 = vmatpush1.bf16.msra.mxu0 %v2772
      %2989 = vmatprep.subr.bf16.mxu0 0
      %2990 = vmatpush1.bf16.msra.mxu0 %v2773
      %2991 = vmatprep.subr.bf16.mxu0 0
      %2992 = vmatpush1.bf16.msra.mxu0 0
      %2993 = vmatprep.subr.bf16.mxu0 0
      %2994 = vmatpush1.bf16.msra.mxu0 0
      %2995 = vmatprep.subr.bf16.mxu0 0
      %2996 = vmatpush1.bf16.msra.mxu0 0
      %2997 = vmatprep.subr.bf16.mxu0 0
      %2998 = vmatpush1.bf16.msra.mxu0 0
      %2999 = vmatprep.subr.bf16.mxu0 0
      %3000 = vmatpush1.bf16.msra.mxu0 0
      %3001 = vmatprep.subr.bf16.mxu0 0
      %3002 = vmatpush1.bf16.msra.mxu0 0
      %3003 = vmatprep.subr.bf16.mxu0 0
      %3004 = vmatpush1.bf16.msra.mxu0 0
      %3005 = vmatprep.subr.bf16.mxu0 0
      %3006 = vmatpush1.bf16.msra.mxu0 0
      %3007 = vmatprep.mubr.bf16.mxu0 0
      %3008 = vmatmul.mubr.bf16.gmra.mrb[0].mxu0 %v1394
      %v3009 = vpop.f32.mrb[0].mxu0
      %v3010 = vadd.f32 %v2833, %v3009
      %v3011 = vpop.f32.mrb[0].mxu0
      %v3012 = vpop.f32.mrb[0].mxu0
      %v3013 = vadd.f32 %v2836, %v3012
      %v3014 = vpop.f32.mrb[0].mxu0
      %3015 = vmatprep.mubr.bf16.mxu0 0
      %3016 = vmatmul.mubr.bf16.gmra.mrb[0].mxu0 %v1397
      %v3017 = vpop.f32.mrb[0].mxu0
      %v3018 = vadd.f32 %v2841, %v3017
      %v3019 = vpop.f32.mrb[0].mxu0
      %v3020 = vpop.f32.mrb[0].mxu0
      %v3021 = vadd.f32 %v2844, %v3020
      %v3022 = vpop.f32.mrb[0].mxu0
      %3023 = vmatprep.mubr.bf16.mxu0 0
      %3024 = vmatmul.mubr.bf16.gmra.mrb[0].mxu0 %v1400
      %v3025 = vpop.f32.mrb[0].mxu0
      %v3026 = vadd.f32 %v2849, %v3025
      %v3027 = vpop.f32.mrb[0].mxu0
      %v3028 = vpop.f32.mrb[0].mxu0
      %v3029 = vadd.f32 %v2852, %v3028
      %v3030 = vpop.f32.mrb[0].mxu0
      %3031 = vmatprep.mubr.bf16.mxu0 0
      %3032 = vmatmul.mubr.bf16.gmra.mrb[0].mxu0 %v1403
      %v3033 = vpop.f32.mrb[0].mxu0
      %v3034 = vadd.f32 %v2857, %v3033
      %v3035 = vpop.f32.mrb[0].mxu0
      %v3036 = vpop.f32.mrb[0].mxu0
      %v3037 = vadd.f32 %v2860, %v3036
      %v3038 = vpop.f32.mrb[0].mxu0
      %3039 = vmatprep.mubr.bf16.mxu0 0
      %3040 = vmatmul.mubr.bf16.gmra.mrb[0].mxu0 %v1406
      %v3041 = vpop.f32.mrb[0].mxu0
      %v3042 = vadd.f32 %v2865, %v3041
      %v3043 = vpop.f32.mrb[0].mxu0
      %v3044 = vpop.f32.mrb[0].mxu0
      %v3045 = vadd.f32 %v2868, %v3044
      %v3046 = vpop.f32.mrb[0].mxu0
      %3047 = vmatprep.mubr.bf16.mxu0 0
      %3048 = vmatmul.mubr.bf16.gmra.mrb[0].mxu0 %v1409
      %v3049 = vpop.f32.mrb[0].mxu0
      %v3050 = vadd.f32 %v2873, %v3049
      %v3051 = vpop.f32.mrb[0].mxu0
      %v3052 = vpop.f32.mrb[0].mxu0
      %v3053 = vadd.f32 %v2876, %v3052
      %v3054 = vpop.f32.mrb[0].mxu0
      %3055 = vmatprep.mubr.bf16.mxu0 0
      %3056 = vmatmul.mubr.bf16.gmra.mrb[0].mxu0 %v1412
      %v3057 = vpop.f32.mrb[0].mxu0
      %v3058 = vadd.f32 %v2881, %v3057
      %v3059 = vpop.f32.mrb[0].mxu0
      %v3060 = vpop.f32.mrb[0].mxu0
      %v3061 = vadd.f32 %v2884, %v3060
      %v3062 = vpop.f32.mrb[0].mxu0
      %3063 = vmatprep.mubr.bf16.mxu0 0
      %3064 = vmatmul.mubr.bf16.gmra.mrb[0].mxu0 %v1415
      %v3065 = vpop.f32.mrb[0].mxu0
      %v3066 = vadd.f32 %v2889, %v3065
      %v3067 = vpop.f32.mrb[0].mxu0
      %v3068 = vpop.f32.mrb[0].mxu0
      %v3069 = vadd.f32 %v2892, %v3068
      %v3070 = vpop.f32.mrb[0].mxu0
      %3071 = vmatprep.mubr.bf16.mxu0 0
      %3072 = vmatmul.mubr.bf16.gmra.mrb[0].mxu0 %v1418
      %v3073 = vpop.f32.mrb[0].mxu0
      %v3074 = vadd.f32 %v2897, %v3073
      %v3075 = vpop.f32.mrb[0].mxu0
      %v3076 = vpop.f32.mrb[0].mxu0
      %v3077 = vadd.f32 %v2900, %v3076
      %v3078 = vpop.f32.mrb[0].mxu0
      %3079 = vmatprep.mubr.bf16.mxu0 0
      %3080 = vmatmul.mubr.bf16.gmra.mrb[0].mxu0 %v1421
      %v3081 = vpop.f32.mrb[0].mxu0
      %v3082 = vadd.f32 %v2905, %v3081
      %v3083 = vpop.f32.mrb[0].mxu0
      %v3084 = vpop.f32.mrb[0].mxu0
      %v3085 = vadd.f32 %v2908, %v3084
      %v3086 = vpop.f32.mrb[0].mxu0
      %3087 = vmatprep.mubr.bf16.mxu0 0
      %3088 = vmatmul.mubr.bf16.gmra.mrb[0].mxu0 %v1424
      %v3089 = vpop.f32.mrb[0].mxu0
      %v3090 = vadd.f32 %v2913, %v3089
      %v3091 = vpop.f32.mrb[0].mxu0
      %v3092 = vpop.f32.mrb[0].mxu0
      %v3093 = vadd.f32 %v2916, %v3092
      %v3094 = vpop.f32.mrb[0].mxu0
      %3095 = vmatprep.mubr.bf16.mxu0 0
      %3096 = vmatmul.mubr.bf16.gmra.mrb[0].mxu0 %v1427
      %v3097 = vpop.f32.mrb[0].mxu0
      %v3098 = vadd.f32 %v2921, %v3097
      %v3099 = vpop.f32.mrb[0].mxu0
      %v3100 = vpop.f32.mrb[0].mxu0
      %v3101 = vadd.f32 %v2924, %v3100
      %v3102 = vpop.f32.mrb[0].mxu0
      %3103 = vmatprep.mubr.bf16.mxu0 0
      %3104 = vmatmul.mubr.bf16.gmra.mrb[0].mxu0 %v1430
      %v3105 = vpop.f32.mrb[0].mxu0
      %v3106 = vadd.f32 %v2929, %v3105
      %v3107 = vpop.f32.mrb[0].mxu0
      %v3108 = vpop.f32.mrb[0].mxu0
      %v3109 = vadd.f32 %v2932, %v3108
      %v3110 = vpop.f32.mrb[0].mxu0
      %3111 = vmatprep.mubr.bf16.mxu0 0
      %3112 = vmatmul.mubr.bf16.gmra.mrb[0].mxu0 %v1433
      %v3113 = vpop.f32.mrb[0].mxu0
      %v3114 = vadd.f32 %v2937, %v3113
      %v3115 = vpop.f32.mrb[0].mxu0
      %v3116 = vpop.f32.mrb[0].mxu0
      %v3117 = vadd.f32 %v2940, %v3116
      %v3118 = vpop.f32.mrb[0].mxu0
      %3119 = vmatprep.mubr.bf16.mxu0 0
      %3120 = vmatmul.mubr.bf16.gmra.mrb[0].mxu0 %v1436
      %v3121 = vpop.f32.mrb[0].mxu0
      %v3122 = vadd.f32 %v2945, %v3121
      %v3123 = vpop.f32.mrb[0].mxu0
      %v3124 = vpop.f32.mrb[0].mxu0
      %v3125 = vadd.f32 %v2948, %v3124
      %v3126 = vpop.f32.mrb[0].mxu0
      %3127 = vmatprep.mubr.bf16.mxu0 0
      %3128 = vmatmul.mubr.bf16.gmra.mrb[0].mxu0 %v1439
      %v3129 = vpop.f32.mrb[0].mxu0
      %v3130 = vadd.f32 %v2953, %v3129
      %v3131 = vpop.f32.mrb[0].mxu0
      %v3132 = vpop.f32.mrb[0].mxu0
      %v3133 = vadd.f32 %v2956, %v3132
      %v3134 = vpop.f32.mrb[0].mxu0
      %3135 = vmatprep.mubr.bf16.mxu0 0
      %3136 = vmatmul.mubr.bf16.gmra.mrb[0].mxu0 %v1442
      %v3137 = vpop.f32.mrb[0].mxu0
      %v3138 = vadd.f32 %v2961, %v3137
      %v3139 = vpop.f32.mrb[0].mxu0
      %v3140 = vpop.f32.mrb[0].mxu0
      %v3141 = vadd.f32 %v2964, %v3140
      %v3142 = vpop.f32.mrb[0].mxu0
      %3143 = vmatprep.mubr.bf16.mxu0 0
      %3144 = vmatmul.mubr.bf16.gmra.mrb[0].mxu0 %v1445
      %v3145 = vpop.f32.mrb[0].mxu0
      %v3146 = vadd.f32 %v2969, %v3145
      %v3147 = vpop.f32.mrb[0].mxu0
      %v3148 = vpop.f32.mrb[0].mxu0
      %v3149 = vadd.f32 %v2972, %v3148
      %v3150 = vpop.f32.mrb[0].mxu0
      %3151 = vdwg.mxu0
      %s3152 = scalar_lea.vmem [#allocation3], 24
      %v3153 = vld [vmem:[%s3152] sm:$0xf]
      %v3154 = vld [vmem:[%s3152 + $0x4] sm:$0xf]
      %v3155 = vld [vmem:[%s3152 + $0xc] sm:$0xf]
      %v3156 = vld [vmem:[%s3152 + $0x10] sm:$0xf]
      %v3157 = vld [vmem:[%s3152 + $0x18] sm:$0xf]
      %v3158 = vld [vmem:[%s3152 + $0x1c] sm:$0xf]
      %v3159 = vld [vmem:[%s3152 + $0x24] sm:$0xf]
      %v3160 = vld [vmem:[%s3152 + $0x28] sm:$0xf]
      %v3161 = vld [vmem:[%s3152 + $0x30] sm:$0xf]
      %v3162 = vld [vmem:[%s3152 + $0x34] sm:$0xf]
      %v3163 = vld [vmem:[%s3152 + $0x3c] sm:$0xf]
      %v3164 = vld [vmem:[%s3152 + $0x40] sm:$0xf]
      %v3165 = vld [vmem:[%s3152 + $0x48] sm:$0xf]
      %v3166 = vld [vmem:[%s3152 + $0x4c] sm:$0xf]
      %v3167 = vld [vmem:[%s3152 + $0x54] sm:$0xf]
      %v3168 = vld [vmem:[%s3152 + $0x58] sm:$0xf]
      %v3169 = vld [vmem:[%s3152 + $0x60] sm:$0xf]
      %v3170 = vld [vmem:[%s3152 + $0x64] sm:$0xf]
      %v3171 = vld [vmem:[%s3152 + $0x6c] sm:$0xf]
      %v3172 = vld [vmem:[%s3152 + $0x70] sm:$0xf]
      %v3173 = vld [vmem:[%s3152 + $0x78] sm:$0xf]
      %v3174 = vld [vmem:[%s3152 + $0x7c] sm:$0xf]
      %v3175 = vld [vmem:[%s3152 + $0x84] sm:$0xf]
      %v3176 = vld [vmem:[%s3152 + $0x88] sm:$0xf]
      %v3177 = vld [vmem:[%s3152 + $0x90] sm:$0xf]
      %v3178 = vld [vmem:[%s3152 + $0x94] sm:$0xf]
      %v3179 = vld [vmem:[%s3152 + $0x9c] sm:$0xf]
      %v3180 = vld [vmem:[%s3152 + $0xa0] sm:$0xf]
      %v3181 = vld [vmem:[%s3152 + $0xa8] sm:$0xf]
      %v3182 = vld [vmem:[%s3152 + $0xac] sm:$0xf]
      %v3183 = vld [vmem:[%s3152 + $0xb4] sm:$0xf]
      %v3184 = vld [vmem:[%s3152 + $0xb8] sm:$0xf]
      %v3185 = vld [vmem:[%s3152 + $0xc0] sm:$0xf]
      %v3186 = vld [vmem:[%s3152 + $0xc4] sm:$0xf]
      %v3187 = vld [vmem:[%s3152 + $0xcc] sm:$0xf]
      %v3188 = vld [vmem:[%s3152 + $0xd0] sm:$0xf]
      %v3189 = vld [vmem:[%s3152 + $0x8] sm:$0x1]
      %v3190 = vld [vmem:[%s3152 + $0x14] sm:$0x1]
      %v3191 = vld [vmem:[%s3152 + $0x20] sm:$0x1]
      %v3192 = vld [vmem:[%s3152 + $0x2c] sm:$0x1]
      %v3193 = vld [vmem:[%s3152 + $0x38] sm:$0x1]
      %v3194 = vld [vmem:[%s3152 + $0x44] sm:$0x1]
      %v3195 = vld [vmem:[%s3152 + $0x50] sm:$0x1]
      %v3196 = vld [vmem:[%s3152 + $0x5c] sm:$0x1]
      %v3197 = vld [vmem:[%s3152 + $0x68] sm:$0x1]
      %v3198 = vld [vmem:[%s3152 + $0x74] sm:$0x1]
      %v3199 = vld [vmem:[%s3152 + $0x80] sm:$0x1]
      %v3200 = vld [vmem:[%s3152 + $0x8c] sm:$0x1]
      %v3201 = vld [vmem:[%s3152 + $0x98] sm:$0x1]
      %v3202 = vld [vmem:[%s3152 + $0xa4] sm:$0x1]
      %v3203 = vld [vmem:[%s3152 + $0xb0] sm:$0x1]
      %v3204 = vld [vmem:[%s3152 + $0xbc] sm:$0x1]
      %v3205 = vld [vmem:[%s3152 + $0xc8] sm:$0x1]
      %v3206 = vld [vmem:[%s3152 + $0xd4] sm:$0x1]
      %v3207 = vld [vmem:[%s3152] sm:$0xe]
      %v3208 = vld [vmem:[%s3152 + $0xc] sm:$0xe]
      %v3209 = vld [vmem:[%s3152 + $0x18] sm:$0xe]
      %v3210 = vld [vmem:[%s3152 + $0x24] sm:$0xe]
      %v3211 = vld [vmem:[%s3152 + $0x30] sm:$0xe]
      %v3212 = vld [vmem:[%s3152 + $0x3c] sm:$0xe]
      %v3213 = vld [vmem:[%s3152 + $0x48] sm:$0xe]
      %v3214 = vld [vmem:[%s3152 + $0x54] sm:$0xe]
      %v3215 = vld [vmem:[%s3152 + $0x60] sm:$0xe]
      %v3216 = vld [vmem:[%s3152 + $0x6c] sm:$0xe]
      %v3217 = vld [vmem:[%s3152 + $0x78] sm:$0xe]
      %v3218 = vld [vmem:[%s3152 + $0x84] sm:$0xe]
      %v3219 = vld [vmem:[%s3152 + $0x90] sm:$0xe]
      %v3220 = vld [vmem:[%s3152 + $0x9c] sm:$0xe]
      %v3221 = vld [vmem:[%s3152 + $0xa8] sm:$0xe]
      %v3222 = vld [vmem:[%s3152 + $0xb4] sm:$0xe]
      %v3223 = vld [vmem:[%s3152 + $0xc0] sm:$0xe]
      %v3224 = vld [vmem:[%s3152 + $0xcc] sm:$0xe]
      %v3261 = vunpack.c.l.b16 %v3153
      %v3262 = vunpack.c.l.b16 %v3154
      %v3263 = vunpack.c.l.b16 %v3155
      %v3264 = vunpack.c.l.b16 %v3156
      %v3265 = vunpack.c.l.b16 %v3157
      %v3266 = vunpack.c.l.b16 %v3158
      %v3267 = vunpack.c.l.b16 %v3159
      %v3268 = vunpack.c.l.b16 %v3160
      %v3269 = vunpack.c.l.b16 %v3161
      %v3270 = vunpack.c.l.b16 %v3162
      %v3271 = vunpack.c.l.b16 %v3163
      %v3272 = vunpack.c.l.b16 %v3164
      %v3273 = vunpack.c.l.b16 %v3165
      %v3274 = vunpack.c.l.b16 %v3166
      %v3275 = vunpack.c.l.b16 %v3167
      %v3276 = vunpack.c.l.b16 %v3168
      %v3277 = vunpack.c.l.b16 %v3169
      %v3278 = vunpack.c.l.b16 %v3170
      %v3279 = vunpack.c.l.b16 %v3171
      %v3280 = vunpack.c.l.b16 %v3172
      %v3281 = vunpack.c.l.b16 %v3173
      %v3282 = vunpack.c.l.b16 %v3174
      %v3283 = vunpack.c.l.b16 %v3175
      %v3284 = vunpack.c.l.b16 %v3176
      %v3285 = vunpack.c.l.b16 %v3177
      %v3286 = vunpack.c.l.b16 %v3178
      %v3287 = vunpack.c.l.b16 %v3179
      %v3288 = vunpack.c.l.b16 %v3180
      %v3289 = vunpack.c.l.b16 %v3181
      %v3290 = vunpack.c.l.b16 %v3182
      %v3291 = vunpack.c.l.b16 %v3183
      %v3292 = vunpack.c.l.b16 %v3184
      %v3293 = vunpack.c.l.b16 %v3185
      %v3294 = vunpack.c.l.b16 %v3186
      %v3295 = vunpack.c.l.b16 %v3187
      %v3296 = vunpack.c.l.b16 %v3188
      %v3297 = vpack.c.b16 %v3262, %v3261
      %v3298 = vpack.c.b16 %v3264, %v3263
      %v3299 = vpack.c.b16 %v3266, %v3265
      %v3300 = vpack.c.b16 %v3268, %v3267
      %v3301 = vpack.c.b16 %v3270, %v3269
      %v3302 = vpack.c.b16 %v3272, %v3271
      %v3303 = vpack.c.b16 %v3274, %v3273
      %v3304 = vpack.c.b16 %v3276, %v3275
      %v3305 = vpack.c.b16 %v3278, %v3277
      %v3306 = vpack.c.b16 %v3280, %v3279
      %v3307 = vpack.c.b16 %v3282, %v3281
      %v3308 = vpack.c.b16 %v3284, %v3283
      %v3309 = vpack.c.b16 %v3286, %v3285
      %v3310 = vpack.c.b16 %v3288, %v3287
      %v3311 = vpack.c.b16 %v3290, %v3289
      %v3312 = vpack.c.b16 %v3292, %v3291
      %v3313 = vpack.c.b16 %v3294, %v3293
      %v3314 = vpack.c.b16 %v3296, %v3295
      %v3351 = vunpack.c.l.b16 %v3189
      %v3352 = vunpack.c.l.b16 %v3190
      %v3353 = vunpack.c.l.b16 %v3191
      %v3354 = vunpack.c.l.b16 %v3192
      %v3355 = vunpack.c.l.b16 %v3193
      %v3356 = vunpack.c.l.b16 %v3194
      %v3357 = vunpack.c.l.b16 %v3195
      %v3358 = vunpack.c.l.b16 %v3196
      %v3359 = vunpack.c.l.b16 %v3197
      %v3360 = vunpack.c.l.b16 %v3198
      %v3361 = vunpack.c.l.b16 %v3199
      %v3362 = vunpack.c.l.b16 %v3200
      %v3363 = vunpack.c.l.b16 %v3201
      %v3364 = vunpack.c.l.b16 %v3202
      %v3365 = vunpack.c.l.b16 %v3203
      %v3366 = vunpack.c.l.b16 %v3204
      %v3367 = vunpack.c.l.b16 %v3205
      %v3368 = vunpack.c.l.b16 %v3206
      %v3369 = vpack.c.b16 %v3351, %v3351
      %v3370 = vpack.c.b16 %v3352, %v3352
      %v3371 = vpack.c.b16 %v3353, %v3353
      %v3372 = vpack.c.b16 %v3354, %v3354
      %v3373 = vpack.c.b16 %v3355, %v3355
      %v3374 = vpack.c.b16 %v3356, %v3356
      %v3375 = vpack.c.b16 %v3357, %v3357
      %v3376 = vpack.c.b16 %v3358, %v3358
      %v3377 = vpack.c.b16 %v3359, %v3359
      %v3378 = vpack.c.b16 %v3360, %v3360
      %v3379 = vpack.c.b16 %v3361, %v3361
      %v3380 = vpack.c.b16 %v3362, %v3362
      %v3381 = vpack.c.b16 %v3363, %v3363
      %v3382 = vpack.c.b16 %v3364, %v3364
      %v3383 = vpack.c.b16 %v3365, %v3365
      %v3384 = vpack.c.b16 %v3366, %v3366
      %v3385 = vpack.c.b16 %v3367, %v3367
      %v3386 = vpack.c.b16 %v3368, %v3368
      %v3388 = vshrl.u32 %v3297, 16
      %v3390 = vshll.u32 %v3297, 16
      %v3392 = vrot.slane %v3390, 1
      %v3393 = vor.u32 %v3388, %v3392
      %v3395 = vshll.u32 %v3369, 16
      %v3397 = vrot.slane %v3395, 1
      %v3398 = vsel %vm1102, %v3393, %v3397
      %v3400 = vshrl.u32 %v3298, 16
      %v3402 = vshll.u32 %v3298, 16
      %v3404 = vrot.slane %v3402, 1
      %v3405 = vor.u32 %v3400, %v3404
      %v3407 = vshll.u32 %v3370, 16
      %v3409 = vrot.slane %v3407, 1
      %v3410 = vsel %vm1102, %v3405, %v3409
      %v3412 = vshrl.u32 %v3299, 16
      %v3414 = vshll.u32 %v3299, 16
      %v3416 = vrot.slane %v3414, 1
      %v3417 = vor.u32 %v3412, %v3416
      %v3419 = vshll.u32 %v3371, 16
      %v3421 = vrot.slane %v3419, 1
      %v3422 = vsel %vm1102, %v3417, %v3421
      %v3424 = vshrl.u32 %v3300, 16
      %v3426 = vshll.u32 %v3300, 16
      %v3428 = vrot.slane %v3426, 1
      %v3429 = vor.u32 %v3424, %v3428
      %v3431 = vshll.u32 %v3372, 16
      %v3433 = vrot.slane %v3431, 1
      %v3434 = vsel %vm1102, %v3429, %v3433
      %v3436 = vshrl.u32 %v3301, 16
      %v3438 = vshll.u32 %v3301, 16
      %v3440 = vrot.slane %v3438, 1
      %v3441 = vor.u32 %v3436, %v3440
      %v3443 = vshll.u32 %v3373, 16
      %v3445 = vrot.slane %v3443, 1
      %v3446 = vsel %vm1102, %v3441, %v3445
      %v3448 = vshrl.u32 %v3302, 16
      %v3450 = vshll.u32 %v3302, 16
      %v3452 = vrot.slane %v3450, 1
      %v3453 = vor.u32 %v3448, %v3452
      %v3455 = vshll.u32 %v3374, 16
      %v3457 = vrot.slane %v3455, 1
      %v3458 = vsel %vm1102, %v3453, %v3457
      %v3460 = vshrl.u32 %v3303, 16
      %v3462 = vshll.u32 %v3303, 16
      %v3464 = vrot.slane %v3462, 1
      %v3465 = vor.u32 %v3460, %v3464
      %v3467 = vshll.u32 %v3375, 16
      %v3469 = vrot.slane %v3467, 1
      %v3470 = vsel %vm1102, %v3465, %v3469
      %v3472 = vshrl.u32 %v3304, 16
      %v3474 = vshll.u32 %v3304, 16
      %v3476 = vrot.slane %v3474, 1
      %v3477 = vor.u32 %v3472, %v3476
      %v3479 = vshll.u32 %v3376, 16
      %v3481 = vrot.slane %v3479, 1
      %v3482 = vsel %vm1102, %v3477, %v3481
      %v3484 = vshrl.u32 %v3305, 16
      %v3486 = vshll.u32 %v3305, 16
      %v3488 = vrot.slane %v3486, 1
      %v3489 = vor.u32 %v3484, %v3488
      %v3491 = vshll.u32 %v3377, 16
      %v3493 = vrot.slane %v3491, 1
      %v3494 = vsel %vm1102, %v3489, %v3493
      %v3496 = vshrl.u32 %v3306, 16
      %v3498 = vshll.u32 %v3306, 16
      %v3500 = vrot.slane %v3498, 1
      %v3501 = vor.u32 %v3496, %v3500
      %v3503 = vshll.u32 %v3378, 16
      %v3505 = vrot.slane %v3503, 1
      %v3506 = vsel %vm1102, %v3501, %v3505
      %v3508 = vshrl.u32 %v3307, 16
      %v3510 = vshll.u32 %v3307, 16
      %v3512 = vrot.slane %v3510, 1
      %v3513 = vor.u32 %v3508, %v3512
      %v3515 = vshll.u32 %v3379, 16
      %v3517 = vrot.slane %v3515, 1
      %v3518 = vsel %vm1102, %v3513, %v3517
      %v3520 = vshrl.u32 %v3308, 16
      %v3522 = vshll.u32 %v3308, 16
      %v3524 = vrot.slane %v3522, 1
      %v3525 = vor.u32 %v3520, %v3524
      %v3527 = vshll.u32 %v3380, 16
      %v3529 = vrot.slane %v3527, 1
      %v3530 = vsel %vm1102, %v3525, %v3529
      %v3532 = vshrl.u32 %v3309, 16
      %v3534 = vshll.u32 %v3309, 16
      %v3536 = vrot.slane %v3534, 1
      %v3537 = vor.u32 %v3532, %v3536
      %v3539 = vshll.u32 %v3381, 16
      %v3541 = vrot.slane %v3539, 1
      %v3542 = vsel %vm1102, %v3537, %v3541
      %v3544 = vshrl.u32 %v3310, 16
      %v3546 = vshll.u32 %v3310, 16
      %v3548 = vrot.slane %v3546, 1
      %v3549 = vor.u32 %v3544, %v3548
      %v3551 = vshll.u32 %v3382, 16
      %v3553 = vrot.slane %v3551, 1
      %v3554 = vsel %vm1102, %v3549, %v3553
      %v3556 = vshrl.u32 %v3311, 16
      %v3558 = vshll.u32 %v3311, 16
      %v3560 = vrot.slane %v3558, 1
      %v3561 = vor.u32 %v3556, %v3560
      %v3563 = vshll.u32 %v3383, 16
      %v3565 = vrot.slane %v3563, 1
      %v3566 = vsel %vm1102, %v3561, %v3565
      %v3568 = vshrl.u32 %v3312, 16
      %v3570 = vshll.u32 %v3312, 16
      %v3572 = vrot.slane %v3570, 1
      %v3573 = vor.u32 %v3568, %v3572
      %v3575 = vshll.u32 %v3384, 16
      %v3577 = vrot.slane %v3575, 1
      %v3578 = vsel %vm1102, %v3573, %v3577
      %v3580 = vshrl.u32 %v3313, 16
      %v3582 = vshll.u32 %v3313, 16
      %v3584 = vrot.slane %v3582, 1
      %v3585 = vor.u32 %v3580, %v3584
      %v3587 = vshll.u32 %v3385, 16
      %v3589 = vrot.slane %v3587, 1
      %v3590 = vsel %vm1102, %v3585, %v3589
      %v3592 = vshrl.u32 %v3314, 16
      %v3594 = vshll.u32 %v3314, 16
      %v3596 = vrot.slane %v3594, 1
      %v3597 = vor.u32 %v3592, %v3596
      %v3599 = vshll.u32 %v3386, 16
      %v3601 = vrot.slane %v3599, 1
      %v3602 = vsel %vm1102, %v3597, %v3601
      %v3639 = vunpack.c.l.b16 %v3207
      %v3640 = vunpack.c.l.b16 %v3208
      %v3641 = vunpack.c.l.b16 %v3209
      %v3642 = vunpack.c.l.b16 %v3210
      %v3643 = vunpack.c.l.b16 %v3211
      %v3644 = vunpack.c.l.b16 %v3212
      %v3645 = vunpack.c.l.b16 %v3213
      %v3646 = vunpack.c.l.b16 %v3214
      %v3647 = vunpack.c.l.b16 %v3215
      %v3648 = vunpack.c.l.b16 %v3216
      %v3649 = vunpack.c.l.b16 %v3217
      %v3650 = vunpack.c.l.b16 %v3218
      %v3651 = vunpack.c.l.b16 %v3219
      %v3652 = vunpack.c.l.b16 %v3220
      %v3653 = vunpack.c.l.b16 %v3221
      %v3654 = vunpack.c.l.b16 %v3222
      %v3655 = vunpack.c.l.b16 %v3223
      %v3656 = vunpack.c.l.b16 %v3224
      %v3657 = vpack.c.b16 %v3262, %v3639
      %v3658 = vpack.c.b16 %v3264, %v3640
      %v3659 = vpack.c.b16 %v3266, %v3641
      %v3660 = vpack.c.b16 %v3268, %v3642
      %v3661 = vpack.c.b16 %v3270, %v3643
      %v3662 = vpack.c.b16 %v3272, %v3644
      %v3663 = vpack.c.b16 %v3274, %v3645
      %v3664 = vpack.c.b16 %v3276, %v3646
      %v3665 = vpack.c.b16 %v3278, %v3647
      %v3666 = vpack.c.b16 %v3280, %v3648
      %v3667 = vpack.c.b16 %v3282, %v3649
      %v3668 = vpack.c.b16 %v3284, %v3650
      %v3669 = vpack.c.b16 %v3286, %v3651
      %v3670 = vpack.c.b16 %v3288, %v3652
      %v3671 = vpack.c.b16 %v3290, %v3653
      %v3672 = vpack.c.b16 %v3292, %v3654
      %v3673 = vpack.c.b16 %v3294, %v3655
      %v3674 = vpack.c.b16 %v3296, %v3656
      %v3675 = vrot.slane %v3657, 1
      %v3676 = vrot.slane %v3369, 1
      %v3677 = vsel %vm1391, %v3675, %v3676
      %v3678 = vrot.slane %v3658, 1
      %v3679 = vrot.slane %v3370, 1
      %v3680 = vsel %vm1391, %v3678, %v3679
      %v3681 = vrot.slane %v3659, 1
      %v3682 = vrot.slane %v3371, 1
      %v3683 = vsel %vm1391, %v3681, %v3682
      %v3684 = vrot.slane %v3660, 1
      %v3685 = vrot.slane %v3372, 1
      %v3686 = vsel %vm1391, %v3684, %v3685
      %v3687 = vrot.slane %v3661, 1
      %v3688 = vrot.slane %v3373, 1
      %v3689 = vsel %vm1391, %v3687, %v3688
      %v3690 = vrot.slane %v3662, 1
      %v3691 = vrot.slane %v3374, 1
      %v3692 = vsel %vm1391, %v3690, %v3691
      %v3693 = vrot.slane %v3663, 1
      %v3694 = vrot.slane %v3375, 1
      %v3695 = vsel %vm1391, %v3693, %v3694
      %v3696 = vrot.slane %v3664, 1
      %v3697 = vrot.slane %v3376, 1
      %v3698 = vsel %vm1391, %v3696, %v3697
      %v3699 = vrot.slane %v3665, 1
      %v3700 = vrot.slane %v3377, 1
      %v3701 = vsel %vm1391, %v3699, %v3700
      %v3702 = vrot.slane %v3666, 1
      %v3703 = vrot.slane %v3378, 1
      %v3704 = vsel %vm1391, %v3702, %v3703
      %v3705 = vrot.slane %v3667, 1
      %v3706 = vrot.slane %v3379, 1
      %v3707 = vsel %vm1391, %v3705, %v3706
      %v3708 = vrot.slane %v3668, 1
      %v3709 = vrot.slane %v3380, 1
      %v3710 = vsel %vm1391, %v3708, %v3709
      %v3711 = vrot.slane %v3669, 1
      %v3712 = vrot.slane %v3381, 1
      %v3713 = vsel %vm1391, %v3711, %v3712
      %v3714 = vrot.slane %v3670, 1
      %v3715 = vrot.slane %v3382, 1
      %v3716 = vsel %vm1391, %v3714, %v3715
      %v3717 = vrot.slane %v3671, 1
      %v3718 = vrot.slane %v3383, 1
      %v3719 = vsel %vm1391, %v3717, %v3718
      %v3720 = vrot.slane %v3672, 1
      %v3721 = vrot.slane %v3384, 1
      %v3722 = vsel %vm1391, %v3720, %v3721
      %v3723 = vrot.slane %v3673, 1
      %v3724 = vrot.slane %v3385, 1
      %v3725 = vsel %vm1391, %v3723, %v3724
      %v3726 = vrot.slane %v3674, 1
      %v3727 = vrot.slane %v3386, 1
      %v3728 = vsel %vm1391, %v3726, %v3727
      %s3747 = scalar_lea.vmem %s1, 384
      %v3748 = vld [vmem:[%s3747] sm:$0xf]
      %v3749 = vld [vmem:[%s3747 + $0x4] sm:$0xf]
      %v3750 = vld [vmem:[%s3747 + $0x8] sm:$0xf]
      %v3751 = vld [vmem:[%s3747 + $0xc] sm:$0xf]
      %v3752 = vld [vmem:[%s3747 + $0x10] sm:$0xf]
      %v3753 = vld [vmem:[%s3747 + $0x14] sm:$0xf]
      %v3754 = vld [vmem:[%s3747 + $0x18] sm:$0xf]
      %v3755 = vld [vmem:[%s3747 + $0x1c] sm:$0xf]
      %v3756 = vld [vmem:[%s3747 + $0x20] sm:$0xf]
      %v3757 = vld [vmem:[%s3747 + $0x24] sm:$0xf]
      %v3758 = vld [vmem:[%s3747 + $0x28] sm:$0xf]
      %v3759 = vld [vmem:[%s3747 + $0x2c] sm:$0xf]
      %v3760 = vld [vmem:[%s3747 + $0x30] sm:$0xf]
      %v3761 = vld [vmem:[%s3747 + $0x34] sm:$0xf]
      %v3762 = vld [vmem:[%s3747 + $0x38] sm:$0xf]
      %v3763 = vld [vmem:[%s3747 + $0x3c] sm:$0xf]
      %v3764 = vld [vmem:[%s3747 + $0x40] sm:$0xf]
      %v3765 = vld [vmem:[%s3747 + $0x44] sm:$0xf]
      %v3766 = vld [vmem:[%s3747 + $0x48] sm:$0xf]
      %v3767 = vld [vmem:[%s3747 + $0x4c] sm:$0xf]
      %v3768 = vld [vmem:[%s3747 + $0x50] sm:$0xf]
      %v3769 = vld [vmem:[%s3747 + $0x54] sm:$0xf]
      %v3770 = vld [vmem:[%s3747 + $0x58] sm:$0xf]
      %v3771 = vld [vmem:[%s3747 + $0x5c] sm:$0xf]
      %v3772 = vld [vmem:[%s3747 + $0x60] sm:$0xf]
      %v3773 = vld [vmem:[%s3747 + $0x64] sm:$0xf]
      %v3774 = vld [vmem:[%s3747 + $0x68] sm:$0xf]
      %v3775 = vld [vmem:[%s3747 + $0x6c] sm:$0xf]
      %v3776 = vld [vmem:[%s3747 + $0x70] sm:$0xf]
      %v3777 = vld [vmem:[%s3747 + $0x74] sm:$0xf]
      %v3778 = vld [vmem:[%s3747 + $0x78] sm:$0xf]
      %v3779 = vld [vmem:[%s3747 + $0x7c] sm:$0xf]
      %v3780 = vld [vmem:[%s3747 + $0x80] sm:$0xf]
      %v3781 = vld [vmem:[%s3747 + $0x84] sm:$0xf]
      %v3782 = vld [vmem:[%s3747 + $0x88] sm:$0xf]
      %v3783 = vld [vmem:[%s3747 + $0x8c] sm:$0xf]
      %v3784 = vld [vmem:[%s3747 + $0x90] sm:$0xf]
      %v3785 = vld [vmem:[%s3747 + $0x94] sm:$0xf]
      %v3786 = vld [vmem:[%s3747 + $0x98] sm:$0xf]
      %v3787 = vld [vmem:[%s3747 + $0x9c] sm:$0xf]
      %v3788 = vld [vmem:[%s3747 + $0xa0] sm:$0xf]
      %v3789 = vld [vmem:[%s3747 + $0xa4] sm:$0xf]
      %v3790 = vld [vmem:[%s3747 + $0xa8] sm:$0xf]
      %v3791 = vld [vmem:[%s3747 + $0xac] sm:$0xf]
      %v3792 = vld [vmem:[%s3747 + $0xb0] sm:$0xf]
      %v3793 = vld [vmem:[%s3747 + $0xb4] sm:$0xf]
      %v3794 = vld [vmem:[%s3747 + $0xb8] sm:$0xf]
      %v3795 = vld [vmem:[%s3747 + $0xbc] sm:$0xf]
      %v3844 = vunpack.c.l.b16 %v3748
      %v3845 = vunpack.c.l.b16 %v3749
      %v3846 = vunpack.c.l.b16 %v3750
      %v3847 = vunpack.c.l.b16 %v3751
      %v3848 = vunpack.c.l.b16 %v3752
      %v3849 = vunpack.c.l.b16 %v3753
      %v3850 = vunpack.c.l.b16 %v3754
      %v3851 = vunpack.c.l.b16 %v3755
      %v3852 = vunpack.c.l.b16 %v3756
      %v3853 = vunpack.c.l.b16 %v3757
      %v3854 = vunpack.c.l.b16 %v3758
      %v3855 = vunpack.c.l.b16 %v3759
      %v3856 = vunpack.c.l.b16 %v3760
      %v3857 = vunpack.c.l.b16 %v3761
      %v3858 = vunpack.c.l.b16 %v3762
      %v3859 = vunpack.c.l.b16 %v3763
      %v3860 = vunpack.c.l.b16 %v3764
      %v3861 = vunpack.c.l.b16 %v3765
      %v3862 = vunpack.c.l.b16 %v3766
      %v3863 = vunpack.c.l.b16 %v3767
      %v3864 = vunpack.c.l.b16 %v3768
      %v3865 = vunpack.c.l.b16 %v3769
      %v3866 = vunpack.c.l.b16 %v3770
      %v3867 = vunpack.c.l.b16 %v3771
      %v3868 = vunpack.c.l.b16 %v3772
      %v3869 = vunpack.c.l.b16 %v3773
      %v3870 = vunpack.c.l.b16 %v3774
      %v3871 = vunpack.c.l.b16 %v3775
      %v3872 = vunpack.c.l.b16 %v3776
      %v3873 = vunpack.c.l.b16 %v3777
      %v3874 = vunpack.c.l.b16 %v3778
      %v3875 = vunpack.c.l.b16 %v3779
      %v3876 = vunpack.c.l.b16 %v3780
      %v3877 = vunpack.c.l.b16 %v3781
      %v3878 = vunpack.c.l.b16 %v3782
      %v3879 = vunpack.c.l.b16 %v3783
      %v3880 = vunpack.c.l.b16 %v3784
      %v3881 = vunpack.c.l.b16 %v3785
      %v3882 = vunpack.c.l.b16 %v3786
      %v3883 = vunpack.c.l.b16 %v3787
      %v3884 = vunpack.c.l.b16 %v3788
      %v3885 = vunpack.c.l.b16 %v3789
      %v3886 = vunpack.c.l.b16 %v3790
      %v3887 = vunpack.c.l.b16 %v3791
      %v3888 = vunpack.c.l.b16 %v3792
      %v3889 = vunpack.c.l.b16 %v3793
      %v3890 = vunpack.c.l.b16 %v3794
      %v3891 = vunpack.c.l.b16 %v3795
      %v3892 = vpack.c.b16 %v3845, %v3844
      %v3893 = vpack.c.b16 %v3847, %v3846
      %v3894 = vpack.c.b16 %v3849, %v3848
      %v3895 = vpack.c.b16 %v3851, %v3850
      %v3896 = vpack.c.b16 %v3853, %v3852
      %v3897 = vpack.c.b16 %v3855, %v3854
      %v3898 = vpack.c.b16 %v3857, %v3856
      %v3899 = vpack.c.b16 %v3859, %v3858
      %v3900 = vpack.c.b16 %v3861, %v3860
      %v3901 = vpack.c.b16 %v3863, %v3862
      %v3902 = vpack.c.b16 %v3865, %v3864
      %v3903 = vpack.c.b16 %v3867, %v3866
      %v3904 = vpack.c.b16 %v3869, %v3868
      %v3905 = vpack.c.b16 %v3871, %v3870
      %v3906 = vpack.c.b16 %v3873, %v3872
      %v3907 = vpack.c.b16 %v3875, %v3874
      %v3908 = vpack.c.b16 %v3877, %v3876
      %v3909 = vpack.c.b16 %v3879, %v3878
      %v3910 = vpack.c.b16 %v3881, %v3880
      %v3911 = vpack.c.b16 %v3883, %v3882
      %v3912 = vpack.c.b16 %v3885, %v3884
      %v3913 = vpack.c.b16 %v3887, %v3886
      %v3914 = vpack.c.b16 %v3889, %v3888
      %v3915 = vpack.c.b16 %v3891, %v3890
      %3940 = vmatprep.subr.bf16.mxu0 0
      %3941 = vmatpush1.bf16.msra.mxu0 %v3892
      %3942 = vmatprep.subr.bf16.mxu0 0
      %3943 = vmatpush1.bf16.msra.mxu0 %v3893
      %3944 = vmatprep.subr.bf16.mxu0 0
      %3945 = vmatpush1.bf16.msra.mxu0 %v3894
      %3946 = vmatprep.subr.bf16.mxu0 0
      %3947 = vmatpush1.bf16.msra.mxu0 %v3895
      %3948 = vmatprep.subr.bf16.mxu0 0
      %3949 = vmatpush1.bf16.msra.mxu0 %v3896
      %3950 = vmatprep.subr.bf16.mxu0 0
      %3951 = vmatpush1.bf16.msra.mxu0 %v3897
      %3952 = vmatprep.subr.bf16.mxu0 0
      %3953 = vmatpush1.bf16.msra.mxu0 %v3898
      %3954 = vmatprep.subr.bf16.mxu0 0
      %3955 = vmatpush1.bf16.msra.mxu0 %v3899
      %3956 = vmatprep.subr.bf16.mxu0 0
      %3957 = vmatpush1.bf16.msra.mxu0 %v3900
      %3958 = vmatprep.subr.bf16.mxu0 0
      %3959 = vmatpush1.bf16.msra.mxu0 %v3901
      %3960 = vmatprep.subr.bf16.mxu0 0
      %3961 = vmatpush1.bf16.msra.mxu0 %v3902
      %3962 = vmatprep.subr.bf16.mxu0 0
      %3963 = vmatpush1.bf16.msra.mxu0 %v3903
      %3964 = vmatprep.subr.bf16.mxu0 0
      %3965 = vmatpush1.bf16.msra.mxu0 %v3904
      %3966 = vmatprep.subr.bf16.mxu0 0
      %3967 = vmatpush1.bf16.msra.mxu0 %v3905
      %3968 = vmatprep.subr.bf16.mxu0 0
      %3969 = vmatpush1.bf16.msra.mxu0 %v3906
      %3970 = vmatprep.subr.bf16.mxu0 0
      %3971 = vmatpush1.bf16.msra.mxu0 %v3907
      %3972 = vmatprep.mubr.bf16.mxu0 %v3398
      %3973 = vmatmul.mubr.bf16.gmra.mrb[0].mxu0 %v3297
      %v3974 = vpop.f32.mrb[0].mxu0
      %v3975 = vadd.f32 0.0, %v3974
      %v3976 = vpop.f32.mrb[0].mxu0
      %v3977 = vpop.f32.mrb[0].mxu0
      %v3978 = vadd.f32 0.0, %v3977
      %v3979 = vpop.f32.mrb[0].mxu0
      %3980 = vmatprep.mubr.bf16.mxu0 %v3410
      %3981 = vmatmul.mubr.bf16.gmra.mrb[0].mxu0 %v3298
      %v3982 = vpop.f32.mrb[0].mxu0
      %v3983 = vadd.f32 0.0, %v3982
      %v3984 = vpop.f32.mrb[0].mxu0
      %v3985 = vpop.f32.mrb[0].mxu0
      %v3986 = vadd.f32 0.0, %v3985
      %v3987 = vpop.f32.mrb[0].mxu0
      %3988 = vmatprep.mubr.bf16.mxu0 %v3422
      %3989 = vmatmul.mubr.bf16.gmra.mrb[0].mxu0 %v3299
      %v3990 = vpop.f32.mrb[0].mxu0
      %v3991 = vadd.f32 0.0, %v3990
      %v3992 = vpop.f32.mrb[0].mxu0
      %v3993 = vpop.f32.mrb[0].mxu0
      %v3994 = vadd.f32 0.0, %v3993
      %v3995 = vpop.f32.mrb[0].mxu0
      %3996 = vmatprep.mubr.bf16.mxu0 %v3434
      %3997 = vmatmul.mubr.bf16.gmra.mrb[0].mxu0 %v3300
      %v3998 = vpop.f32.mrb[0].mxu0
      %v3999 = vadd.f32 0.0, %v3998
      %v4000 = vpop.f32.mrb[0].mxu0
      %v4001 = vpop.f32.mrb[0].mxu0
      %v4002 = vadd.f32 0.0, %v4001
      %v4003 = vpop.f32.mrb[0].mxu0
      %4004 = vmatprep.mubr.bf16.mxu0 %v3446
      %4005 = vmatmul.mubr.bf16.gmra.mrb[0].mxu0 %v3301
      %v4006 = vpop.f32.mrb[0].mxu0
      %v4007 = vadd.f32 0.0, %v4006
      %v4008 = vpop.f32.mrb[0].mxu0
      %v4009 = vpop.f32.mrb[0].mxu0
      %v4010 = vadd.f32 0.0, %v4009
      %v4011 = vpop.f32.mrb[0].mxu0
      %4012 = vmatprep.mubr.bf16.mxu0 %v3458
      %4013 = vmatmul.mubr.bf16.gmra.mrb[0].mxu0 %v3302
      %v4014 = vpop.f32.mrb[0].mxu0
      %v4015 = vadd.f32 0.0, %v4014
      %v4016 = vpop.f32.mrb[0].mxu0
      %v4017 = vpop.f32.mrb[0].mxu0
      %v4018 = vadd.f32 0.0, %v4017
      %v4019 = vpop.f32.mrb[0].mxu0
      %4020 = vmatprep.mubr.bf16.mxu0 %v3470
      %4021 = vmatmul.mubr.bf16.gmra.mrb[0].mxu0 %v3303
      %v4022 = vpop.f32.mrb[0].mxu0
      %v4023 = vadd.f32 0.0, %v4022
      %v4024 = vpop.f32.mrb[0].mxu0
      %v4025 = vpop.f32.mrb[0].mxu0
      %v4026 = vadd.f32 0.0, %v4025
      %v4027 = vpop.f32.mrb[0].mxu0
      %4028 = vmatprep.mubr.bf16.mxu0 %v3482
      %4029 = vmatmul.mubr.bf16.gmra.mrb[0].mxu0 %v3304
      %v4030 = vpop.f32.mrb[0].mxu0
      %v4031 = vadd.f32 0.0, %v4030
      %v4032 = vpop.f32.mrb[0].mxu0
      %v4033 = vpop.f32.mrb[0].mxu0
      %v4034 = vadd.f32 0.0, %v4033
      %v4035 = vpop.f32.mrb[0].mxu0
      %4036 = vmatprep.mubr.bf16.mxu0 %v3494
      %4037 = vmatmul.mubr.bf16.gmra.mrb[0].mxu0 %v3305
      %v4038 = vpop.f32.mrb[0].mxu0
      %v4039 = vadd.f32 0.0, %v4038
      %v4040 = vpop.f32.mrb[0].mxu0
      %v4041 = vpop.f32.mrb[0].mxu0
      %v4042 = vadd.f32 0.0, %v4041
      %v4043 = vpop.f32.mrb[0].mxu0
      %4044 = vmatprep.mubr.bf16.mxu0 %v3506
      %4045 = vmatmul.mubr.bf16.gmra.mrb[0].mxu0 %v3306
      %v4046 = vpop.f32.mrb[0].mxu0
      %v4047 = vadd.f32 0.0, %v4046
      %v4048 = vpop.f32.mrb[0].mxu0
      %v4049 = vpop.f32.mrb[0].mxu0
      %v4050 = vadd.f32 0.0, %v4049
      %v4051 = vpop.f32.mrb[0].mxu0
      %4052 = vmatprep.mubr.bf16.mxu0 %v3518
      %4053 = vmatmul.mubr.bf16.gmra.mrb[0].mxu0 %v3307
      %v4054 = vpop.f32.mrb[0].mxu0
      %v4055 = vadd.f32 0.0, %v4054
      %v4056 = vpop.f32.mrb[0].mxu0
      %v4057 = vpop.f32.mrb[0].mxu0
      %v4058 = vadd.f32 0.0, %v4057
      %v4059 = vpop.f32.mrb[0].mxu0
      %4060 = vmatprep.mubr.bf16.mxu0 %v3530
      %4061 = vmatmul.mubr.bf16.gmra.mrb[0].mxu0 %v3308
      %v4062 = vpop.f32.mrb[0].mxu0
      %v4063 = vadd.f32 0.0, %v4062
      %v4064 = vpop.f32.mrb[0].mxu0
      %v4065 = vpop.f32.mrb[0].mxu0
      %v4066 = vadd.f32 0.0, %v4065
      %v4067 = vpop.f32.mrb[0].mxu0
      %4068 = vmatprep.mubr.bf16.mxu0 %v3542
      %4069 = vmatmul.mubr.bf16.gmra.mrb[0].mxu0 %v3309
      %v4070 = vpop.f32.mrb[0].mxu0
      %v4071 = vadd.f32 0.0, %v4070
      %v4072 = vpop.f32.mrb[0].mxu0
      %v4073 = vpop.f32.mrb[0].mxu0
      %v4074 = vadd.f32 0.0, %v4073
      %v4075 = vpop.f32.mrb[0].mxu0
      %4076 = vmatprep.mubr.bf16.mxu0 %v3554
      %4077 = vmatmul.mubr.bf16.gmra.mrb[0].mxu0 %v3310
      %v4078 = vpop.f32.mrb[0].mxu0
      %v4079 = vadd.f32 0.0, %v4078
      %v4080 = vpop.f32.mrb[0].mxu0
      %v4081 = vpop.f32.mrb[0].mxu0
      %v4082 = vadd.f32 0.0, %v4081
      %v4083 = vpop.f32.mrb[0].mxu0
      %4084 = vmatprep.mubr.bf16.mxu0 %v3566
      %4085 = vmatmul.mubr.bf16.gmra.mrb[0].mxu0 %v3311
      %v4086 = vpop.f32.mrb[0].mxu0
      %v4087 = vadd.f32 0.0, %v4086
      %v4088 = vpop.f32.mrb[0].mxu0
      %v4089 = vpop.f32.mrb[0].mxu0
      %v4090 = vadd.f32 0.0, %v4089
      %v4091 = vpop.f32.mrb[0].mxu0
      %4092 = vmatprep.mubr.bf16.mxu0 %v3578
      %4093 = vmatmul.mubr.bf16.gmra.mrb[0].mxu0 %v3312
      %v4094 = vpop.f32.mrb[0].mxu0
      %v4095 = vadd.f32 0.0, %v4094
      %v4096 = vpop.f32.mrb[0].mxu0
      %v4097 = vpop.f32.mrb[0].mxu0
      %v4098 = vadd.f32 0.0, %v4097
      %v4099 = vpop.f32.mrb[0].mxu0
      %4100 = vmatprep.mubr.bf16.mxu0 %v3590
      %4101 = vmatmul.mubr.bf16.gmra.mrb[0].mxu0 %v3313
      %v4102 = vpop.f32.mrb[0].mxu0
      %v4103 = vadd.f32 0.0, %v4102
      %v4104 = vpop.f32.mrb[0].mxu0
      %v4105 = vpop.f32.mrb[0].mxu0
      %v4106 = vadd.f32 0.0, %v4105
      %v4107 = vpop.f32.mrb[0].mxu0
      %4108 = vmatprep.mubr.bf16.mxu0 %v3602
      %4109 = vmatmul.mubr.bf16.gmra.mrb[0].mxu0 %v3314
      %v4110 = vpop.f32.mrb[0].mxu0
      %v4111 = vadd.f32 0.0, %v4110
      %v4112 = vpop.f32.mrb[0].mxu0
      %v4113 = vpop.f32.mrb[0].mxu0
      %v4114 = vadd.f32 0.0, %v4113
      %v4115 = vpop.f32.mrb[0].mxu0
      %4116 = vdwg.mxu0
      %4117 = vmatprep.subr.bf16.mxu0 0
      %4118 = vmatpush1.bf16.msra.mxu0 %v3908
      %4119 = vmatprep.subr.bf16.mxu0 0
      %4120 = vmatpush1.bf16.msra.mxu0 %v3909
      %4121 = vmatprep.subr.bf16.mxu0 0
      %4122 = vmatpush1.bf16.msra.mxu0 %v3910
      %4123 = vmatprep.subr.bf16.mxu0 0
      %4124 = vmatpush1.bf16.msra.mxu0 %v3911
      %4125 = vmatprep.subr.bf16.mxu0 0
      %4126 = vmatpush1.bf16.msra.mxu0 %v3912
      %4127 = vmatprep.subr.bf16.mxu0 0
      %4128 = vmatpush1.bf16.msra.mxu0 %v3913
      %4129 = vmatprep.subr.bf16.mxu0 0
      %4130 = vmatpush1.bf16.msra.mxu0 %v3914
      %4131 = vmatprep.subr.bf16.mxu0 0
      %4132 = vmatpush1.bf16.msra.mxu0 %v3915
      %4133 = vmatprep.subr.bf16.mxu0 0
      %4134 = vmatpush1.bf16.msra.mxu0 0
      %4135 = vmatprep.subr.bf16.mxu0 0
      %4136 = vmatpush1.bf16.msra.mxu0 0
      %4137 = vmatprep.subr.bf16.mxu0 0
      %4138 = vmatpush1.bf16.msra.mxu0 0
      %4139 = vmatprep.subr.bf16.mxu0 0
      %4140 = vmatpush1.bf16.msra.mxu0 0
      %4141 = vmatprep.subr.bf16.mxu0 0
      %4142 = vmatpush1.bf16.msra.mxu0 0
      %4143 = vmatprep.subr.bf16.mxu0 0
      %4144 = vmatpush1.bf16.msra.mxu0 0
      %4145 = vmatprep.subr.bf16.mxu0 0
      %4146 = vmatpush1.bf16.msra.mxu0 0
      %4147 = vmatprep.subr.bf16.mxu0 0
      %4148 = vmatpush1.bf16.msra.mxu0 0
      %4149 = vmatprep.mubr.bf16.mxu0 0
      %4150 = vmatmul.mubr.bf16.gmra.mrb[0].mxu0 %v3677
      %v4151 = vpop.f32.mrb[0].mxu0
      %v4152 = vadd.f32 %v3975, %v4151
      %v4153 = vpop.f32.mrb[0].mxu0
      %v4154 = vpop.f32.mrb[0].mxu0
      %v4155 = vadd.f32 %v3978, %v4154
      %v4156 = vpop.f32.mrb[0].mxu0
      %4157 = vmatprep.mubr.bf16.mxu0 0
      %4158 = vmatmul.mubr.bf16.gmra.mrb[0].mxu0 %v3680
      %v4159 = vpop.f32.mrb[0].mxu0
      %v4160 = vadd.f32 %v3983, %v4159
      %v4161 = vpop.f32.mrb[0].mxu0
      %v4162 = vpop.f32.mrb[0].mxu0
      %v4163 = vadd.f32 %v3986, %v4162
      %v4164 = vpop.f32.mrb[0].mxu0
      %4165 = vmatprep.mubr.bf16.mxu0 0
      %4166 = vmatmul.mubr.bf16.gmra.mrb[0].mxu0 %v3683
      %v4167 = vpop.f32.mrb[0].mxu0
      %v4168 = vadd.f32 %v3991, %v4167
      %v4169 = vpop.f32.mrb[0].mxu0
      %v4170 = vpop.f32.mrb[0].mxu0
      %v4171 = vadd.f32 %v3994, %v4170
      %v4172 = vpop.f32.mrb[0].mxu0
      %4173 = vmatprep.mubr.bf16.mxu0 0
      %4174 = vmatmul.mubr.bf16.gmra.mrb[0].mxu0 %v3686
      %v4175 = vpop.f32.mrb[0].mxu0
      %v4176 = vadd.f32 %v3999, %v4175
      %v4177 = vpop.f32.mrb[0].mxu0
      %v4178 = vpop.f32.mrb[0].mxu0
      %v4179 = vadd.f32 %v4002, %v4178
      %v4180 = vpop.f32.mrb[0].mxu0
      %4181 = vmatprep.mubr.bf16.mxu0 0
      %4182 = vmatmul.mubr.bf16.gmra.mrb[0].mxu0 %v3689
      %v4183 = vpop.f32.mrb[0].mxu0
      %v4184 = vadd.f32 %v4007, %v4183
      %v4185 = vpop.f32.mrb[0].mxu0
      %v4186 = vpop.f32.mrb[0].mxu0
      %v4187 = vadd.f32 %v4010, %v4186
      %v4188 = vpop.f32.mrb[0].mxu0
      %4189 = vmatprep.mubr.bf16.mxu0 0
      %4190 = vmatmul.mubr.bf16.gmra.mrb[0].mxu0 %v3692
      %v4191 = vpop.f32.mrb[0].mxu0
      %v4192 = vadd.f32 %v4015, %v4191
      %v4193 = vpop.f32.mrb[0].mxu0
      %v4194 = vpop.f32.mrb[0].mxu0
      %v4195 = vadd.f32 %v4018, %v4194
      %v4196 = vpop.f32.mrb[0].mxu0
      %4197 = vmatprep.mubr.bf16.mxu0 0
      %4198 = vmatmul.mubr.bf16.gmra.mrb[0].mxu0 %v3695
      %v4199 = vpop.f32.mrb[0].mxu0
      %v4200 = vadd.f32 %v4023, %v4199
      %v4201 = vpop.f32.mrb[0].mxu0
      %v4202 = vpop.f32.mrb[0].mxu0
      %v4203 = vadd.f32 %v4026, %v4202
      %v4204 = vpop.f32.mrb[0].mxu0
      %4205 = vmatprep.mubr.bf16.mxu0 0
      %4206 = vmatmul.mubr.bf16.gmra.mrb[0].mxu0 %v3698
      %v4207 = vpop.f32.mrb[0].mxu0
      %v4208 = vadd.f32 %v4031, %v4207
      %v4209 = vpop.f32.mrb[0].mxu0
      %v4210 = vpop.f32.mrb[0].mxu0
      %v4211 = vadd.f32 %v4034, %v4210
      %v4212 = vpop.f32.mrb[0].mxu0
      %4213 = vmatprep.mubr.bf16.mxu0 0
      %4214 = vmatmul.mubr.bf16.gmra.mrb[0].mxu0 %v3701
      %v4215 = vpop.f32.mrb[0].mxu0
      %v4216 = vadd.f32 %v4039, %v4215
      %v4217 = vpop.f32.mrb[0].mxu0
      %v4218 = vpop.f32.mrb[0].mxu0
      %v4219 = vadd.f32 %v4042, %v4218
      %v4220 = vpop.f32.mrb[0].mxu0
      %4221 = vmatprep.mubr.bf16.mxu0 0
      %4222 = vmatmul.mubr.bf16.gmra.mrb[0].mxu0 %v3704
      %v4223 = vpop.f32.mrb[0].mxu0
      %v4224 = vadd.f32 %v4047, %v4223
      %v4225 = vpop.f32.mrb[0].mxu0
      %v4226 = vpop.f32.mrb[0].mxu0
      %v4227 = vadd.f32 %v4050, %v4226
      %v4228 = vpop.f32.mrb[0].mxu0
      %4229 = vmatprep.mubr.bf16.mxu0 0
      %4230 = vmatmul.mubr.bf16.gmra.mrb[0].mxu0 %v3707
      %v4231 = vpop.f32.mrb[0].mxu0
      %v4232 = vadd.f32 %v4055, %v4231
      %v4233 = vpop.f32.mrb[0].mxu0
      %v4234 = vpop.f32.mrb[0].mxu0
      %v4235 = vadd.f32 %v4058, %v4234
      %v4236 = vpop.f32.mrb[0].mxu0
      %4237 = vmatprep.mubr.bf16.mxu0 0
      %4238 = vmatmul.mubr.bf16.gmra.mrb[0].mxu0 %v3710
      %v4239 = vpop.f32.mrb[0].mxu0
      %v4240 = vadd.f32 %v4063, %v4239
      %v4241 = vpop.f32.mrb[0].mxu0
      %v4242 = vpop.f32.mrb[0].mxu0
      %v4243 = vadd.f32 %v4066, %v4242
      %v4244 = vpop.f32.mrb[0].mxu0
      %4245 = vmatprep.mubr.bf16.mxu0 0
      %4246 = vmatmul.mubr.bf16.gmra.mrb[0].mxu0 %v3713
      %v4247 = vpop.f32.mrb[0].mxu0
      %v4248 = vadd.f32 %v4071, %v4247
      %v4249 = vpop.f32.mrb[0].mxu0
      %v4250 = vpop.f32.mrb[0].mxu0
      %v4251 = vadd.f32 %v4074, %v4250
      %v4252 = vpop.f32.mrb[0].mxu0
      %4253 = vmatprep.mubr.bf16.mxu0 0
      %4254 = vmatmul.mubr.bf16.gmra.mrb[0].mxu0 %v3716
      %v4255 = vpop.f32.mrb[0].mxu0
      %v4256 = vadd.f32 %v4079, %v4255
      %v4257 = vpop.f32.mrb[0].mxu0
      %v4258 = vpop.f32.mrb[0].mxu0
      %v4259 = vadd.f32 %v4082, %v4258
      %v4260 = vpop.f32.mrb[0].mxu0
      %4261 = vmatprep.mubr.bf16.mxu0 0
      %4262 = vmatmul.mubr.bf16.gmra.mrb[0].mxu0 %v3719
      %v4263 = vpop.f32.mrb[0].mxu0
      %v4264 = vadd.f32 %v4087, %v4263
      %v4265 = vpop.f32.mrb[0].mxu0
      %v4266 = vpop.f32.mrb[0].mxu0
      %v4267 = vadd.f32 %v4090, %v4266
      %v4268 = vpop.f32.mrb[0].mxu0
      %4269 = vmatprep.mubr.bf16.mxu0 0
      %4270 = vmatmul.mubr.bf16.gmra.mrb[0].mxu0 %v3722
      %v4271 = vpop.f32.mrb[0].mxu0
      %v4272 = vadd.f32 %v4095, %v4271
      %v4273 = vpop.f32.mrb[0].mxu0
      %v4274 = vpop.f32.mrb[0].mxu0
      %v4275 = vadd.f32 %v4098, %v4274
      %v4276 = vpop.f32.mrb[0].mxu0
      %4277 = vmatprep.mubr.bf16.mxu0 0
      %4278 = vmatmul.mubr.bf16.gmra.mrb[0].mxu0 %v3725
      %v4279 = vpop.f32.mrb[0].mxu0
      %v4280 = vadd.f32 %v4103, %v4279
      %v4281 = vpop.f32.mrb[0].mxu0
      %v4282 = vpop.f32.mrb[0].mxu0
      %v4283 = vadd.f32 %v4106, %v4282
      %v4284 = vpop.f32.mrb[0].mxu0
      %4285 = vmatprep.mubr.bf16.mxu0 0
      %4286 = vmatmul.mubr.bf16.gmra.mrb[0].mxu0 %v3728
      %v4287 = vpop.f32.mrb[0].mxu0
      %v4288 = vadd.f32 %v4111, %v4287
      %v4289 = vpop.f32.mrb[0].mxu0
      %v4290 = vpop.f32.mrb[0].mxu0
      %v4291 = vadd.f32 %v4114, %v4290
      %v4292 = vpop.f32.mrb[0].mxu0
      %4293 = vdwg.mxu0
      %v4294 = vadd.f32 %v3010, %v4152
      %v4295 = vadd.f32 %v3013, %v4155
      %v4296 = vadd.f32 %v3018, %v4160
      %v4297 = vadd.f32 %v3021, %v4163
      %v4298 = vadd.f32 %v3026, %v4168
      %v4299 = vadd.f32 %v3029, %v4171
      %v4300 = vadd.f32 %v3034, %v4176
      %v4301 = vadd.f32 %v3037, %v4179
      %v4302 = vadd.f32 %v3042, %v4184
      %v4303 = vadd.f32 %v3045, %v4187
      %v4304 = vadd.f32 %v3050, %v4192
      %v4305 = vadd.f32 %v3053, %v4195
      %v4306 = vadd.f32 %v3058, %v4200
      %v4307 = vadd.f32 %v3061, %v4203
      %v4308 = vadd.f32 %v3066, %v4208
      %v4309 = vadd.f32 %v3069, %v4211
      %v4310 = vadd.f32 %v3074, %v4216
      %v4311 = vadd.f32 %v3077, %v4219
      %v4312 = vadd.f32 %v3082, %v4224
      %v4313 = vadd.f32 %v3085, %v4227
      %v4314 = vadd.f32 %v3090, %v4232
      %v4315 = vadd.f32 %v3093, %v4235
      %v4316 = vadd.f32 %v3098, %v4240
      %v4317 = vadd.f32 %v3101, %v4243
      %v4318 = vadd.f32 %v3106, %v4248
      %v4319 = vadd.f32 %v3109, %v4251
      %v4320 = vadd.f32 %v3114, %v4256
      %v4321 = vadd.f32 %v3117, %v4259
      %v4322 = vadd.f32 %v3122, %v4264
      %v4323 = vadd.f32 %v3125, %v4267
      %v4324 = vadd.f32 %v3130, %v4272
      %v4325 = vadd.f32 %v3133, %v4275
      %v4326 = vadd.f32 %v3138, %v4280
      %v4327 = vadd.f32 %v3141, %v4283
      %v4328 = vadd.f32 %v3146, %v4288
      %v4329 = vadd.f32 %v3149, %v4291
      %v4330 = vld [vmem:[%s2] sm:$0x1]
      %v4332 = vlaneseq
      %v4333 = vshrl.u32 %v4332, 7
      %v4334 = vsub.s32 0, %v4333
      %v4335 = vrot.slane %v4330, %v4334
      %v4337 = vadd.f32 %v4294, %v4335
      %v4338 = vadd.f32 %v4295, %v4335
      %v4339 = vadd.f32 %v4296, %v4335
      %v4340 = vadd.f32 %v4297, %v4335
      %v4341 = vadd.f32 %v4298, %v4335
      %v4342 = vadd.f32 %v4299, %v4335
      %v4343 = vadd.f32 %v4300, %v4335
      %v4344 = vadd.f32 %v4301, %v4335
      %v4345 = vadd.f32 %v4302, %v4335
      %v4346 = vadd.f32 %v4303, %v4335
      %v4347 = vadd.f32 %v4304, %v4335
      %v4348 = vadd.f32 %v4305, %v4335
      %v4349 = vadd.f32 %v4306, %v4335
      %v4350 = vadd.f32 %v4307, %v4335
      %v4351 = vadd.f32 %v4308, %v4335
      %v4352 = vadd.f32 %v4309, %v4335
      %v4353 = vadd.f32 %v4310, %v4335
      %v4354 = vadd.f32 %v4311, %v4335
      %v4355 = vadd.f32 %v4312, %v4335
      %v4356 = vadd.f32 %v4313, %v4335
      %v4357 = vadd.f32 %v4314, %v4335
      %v4358 = vadd.f32 %v4315, %v4335
      %v4359 = vadd.f32 %v4316, %v4335
      %v4360 = vadd.f32 %v4317, %v4335
      %v4361 = vadd.f32 %v4318, %v4335
      %v4362 = vadd.f32 %v4319, %v4335
      %v4363 = vadd.f32 %v4320, %v4335
      %v4364 = vadd.f32 %v4321, %v4335
      %v4365 = vadd.f32 %v4322, %v4335
      %v4366 = vadd.f32 %v4323, %v4335
      %v4367 = vadd.f32 %v4324, %v4335
      %v4368 = vadd.f32 %v4325, %v4335
      %v4369 = vadd.f32 %v4326, %v4335
      %v4370 = vadd.f32 %v4327, %v4335
      %v4371 = vadd.f32 %v4328, %v4335
      %v4372 = vadd.f32 %v4329, %v4335
      %v4373 = vmax.f32 %v4337, 0.0
      %v4374 = vmax.f32 %v4338, 0.0
      %v4375 = vmax.f32 %v4339, 0.0
      %v4376 = vmax.f32 %v4340, 0.0
      %v4377 = vmax.f32 %v4341, 0.0
      %v4378 = vmax.f32 %v4342, 0.0
      %v4379 = vmax.f32 %v4343, 0.0
      %v4380 = vmax.f32 %v4344, 0.0
      %v4381 = vmax.f32 %v4345, 0.0
      %v4382 = vmax.f32 %v4346, 0.0
      %v4383 = vmax.f32 %v4347, 0.0
      %v4384 = vmax.f32 %v4348, 0.0
      %v4385 = vmax.f32 %v4349, 0.0
      %v4386 = vmax.f32 %v4350, 0.0
      %v4387 = vmax.f32 %v4351, 0.0
      %v4388 = vmax.f32 %v4352, 0.0
      %v4389 = vmax.f32 %v4353, 0.0
      %v4390 = vmax.f32 %v4354, 0.0
      %v4391 = vmax.f32 %v4355, 0.0
      %v4392 = vmax.f32 %v4356, 0.0
      %v4393 = vmax.f32 %v4357, 0.0
      %v4394 = vmax.f32 %v4358, 0.0
      %v4395 = vmax.f32 %v4359, 0.0
      %v4396 = vmax.f32 %v4360, 0.0
      %v4397 = vmax.f32 %v4361, 0.0
      %v4398 = vmax.f32 %v4362, 0.0
      %v4399 = vmax.f32 %v4363, 0.0
      %v4400 = vmax.f32 %v4364, 0.0
      %v4401 = vmax.f32 %v4365, 0.0
      %v4402 = vmax.f32 %v4366, 0.0
      %v4403 = vmax.f32 %v4367, 0.0
      %v4404 = vmax.f32 %v4368, 0.0
      %v4405 = vmax.f32 %v4369, 0.0
      %v4406 = vmax.f32 %v4370, 0.0
      %v4407 = vmax.f32 %v4371, 0.0
      %v4408 = vmax.f32 %v4372, 0.0
      %v4409 = vpack.c.bf16 %v4374, %v4373
      %v4410 = vpack.c.bf16 %v4376, %v4375
      %v4411 = vpack.c.bf16 %v4378, %v4377
      %v4412 = vpack.c.bf16 %v4380, %v4379
      %v4413 = vpack.c.bf16 %v4382, %v4381
      %v4414 = vpack.c.bf16 %v4384, %v4383
      %v4415 = vpack.c.bf16 %v4386, %v4385
      %v4416 = vpack.c.bf16 %v4388, %v4387
      %v4417 = vpack.c.bf16 %v4390, %v4389
      %v4418 = vpack.c.bf16 %v4392, %v4391
      %v4419 = vpack.c.bf16 %v4394, %v4393
      %v4420 = vpack.c.bf16 %v4396, %v4395
      %v4421 = vpack.c.bf16 %v4398, %v4397
      %v4422 = vpack.c.bf16 %v4400, %v4399
      %v4423 = vpack.c.bf16 %v4402, %v4401
      %v4424 = vpack.c.bf16 %v4404, %v4403
      %v4425 = vpack.c.bf16 %v4406, %v4405
      %v4426 = vpack.c.bf16 %v4408, %v4407
      %v4445 = vunpack.c.l.b16 %v4409
      %v4446 = vunpack.c.h.b16 %v4409
      %v4447 = vunpack.c.l.b16 %v4410
      %v4448 = vunpack.c.h.b16 %v4410
      %v4449 = vunpack.c.l.b16 %v4411
      %v4450 = vunpack.c.h.b16 %v4411
      %v4451 = vunpack.c.l.b16 %v4412
      %v4452 = vunpack.c.h.b16 %v4412
      %v4453 = vunpack.c.l.b16 %v4413
      %v4454 = vunpack.c.h.b16 %v4413
      %v4455 = vunpack.c.l.b16 %v4414
      %v4456 = vunpack.c.h.b16 %v4414
      %v4457 = vunpack.c.l.b16 %v4415
      %v4458 = vunpack.c.h.b16 %v4415
      %v4459 = vunpack.c.l.b16 %v4416
      %v4460 = vunpack.c.h.b16 %v4416
      %v4461 = vunpack.c.l.b16 %v4417
      %v4462 = vunpack.c.h.b16 %v4417
      %v4463 = vunpack.c.l.b16 %v4418
      %v4464 = vunpack.c.h.b16 %v4418
      %v4465 = vunpack.c.l.b16 %v4419
      %v4466 = vunpack.c.h.b16 %v4419
      %v4467 = vunpack.c.l.b16 %v4420
      %v4468 = vunpack.c.h.b16 %v4420
      %v4469 = vunpack.c.l.b16 %v4421
      %v4470 = vunpack.c.h.b16 %v4421
      %v4471 = vunpack.c.l.b16 %v4422
      %v4472 = vunpack.c.h.b16 %v4422
      %v4473 = vunpack.c.l.b16 %v4423
      %v4474 = vunpack.c.h.b16 %v4423
      %v4475 = vunpack.c.l.b16 %v4424
      %v4476 = vunpack.c.h.b16 %v4424
      %v4477 = vunpack.c.l.b16 %v4425
      %v4478 = vunpack.c.h.b16 %v4425
      %v4479 = vunpack.c.l.b16 %v4426
      %v4480 = vunpack.c.h.b16 %v4426
      %v4481 = vpack.c.b16 %v4445, %v4445
      %v4482 = vpack.c.b16 %v4446, %v4446
      %v4483 = vpack.c.b16 %v4447, %v4447
      %v4484 = vpack.c.b16 %v4448, %v4448
      %v4485 = vpack.c.b16 %v4449, %v4449
      %v4486 = vpack.c.b16 %v4450, %v4450
      %v4487 = vpack.c.b16 %v4451, %v4451
      %v4488 = vpack.c.b16 %v4452, %v4452
      %v4489 = vpack.c.b16 %v4453, %v4453
      %v4490 = vpack.c.b16 %v4454, %v4454
      %v4491 = vpack.c.b16 %v4455, %v4455
      %v4492 = vpack.c.b16 %v4456, %v4456
      %v4493 = vpack.c.b16 %v4457, %v4457
      %v4494 = vpack.c.b16 %v4458, %v4458
      %v4495 = vpack.c.b16 %v4459, %v4459
      %v4496 = vpack.c.b16 %v4460, %v4460
      %v4497 = vpack.c.b16 %v4461, %v4461
      %v4498 = vpack.c.b16 %v4462, %v4462
      %v4499 = vpack.c.b16 %v4463, %v4463
      %v4500 = vpack.c.b16 %v4464, %v4464
      %v4501 = vpack.c.b16 %v4465, %v4465
      %v4502 = vpack.c.b16 %v4466, %v4466
      %v4503 = vpack.c.b16 %v4467, %v4467
      %v4504 = vpack.c.b16 %v4468, %v4468
      %v4505 = vpack.c.b16 %v4469, %v4469
      %v4506 = vpack.c.b16 %v4470, %v4470
      %v4507 = vpack.c.b16 %v4471, %v4471
      %v4508 = vpack.c.b16 %v4472, %v4472
      %v4509 = vpack.c.b16 %v4473, %v4473
      %v4510 = vpack.c.b16 %v4474, %v4474
      %v4511 = vpack.c.b16 %v4475, %v4475
      %v4512 = vpack.c.b16 %v4476, %v4476
      %v4513 = vpack.c.b16 %v4477, %v4477
      %v4514 = vpack.c.b16 %v4478, %v4478
      %v4515 = vpack.c.b16 %v4479, %v4479
      %v4516 = vpack.c.b16 %v4480, %v4480
      %vm4517 = vsmask.f32 4368
      %vm4518 = vmor %vm371, %vm4517
      %v4520 = vshrl.u32 %v4481, 16
      %v4522 = vrot.slane %v4520, 7
      %v4523 = vshll.u32 %v4481, 16
      %v4525 = vor.u32 %v4522, %v4523
      %v4526 = vrot.slane %v4522, 4
      %v4528 = vshrl.u32 %v4482, 16
      %v4530 = vrot.slane %v4528, 7
      %v4531 = vshll.u32 %v4482, 16
      %v4533 = vor.u32 %v4530, %v4531
      %v4534 = vsel %vm4518, %v4526, %v4533
      %v4535 = vrot.slane %v4530, 4
      %v4537 = vshrl.u32 %v4483, 16
      %v4539 = vrot.slane %v4537, 7
      %v4540 = vshll.u32 %v4483, 16
      %v4542 = vor.u32 %v4539, %v4540
      %v4543 = vrot.slane %v4539, 4
      %v4545 = vshrl.u32 %v4484, 16
      %v4547 = vrot.slane %v4545, 7
      %v4548 = vshll.u32 %v4484, 16
      %v4550 = vor.u32 %v4547, %v4548
      %v4551 = vsel %vm4518, %v4543, %v4550
      %v4552 = vrot.slane %v4547, 4
      %v4554 = vshrl.u32 %v4485, 16
      %v4556 = vrot.slane %v4554, 7
      %v4557 = vshll.u32 %v4485, 16
      %v4559 = vor.u32 %v4556, %v4557
      %v4560 = vrot.slane %v4556, 4
      %v4562 = vshrl.u32 %v4486, 16
      %v4564 = vrot.slane %v4562, 7
      %v4565 = vshll.u32 %v4486, 16
      %v4567 = vor.u32 %v4564, %v4565
      %v4568 = vsel %vm4518, %v4560, %v4567
      %v4569 = vrot.slane %v4564, 4
      %v4571 = vshrl.u32 %v4487, 16
      %v4573 = vrot.slane %v4571, 7
      %v4574 = vshll.u32 %v4487, 16
      %v4576 = vor.u32 %v4573, %v4574
      %v4577 = vrot.slane %v4573, 4
      %v4579 = vshrl.u32 %v4488, 16
      %v4581 = vrot.slane %v4579, 7
      %v4582 = vshll.u32 %v4488, 16
      %v4584 = vor.u32 %v4581, %v4582
      %v4585 = vsel %vm4518, %v4577, %v4584
      %v4586 = vrot.slane %v4581, 4
      %v4588 = vshrl.u32 %v4489, 16
      %v4590 = vrot.slane %v4588, 7
      %v4591 = vshll.u32 %v4489, 16
      %v4593 = vor.u32 %v4590, %v4591
      %v4594 = vrot.slane %v4590, 4
      %v4596 = vshrl.u32 %v4490, 16
      %v4598 = vrot.slane %v4596, 7
      %v4599 = vshll.u32 %v4490, 16
      %v4601 = vor.u32 %v4598, %v4599
      %v4602 = vsel %vm4518, %v4594, %v4601
      %v4603 = vrot.slane %v4598, 4
      %v4605 = vshrl.u32 %v4491, 16
      %v4607 = vrot.slane %v4605, 7
      %v4608 = vshll.u32 %v4491, 16
      %v4610 = vor.u32 %v4607, %v4608
      %v4611 = vrot.slane %v4607, 4
      %v4613 = vshrl.u32 %v4492, 16
      %v4615 = vrot.slane %v4613, 7
      %v4616 = vshll.u32 %v4492, 16
      %v4618 = vor.u32 %v4615, %v4616
      %v4619 = vsel %vm4518, %v4611, %v4618
      %v4620 = vrot.slane %v4615, 4
      %v4622 = vshrl.u32 %v4493, 16
      %v4624 = vrot.slane %v4622, 7
      %v4625 = vshll.u32 %v4493, 16
      %v4627 = vor.u32 %v4624, %v4625
      %v4628 = vrot.slane %v4624, 4
      %v4630 = vshrl.u32 %v4494, 16
      %v4632 = vrot.slane %v4630, 7
      %v4633 = vshll.u32 %v4494, 16
      %v4635 = vor.u32 %v4632, %v4633
      %v4636 = vsel %vm4518, %v4628, %v4635
      %v4637 = vrot.slane %v4632, 4
      %v4639 = vshrl.u32 %v4495, 16
      %v4641 = vrot.slane %v4639, 7
      %v4642 = vshll.u32 %v4495, 16
      %v4644 = vor.u32 %v4641, %v4642
      %v4645 = vrot.slane %v4641, 4
      %v4647 = vshrl.u32 %v4496, 16
      %v4649 = vrot.slane %v4647, 7
      %v4650 = vshll.u32 %v4496, 16
      %v4652 = vor.u32 %v4649, %v4650
      %v4653 = vsel %vm4518, %v4645, %v4652
      %v4654 = vrot.slane %v4649, 4
      %v4656 = vshrl.u32 %v4497, 16
      %v4658 = vrot.slane %v4656, 7
      %v4659 = vshll.u32 %v4497, 16
      %v4661 = vor.u32 %v4658, %v4659
      %v4662 = vrot.slane %v4658, 4
      %v4664 = vshrl.u32 %v4498, 16
      %v4666 = vrot.slane %v4664, 7
      %v4667 = vshll.u32 %v4498, 16
      %v4669 = vor.u32 %v4666, %v4667
      %v4670 = vsel %vm4518, %v4662, %v4669
      %v4671 = vrot.slane %v4666, 4
      %v4673 = vshrl.u32 %v4499, 16
      %v4675 = vrot.slane %v4673, 7
      %v4676 = vshll.u32 %v4499, 16
      %v4678 = vor.u32 %v4675, %v4676
      %v4679 = vrot.slane %v4675, 4
      %v4681 = vshrl.u32 %v4500, 16
      %v4683 = vrot.slane %v4681, 7
      %v4684 = vshll.u32 %v4500, 16
      %v4686 = vor.u32 %v4683, %v4684
      %v4687 = vsel %vm4518, %v4679, %v4686
      %v4688 = vrot.slane %v4683, 4
      %v4690 = vshrl.u32 %v4501, 16
      %v4692 = vrot.slane %v4690, 7
      %v4693 = vshll.u32 %v4501, 16
      %v4695 = vor.u32 %v4692, %v4693
      %v4696 = vrot.slane %v4692, 4
      %v4698 = vshrl.u32 %v4502, 16
      %v4700 = vrot.slane %v4698, 7
      %v4701 = vshll.u32 %v4502, 16
      %v4703 = vor.u32 %v4700, %v4701
      %v4704 = vsel %vm4518, %v4696, %v4703
      %v4705 = vrot.slane %v4700, 4
      %v4707 = vshrl.u32 %v4503, 16
      %v4709 = vrot.slane %v4707, 7
      %v4710 = vshll.u32 %v4503, 16
      %v4712 = vor.u32 %v4709, %v4710
      %v4713 = vrot.slane %v4709, 4
      %v4715 = vshrl.u32 %v4504, 16
      %v4717 = vrot.slane %v4715, 7
      %v4718 = vshll.u32 %v4504, 16
      %v4720 = vor.u32 %v4717, %v4718
      %v4721 = vsel %vm4518, %v4713, %v4720
      %v4722 = vrot.slane %v4717, 4
      %v4724 = vshrl.u32 %v4505, 16
      %v4726 = vrot.slane %v4724, 7
      %v4727 = vshll.u32 %v4505, 16
      %v4729 = vor.u32 %v4726, %v4727
      %v4730 = vrot.slane %v4726, 4
      %v4732 = vshrl.u32 %v4506, 16
      %v4734 = vrot.slane %v4732, 7
      %v4735 = vshll.u32 %v4506, 16
      %v4737 = vor.u32 %v4734, %v4735
      %v4738 = vsel %vm4518, %v4730, %v4737
      %v4739 = vrot.slane %v4734, 4
      %v4741 = vshrl.u32 %v4507, 16
      %v4743 = vrot.slane %v4741, 7
      %v4744 = vshll.u32 %v4507, 16
      %v4746 = vor.u32 %v4743, %v4744
      %v4747 = vrot.slane %v4743, 4
      %v4749 = vshrl.u32 %v4508, 16
      %v4751 = vrot.slane %v4749, 7
      %v4752 = vshll.u32 %v4508, 16
      %v4754 = vor.u32 %v4751, %v4752
      %v4755 = vsel %vm4518, %v4747, %v4754
      %v4756 = vrot.slane %v4751, 4
      %v4758 = vshrl.u32 %v4509, 16
      %v4760 = vrot.slane %v4758, 7
      %v4761 = vshll.u32 %v4509, 16
      %v4763 = vor.u32 %v4760, %v4761
      %v4764 = vrot.slane %v4760, 4
      %v4766 = vshrl.u32 %v4510, 16
      %v4768 = vrot.slane %v4766, 7
      %v4769 = vshll.u32 %v4510, 16
      %v4771 = vor.u32 %v4768, %v4769
      %v4772 = vsel %vm4518, %v4764, %v4771
      %v4773 = vrot.slane %v4768, 4
      %v4775 = vshrl.u32 %v4511, 16
      %v4777 = vrot.slane %v4775, 7
      %v4778 = vshll.u32 %v4511, 16
      %v4780 = vor.u32 %v4777, %v4778
      %v4781 = vrot.slane %v4777, 4
      %v4783 = vshrl.u32 %v4512, 16
      %v4785 = vrot.slane %v4783, 7
      %v4786 = vshll.u32 %v4512, 16
      %v4788 = vor.u32 %v4785, %v4786
      %v4789 = vsel %vm4518, %v4781, %v4788
      %v4790 = vrot.slane %v4785, 4
      %v4792 = vshrl.u32 %v4513, 16
      %v4794 = vrot.slane %v4792, 7
      %v4795 = vshll.u32 %v4513, 16
      %v4797 = vor.u32 %v4794, %v4795
      %v4798 = vrot.slane %v4794, 4
      %v4800 = vshrl.u32 %v4514, 16
      %v4802 = vrot.slane %v4800, 7
      %v4803 = vshll.u32 %v4514, 16
      %v4805 = vor.u32 %v4802, %v4803
      %v4806 = vsel %vm4518, %v4798, %v4805
      %v4807 = vrot.slane %v4802, 4
      %v4809 = vshrl.u32 %v4515, 16
      %v4811 = vrot.slane %v4809, 7
      %v4812 = vshll.u32 %v4515, 16
      %v4814 = vor.u32 %v4811, %v4812
      %v4815 = vrot.slane %v4811, 4
      %v4817 = vshrl.u32 %v4516, 16
      %v4819 = vrot.slane %v4817, 7
      %v4820 = vshll.u32 %v4516, 16
      %v4822 = vor.u32 %v4819, %v4820
      %v4823 = vsel %vm4518, %v4815, %v4822
      %v4824 = vrot.slane %v4819, 4
      %v4879 = vld [vmem:[#allocation4] sm:$0xf]
      %v4880 = vsel %vm429, %v4525, %v4879
      %4881 = vst [vmem:[#allocation4] sm:$0xf] %v4880
      %4882 = vst [vmem:[#allocation4 + $0x4] sm:$0xf] %v4534
      %v4883 = vld [vmem:[#allocation4 + $0x8] sm:$0x1]
      %v4884 = vsel %vm372, %v4535, %v4883
      %4885 = vst [vmem:[#allocation4 + $0x8] sm:$0x1] %v4884
      %v4886 = vld [vmem:[#allocation4 + $0xc] sm:$0xf]
      %v4887 = vsel %vm429, %v4542, %v4886
      %4888 = vst [vmem:[#allocation4 + $0xc] sm:$0xf] %v4887
      %4889 = vst [vmem:[#allocation4 + $0x10] sm:$0xf] %v4551
      %v4890 = vld [vmem:[#allocation4 + $0x14] sm:$0x1]
      %v4891 = vsel %vm372, %v4552, %v4890
      %4892 = vst [vmem:[#allocation4 + $0x14] sm:$0x1] %v4891
      %v4893 = vld [vmem:[#allocation4 + $0x18] sm:$0xf]
      %v4894 = vsel %vm429, %v4559, %v4893
      %4895 = vst [vmem:[#allocation4 + $0x18] sm:$0xf] %v4894
      %4896 = vst [vmem:[#allocation4 + $0x1c] sm:$0xf] %v4568
      %v4897 = vld [vmem:[#allocation4 + $0x20] sm:$0x1]
      %v4898 = vsel %vm372, %v4569, %v4897
      %4899 = vst [vmem:[#allocation4 + $0x20] sm:$0x1] %v4898
      %v4900 = vld [vmem:[#allocation4 + $0x24] sm:$0xf]
      %v4901 = vsel %vm429, %v4576, %v4900
      %4902 = vst [vmem:[#allocation4 + $0x24] sm:$0xf] %v4901
      %4903 = vst [vmem:[#allocation4 + $0x28] sm:$0xf] %v4585
      %v4904 = vld [vmem:[#allocation4 + $0x2c] sm:$0x1]
      %v4905 = vsel %vm372, %v4586, %v4904
      %4906 = vst [vmem:[#allocation4 + $0x2c] sm:$0x1] %v4905
      %v4907 = vld [vmem:[#allocation4 + $0x30] sm:$0xf]
      %v4908 = vsel %vm429, %v4593, %v4907
      %4909 = vst [vmem:[#allocation4 + $0x30] sm:$0xf] %v4908
      %4910 = vst [vmem:[#allocation4 + $0x34] sm:$0xf] %v4602
      %v4911 = vld [vmem:[#allocation4 + $0x38] sm:$0x1]
      %v4912 = vsel %vm372, %v4603, %v4911
      %4913 = vst [vmem:[#allocation4 + $0x38] sm:$0x1] %v4912
      %v4914 = vld [vmem:[#allocation4 + $0x3c] sm:$0xf]
      %v4915 = vsel %vm429, %v4610, %v4914
      %4916 = vst [vmem:[#allocation4 + $0x3c] sm:$0xf] %v4915
      %4917 = vst [vmem:[#allocation4 + $0x40] sm:$0xf] %v4619
      %v4918 = vld [vmem:[#allocation4 + $0x44] sm:$0x1]
      %v4919 = vsel %vm372, %v4620, %v4918
      %4920 = vst [vmem:[#allocation4 + $0x44] sm:$0x1] %v4919
      %v4921 = vld [vmem:[#allocation4 + $0x48] sm:$0xf]
      %v4922 = vsel %vm429, %v4627, %v4921
      %4923 = vst [vmem:[#allocation4 + $0x48] sm:$0xf] %v4922
      %4924 = vst [vmem:[#allocation4 + $0x4c] sm:$0xf] %v4636
      %v4925 = vld [vmem:[#allocation4 + $0x50] sm:$0x1]
      %v4926 = vsel %vm372, %v4637, %v4925
      %4927 = vst [vmem:[#allocation4 + $0x50] sm:$0x1] %v4926
      %v4928 = vld [vmem:[#allocation4 + $0x54] sm:$0xf]
      %v4929 = vsel %vm429, %v4644, %v4928
      %4930 = vst [vmem:[#allocation4 + $0x54] sm:$0xf] %v4929
      %4931 = vst [vmem:[#allocation4 + $0x58] sm:$0xf] %v4653
      %v4932 = vld [vmem:[#allocation4 + $0x5c] sm:$0x1]
      %v4933 = vsel %vm372, %v4654, %v4932
      %4934 = vst [vmem:[#allocation4 + $0x5c] sm:$0x1] %v4933
      %v4935 = vld [vmem:[#allocation4 + $0x60] sm:$0xf]
      %v4936 = vsel %vm429, %v4661, %v4935
      %4937 = vst [vmem:[#allocation4 + $0x60] sm:$0xf] %v4936
      %4938 = vst [vmem:[#allocation4 + $0x64] sm:$0xf] %v4670
      %v4939 = vld [vmem:[#allocation4 + $0x68] sm:$0x1]
      %v4940 = vsel %vm372, %v4671, %v4939
      %4941 = vst [vmem:[#allocation4 + $0x68] sm:$0x1] %v4940
      %v4942 = vld [vmem:[#allocation4 + $0x6c] sm:$0xf]
      %v4943 = vsel %vm429, %v4678, %v4942
      %4944 = vst [vmem:[#allocation4 + $0x6c] sm:$0xf] %v4943
      %4945 = vst [vmem:[#allocation4 + $0x70] sm:$0xf] %v4687
      %v4946 = vld [vmem:[#allocation4 + $0x74] sm:$0x1]
      %v4947 = vsel %vm372, %v4688, %v4946
      %4948 = vst [vmem:[#allocation4 + $0x74] sm:$0x1] %v4947
      %v4949 = vld [vmem:[#allocation4 + $0x78] sm:$0xf]
      %v4950 = vsel %vm429, %v4695, %v4949
      %4951 = vst [vmem:[#allocation4 + $0x78] sm:$0xf] %v4950
      %4952 = vst [vmem:[#allocation4 + $0x7c] sm:$0xf] %v4704
      %v4953 = vld [vmem:[#allocation4 + $0x80] sm:$0x1]
      %v4954 = vsel %vm372, %v4705, %v4953
      %4955 = vst [vmem:[#allocation4 + $0x80] sm:$0x1] %v4954
      %v4956 = vld [vmem:[#allocation4 + $0x84] sm:$0xf]
      %v4957 = vsel %vm429, %v4712, %v4956
      %4958 = vst [vmem:[#allocation4 + $0x84] sm:$0xf] %v4957
      %4959 = vst [vmem:[#allocation4 + $0x88] sm:$0xf] %v4721
      %v4960 = vld [vmem:[#allocation4 + $0x8c] sm:$0x1]
      %v4961 = vsel %vm372, %v4722, %v4960
      %4962 = vst [vmem:[#allocation4 + $0x8c] sm:$0x1] %v4961
      %v4963 = vld [vmem:[#allocation4 + $0x90] sm:$0xf]
      %v4964 = vsel %vm429, %v4729, %v4963
      %4965 = vst [vmem:[#allocation4 + $0x90] sm:$0xf] %v4964
      %4966 = vst [vmem:[#allocation4 + $0x94] sm:$0xf] %v4738
      %v4967 = vld [vmem:[#allocation4 + $0x98] sm:$0x1]
      %v4968 = vsel %vm372, %v4739, %v4967
      %4969 = vst [vmem:[#allocation4 + $0x98] sm:$0x1] %v4968
      %v4970 = vld [vmem:[#allocation4 + $0x9c] sm:$0xf]
      %v4971 = vsel %vm429, %v4746, %v4970
      %4972 = vst [vmem:[#allocation4 + $0x9c] sm:$0xf] %v4971
      %4973 = vst [vmem:[#allocation4 + $0xa0] sm:$0xf] %v4755
      %v4974 = vld [vmem:[#allocation4 + $0xa4] sm:$0x1]
      %v4975 = vsel %vm372, %v4756, %v4974
      %4976 = vst [vmem:[#allocation4 + $0xa4] sm:$0x1] %v4975
      %v4977 = vld [vmem:[#allocation4 + $0xa8] sm:$0xf]
      %v4978 = vsel %vm429, %v4763, %v4977
      %4979 = vst [vmem:[#allocation4 + $0xa8] sm:$0xf] %v4978
      %4980 = vst [vmem:[#allocation4 + $0xac] sm:$0xf] %v4772
      %v4981 = vld [vmem:[#allocation4 + $0xb0] sm:$0x1]
      %v4982 = vsel %vm372, %v4773, %v4981
      %4983 = vst [vmem:[#allocation4 + $0xb0] sm:$0x1] %v4982
      %v4984 = vld [vmem:[#allocation4 + $0xb4] sm:$0xf]
      %v4985 = vsel %vm429, %v4780, %v4984
      %4986 = vst [vmem:[#allocation4 + $0xb4] sm:$0xf] %v4985
      %4987 = vst [vmem:[#allocation4 + $0xb8] sm:$0xf] %v4789
      %v4988 = vld [vmem:[#allocation4 + $0xbc] sm:$0x1]
      %v4989 = vsel %vm372, %v4790, %v4988
      %4990 = vst [vmem:[#allocation4 + $0xbc] sm:$0x1] %v4989
      %v4991 = vld [vmem:[#allocation4 + $0xc0] sm:$0xf]
      %v4992 = vsel %vm429, %v4797, %v4991
      %4993 = vst [vmem:[#allocation4 + $0xc0] sm:$0xf] %v4992
      %4994 = vst [vmem:[#allocation4 + $0xc4] sm:$0xf] %v4806
      %v4995 = vld [vmem:[#allocation4 + $0xc8] sm:$0x1]
      %v4996 = vsel %vm372, %v4807, %v4995
      %4997 = vst [vmem:[#allocation4 + $0xc8] sm:$0x1] %v4996
      %v4998 = vld [vmem:[#allocation4 + $0xcc] sm:$0xf]
      %v4999 = vsel %vm429, %v4814, %v4998
      %5000 = vst [vmem:[#allocation4 + $0xcc] sm:$0xf] %v4999
      %5001 = vst [vmem:[#allocation4 + $0xd0] sm:$0xf] %v4823
      %v5002 = vld [vmem:[#allocation4 + $0xd4] sm:$0x1]
      %v5003 = vsel %vm372, %v4824, %v5002
      %5004 = vst [vmem:[#allocation4 + $0xd4] sm:$0x1] %v5003
      %p5005 = scmp.eq.s32.totalorder %s21, 0
      // Predicated region
      $region71: #{basic_block_forward.1} parent=35 // pred_check
        %p5006 = pneg %p5005
      $region72: #{basic_block_forward.1} parent=35 // pred_check_branch
        %5008 = sbr.rel (%p5006) target = $region74
      $region73: #{basic_block_forward.1} parent=35 // pred_region
        %5009 = vst [vmem:[#allocation4] sm:$0xf] 0
        %5010 = vst [vmem:[#allocation4 + $0x4] sm:$0xf] 0
        %5011 = vst [vmem:[#allocation4 + $0x8] sm:$0xf] 0
        %s5012 = scalar_lea.vmem [#allocation4], 204
        %5013 = vst [vmem:[%s5012] sm:$0xf] 0
        %5014 = vst [vmem:[%s5012 + $0x4] sm:$0xf] 0
        %5015 = vst [vmem:[%s5012 + $0x8] sm:$0xf] 0
      $region74: #{basic_block_forward.1} parent=35 // pred_fallthru
        _
      %v5016 = vld [vmem:[#allocation4] sm:$0xf]
      %v5017 = vld [vmem:[#allocation4 + $0x4] sm:$0xf]
      %v5018 = vld [vmem:[#allocation4 + $0xc] sm:$0xf]
      %v5019 = vld [vmem:[#allocation4 + $0x10] sm:$0xf]
      %v5020 = vld [vmem:[#allocation4 + $0x18] sm:$0xf]
      %v5021 = vld [vmem:[#allocation4 + $0x1c] sm:$0xf]
      %v5022 = vld [vmem:[#allocation4 + $0x24] sm:$0xf]
      %v5023 = vld [vmem:[#allocation4 + $0x28] sm:$0xf]
      %v5024 = vld [vmem:[#allocation4 + $0x30] sm:$0xf]
      %v5025 = vld [vmem:[#allocation4 + $0x34] sm:$0xf]
      %v5026 = vld [vmem:[#allocation4 + $0x3c] sm:$0xf]
      %v5027 = vld [vmem:[#allocation4 + $0x40] sm:$0xf]
      %v5028 = vld [vmem:[#allocation4 + $0x48] sm:$0xf]
      %v5029 = vld [vmem:[#allocation4 + $0x4c] sm:$0xf]
      %v5030 = vld [vmem:[#allocation4 + $0x54] sm:$0xf]
      %v5031 = vld [vmem:[#allocation4 + $0x58] sm:$0xf]
      %v5032 = vld [vmem:[#allocation4 + $0x60] sm:$0xf]
      %v5033 = vld [vmem:[#allocation4 + $0x64] sm:$0xf]
      %v5034 = vld [vmem:[#allocation4 + $0x6c] sm:$0xf]
      %v5035 = vld [vmem:[#allocation4 + $0x70] sm:$0xf]
      %v5036 = vld [vmem:[#allocation4 + $0x78] sm:$0xf]
      %v5037 = vld [vmem:[#allocation4 + $0x7c] sm:$0xf]
      %v5038 = vld [vmem:[#allocation4 + $0x84] sm:$0xf]
      %v5039 = vld [vmem:[#allocation4 + $0x88] sm:$0xf]
      %v5040 = vld [vmem:[#allocation4 + $0x90] sm:$0xf]
      %v5041 = vld [vmem:[#allocation4 + $0x94] sm:$0xf]
      %v5042 = vld [vmem:[#allocation4 + $0x9c] sm:$0xf]
      %v5043 = vld [vmem:[#allocation4 + $0xa0] sm:$0xf]
      %v5044 = vld [vmem:[#allocation4 + $0xa8] sm:$0xf]
      %v5045 = vld [vmem:[#allocation4 + $0xac] sm:$0xf]
      %v5046 = vld [vmem:[#allocation4 + $0xb4] sm:$0xf]
      %v5047 = vld [vmem:[#allocation4 + $0xb8] sm:$0xf]
      %v5048 = vld [vmem:[#allocation4 + $0x8] sm:$0x1]
      %v5049 = vld [vmem:[#allocation4 + $0x14] sm:$0x1]
      %v5050 = vld [vmem:[#allocation4 + $0x20] sm:$0x1]
      %v5051 = vld [vmem:[#allocation4 + $0x2c] sm:$0x1]
      %v5052 = vld [vmem:[#allocation4 + $0x38] sm:$0x1]
      %v5053 = vld [vmem:[#allocation4 + $0x44] sm:$0x1]
      %v5054 = vld [vmem:[#allocation4 + $0x50] sm:$0x1]
      %v5055 = vld [vmem:[#allocation4 + $0x5c] sm:$0x1]
      %v5056 = vld [vmem:[#allocation4 + $0x68] sm:$0x1]
      %v5057 = vld [vmem:[#allocation4 + $0x74] sm:$0x1]
      %v5058 = vld [vmem:[#allocation4 + $0x80] sm:$0x1]
      %v5059 = vld [vmem:[#allocation4 + $0x8c] sm:$0x1]
      %v5060 = vld [vmem:[#allocation4 + $0x98] sm:$0x1]
      %v5061 = vld [vmem:[#allocation4 + $0xa4] sm:$0x1]
      %v5062 = vld [vmem:[#allocation4 + $0xb0] sm:$0x1]
      %v5063 = vld [vmem:[#allocation4 + $0xbc] sm:$0x1]
      %v5064 = vld [vmem:[#allocation4] sm:$0xe]
      %v5065 = vld [vmem:[#allocation4 + $0xc] sm:$0xe]
      %v5066 = vld [vmem:[#allocation4 + $0x18] sm:$0xe]
      %v5067 = vld [vmem:[#allocation4 + $0x24] sm:$0xe]
      %v5068 = vld [vmem:[#allocation4 + $0x30] sm:$0xe]
      %v5069 = vld [vmem:[#allocation4 + $0x3c] sm:$0xe]
      %v5070 = vld [vmem:[#allocation4 + $0x48] sm:$0xe]
      %v5071 = vld [vmem:[#allocation4 + $0x54] sm:$0xe]
      %v5072 = vld [vmem:[#allocation4 + $0x60] sm:$0xe]
      %v5073 = vld [vmem:[#allocation4 + $0x6c] sm:$0xe]
      %v5074 = vld [vmem:[#allocation4 + $0x78] sm:$0xe]
      %v5075 = vld [vmem:[#allocation4 + $0x84] sm:$0xe]
      %v5076 = vld [vmem:[#allocation4 + $0x90] sm:$0xe]
      %v5077 = vld [vmem:[#allocation4 + $0x9c] sm:$0xe]
      %v5078 = vld [vmem:[#allocation4 + $0xa8] sm:$0xe]
      %v5079 = vld [vmem:[#allocation4 + $0xb4] sm:$0xe]
      %v5112 = vunpack.c.l.b16 %v5016
      %v5113 = vunpack.c.l.b16 %v5017
      %v5114 = vunpack.c.l.b16 %v5018
      %v5115 = vunpack.c.l.b16 %v5019
      %v5116 = vunpack.c.l.b16 %v5020
      %v5117 = vunpack.c.l.b16 %v5021
      %v5118 = vunpack.c.l.b16 %v5022
      %v5119 = vunpack.c.l.b16 %v5023
      %v5120 = vunpack.c.l.b16 %v5024
      %v5121 = vunpack.c.l.b16 %v5025
      %v5122 = vunpack.c.l.b16 %v5026
      %v5123 = vunpack.c.l.b16 %v5027
      %v5124 = vunpack.c.l.b16 %v5028
      %v5125 = vunpack.c.l.b16 %v5029
      %v5126 = vunpack.c.l.b16 %v5030
      %v5127 = vunpack.c.l.b16 %v5031
      %v5128 = vunpack.c.l.b16 %v5032
      %v5129 = vunpack.c.l.b16 %v5033
      %v5130 = vunpack.c.l.b16 %v5034
      %v5131 = vunpack.c.l.b16 %v5035
      %v5132 = vunpack.c.l.b16 %v5036
      %v5133 = vunpack.c.l.b16 %v5037
      %v5134 = vunpack.c.l.b16 %v5038
      %v5135 = vunpack.c.l.b16 %v5039
      %v5136 = vunpack.c.l.b16 %v5040
      %v5137 = vunpack.c.l.b16 %v5041
      %v5138 = vunpack.c.l.b16 %v5042
      %v5139 = vunpack.c.l.b16 %v5043
      %v5140 = vunpack.c.l.b16 %v5044
      %v5141 = vunpack.c.l.b16 %v5045
      %v5142 = vunpack.c.l.b16 %v5046
      %v5143 = vunpack.c.l.b16 %v5047
      %v5144 = vpack.c.b16 %v5113, %v5112
      %v5145 = vpack.c.b16 %v5115, %v5114
      %v5146 = vpack.c.b16 %v5117, %v5116
      %v5147 = vpack.c.b16 %v5119, %v5118
      %v5148 = vpack.c.b16 %v5121, %v5120
      %v5149 = vpack.c.b16 %v5123, %v5122
      %v5150 = vpack.c.b16 %v5125, %v5124
      %v5151 = vpack.c.b16 %v5127, %v5126
      %v5152 = vpack.c.b16 %v5129, %v5128
      %v5153 = vpack.c.b16 %v5131, %v5130
      %v5154 = vpack.c.b16 %v5133, %v5132
      %v5155 = vpack.c.b16 %v5135, %v5134
      %v5156 = vpack.c.b16 %v5137, %v5136
      %v5157 = vpack.c.b16 %v5139, %v5138
      %v5158 = vpack.c.b16 %v5141, %v5140
      %v5159 = vpack.c.b16 %v5143, %v5142
      %v5192 = vunpack.c.l.b16 %v5048
      %v5193 = vunpack.c.l.b16 %v5049
      %v5194 = vunpack.c.l.b16 %v5050
      %v5195 = vunpack.c.l.b16 %v5051
      %v5196 = vunpack.c.l.b16 %v5052
      %v5197 = vunpack.c.l.b16 %v5053
      %v5198 = vunpack.c.l.b16 %v5054
      %v5199 = vunpack.c.l.b16 %v5055
      %v5200 = vunpack.c.l.b16 %v5056
      %v5201 = vunpack.c.l.b16 %v5057
      %v5202 = vunpack.c.l.b16 %v5058
      %v5203 = vunpack.c.l.b16 %v5059
      %v5204 = vunpack.c.l.b16 %v5060
      %v5205 = vunpack.c.l.b16 %v5061
      %v5206 = vunpack.c.l.b16 %v5062
      %v5207 = vunpack.c.l.b16 %v5063
      %v5208 = vpack.c.b16 %v5192, %v5192
      %v5209 = vpack.c.b16 %v5193, %v5193
      %v5210 = vpack.c.b16 %v5194, %v5194
      %v5211 = vpack.c.b16 %v5195, %v5195
      %v5212 = vpack.c.b16 %v5196, %v5196
      %v5213 = vpack.c.b16 %v5197, %v5197
      %v5214 = vpack.c.b16 %v5198, %v5198
      %v5215 = vpack.c.b16 %v5199, %v5199
      %v5216 = vpack.c.b16 %v5200, %v5200
      %v5217 = vpack.c.b16 %v5201, %v5201
      %v5218 = vpack.c.b16 %v5202, %v5202
      %v5219 = vpack.c.b16 %v5203, %v5203
      %v5220 = vpack.c.b16 %v5204, %v5204
      %v5221 = vpack.c.b16 %v5205, %v5205
      %v5222 = vpack.c.b16 %v5206, %v5206
      %v5223 = vpack.c.b16 %v5207, %v5207
      %v5225 = vshrl.u32 %v5144, 16
      %v5227 = vshll.u32 %v5144, 16
      %v5229 = vrot.slane %v5227, 1
      %v5230 = vor.u32 %v5225, %v5229
      %v5232 = vshll.u32 %v5208, 16
      %v5234 = vrot.slane %v5232, 1
      %v5235 = vsel %vm1102, %v5230, %v5234
      %v5237 = vshrl.u32 %v5145, 16
      %v5239 = vshll.u32 %v5145, 16
      %v5241 = vrot.slane %v5239, 1
      %v5242 = vor.u32 %v5237, %v5241
      %v5244 = vshll.u32 %v5209, 16
      %v5246 = vrot.slane %v5244, 1
      %v5247 = vsel %vm1102, %v5242, %v5246
      %v5249 = vshrl.u32 %v5146, 16
      %v5251 = vshll.u32 %v5146, 16
      %v5253 = vrot.slane %v5251, 1
      %v5254 = vor.u32 %v5249, %v5253
      %v5256 = vshll.u32 %v5210, 16
      %v5258 = vrot.slane %v5256, 1
      %v5259 = vsel %vm1102, %v5254, %v5258
      %v5261 = vshrl.u32 %v5147, 16
      %v5263 = vshll.u32 %v5147, 16
      %v5265 = vrot.slane %v5263, 1
      %v5266 = vor.u32 %v5261, %v5265
      %v5268 = vshll.u32 %v5211, 16
      %v5270 = vrot.slane %v5268, 1
      %v5271 = vsel %vm1102, %v5266, %v5270
      %v5273 = vshrl.u32 %v5148, 16
      %v5275 = vshll.u32 %v5148, 16
      %v5277 = vrot.slane %v5275, 1
      %v5278 = vor.u32 %v5273, %v5277
      %v5280 = vshll.u32 %v5212, 16
      %v5282 = vrot.slane %v5280, 1
      %v5283 = vsel %vm1102, %v5278, %v5282
      %v5285 = vshrl.u32 %v5149, 16
      %v5287 = vshll.u32 %v5149, 16
      %v5289 = vrot.slane %v5287, 1
      %v5290 = vor.u32 %v5285, %v5289
      %v5292 = vshll.u32 %v5213, 16
      %v5294 = vrot.slane %v5292, 1
      %v5295 = vsel %vm1102, %v5290, %v5294
      %v5297 = vshrl.u32 %v5150, 16
      %v5299 = vshll.u32 %v5150, 16
      %v5301 = vrot.slane %v5299, 1
      %v5302 = vor.u32 %v5297, %v5301
      %v5304 = vshll.u32 %v5214, 16
      %v5306 = vrot.slane %v5304, 1
      %v5307 = vsel %vm1102, %v5302, %v5306
      %v5309 = vshrl.u32 %v5151, 16
      %v5311 = vshll.u32 %v5151, 16
      %v5313 = vrot.slane %v5311, 1
      %v5314 = vor.u32 %v5309, %v5313
      %v5316 = vshll.u32 %v5215, 16
      %v5318 = vrot.slane %v5316, 1
      %v5319 = vsel %vm1102, %v5314, %v5318
      %v5321 = vshrl.u32 %v5152, 16
      %v5323 = vshll.u32 %v5152, 16
      %v5325 = vrot.slane %v5323, 1
      %v5326 = vor.u32 %v5321, %v5325
      %v5328 = vshll.u32 %v5216, 16
      %v5330 = vrot.slane %v5328, 1
      %v5331 = vsel %vm1102, %v5326, %v5330
      %v5333 = vshrl.u32 %v5153, 16
      %v5335 = vshll.u32 %v5153, 16
      %v5337 = vrot.slane %v5335, 1
      %v5338 = vor.u32 %v5333, %v5337
      %v5340 = vshll.u32 %v5217, 16
      %v5342 = vrot.slane %v5340, 1
      %v5343 = vsel %vm1102, %v5338, %v5342
      %v5345 = vshrl.u32 %v5154, 16
      %v5347 = vshll.u32 %v5154, 16
      %v5349 = vrot.slane %v5347, 1
      %v5350 = vor.u32 %v5345, %v5349
      %v5352 = vshll.u32 %v5218, 16
      %v5354 = vrot.slane %v5352, 1
      %v5355 = vsel %vm1102, %v5350, %v5354
      %v5357 = vshrl.u32 %v5155, 16
      %v5359 = vshll.u32 %v5155, 16
      %v5361 = vrot.slane %v5359, 1
      %v5362 = vor.u32 %v5357, %v5361
      %v5364 = vshll.u32 %v5219, 16
      %v5366 = vrot.slane %v5364, 1
      %v5367 = vsel %vm1102, %v5362, %v5366
      %v5369 = vshrl.u32 %v5156, 16
      %v5371 = vshll.u32 %v5156, 16
      %v5373 = vrot.slane %v5371, 1
      %v5374 = vor.u32 %v5369, %v5373
      %v5376 = vshll.u32 %v5220, 16
      %v5378 = vrot.slane %v5376, 1
      %v5379 = vsel %vm1102, %v5374, %v5378
      %v5381 = vshrl.u32 %v5157, 16
      %v5383 = vshll.u32 %v5157, 16
      %v5385 = vrot.slane %v5383, 1
      %v5386 = vor.u32 %v5381, %v5385
      %v5388 = vshll.u32 %v5221, 16
      %v5390 = vrot.slane %v5388, 1
      %v5391 = vsel %vm1102, %v5386, %v5390
      %v5393 = vshrl.u32 %v5158, 16
      %v5395 = vshll.u32 %v5158, 16
      %v5397 = vrot.slane %v5395, 1
      %v5398 = vor.u32 %v5393, %v5397
      %v5400 = vshll.u32 %v5222, 16
      %v5402 = vrot.slane %v5400, 1
      %v5403 = vsel %vm1102, %v5398, %v5402
      %v5405 = vshrl.u32 %v5159, 16
      %v5407 = vshll.u32 %v5159, 16
      %v5409 = vrot.slane %v5407, 1
      %v5410 = vor.u32 %v5405, %v5409
      %v5412 = vshll.u32 %v5223, 16
      %v5414 = vrot.slane %v5412, 1
      %v5415 = vsel %vm1102, %v5410, %v5414
      %v5448 = vunpack.c.l.b16 %v5064
      %v5449 = vunpack.c.l.b16 %v5065
      %v5450 = vunpack.c.l.b16 %v5066
      %v5451 = vunpack.c.l.b16 %v5067
      %v5452 = vunpack.c.l.b16 %v5068
      %v5453 = vunpack.c.l.b16 %v5069
      %v5454 = vunpack.c.l.b16 %v5070
      %v5455 = vunpack.c.l.b16 %v5071
      %v5456 = vunpack.c.l.b16 %v5072
      %v5457 = vunpack.c.l.b16 %v5073
      %v5458 = vunpack.c.l.b16 %v5074
      %v5459 = vunpack.c.l.b16 %v5075
      %v5460 = vunpack.c.l.b16 %v5076
      %v5461 = vunpack.c.l.b16 %v5077
      %v5462 = vunpack.c.l.b16 %v5078
      %v5463 = vunpack.c.l.b16 %v5079
      %v5464 = vpack.c.b16 %v5113, %v5448
      %v5465 = vpack.c.b16 %v5115, %v5449
      %v5466 = vpack.c.b16 %v5117, %v5450
      %v5467 = vpack.c.b16 %v5119, %v5451
      %v5468 = vpack.c.b16 %v5121, %v5452
      %v5469 = vpack.c.b16 %v5123, %v5453
      %v5470 = vpack.c.b16 %v5125, %v5454
      %v5471 = vpack.c.b16 %v5127, %v5455
      %v5472 = vpack.c.b16 %v5129, %v5456
      %v5473 = vpack.c.b16 %v5131, %v5457
      %v5474 = vpack.c.b16 %v5133, %v5458
      %v5475 = vpack.c.b16 %v5135, %v5459
      %v5476 = vpack.c.b16 %v5137, %v5460
      %v5477 = vpack.c.b16 %v5139, %v5461
      %v5478 = vpack.c.b16 %v5141, %v5462
      %v5479 = vpack.c.b16 %v5143, %v5463
      %v5480 = vrot.slane %v5464, 1
      %v5481 = vrot.slane %v5208, 1
      %v5482 = vsel %vm1391, %v5480, %v5481
      %v5483 = vrot.slane %v5465, 1
      %v5484 = vrot.slane %v5209, 1
      %v5485 = vsel %vm1391, %v5483, %v5484
      %v5486 = vrot.slane %v5466, 1
      %v5487 = vrot.slane %v5210, 1
      %v5488 = vsel %vm1391, %v5486, %v5487
      %v5489 = vrot.slane %v5467, 1
      %v5490 = vrot.slane %v5211, 1
      %v5491 = vsel %vm1391, %v5489, %v5490
      %v5492 = vrot.slane %v5468, 1
      %v5493 = vrot.slane %v5212, 1
      %v5494 = vsel %vm1391, %v5492, %v5493
      %v5495 = vrot.slane %v5469, 1
      %v5496 = vrot.slane %v5213, 1
      %v5497 = vsel %vm1391, %v5495, %v5496
      %v5498 = vrot.slane %v5470, 1
      %v5499 = vrot.slane %v5214, 1
      %v5500 = vsel %vm1391, %v5498, %v5499
      %v5501 = vrot.slane %v5471, 1
      %v5502 = vrot.slane %v5215, 1
      %v5503 = vsel %vm1391, %v5501, %v5502
      %v5504 = vrot.slane %v5472, 1
      %v5505 = vrot.slane %v5216, 1
      %v5506 = vsel %vm1391, %v5504, %v5505
      %v5507 = vrot.slane %v5473, 1
      %v5508 = vrot.slane %v5217, 1
      %v5509 = vsel %vm1391, %v5507, %v5508
      %v5510 = vrot.slane %v5474, 1
      %v5511 = vrot.slane %v5218, 1
      %v5512 = vsel %vm1391, %v5510, %v5511
      %v5513 = vrot.slane %v5475, 1
      %v5514 = vrot.slane %v5219, 1
      %v5515 = vsel %vm1391, %v5513, %v5514
      %v5516 = vrot.slane %v5476, 1
      %v5517 = vrot.slane %v5220, 1
      %v5518 = vsel %vm1391, %v5516, %v5517
      %v5519 = vrot.slane %v5477, 1
      %v5520 = vrot.slane %v5221, 1
      %v5521 = vsel %vm1391, %v5519, %v5520
      %v5522 = vrot.slane %v5478, 1
      %v5523 = vrot.slane %v5222, 1
      %v5524 = vsel %vm1391, %v5522, %v5523
      %v5525 = vrot.slane %v5479, 1
      %v5526 = vrot.slane %v5223, 1
      %v5527 = vsel %vm1391, %v5525, %v5526
      %v5544 = vld [vmem:[%s3] sm:$0xf]
      %v5545 = vld [vmem:[%s3 + $0x4] sm:$0xf]
      %v5546 = vld [vmem:[%s3 + $0x8] sm:$0xf]
      %v5547 = vld [vmem:[%s3 + $0xc] sm:$0xf]
      %v5548 = vld [vmem:[%s3 + $0x10] sm:$0xf]
      %v5549 = vld [vmem:[%s3 + $0x14] sm:$0xf]
      %v5550 = vld [vmem:[%s3 + $0x18] sm:$0xf]
      %v5551 = vld [vmem:[%s3 + $0x1c] sm:$0xf]
      %v5552 = vld [vmem:[%s3 + $0x20] sm:$0xf]
      %v5553 = vld [vmem:[%s3 + $0x24] sm:$0xf]
      %v5554 = vld [vmem:[%s3 + $0x28] sm:$0xf]
      %v5555 = vld [vmem:[%s3 + $0x2c] sm:$0xf]
      %v5556 = vld [vmem:[%s3 + $0x30] sm:$0xf]
      %v5557 = vld [vmem:[%s3 + $0x34] sm:$0xf]
      %v5558 = vld [vmem:[%s3 + $0x38] sm:$0xf]
      %v5559 = vld [vmem:[%s3 + $0x3c] sm:$0xf]
      %v5560 = vld [vmem:[%s3 + $0x40] sm:$0xf]
      %v5561 = vld [vmem:[%s3 + $0x44] sm:$0xf]
      %v5562 = vld [vmem:[%s3 + $0x48] sm:$0xf]
      %v5563 = vld [vmem:[%s3 + $0x4c] sm:$0xf]
      %v5564 = vld [vmem:[%s3 + $0x50] sm:$0xf]
      %v5565 = vld [vmem:[%s3 + $0x54] sm:$0xf]
      %v5566 = vld [vmem:[%s3 + $0x58] sm:$0xf]
      %v5567 = vld [vmem:[%s3 + $0x5c] sm:$0xf]
      %v5568 = vld [vmem:[%s3 + $0x60] sm:$0xf]
      %v5569 = vld [vmem:[%s3 + $0x64] sm:$0xf]
      %v5570 = vld [vmem:[%s3 + $0x68] sm:$0xf]
      %v5571 = vld [vmem:[%s3 + $0x6c] sm:$0xf]
      %v5572 = vld [vmem:[%s3 + $0x70] sm:$0xf]
      %v5573 = vld [vmem:[%s3 + $0x74] sm:$0xf]
      %v5574 = vld [vmem:[%s3 + $0x78] sm:$0xf]
      %v5575 = vld [vmem:[%s3 + $0x7c] sm:$0xf]
      %v5576 = vld [vmem:[%s3 + $0x80] sm:$0xf]
      %v5577 = vld [vmem:[%s3 + $0x84] sm:$0xf]
      %v5578 = vld [vmem:[%s3 + $0x88] sm:$0xf]
      %v5579 = vld [vmem:[%s3 + $0x8c] sm:$0xf]
      %v5580 = vld [vmem:[%s3 + $0x90] sm:$0xf]
      %v5581 = vld [vmem:[%s3 + $0x94] sm:$0xf]
      %v5582 = vld [vmem:[%s3 + $0x98] sm:$0xf]
      %v5583 = vld [vmem:[%s3 + $0x9c] sm:$0xf]
      %v5584 = vld [vmem:[%s3 + $0xa0] sm:$0xf]
      %v5585 = vld [vmem:[%s3 + $0xa4] sm:$0xf]
      %v5586 = vld [vmem:[%s3 + $0xa8] sm:$0xf]
      %v5587 = vld [vmem:[%s3 + $0xac] sm:$0xf]
      %v5588 = vld [vmem:[%s3 + $0xb0] sm:$0xf]
      %v5589 = vld [vmem:[%s3 + $0xb4] sm:$0xf]
      %v5590 = vld [vmem:[%s3 + $0xb8] sm:$0xf]
      %v5591 = vld [vmem:[%s3 + $0xbc] sm:$0xf]
      %s5592 = scalar_lea.vmem [#allocation4], 12
      %v5593 = vld [vmem:[%s5592] sm:$0xf]
      %v5594 = vld [vmem:[%s5592 + $0x4] sm:$0xf]
      %v5595 = vld [vmem:[%s5592 + $0xc] sm:$0xf]
      %v5596 = vld [vmem:[%s5592 + $0x10] sm:$0xf]
      %v5597 = vld [vmem:[%s5592 + $0x18] sm:$0xf]
      %v5598 = vld [vmem:[%s5592 + $0x1c] sm:$0xf]
      %v5599 = vld [vmem:[%s5592 + $0x24] sm:$0xf]
      %v5600 = vld [vmem:[%s5592 + $0x28] sm:$0xf]
      %v5601 = vld [vmem:[%s5592 + $0x30] sm:$0xf]
      %v5602 = vld [vmem:[%s5592 + $0x34] sm:$0xf]
      %v5603 = vld [vmem:[%s5592 + $0x3c] sm:$0xf]
      %v5604 = vld [vmem:[%s5592 + $0x40] sm:$0xf]
      %v5605 = vld [vmem:[%s5592 + $0x48] sm:$0xf]
      %v5606 = vld [vmem:[%s5592 + $0x4c] sm:$0xf]
      %v5607 = vld [vmem:[%s5592 + $0x54] sm:$0xf]
      %v5608 = vld [vmem:[%s5592 + $0x58] sm:$0xf]
      %v5609 = vld [vmem:[%s5592 + $0x60] sm:$0xf]
      %v5610 = vld [vmem:[%s5592 + $0x64] sm:$0xf]
      %v5611 = vld [vmem:[%s5592 + $0x6c] sm:$0xf]
      %v5612 = vld [vmem:[%s5592 + $0x70] sm:$0xf]
      %v5613 = vld [vmem:[%s5592 + $0x78] sm:$0xf]
      %v5614 = vld [vmem:[%s5592 + $0x7c] sm:$0xf]
      %v5615 = vld [vmem:[%s5592 + $0x84] sm:$0xf]
      %v5616 = vld [vmem:[%s5592 + $0x88] sm:$0xf]
      %v5617 = vld [vmem:[%s5592 + $0x90] sm:$0xf]
      %v5618 = vld [vmem:[%s5592 + $0x94] sm:$0xf]
      %v5619 = vld [vmem:[%s5592 + $0x9c] sm:$0xf]
      %v5620 = vld [vmem:[%s5592 + $0xa0] sm:$0xf]
      %v5621 = vld [vmem:[%s5592 + $0xa8] sm:$0xf]
      %v5622 = vld [vmem:[%s5592 + $0xac] sm:$0xf]
      %v5623 = vld [vmem:[%s5592 + $0xb4] sm:$0xf]
      %v5624 = vld [vmem:[%s5592 + $0xb8] sm:$0xf]
      %v5625 = vld [vmem:[%s5592 + $0x8] sm:$0x1]
      %v5626 = vld [vmem:[%s5592 + $0x14] sm:$0x1]
      %v5627 = vld [vmem:[%s5592 + $0x20] sm:$0x1]
      %v5628 = vld [vmem:[%s5592 + $0x2c] sm:$0x1]
      %v5629 = vld [vmem:[%s5592 + $0x38] sm:$0x1]
      %v5630 = vld [vmem:[%s5592 + $0x44] sm:$0x1]
      %v5631 = vld [vmem:[%s5592 + $0x50] sm:$0x1]
      %v5632 = vld [vmem:[%s5592 + $0x5c] sm:$0x1]
      %v5633 = vld [vmem:[%s5592 + $0x68] sm:$0x1]
      %v5634 = vld [vmem:[%s5592 + $0x74] sm:$0x1]
      %v5635 = vld [vmem:[%s5592 + $0x80] sm:$0x1]
      %v5636 = vld [vmem:[%s5592 + $0x8c] sm:$0x1]
      %v5637 = vld [vmem:[%s5592 + $0x98] sm:$0x1]
      %v5638 = vld [vmem:[%s5592 + $0xa4] sm:$0x1]
      %v5639 = vld [vmem:[%s5592 + $0xb0] sm:$0x1]
      %v5640 = vld [vmem:[%s5592 + $0xbc] sm:$0x1]
      %v5641 = vld [vmem:[%s5592] sm:$0xe]
      %v5642 = vld [vmem:[%s5592 + $0xc] sm:$0xe]
      %v5643 = vld [vmem:[%s5592 + $0x18] sm:$0xe]
      %v5644 = vld [vmem:[%s5592 + $0x24] sm:$0xe]
      %v5645 = vld [vmem:[%s5592 + $0x30] sm:$0xe]
      %v5646 = vld [vmem:[%s5592 + $0x3c] sm:$0xe]
      %v5647 = vld [vmem:[%s5592 + $0x48] sm:$0xe]
      %v5648 = vld [vmem:[%s5592 + $0x54] sm:$0xe]
      %v5649 = vld [vmem:[%s5592 + $0x60] sm:$0xe]
      %v5650 = vld [vmem:[%s5592 + $0x6c] sm:$0xe]
      %v5651 = vld [vmem:[%s5592 + $0x78] sm:$0xe]
      %v5652 = vld [vmem:[%s5592 + $0x84] sm:$0xe]
      %v5653 = vld [vmem:[%s5592 + $0x90] sm:$0xe]
      %v5654 = vld [vmem:[%s5592 + $0x9c] sm:$0xe]
      %v5655 = vld [vmem:[%s5592 + $0xa8] sm:$0xe]
      %v5656 = vld [vmem:[%s5592 + $0xb4] sm:$0xe]
      %v5689 = vunpack.c.l.b16 %v5593
      %v5690 = vunpack.c.l.b16 %v5594
      %v5691 = vunpack.c.l.b16 %v5595
      %v5692 = vunpack.c.l.b16 %v5596
      %v5693 = vunpack.c.l.b16 %v5597
      %v5694 = vunpack.c.l.b16 %v5598
      %v5695 = vunpack.c.l.b16 %v5599
      %v5696 = vunpack.c.l.b16 %v5600
      %v5697 = vunpack.c.l.b16 %v5601
      %v5698 = vunpack.c.l.b16 %v5602
      %v5699 = vunpack.c.l.b16 %v5603
      %v5700 = vunpack.c.l.b16 %v5604
      %v5701 = vunpack.c.l.b16 %v5605
      %v5702 = vunpack.c.l.b16 %v5606
      %v5703 = vunpack.c.l.b16 %v5607
      %v5704 = vunpack.c.l.b16 %v5608
      %v5705 = vunpack.c.l.b16 %v5609
      %v5706 = vunpack.c.l.b16 %v5610
      %v5707 = vunpack.c.l.b16 %v5611
      %v5708 = vunpack.c.l.b16 %v5612
      %v5709 = vunpack.c.l.b16 %v5613
      %v5710 = vunpack.c.l.b16 %v5614
      %v5711 = vunpack.c.l.b16 %v5615
      %v5712 = vunpack.c.l.b16 %v5616
      %v5713 = vunpack.c.l.b16 %v5617
      %v5714 = vunpack.c.l.b16 %v5618
      %v5715 = vunpack.c.l.b16 %v5619
      %v5716 = vunpack.c.l.b16 %v5620
      %v5717 = vunpack.c.l.b16 %v5621
      %v5718 = vunpack.c.l.b16 %v5622
      %v5719 = vunpack.c.l.b16 %v5623
      %v5720 = vunpack.c.l.b16 %v5624
      %v5721 = vpack.c.b16 %v5690, %v5689
      %v5722 = vpack.c.b16 %v5692, %v5691
      %v5723 = vpack.c.b16 %v5694, %v5693
      %v5724 = vpack.c.b16 %v5696, %v5695
      %v5725 = vpack.c.b16 %v5698, %v5697
      %v5726 = vpack.c.b16 %v5700, %v5699
      %v5727 = vpack.c.b16 %v5702, %v5701
      %v5728 = vpack.c.b16 %v5704, %v5703
      %v5729 = vpack.c.b16 %v5706, %v5705
      %v5730 = vpack.c.b16 %v5708, %v5707
      %v5731 = vpack.c.b16 %v5710, %v5709
      %v5732 = vpack.c.b16 %v5712, %v5711
      %v5733 = vpack.c.b16 %v5714, %v5713
      %v5734 = vpack.c.b16 %v5716, %v5715
      %v5735 = vpack.c.b16 %v5718, %v5717
      %v5736 = vpack.c.b16 %v5720, %v5719
      %v5769 = vunpack.c.l.b16 %v5625
      %v5770 = vunpack.c.l.b16 %v5626
      %v5771 = vunpack.c.l.b16 %v5627
      %v5772 = vunpack.c.l.b16 %v5628
      %v5773 = vunpack.c.l.b16 %v5629
      %v5774 = vunpack.c.l.b16 %v5630
      %v5775 = vunpack.c.l.b16 %v5631
      %v5776 = vunpack.c.l.b16 %v5632
      %v5777 = vunpack.c.l.b16 %v5633
      %v5778 = vunpack.c.l.b16 %v5634
      %v5779 = vunpack.c.l.b16 %v5635
      %v5780 = vunpack.c.l.b16 %v5636
      %v5781 = vunpack.c.l.b16 %v5637
      %v5782 = vunpack.c.l.b16 %v5638
      %v5783 = vunpack.c.l.b16 %v5639
      %v5784 = vunpack.c.l.b16 %v5640
      %v5785 = vpack.c.b16 %v5769, %v5769
      %v5786 = vpack.c.b16 %v5770, %v5770
      %v5787 = vpack.c.b16 %v5771, %v5771
      %v5788 = vpack.c.b16 %v5772, %v5772
      %v5789 = vpack.c.b16 %v5773, %v5773
      %v5790 = vpack.c.b16 %v5774, %v5774
      %v5791 = vpack.c.b16 %v5775, %v5775
      %v5792 = vpack.c.b16 %v5776, %v5776
      %v5793 = vpack.c.b16 %v5777, %v5777
      %v5794 = vpack.c.b16 %v5778, %v5778
      %v5795 = vpack.c.b16 %v5779, %v5779
      %v5796 = vpack.c.b16 %v5780, %v5780
      %v5797 = vpack.c.b16 %v5781, %v5781
      %v5798 = vpack.c.b16 %v5782, %v5782
      %v5799 = vpack.c.b16 %v5783, %v5783
      %v5800 = vpack.c.b16 %v5784, %v5784
      %v5802 = vshrl.u32 %v5721, 16
      %v5804 = vshll.u32 %v5721, 16
      %v5806 = vrot.slane %v5804, 1
      %v5807 = vor.u32 %v5802, %v5806
      %v5809 = vshll.u32 %v5785, 16
      %v5811 = vrot.slane %v5809, 1
      %v5812 = vsel %vm1102, %v5807, %v5811
      %v5814 = vshrl.u32 %v5722, 16
      %v5816 = vshll.u32 %v5722, 16
      %v5818 = vrot.slane %v5816, 1
      %v5819 = vor.u32 %v5814, %v5818
      %v5821 = vshll.u32 %v5786, 16
      %v5823 = vrot.slane %v5821, 1
      %v5824 = vsel %vm1102, %v5819, %v5823
      %v5826 = vshrl.u32 %v5723, 16
      %v5828 = vshll.u32 %v5723, 16
      %v5830 = vrot.slane %v5828, 1
      %v5831 = vor.u32 %v5826, %v5830
      %v5833 = vshll.u32 %v5787, 16
      %v5835 = vrot.slane %v5833, 1
      %v5836 = vsel %vm1102, %v5831, %v5835
      %v5838 = vshrl.u32 %v5724, 16
      %v5840 = vshll.u32 %v5724, 16
      %v5842 = vrot.slane %v5840, 1
      %v5843 = vor.u32 %v5838, %v5842
      %v5845 = vshll.u32 %v5788, 16
      %v5847 = vrot.slane %v5845, 1
      %v5848 = vsel %vm1102, %v5843, %v5847
      %v5850 = vshrl.u32 %v5725, 16
      %v5852 = vshll.u32 %v5725, 16
      %v5854 = vrot.slane %v5852, 1
      %v5855 = vor.u32 %v5850, %v5854
      %v5857 = vshll.u32 %v5789, 16
      %v5859 = vrot.slane %v5857, 1
      %v5860 = vsel %vm1102, %v5855, %v5859
      %v5862 = vshrl.u32 %v5726, 16
      %v5864 = vshll.u32 %v5726, 16
      %v5866 = vrot.slane %v5864, 1
      %v5867 = vor.u32 %v5862, %v5866
      %v5869 = vshll.u32 %v5790, 16
      %v5871 = vrot.slane %v5869, 1
      %v5872 = vsel %vm1102, %v5867, %v5871
      %v5874 = vshrl.u32 %v5727, 16
      %v5876 = vshll.u32 %v5727, 16
      %v5878 = vrot.slane %v5876, 1
      %v5879 = vor.u32 %v5874, %v5878
      %v5881 = vshll.u32 %v5791, 16
      %v5883 = vrot.slane %v5881, 1
      %v5884 = vsel %vm1102, %v5879, %v5883
      %v5886 = vshrl.u32 %v5728, 16
      %v5888 = vshll.u32 %v5728, 16
      %v5890 = vrot.slane %v5888, 1
      %v5891 = vor.u32 %v5886, %v5890
      %v5893 = vshll.u32 %v5792, 16
      %v5895 = vrot.slane %v5893, 1
      %v5896 = vsel %vm1102, %v5891, %v5895
      %v5898 = vshrl.u32 %v5729, 16
      %v5900 = vshll.u32 %v5729, 16
      %v5902 = vrot.slane %v5900, 1
      %v5903 = vor.u32 %v5898, %v5902
      %v5905 = vshll.u32 %v5793, 16
      %v5907 = vrot.slane %v5905, 1
      %v5908 = vsel %vm1102, %v5903, %v5907
      %v5910 = vshrl.u32 %v5730, 16
      %v5912 = vshll.u32 %v5730, 16
      %v5914 = vrot.slane %v5912, 1
      %v5915 = vor.u32 %v5910, %v5914
      %v5917 = vshll.u32 %v5794, 16
      %v5919 = vrot.slane %v5917, 1
      %v5920 = vsel %vm1102, %v5915, %v5919
      %v5922 = vshrl.u32 %v5731, 16
      %v5924 = vshll.u32 %v5731, 16
      %v5926 = vrot.slane %v5924, 1
      %v5927 = vor.u32 %v5922, %v5926
      %v5929 = vshll.u32 %v5795, 16
      %v5931 = vrot.slane %v5929, 1
      %v5932 = vsel %vm1102, %v5927, %v5931
      %v5934 = vshrl.u32 %v5732, 16
      %v5936 = vshll.u32 %v5732, 16
      %v5938 = vrot.slane %v5936, 1
      %v5939 = vor.u32 %v5934, %v5938
      %v5941 = vshll.u32 %v5796, 16
      %v5943 = vrot.slane %v5941, 1
      %v5944 = vsel %vm1102, %v5939, %v5943
      %v5946 = vshrl.u32 %v5733, 16
      %v5948 = vshll.u32 %v5733, 16
      %v5950 = vrot.slane %v5948, 1
      %v5951 = vor.u32 %v5946, %v5950
      %v5953 = vshll.u32 %v5797, 16
      %v5955 = vrot.slane %v5953, 1
      %v5956 = vsel %vm1102, %v5951, %v5955
      %v5958 = vshrl.u32 %v5734, 16
      %v5960 = vshll.u32 %v5734, 16
      %v5962 = vrot.slane %v5960, 1
      %v5963 = vor.u32 %v5958, %v5962
      %v5965 = vshll.u32 %v5798, 16
      %v5967 = vrot.slane %v5965, 1
      %v5968 = vsel %vm1102, %v5963, %v5967
      %v5970 = vshrl.u32 %v5735, 16
      %v5972 = vshll.u32 %v5735, 16
      %v5974 = vrot.slane %v5972, 1
      %v5975 = vor.u32 %v5970, %v5974
      %v5977 = vshll.u32 %v5799, 16
      %v5979 = vrot.slane %v5977, 1
      %v5980 = vsel %vm1102, %v5975, %v5979
      %v5982 = vshrl.u32 %v5736, 16
      %v5984 = vshll.u32 %v5736, 16
      %v5986 = vrot.slane %v5984, 1
      %v5987 = vor.u32 %v5982, %v5986
      %v5989 = vshll.u32 %v5800, 16
      %v5991 = vrot.slane %v5989, 1
      %v5992 = vsel %vm1102, %v5987, %v5991
      %v6025 = vunpack.c.l.b16 %v5641
      %v6026 = vunpack.c.l.b16 %v5642
      %v6027 = vunpack.c.l.b16 %v5643
      %v6028 = vunpack.c.l.b16 %v5644
      %v6029 = vunpack.c.l.b16 %v5645
      %v6030 = vunpack.c.l.b16 %v5646
      %v6031 = vunpack.c.l.b16 %v5647
      %v6032 = vunpack.c.l.b16 %v5648
      %v6033 = vunpack.c.l.b16 %v5649
      %v6034 = vunpack.c.l.b16 %v5650
      %v6035 = vunpack.c.l.b16 %v5651
      %v6036 = vunpack.c.l.b16 %v5652
      %v6037 = vunpack.c.l.b16 %v5653
      %v6038 = vunpack.c.l.b16 %v5654
      %v6039 = vunpack.c.l.b16 %v5655
      %v6040 = vunpack.c.l.b16 %v5656
      %v6041 = vpack.c.b16 %v5690, %v6025
      %v6042 = vpack.c.b16 %v5692, %v6026
      %v6043 = vpack.c.b16 %v5694, %v6027
      %v6044 = vpack.c.b16 %v5696, %v6028
      %v6045 = vpack.c.b16 %v5698, %v6029
      %v6046 = vpack.c.b16 %v5700, %v6030
      %v6047 = vpack.c.b16 %v5702, %v6031
      %v6048 = vpack.c.b16 %v5704, %v6032
      %v6049 = vpack.c.b16 %v5706, %v6033
      %v6050 = vpack.c.b16 %v5708, %v6034
      %v6051 = vpack.c.b16 %v5710, %v6035
      %v6052 = vpack.c.b16 %v5712, %v6036
      %v6053 = vpack.c.b16 %v5714, %v6037
      %v6054 = vpack.c.b16 %v5716, %v6038
      %v6055 = vpack.c.b16 %v5718, %v6039
      %v6056 = vpack.c.b16 %v5720, %v6040
      %v6057 = vrot.slane %v6041, 1
      %v6058 = vrot.slane %v5785, 1
      %v6059 = vsel %vm1391, %v6057, %v6058
      %v6060 = vrot.slane %v6042, 1
      %v6061 = vrot.slane %v5786, 1
      %v6062 = vsel %vm1391, %v6060, %v6061
      %v6063 = vrot.slane %v6043, 1
      %v6064 = vrot.slane %v5787, 1
      %v6065 = vsel %vm1391, %v6063, %v6064
      %v6066 = vrot.slane %v6044, 1
      %v6067 = vrot.slane %v5788, 1
      %v6068 = vsel %vm1391, %v6066, %v6067
      %v6069 = vrot.slane %v6045, 1
      %v6070 = vrot.slane %v5789, 1
      %v6071 = vsel %vm1391, %v6069, %v6070
      %v6072 = vrot.slane %v6046, 1
      %v6073 = vrot.slane %v5790, 1
      %v6074 = vsel %vm1391, %v6072, %v6073
      %v6075 = vrot.slane %v6047, 1
      %v6076 = vrot.slane %v5791, 1
      %v6077 = vsel %vm1391, %v6075, %v6076
      %v6078 = vrot.slane %v6048, 1
      %v6079 = vrot.slane %v5792, 1
      %v6080 = vsel %vm1391, %v6078, %v6079
      %v6081 = vrot.slane %v6049, 1
      %v6082 = vrot.slane %v5793, 1
      %v6083 = vsel %vm1391, %v6081, %v6082
      %v6084 = vrot.slane %v6050, 1
      %v6085 = vrot.slane %v5794, 1
      %v6086 = vsel %vm1391, %v6084, %v6085
      %v6087 = vrot.slane %v6051, 1
      %v6088 = vrot.slane %v5795, 1
      %v6089 = vsel %vm1391, %v6087, %v6088
      %v6090 = vrot.slane %v6052, 1
      %v6091 = vrot.slane %v5796, 1
      %v6092 = vsel %vm1391, %v6090, %v6091
      %v6093 = vrot.slane %v6053, 1
      %v6094 = vrot.slane %v5797, 1
      %v6095 = vsel %vm1391, %v6093, %v6094
      %v6096 = vrot.slane %v6054, 1
      %v6097 = vrot.slane %v5798, 1
      %v6098 = vsel %vm1391, %v6096, %v6097
      %v6099 = vrot.slane %v6055, 1
      %v6100 = vrot.slane %v5799, 1
      %v6101 = vsel %vm1391, %v6099, %v6100
      %v6102 = vrot.slane %v6056, 1
      %v6103 = vrot.slane %v5800, 1
      %v6104 = vsel %vm1391, %v6102, %v6103
      %s6121 = scalar_lea.vmem %s3, 192
      %v6122 = vld [vmem:[%s6121] sm:$0xf]
      %v6123 = vld [vmem:[%s6121 + $0x4] sm:$0xf]
      %v6124 = vld [vmem:[%s6121 + $0x8] sm:$0xf]
      %v6125 = vld [vmem:[%s6121 + $0xc] sm:$0xf]
      %v6126 = vld [vmem:[%s6121 + $0x10] sm:$0xf]
      %v6127 = vld [vmem:[%s6121 + $0x14] sm:$0xf]
      %v6128 = vld [vmem:[%s6121 + $0x18] sm:$0xf]
      %v6129 = vld [vmem:[%s6121 + $0x1c] sm:$0xf]
      %v6130 = vld [vmem:[%s6121 + $0x20] sm:$0xf]
      %v6131 = vld [vmem:[%s6121 + $0x24] sm:$0xf]
      %v6132 = vld [vmem:[%s6121 + $0x28] sm:$0xf]
      %v6133 = vld [vmem:[%s6121 + $0x2c] sm:$0xf]
      %v6134 = vld [vmem:[%s6121 + $0x30] sm:$0xf]
      %v6135 = vld [vmem:[%s6121 + $0x34] sm:$0xf]
      %v6136 = vld [vmem:[%s6121 + $0x38] sm:$0xf]
      %v6137 = vld [vmem:[%s6121 + $0x3c] sm:$0xf]
      %v6138 = vld [vmem:[%s6121 + $0x40] sm:$0xf]
      %v6139 = vld [vmem:[%s6121 + $0x44] sm:$0xf]
      %v6140 = vld [vmem:[%s6121 + $0x48] sm:$0xf]
      %v6141 = vld [vmem:[%s6121 + $0x4c] sm:$0xf]
      %v6142 = vld [vmem:[%s6121 + $0x50] sm:$0xf]
      %v6143 = vld [vmem:[%s6121 + $0x54] sm:$0xf]
      %v6144 = vld [vmem:[%s6121 + $0x58] sm:$0xf]
      %v6145 = vld [vmem:[%s6121 + $0x5c] sm:$0xf]
      %v6146 = vld [vmem:[%s6121 + $0x60] sm:$0xf]
      %v6147 = vld [vmem:[%s6121 + $0x64] sm:$0xf]
      %v6148 = vld [vmem:[%s6121 + $0x68] sm:$0xf]
      %v6149 = vld [vmem:[%s6121 + $0x6c] sm:$0xf]
      %v6150 = vld [vmem:[%s6121 + $0x70] sm:$0xf]
      %v6151 = vld [vmem:[%s6121 + $0x74] sm:$0xf]
      %v6152 = vld [vmem:[%s6121 + $0x78] sm:$0xf]
      %v6153 = vld [vmem:[%s6121 + $0x7c] sm:$0xf]
      %v6154 = vld [vmem:[%s6121 + $0x80] sm:$0xf]
      %v6155 = vld [vmem:[%s6121 + $0x84] sm:$0xf]
      %v6156 = vld [vmem:[%s6121 + $0x88] sm:$0xf]
      %v6157 = vld [vmem:[%s6121 + $0x8c] sm:$0xf]
      %v6158 = vld [vmem:[%s6121 + $0x90] sm:$0xf]
      %v6159 = vld [vmem:[%s6121 + $0x94] sm:$0xf]
      %v6160 = vld [vmem:[%s6121 + $0x98] sm:$0xf]
      %v6161 = vld [vmem:[%s6121 + $0x9c] sm:$0xf]
      %v6162 = vld [vmem:[%s6121 + $0xa0] sm:$0xf]
      %v6163 = vld [vmem:[%s6121 + $0xa4] sm:$0xf]
      %v6164 = vld [vmem:[%s6121 + $0xa8] sm:$0xf]
      %v6165 = vld [vmem:[%s6121 + $0xac] sm:$0xf]
      %v6166 = vld [vmem:[%s6121 + $0xb0] sm:$0xf]
      %v6167 = vld [vmem:[%s6121 + $0xb4] sm:$0xf]
      %v6168 = vld [vmem:[%s6121 + $0xb8] sm:$0xf]
      %v6169 = vld [vmem:[%s6121 + $0xbc] sm:$0xf]
      %v6218 = vunpack.c.l.b16 %v6122
      %v6219 = vunpack.c.l.b16 %v6123
      %v6220 = vunpack.c.l.b16 %v6124
      %v6221 = vunpack.c.l.b16 %v6125
      %v6222 = vunpack.c.l.b16 %v6126
      %v6223 = vunpack.c.l.b16 %v6127
      %v6224 = vunpack.c.l.b16 %v6128
      %v6225 = vunpack.c.l.b16 %v6129
      %v6226 = vunpack.c.l.b16 %v6130
      %v6227 = vunpack.c.l.b16 %v6131
      %v6228 = vunpack.c.l.b16 %v6132
      %v6229 = vunpack.c.l.b16 %v6133
      %v6230 = vunpack.c.l.b16 %v6134
      %v6231 = vunpack.c.l.b16 %v6135
      %v6232 = vunpack.c.l.b16 %v6136
      %v6233 = vunpack.c.l.b16 %v6137
      %v6234 = vunpack.c.l.b16 %v6138
      %v6235 = vunpack.c.l.b16 %v6139
      %v6236 = vunpack.c.l.b16 %v6140
      %v6237 = vunpack.c.l.b16 %v6141
      %v6238 = vunpack.c.l.b16 %v6142
      %v6239 = vunpack.c.l.b16 %v6143
      %v6240 = vunpack.c.l.b16 %v6144
      %v6241 = vunpack.c.l.b16 %v6145
      %v6242 = vunpack.c.l.b16 %v6146
      %v6243 = vunpack.c.l.b16 %v6147
      %v6244 = vunpack.c.l.b16 %v6148
      %v6245 = vunpack.c.l.b16 %v6149
      %v6246 = vunpack.c.l.b16 %v6150
      %v6247 = vunpack.c.l.b16 %v6151
      %v6248 = vunpack.c.l.b16 %v6152
      %v6249 = vunpack.c.l.b16 %v6153
      %v6250 = vunpack.c.l.b16 %v6154
      %v6251 = vunpack.c.l.b16 %v6155
      %v6252 = vunpack.c.l.b16 %v6156
      %v6253 = vunpack.c.l.b16 %v6157
      %v6254 = vunpack.c.l.b16 %v6158
      %v6255 = vunpack.c.l.b16 %v6159
      %v6256 = vunpack.c.l.b16 %v6160
      %v6257 = vunpack.c.l.b16 %v6161
      %v6258 = vunpack.c.l.b16 %v6162
      %v6259 = vunpack.c.l.b16 %v6163
      %v6260 = vunpack.c.l.b16 %v6164
      %v6261 = vunpack.c.l.b16 %v6165
      %v6262 = vunpack.c.l.b16 %v6166
      %v6263 = vunpack.c.l.b16 %v6167
      %v6264 = vunpack.c.l.b16 %v6168
      %v6265 = vunpack.c.l.b16 %v6169
      %v6266 = vpack.c.b16 %v6219, %v6218
      %v6267 = vpack.c.b16 %v6221, %v6220
      %v6268 = vpack.c.b16 %v6223, %v6222
      %v6269 = vpack.c.b16 %v6225, %v6224
      %v6270 = vpack.c.b16 %v6227, %v6226
      %v6271 = vpack.c.b16 %v6229, %v6228
      %v6272 = vpack.c.b16 %v6231, %v6230
      %v6273 = vpack.c.b16 %v6233, %v6232
      %v6274 = vpack.c.b16 %v6235, %v6234
      %v6275 = vpack.c.b16 %v6237, %v6236
      %v6276 = vpack.c.b16 %v6239, %v6238
      %v6277 = vpack.c.b16 %v6241, %v6240
      %v6278 = vpack.c.b16 %v6243, %v6242
      %v6279 = vpack.c.b16 %v6245, %v6244
      %v6280 = vpack.c.b16 %v6247, %v6246
      %v6281 = vpack.c.b16 %v6249, %v6248
      %v6282 = vpack.c.b16 %v6251, %v6250
      %v6283 = vpack.c.b16 %v6253, %v6252
      %v6284 = vpack.c.b16 %v6255, %v6254
      %v6285 = vpack.c.b16 %v6257, %v6256
      %v6286 = vpack.c.b16 %v6259, %v6258
      %v6287 = vpack.c.b16 %v6261, %v6260
      %v6288 = vpack.c.b16 %v6263, %v6262
      %v6289 = vpack.c.b16 %v6265, %v6264
      %6314 = vmatprep.subr.bf16.mxu0 0
      %6315 = vmatpush1.bf16.msra.mxu0 %v6266
      %6316 = vmatprep.subr.bf16.mxu0 0
      %6317 = vmatpush1.bf16.msra.mxu0 %v6267
      %6318 = vmatprep.subr.bf16.mxu0 0
      %6319 = vmatpush1.bf16.msra.mxu0 %v6268
      %6320 = vmatprep.subr.bf16.mxu0 0
      %6321 = vmatpush1.bf16.msra.mxu0 %v6269
      %6322 = vmatprep.subr.bf16.mxu0 0
      %6323 = vmatpush1.bf16.msra.mxu0 %v6270
      %6324 = vmatprep.subr.bf16.mxu0 0
      %6325 = vmatpush1.bf16.msra.mxu0 %v6271
      %6326 = vmatprep.subr.bf16.mxu0 0
      %6327 = vmatpush1.bf16.msra.mxu0 %v6272
      %6328 = vmatprep.subr.bf16.mxu0 0
      %6329 = vmatpush1.bf16.msra.mxu0 %v6273
      %6330 = vmatprep.subr.bf16.mxu0 0
      %6331 = vmatpush1.bf16.msra.mxu0 %v6274
      %6332 = vmatprep.subr.bf16.mxu0 0
      %6333 = vmatpush1.bf16.msra.mxu0 %v6275
      %6334 = vmatprep.subr.bf16.mxu0 0
      %6335 = vmatpush1.bf16.msra.mxu0 %v6276
      %6336 = vmatprep.subr.bf16.mxu0 0
      %6337 = vmatpush1.bf16.msra.mxu0 %v6277
      %6338 = vmatprep.subr.bf16.mxu0 0
      %6339 = vmatpush1.bf16.msra.mxu0 %v6278
      %6340 = vmatprep.subr.bf16.mxu0 0
      %6341 = vmatpush1.bf16.msra.mxu0 %v6279
      %6342 = vmatprep.subr.bf16.mxu0 0
      %6343 = vmatpush1.bf16.msra.mxu0 %v6280
      %6344 = vmatprep.subr.bf16.mxu0 0
      %6345 = vmatpush1.bf16.msra.mxu0 %v6281
      %6346 = vmatprep.mubr.bf16.mxu0 %v5812
      %6347 = vmatmul.mubr.bf16.gmra.mrb[0].mxu0 %v5721
      %v6348 = vpop.f32.mrb[0].mxu0
      %v6349 = vadd.f32 0.0, %v6348
      %v6350 = vpop.f32.mrb[0].mxu0
      %v6351 = vpop.f32.mrb[0].mxu0
      %v6352 = vadd.f32 0.0, %v6351
      %v6353 = vpop.f32.mrb[0].mxu0
      %6354 = vmatprep.mubr.bf16.mxu0 %v5824
      %6355 = vmatmul.mubr.bf16.gmra.mrb[0].mxu0 %v5722
      %v6356 = vpop.f32.mrb[0].mxu0
      %v6357 = vadd.f32 0.0, %v6356
      %v6358 = vpop.f32.mrb[0].mxu0
      %v6359 = vpop.f32.mrb[0].mxu0
      %v6360 = vadd.f32 0.0, %v6359
      %v6361 = vpop.f32.mrb[0].mxu0
      %6362 = vmatprep.mubr.bf16.mxu0 %v5836
      %6363 = vmatmul.mubr.bf16.gmra.mrb[0].mxu0 %v5723
      %v6364 = vpop.f32.mrb[0].mxu0
      %v6365 = vadd.f32 0.0, %v6364
      %v6366 = vpop.f32.mrb[0].mxu0
      %v6367 = vpop.f32.mrb[0].mxu0
      %v6368 = vadd.f32 0.0, %v6367
      %v6369 = vpop.f32.mrb[0].mxu0
      %6370 = vmatprep.mubr.bf16.mxu0 %v5848
      %6371 = vmatmul.mubr.bf16.gmra.mrb[0].mxu0 %v5724
      %v6372 = vpop.f32.mrb[0].mxu0
      %v6373 = vadd.f32 0.0, %v6372
      %v6374 = vpop.f32.mrb[0].mxu0
      %v6375 = vpop.f32.mrb[0].mxu0
      %v6376 = vadd.f32 0.0, %v6375
      %v6377 = vpop.f32.mrb[0].mxu0
      %6378 = vmatprep.mubr.bf16.mxu0 %v5860
      %6379 = vmatmul.mubr.bf16.gmra.mrb[0].mxu0 %v5725
      %v6380 = vpop.f32.mrb[0].mxu0
      %v6381 = vadd.f32 0.0, %v6380
      %v6382 = vpop.f32.mrb[0].mxu0
      %v6383 = vpop.f32.mrb[0].mxu0
      %v6384 = vadd.f32 0.0, %v6383
      %v6385 = vpop.f32.mrb[0].mxu0
      %6386 = vmatprep.mubr.bf16.mxu0 %v5872
      %6387 = vmatmul.mubr.bf16.gmra.mrb[0].mxu0 %v5726
      %v6388 = vpop.f32.mrb[0].mxu0
      %v6389 = vadd.f32 0.0, %v6388
      %v6390 = vpop.f32.mrb[0].mxu0
      %v6391 = vpop.f32.mrb[0].mxu0
      %v6392 = vadd.f32 0.0, %v6391
      %v6393 = vpop.f32.mrb[0].mxu0
      %6394 = vmatprep.mubr.bf16.mxu0 %v5884
      %6395 = vmatmul.mubr.bf16.gmra.mrb[0].mxu0 %v5727
      %v6396 = vpop.f32.mrb[0].mxu0
      %v6397 = vadd.f32 0.0, %v6396
      %v6398 = vpop.f32.mrb[0].mxu0
      %v6399 = vpop.f32.mrb[0].mxu0
      %v6400 = vadd.f32 0.0, %v6399
      %v6401 = vpop.f32.mrb[0].mxu0
      %6402 = vmatprep.mubr.bf16.mxu0 %v5896
      %6403 = vmatmul.mubr.bf16.gmra.mrb[0].mxu0 %v5728
      %v6404 = vpop.f32.mrb[0].mxu0
      %v6405 = vadd.f32 0.0, %v6404
      %v6406 = vpop.f32.mrb[0].mxu0
      %v6407 = vpop.f32.mrb[0].mxu0
      %v6408 = vadd.f32 0.0, %v6407
      %v6409 = vpop.f32.mrb[0].mxu0
      %6410 = vmatprep.mubr.bf16.mxu0 %v5908
      %6411 = vmatmul.mubr.bf16.gmra.mrb[0].mxu0 %v5729
      %v6412 = vpop.f32.mrb[0].mxu0
      %v6413 = vadd.f32 0.0, %v6412
      %v6414 = vpop.f32.mrb[0].mxu0
      %v6415 = vpop.f32.mrb[0].mxu0
      %v6416 = vadd.f32 0.0, %v6415
      %v6417 = vpop.f32.mrb[0].mxu0
      %6418 = vmatprep.mubr.bf16.mxu0 %v5920
      %6419 = vmatmul.mubr.bf16.gmra.mrb[0].mxu0 %v5730
      %v6420 = vpop.f32.mrb[0].mxu0
      %v6421 = vadd.f32 0.0, %v6420
      %v6422 = vpop.f32.mrb[0].mxu0
      %v6423 = vpop.f32.mrb[0].mxu0
      %v6424 = vadd.f32 0.0, %v6423
      %v6425 = vpop.f32.mrb[0].mxu0
      %6426 = vmatprep.mubr.bf16.mxu0 %v5932
      %6427 = vmatmul.mubr.bf16.gmra.mrb[0].mxu0 %v5731
      %v6428 = vpop.f32.mrb[0].mxu0
      %v6429 = vadd.f32 0.0, %v6428
      %v6430 = vpop.f32.mrb[0].mxu0
      %v6431 = vpop.f32.mrb[0].mxu0
      %v6432 = vadd.f32 0.0, %v6431
      %v6433 = vpop.f32.mrb[0].mxu0
      %6434 = vmatprep.mubr.bf16.mxu0 %v5944
      %6435 = vmatmul.mubr.bf16.gmra.mrb[0].mxu0 %v5732
      %v6436 = vpop.f32.mrb[0].mxu0
      %v6437 = vadd.f32 0.0, %v6436
      %v6438 = vpop.f32.mrb[0].mxu0
      %v6439 = vpop.f32.mrb[0].mxu0
      %v6440 = vadd.f32 0.0, %v6439
      %v6441 = vpop.f32.mrb[0].mxu0
      %6442 = vmatprep.mubr.bf16.mxu0 %v5956
      %6443 = vmatmul.mubr.bf16.gmra.mrb[0].mxu0 %v5733
      %v6444 = vpop.f32.mrb[0].mxu0
      %v6445 = vadd.f32 0.0, %v6444
      %v6446 = vpop.f32.mrb[0].mxu0
      %v6447 = vpop.f32.mrb[0].mxu0
      %v6448 = vadd.f32 0.0, %v6447
      %v6449 = vpop.f32.mrb[0].mxu0
      %6450 = vmatprep.mubr.bf16.mxu0 %v5968
      %6451 = vmatmul.mubr.bf16.gmra.mrb[0].mxu0 %v5734
      %v6452 = vpop.f32.mrb[0].mxu0
      %v6453 = vadd.f32 0.0, %v6452
      %v6454 = vpop.f32.mrb[0].mxu0
      %v6455 = vpop.f32.mrb[0].mxu0
      %v6456 = vadd.f32 0.0, %v6455
      %v6457 = vpop.f32.mrb[0].mxu0
      %6458 = vmatprep.mubr.bf16.mxu0 %v5980
      %6459 = vmatmul.mubr.bf16.gmra.mrb[0].mxu0 %v5735
      %v6460 = vpop.f32.mrb[0].mxu0
      %v6461 = vadd.f32 0.0, %v6460
      %v6462 = vpop.f32.mrb[0].mxu0
      %v6463 = vpop.f32.mrb[0].mxu0
      %v6464 = vadd.f32 0.0, %v6463
      %v6465 = vpop.f32.mrb[0].mxu0
      %6466 = vmatprep.mubr.bf16.mxu0 %v5992
      %6467 = vmatmul.mubr.bf16.gmra.mrb[0].mxu0 %v5736
      %v6468 = vpop.f32.mrb[0].mxu0
      %v6469 = vadd.f32 0.0, %v6468
      %v6470 = vpop.f32.mrb[0].mxu0
      %v6471 = vpop.f32.mrb[0].mxu0
      %v6472 = vadd.f32 0.0, %v6471
      %v6473 = vpop.f32.mrb[0].mxu0
      %6474 = vdwg.mxu0
      %6475 = vmatprep.subr.bf16.mxu0 0
      %6476 = vmatpush1.bf16.msra.mxu0 %v6282
      %6477 = vmatprep.subr.bf16.mxu0 0
      %6478 = vmatpush1.bf16.msra.mxu0 %v6283
      %6479 = vmatprep.subr.bf16.mxu0 0
      %6480 = vmatpush1.bf16.msra.mxu0 %v6284
      %6481 = vmatprep.subr.bf16.mxu0 0
      %6482 = vmatpush1.bf16.msra.mxu0 %v6285
      %6483 = vmatprep.subr.bf16.mxu0 0
      %6484 = vmatpush1.bf16.msra.mxu0 %v6286
      %6485 = vmatprep.subr.bf16.mxu0 0
      %6486 = vmatpush1.bf16.msra.mxu0 %v6287
      %6487 = vmatprep.subr.bf16.mxu0 0
      %6488 = vmatpush1.bf16.msra.mxu0 %v6288
      %6489 = vmatprep.subr.bf16.mxu0 0
      %6490 = vmatpush1.bf16.msra.mxu0 %v6289
      %6491 = vmatprep.subr.bf16.mxu0 0
      %6492 = vmatpush1.bf16.msra.mxu0 0
      %6493 = vmatprep.subr.bf16.mxu0 0
      %6494 = vmatpush1.bf16.msra.mxu0 0
      %6495 = vmatprep.subr.bf16.mxu0 0
      %6496 = vmatpush1.bf16.msra.mxu0 0
      %6497 = vmatprep.subr.bf16.mxu0 0
      %6498 = vmatpush1.bf16.msra.mxu0 0
      %6499 = vmatprep.subr.bf16.mxu0 0
      %6500 = vmatpush1.bf16.msra.mxu0 0
      %6501 = vmatprep.subr.bf16.mxu0 0
      %6502 = vmatpush1.bf16.msra.mxu0 0
      %6503 = vmatprep.subr.bf16.mxu0 0
      %6504 = vmatpush1.bf16.msra.mxu0 0
      %6505 = vmatprep.subr.bf16.mxu0 0
      %6506 = vmatpush1.bf16.msra.mxu0 0
      %6507 = vmatprep.mubr.bf16.mxu0 0
      %6508 = vmatmul.mubr.bf16.gmra.mrb[0].mxu0 %v6059
      %v6509 = vpop.f32.mrb[0].mxu0
      %v6510 = vadd.f32 %v6349, %v6509
      %v6511 = vpop.f32.mrb[0].mxu0
      %v6512 = vpop.f32.mrb[0].mxu0
      %v6513 = vadd.f32 %v6352, %v6512
      %v6514 = vpop.f32.mrb[0].mxu0
      %6515 = vmatprep.mubr.bf16.mxu0 0
      %6516 = vmatmul.mubr.bf16.gmra.mrb[0].mxu0 %v6062
      %v6517 = vpop.f32.mrb[0].mxu0
      %v6518 = vadd.f32 %v6357, %v6517
      %v6519 = vpop.f32.mrb[0].mxu0
      %v6520 = vpop.f32.mrb[0].mxu0
      %v6521 = vadd.f32 %v6360, %v6520
      %v6522 = vpop.f32.mrb[0].mxu0
      %6523 = vmatprep.mubr.bf16.mxu0 0
      %6524 = vmatmul.mubr.bf16.gmra.mrb[0].mxu0 %v6065
      %v6525 = vpop.f32.mrb[0].mxu0
      %v6526 = vadd.f32 %v6365, %v6525
      %v6527 = vpop.f32.mrb[0].mxu0
      %v6528 = vpop.f32.mrb[0].mxu0
      %v6529 = vadd.f32 %v6368, %v6528
      %v6530 = vpop.f32.mrb[0].mxu0
      %6531 = vmatprep.mubr.bf16.mxu0 0
      %6532 = vmatmul.mubr.bf16.gmra.mrb[0].mxu0 %v6068
      %v6533 = vpop.f32.mrb[0].mxu0
      %v6534 = vadd.f32 %v6373, %v6533
      %v6535 = vpop.f32.mrb[0].mxu0
      %v6536 = vpop.f32.mrb[0].mxu0
      %v6537 = vadd.f32 %v6376, %v6536
      %v6538 = vpop.f32.mrb[0].mxu0
      %6539 = vmatprep.mubr.bf16.mxu0 0
      %6540 = vmatmul.mubr.bf16.gmra.mrb[0].mxu0 %v6071
      %v6541 = vpop.f32.mrb[0].mxu0
      %v6542 = vadd.f32 %v6381, %v6541
      %v6543 = vpop.f32.mrb[0].mxu0
      %v6544 = vpop.f32.mrb[0].mxu0
      %v6545 = vadd.f32 %v6384, %v6544
      %v6546 = vpop.f32.mrb[0].mxu0
      %6547 = vmatprep.mubr.bf16.mxu0 0
      %6548 = vmatmul.mubr.bf16.gmra.mrb[0].mxu0 %v6074
      %v6549 = vpop.f32.mrb[0].mxu0
      %v6550 = vadd.f32 %v6389, %v6549
      %v6551 = vpop.f32.mrb[0].mxu0
      %v6552 = vpop.f32.mrb[0].mxu0
      %v6553 = vadd.f32 %v6392, %v6552
      %v6554 = vpop.f32.mrb[0].mxu0
      %6555 = vmatprep.mubr.bf16.mxu0 0
      %6556 = vmatmul.mubr.bf16.gmra.mrb[0].mxu0 %v6077
      %v6557 = vpop.f32.mrb[0].mxu0
      %v6558 = vadd.f32 %v6397, %v6557
      %v6559 = vpop.f32.mrb[0].mxu0
      %v6560 = vpop.f32.mrb[0].mxu0
      %v6561 = vadd.f32 %v6400, %v6560
      %v6562 = vpop.f32.mrb[0].mxu0
      %6563 = vmatprep.mubr.bf16.mxu0 0
      %6564 = vmatmul.mubr.bf16.gmra.mrb[0].mxu0 %v6080
      %v6565 = vpop.f32.mrb[0].mxu0
      %v6566 = vadd.f32 %v6405, %v6565
      %v6567 = vpop.f32.mrb[0].mxu0
      %v6568 = vpop.f32.mrb[0].mxu0
      %v6569 = vadd.f32 %v6408, %v6568
      %v6570 = vpop.f32.mrb[0].mxu0
      %6571 = vmatprep.mubr.bf16.mxu0 0
      %6572 = vmatmul.mubr.bf16.gmra.mrb[0].mxu0 %v6083
      %v6573 = vpop.f32.mrb[0].mxu0
      %v6574 = vadd.f32 %v6413, %v6573
      %v6575 = vpop.f32.mrb[0].mxu0
      %v6576 = vpop.f32.mrb[0].mxu0
      %v6577 = vadd.f32 %v6416, %v6576
      %v6578 = vpop.f32.mrb[0].mxu0
      %6579 = vmatprep.mubr.bf16.mxu0 0
      %6580 = vmatmul.mubr.bf16.gmra.mrb[0].mxu0 %v6086
      %v6581 = vpop.f32.mrb[0].mxu0
      %v6582 = vadd.f32 %v6421, %v6581
      %v6583 = vpop.f32.mrb[0].mxu0
      %v6584 = vpop.f32.mrb[0].mxu0
      %v6585 = vadd.f32 %v6424, %v6584
      %v6586 = vpop.f32.mrb[0].mxu0
      %6587 = vmatprep.mubr.bf16.mxu0 0
      %6588 = vmatmul.mubr.bf16.gmra.mrb[0].mxu0 %v6089
      %v6589 = vpop.f32.mrb[0].mxu0
      %v6590 = vadd.f32 %v6429, %v6589
      %v6591 = vpop.f32.mrb[0].mxu0
      %v6592 = vpop.f32.mrb[0].mxu0
      %v6593 = vadd.f32 %v6432, %v6592
      %v6594 = vpop.f32.mrb[0].mxu0
      %6595 = vmatprep.mubr.bf16.mxu0 0
      %6596 = vmatmul.mubr.bf16.gmra.mrb[0].mxu0 %v6092
      %v6597 = vpop.f32.mrb[0].mxu0
      %v6598 = vadd.f32 %v6437, %v6597
      %v6599 = vpop.f32.mrb[0].mxu0
      %v6600 = vpop.f32.mrb[0].mxu0
      %v6601 = vadd.f32 %v6440, %v6600
      %v6602 = vpop.f32.mrb[0].mxu0
      %6603 = vmatprep.mubr.bf16.mxu0 0
      %6604 = vmatmul.mubr.bf16.gmra.mrb[0].mxu0 %v6095
      %v6605 = vpop.f32.mrb[0].mxu0
      %v6606 = vadd.f32 %v6445, %v6605
      %v6607 = vpop.f32.mrb[0].mxu0
      %v6608 = vpop.f32.mrb[0].mxu0
      %v6609 = vadd.f32 %v6448, %v6608
      %v6610 = vpop.f32.mrb[0].mxu0
      %6611 = vmatprep.mubr.bf16.mxu0 0
      %6612 = vmatmul.mubr.bf16.gmra.mrb[0].mxu0 %v6098
      %v6613 = vpop.f32.mrb[0].mxu0
      %v6614 = vadd.f32 %v6453, %v6613
      %v6615 = vpop.f32.mrb[0].mxu0
      %v6616 = vpop.f32.mrb[0].mxu0
      %v6617 = vadd.f32 %v6456, %v6616
      %v6618 = vpop.f32.mrb[0].mxu0
      %6619 = vmatprep.mubr.bf16.mxu0 0
      %6620 = vmatmul.mubr.bf16.gmra.mrb[0].mxu0 %v6101
      %v6621 = vpop.f32.mrb[0].mxu0
      %v6622 = vadd.f32 %v6461, %v6621
      %v6623 = vpop.f32.mrb[0].mxu0
      %v6624 = vpop.f32.mrb[0].mxu0
      %v6625 = vadd.f32 %v6464, %v6624
      %v6626 = vpop.f32.mrb[0].mxu0
      %6627 = vmatprep.mubr.bf16.mxu0 0
      %6628 = vmatmul.mubr.bf16.gmra.mrb[0].mxu0 %v6104
      %v6629 = vpop.f32.mrb[0].mxu0
      %v6630 = vadd.f32 %v6469, %v6629
      %v6631 = vpop.f32.mrb[0].mxu0
      %v6632 = vpop.f32.mrb[0].mxu0
      %v6633 = vadd.f32 %v6472, %v6632
      %v6634 = vpop.f32.mrb[0].mxu0
      %6635 = vdwg.mxu0
      %v6684 = vunpack.c.l.b16 %v5544
      %v6685 = vunpack.c.l.b16 %v5545
      %v6686 = vunpack.c.l.b16 %v5546
      %v6687 = vunpack.c.l.b16 %v5547
      %v6688 = vunpack.c.l.b16 %v5548
      %v6689 = vunpack.c.l.b16 %v5549
      %v6690 = vunpack.c.l.b16 %v5550
      %v6691 = vunpack.c.l.b16 %v5551
      %v6692 = vunpack.c.l.b16 %v5552
      %v6693 = vunpack.c.l.b16 %v5553
      %v6694 = vunpack.c.l.b16 %v5554
      %v6695 = vunpack.c.l.b16 %v5555
      %v6696 = vunpack.c.l.b16 %v5556
      %v6697 = vunpack.c.l.b16 %v5557
      %v6698 = vunpack.c.l.b16 %v5558
      %v6699 = vunpack.c.l.b16 %v5559
      %v6700 = vunpack.c.l.b16 %v5560
      %v6701 = vunpack.c.l.b16 %v5561
      %v6702 = vunpack.c.l.b16 %v5562
      %v6703 = vunpack.c.l.b16 %v5563
      %v6704 = vunpack.c.l.b16 %v5564
      %v6705 = vunpack.c.l.b16 %v5565
      %v6706 = vunpack.c.l.b16 %v5566
      %v6707 = vunpack.c.l.b16 %v5567
      %v6708 = vunpack.c.l.b16 %v5568
      %v6709 = vunpack.c.l.b16 %v5569
      %v6710 = vunpack.c.l.b16 %v5570
      %v6711 = vunpack.c.l.b16 %v5571
      %v6712 = vunpack.c.l.b16 %v5572
      %v6713 = vunpack.c.l.b16 %v5573
      %v6714 = vunpack.c.l.b16 %v5574
      %v6715 = vunpack.c.l.b16 %v5575
      %v6716 = vunpack.c.l.b16 %v5576
      %v6717 = vunpack.c.l.b16 %v5577
      %v6718 = vunpack.c.l.b16 %v5578
      %v6719 = vunpack.c.l.b16 %v5579
      %v6720 = vunpack.c.l.b16 %v5580
      %v6721 = vunpack.c.l.b16 %v5581
      %v6722 = vunpack.c.l.b16 %v5582
      %v6723 = vunpack.c.l.b16 %v5583
      %v6724 = vunpack.c.l.b16 %v5584
      %v6725 = vunpack.c.l.b16 %v5585
      %v6726 = vunpack.c.l.b16 %v5586
      %v6727 = vunpack.c.l.b16 %v5587
      %v6728 = vunpack.c.l.b16 %v5588
      %v6729 = vunpack.c.l.b16 %v5589
      %v6730 = vunpack.c.l.b16 %v5590
      %v6731 = vunpack.c.l.b16 %v5591
      %v6732 = vpack.c.b16 %v6685, %v6684
      %v6733 = vpack.c.b16 %v6687, %v6686
      %v6734 = vpack.c.b16 %v6689, %v6688
      %v6735 = vpack.c.b16 %v6691, %v6690
      %v6736 = vpack.c.b16 %v6693, %v6692
      %v6737 = vpack.c.b16 %v6695, %v6694
      %v6738 = vpack.c.b16 %v6697, %v6696
      %v6739 = vpack.c.b16 %v6699, %v6698
      %v6740 = vpack.c.b16 %v6701, %v6700
      %v6741 = vpack.c.b16 %v6703, %v6702
      %v6742 = vpack.c.b16 %v6705, %v6704
      %v6743 = vpack.c.b16 %v6707, %v6706
      %v6744 = vpack.c.b16 %v6709, %v6708
      %v6745 = vpack.c.b16 %v6711, %v6710
      %v6746 = vpack.c.b16 %v6713, %v6712
      %v6747 = vpack.c.b16 %v6715, %v6714
      %v6748 = vpack.c.b16 %v6717, %v6716
      %v6749 = vpack.c.b16 %v6719, %v6718
      %v6750 = vpack.c.b16 %v6721, %v6720
      %v6751 = vpack.c.b16 %v6723, %v6722
      %v6752 = vpack.c.b16 %v6725, %v6724
      %v6753 = vpack.c.b16 %v6727, %v6726
      %v6754 = vpack.c.b16 %v6729, %v6728
      %v6755 = vpack.c.b16 %v6731, %v6730
      %6780 = vmatprep.subr.bf16.mxu0 0
      %6781 = vmatpush1.bf16.msra.mxu0 %v6732
      %6782 = vmatprep.subr.bf16.mxu0 0
      %6783 = vmatpush1.bf16.msra.mxu0 %v6733
      %6784 = vmatprep.subr.bf16.mxu0 0
      %6785 = vmatpush1.bf16.msra.mxu0 %v6734
      %6786 = vmatprep.subr.bf16.mxu0 0
      %6787 = vmatpush1.bf16.msra.mxu0 %v6735
      %6788 = vmatprep.subr.bf16.mxu0 0
      %6789 = vmatpush1.bf16.msra.mxu0 %v6736
      %6790 = vmatprep.subr.bf16.mxu0 0
      %6791 = vmatpush1.bf16.msra.mxu0 %v6737
      %6792 = vmatprep.subr.bf16.mxu0 0
      %6793 = vmatpush1.bf16.msra.mxu0 %v6738
      %6794 = vmatprep.subr.bf16.mxu0 0
      %6795 = vmatpush1.bf16.msra.mxu0 %v6739
      %6796 = vmatprep.subr.bf16.mxu0 0
      %6797 = vmatpush1.bf16.msra.mxu0 %v6740
      %6798 = vmatprep.subr.bf16.mxu0 0
      %6799 = vmatpush1.bf16.msra.mxu0 %v6741
      %6800 = vmatprep.subr.bf16.mxu0 0
      %6801 = vmatpush1.bf16.msra.mxu0 %v6742
      %6802 = vmatprep.subr.bf16.mxu0 0
      %6803 = vmatpush1.bf16.msra.mxu0 %v6743
      %6804 = vmatprep.subr.bf16.mxu0 0
      %6805 = vmatpush1.bf16.msra.mxu0 %v6744
      %6806 = vmatprep.subr.bf16.mxu0 0
      %6807 = vmatpush1.bf16.msra.mxu0 %v6745
      %6808 = vmatprep.subr.bf16.mxu0 0
      %6809 = vmatpush1.bf16.msra.mxu0 %v6746
      %6810 = vmatprep.subr.bf16.mxu0 0
      %6811 = vmatpush1.bf16.msra.mxu0 %v6747
      %6812 = vmatprep.mubr.bf16.mxu0 %v5235
      %6813 = vmatmul.mubr.bf16.gmra.mrb[0].mxu0 %v5144
      %v6814 = vpop.f32.mrb[0].mxu0
      %v6815 = vadd.f32 %v6510, %v6814
      %v6816 = vpop.f32.mrb[0].mxu0
      %v6817 = vpop.f32.mrb[0].mxu0
      %v6818 = vadd.f32 %v6513, %v6817
      %v6819 = vpop.f32.mrb[0].mxu0
      %6820 = vmatprep.mubr.bf16.mxu0 %v5247
      %6821 = vmatmul.mubr.bf16.gmra.mrb[0].mxu0 %v5145
      %v6822 = vpop.f32.mrb[0].mxu0
      %v6823 = vadd.f32 %v6518, %v6822
      %v6824 = vpop.f32.mrb[0].mxu0
      %v6825 = vpop.f32.mrb[0].mxu0
      %v6826 = vadd.f32 %v6521, %v6825
      %v6827 = vpop.f32.mrb[0].mxu0
      %6828 = vmatprep.mubr.bf16.mxu0 %v5259
      %6829 = vmatmul.mubr.bf16.gmra.mrb[0].mxu0 %v5146
      %v6830 = vpop.f32.mrb[0].mxu0
      %v6831 = vadd.f32 %v6526, %v6830
      %v6832 = vpop.f32.mrb[0].mxu0
      %v6833 = vpop.f32.mrb[0].mxu0
      %v6834 = vadd.f32 %v6529, %v6833
      %v6835 = vpop.f32.mrb[0].mxu0
      %6836 = vmatprep.mubr.bf16.mxu0 %v5271
      %6837 = vmatmul.mubr.bf16.gmra.mrb[0].mxu0 %v5147
      %v6838 = vpop.f32.mrb[0].mxu0
      %v6839 = vadd.f32 %v6534, %v6838
      %v6840 = vpop.f32.mrb[0].mxu0
      %v6841 = vpop.f32.mrb[0].mxu0
      %v6842 = vadd.f32 %v6537, %v6841
      %v6843 = vpop.f32.mrb[0].mxu0
      %6844 = vmatprep.mubr.bf16.mxu0 %v5283
      %6845 = vmatmul.mubr.bf16.gmra.mrb[0].mxu0 %v5148
      %v6846 = vpop.f32.mrb[0].mxu0
      %v6847 = vadd.f32 %v6542, %v6846
      %v6848 = vpop.f32.mrb[0].mxu0
      %v6849 = vpop.f32.mrb[0].mxu0
      %v6850 = vadd.f32 %v6545, %v6849
      %v6851 = vpop.f32.mrb[0].mxu0
      %6852 = vmatprep.mubr.bf16.mxu0 %v5295
      %6853 = vmatmul.mubr.bf16.gmra.mrb[0].mxu0 %v5149
      %v6854 = vpop.f32.mrb[0].mxu0
      %v6855 = vadd.f32 %v6550, %v6854
      %v6856 = vpop.f32.mrb[0].mxu0
      %v6857 = vpop.f32.mrb[0].mxu0
      %v6858 = vadd.f32 %v6553, %v6857
      %v6859 = vpop.f32.mrb[0].mxu0
      %6860 = vmatprep.mubr.bf16.mxu0 %v5307
      %6861 = vmatmul.mubr.bf16.gmra.mrb[0].mxu0 %v5150
      %v6862 = vpop.f32.mrb[0].mxu0
      %v6863 = vadd.f32 %v6558, %v6862
      %v6864 = vpop.f32.mrb[0].mxu0
      %v6865 = vpop.f32.mrb[0].mxu0
      %v6866 = vadd.f32 %v6561, %v6865
      %v6867 = vpop.f32.mrb[0].mxu0
      %6868 = vmatprep.mubr.bf16.mxu0 %v5319
      %6869 = vmatmul.mubr.bf16.gmra.mrb[0].mxu0 %v5151
      %v6870 = vpop.f32.mrb[0].mxu0
      %v6871 = vadd.f32 %v6566, %v6870
      %v6872 = vpop.f32.mrb[0].mxu0
      %v6873 = vpop.f32.mrb[0].mxu0
      %v6874 = vadd.f32 %v6569, %v6873
      %v6875 = vpop.f32.mrb[0].mxu0
      %6876 = vmatprep.mubr.bf16.mxu0 %v5331
      %6877 = vmatmul.mubr.bf16.gmra.mrb[0].mxu0 %v5152
      %v6878 = vpop.f32.mrb[0].mxu0
      %v6879 = vadd.f32 %v6574, %v6878
      %v6880 = vpop.f32.mrb[0].mxu0
      %v6881 = vpop.f32.mrb[0].mxu0
      %v6882 = vadd.f32 %v6577, %v6881
      %v6883 = vpop.f32.mrb[0].mxu0
      %6884 = vmatprep.mubr.bf16.mxu0 %v5343
      %6885 = vmatmul.mubr.bf16.gmra.mrb[0].mxu0 %v5153
      %v6886 = vpop.f32.mrb[0].mxu0
      %v6887 = vadd.f32 %v6582, %v6886
      %v6888 = vpop.f32.mrb[0].mxu0
      %v6889 = vpop.f32.mrb[0].mxu0
      %v6890 = vadd.f32 %v6585, %v6889
      %v6891 = vpop.f32.mrb[0].mxu0
      %6892 = vmatprep.mubr.bf16.mxu0 %v5355
      %6893 = vmatmul.mubr.bf16.gmra.mrb[0].mxu0 %v5154
      %v6894 = vpop.f32.mrb[0].mxu0
      %v6895 = vadd.f32 %v6590, %v6894
      %v6896 = vpop.f32.mrb[0].mxu0
      %v6897 = vpop.f32.mrb[0].mxu0
      %v6898 = vadd.f32 %v6593, %v6897
      %v6899 = vpop.f32.mrb[0].mxu0
      %6900 = vmatprep.mubr.bf16.mxu0 %v5367
      %6901 = vmatmul.mubr.bf16.gmra.mrb[0].mxu0 %v5155
      %v6902 = vpop.f32.mrb[0].mxu0
      %v6903 = vadd.f32 %v6598, %v6902
      %v6904 = vpop.f32.mrb[0].mxu0
      %v6905 = vpop.f32.mrb[0].mxu0
      %v6906 = vadd.f32 %v6601, %v6905
      %v6907 = vpop.f32.mrb[0].mxu0
      %6908 = vmatprep.mubr.bf16.mxu0 %v5379
      %6909 = vmatmul.mubr.bf16.gmra.mrb[0].mxu0 %v5156
      %v6910 = vpop.f32.mrb[0].mxu0
      %v6911 = vadd.f32 %v6606, %v6910
      %v6912 = vpop.f32.mrb[0].mxu0
      %v6913 = vpop.f32.mrb[0].mxu0
      %v6914 = vadd.f32 %v6609, %v6913
      %v6915 = vpop.f32.mrb[0].mxu0
      %6916 = vmatprep.mubr.bf16.mxu0 %v5391
      %6917 = vmatmul.mubr.bf16.gmra.mrb[0].mxu0 %v5157
      %v6918 = vpop.f32.mrb[0].mxu0
      %v6919 = vadd.f32 %v6614, %v6918
      %v6920 = vpop.f32.mrb[0].mxu0
      %v6921 = vpop.f32.mrb[0].mxu0
      %v6922 = vadd.f32 %v6617, %v6921
      %v6923 = vpop.f32.mrb[0].mxu0
      %6924 = vmatprep.mubr.bf16.mxu0 %v5403
      %6925 = vmatmul.mubr.bf16.gmra.mrb[0].mxu0 %v5158
      %v6926 = vpop.f32.mrb[0].mxu0
      %v6927 = vadd.f32 %v6622, %v6926
      %v6928 = vpop.f32.mrb[0].mxu0
      %v6929 = vpop.f32.mrb[0].mxu0
      %v6930 = vadd.f32 %v6625, %v6929
      %v6931 = vpop.f32.mrb[0].mxu0
      %6932 = vmatprep.mubr.bf16.mxu0 %v5415
      %6933 = vmatmul.mubr.bf16.gmra.mrb[0].mxu0 %v5159
      %v6934 = vpop.f32.mrb[0].mxu0
      %v6935 = vadd.f32 %v6630, %v6934
      %v6936 = vpop.f32.mrb[0].mxu0
      %v6937 = vpop.f32.mrb[0].mxu0
      %v6938 = vadd.f32 %v6633, %v6937
      %v6939 = vpop.f32.mrb[0].mxu0
      %6940 = vdwg.mxu0
      %6941 = vmatprep.subr.bf16.mxu0 0
      %6942 = vmatpush1.bf16.msra.mxu0 %v6748
      %6943 = vmatprep.subr.bf16.mxu0 0
      %6944 = vmatpush1.bf16.msra.mxu0 %v6749
      %6945 = vmatprep.subr.bf16.mxu0 0
      %6946 = vmatpush1.bf16.msra.mxu0 %v6750
      %6947 = vmatprep.subr.bf16.mxu0 0
      %6948 = vmatpush1.bf16.msra.mxu0 %v6751
      %6949 = vmatprep.subr.bf16.mxu0 0
      %6950 = vmatpush1.bf16.msra.mxu0 %v6752
      %6951 = vmatprep.subr.bf16.mxu0 0
      %6952 = vmatpush1.bf16.msra.mxu0 %v6753
      %6953 = vmatprep.subr.bf16.mxu0 0
      %6954 = vmatpush1.bf16.msra.mxu0 %v6754
      %6955 = vmatprep.subr.bf16.mxu0 0
      %6956 = vmatpush1.bf16.msra.mxu0 %v6755
      %6957 = vmatprep.subr.bf16.mxu0 0
      %6958 = vmatpush1.bf16.msra.mxu0 0
      %6959 = vmatprep.subr.bf16.mxu0 0
      %6960 = vmatpush1.bf16.msra.mxu0 0
      %6961 = vmatprep.subr.bf16.mxu0 0
      %6962 = vmatpush1.bf16.msra.mxu0 0
      %6963 = vmatprep.subr.bf16.mxu0 0
      %6964 = vmatpush1.bf16.msra.mxu0 0
      %6965 = vmatprep.subr.bf16.mxu0 0
      %6966 = vmatpush1.bf16.msra.mxu0 0
      %6967 = vmatprep.subr.bf16.mxu0 0
      %6968 = vmatpush1.bf16.msra.mxu0 0
      %6969 = vmatprep.subr.bf16.mxu0 0
      %6970 = vmatpush1.bf16.msra.mxu0 0
      %6971 = vmatprep.subr.bf16.mxu0 0
      %6972 = vmatpush1.bf16.msra.mxu0 0
      %6973 = vmatprep.mubr.bf16.mxu0 0
      %6974 = vmatmul.mubr.bf16.gmra.mrb[0].mxu0 %v5482
      %v6975 = vpop.f32.mrb[0].mxu0
      %v6976 = vadd.f32 %v6815, %v6975
      %v6977 = vpop.f32.mrb[0].mxu0
      %v6978 = vpop.f32.mrb[0].mxu0
      %v6979 = vadd.f32 %v6818, %v6978
      %v6980 = vpop.f32.mrb[0].mxu0
      %6981 = vmatprep.mubr.bf16.mxu0 0
      %6982 = vmatmul.mubr.bf16.gmra.mrb[0].mxu0 %v5485
      %v6983 = vpop.f32.mrb[0].mxu0
      %v6984 = vadd.f32 %v6823, %v6983
      %v6985 = vpop.f32.mrb[0].mxu0
      %v6986 = vpop.f32.mrb[0].mxu0
      %v6987 = vadd.f32 %v6826, %v6986
      %v6988 = vpop.f32.mrb[0].mxu0
      %6989 = vmatprep.mubr.bf16.mxu0 0
      %6990 = vmatmul.mubr.bf16.gmra.mrb[0].mxu0 %v5488
      %v6991 = vpop.f32.mrb[0].mxu0
      %v6992 = vadd.f32 %v6831, %v6991
      %v6993 = vpop.f32.mrb[0].mxu0
      %v6994 = vpop.f32.mrb[0].mxu0
      %v6995 = vadd.f32 %v6834, %v6994
      %v6996 = vpop.f32.mrb[0].mxu0
      %6997 = vmatprep.mubr.bf16.mxu0 0
      %6998 = vmatmul.mubr.bf16.gmra.mrb[0].mxu0 %v5491
      %v6999 = vpop.f32.mrb[0].mxu0
      %v7000 = vadd.f32 %v6839, %v6999
      %v7001 = vpop.f32.mrb[0].mxu0
      %v7002 = vpop.f32.mrb[0].mxu0
      %v7003 = vadd.f32 %v6842, %v7002
      %v7004 = vpop.f32.mrb[0].mxu0
      %7005 = vmatprep.mubr.bf16.mxu0 0
      %7006 = vmatmul.mubr.bf16.gmra.mrb[0].mxu0 %v5494
      %v7007 = vpop.f32.mrb[0].mxu0
      %v7008 = vadd.f32 %v6847, %v7007
      %v7009 = vpop.f32.mrb[0].mxu0
      %v7010 = vpop.f32.mrb[0].mxu0
      %v7011 = vadd.f32 %v6850, %v7010
      %v7012 = vpop.f32.mrb[0].mxu0
      %7013 = vmatprep.mubr.bf16.mxu0 0
      %7014 = vmatmul.mubr.bf16.gmra.mrb[0].mxu0 %v5497
      %v7015 = vpop.f32.mrb[0].mxu0
      %v7016 = vadd.f32 %v6855, %v7015
      %v7017 = vpop.f32.mrb[0].mxu0
      %v7018 = vpop.f32.mrb[0].mxu0
      %v7019 = vadd.f32 %v6858, %v7018
      %v7020 = vpop.f32.mrb[0].mxu0
      %7021 = vmatprep.mubr.bf16.mxu0 0
      %7022 = vmatmul.mubr.bf16.gmra.mrb[0].mxu0 %v5500
      %v7023 = vpop.f32.mrb[0].mxu0
      %v7024 = vadd.f32 %v6863, %v7023
      %v7025 = vpop.f32.mrb[0].mxu0
      %v7026 = vpop.f32.mrb[0].mxu0
      %v7027 = vadd.f32 %v6866, %v7026
      %v7028 = vpop.f32.mrb[0].mxu0
      %7029 = vmatprep.mubr.bf16.mxu0 0
      %7030 = vmatmul.mubr.bf16.gmra.mrb[0].mxu0 %v5503
      %v7031 = vpop.f32.mrb[0].mxu0
      %v7032 = vadd.f32 %v6871, %v7031
      %v7033 = vpop.f32.mrb[0].mxu0
      %v7034 = vpop.f32.mrb[0].mxu0
      %v7035 = vadd.f32 %v6874, %v7034
      %v7036 = vpop.f32.mrb[0].mxu0
      %7037 = vmatprep.mubr.bf16.mxu0 0
      %7038 = vmatmul.mubr.bf16.gmra.mrb[0].mxu0 %v5506
      %v7039 = vpop.f32.mrb[0].mxu0
      %v7040 = vadd.f32 %v6879, %v7039
      %v7041 = vpop.f32.mrb[0].mxu0
      %v7042 = vpop.f32.mrb[0].mxu0
      %v7043 = vadd.f32 %v6882, %v7042
      %v7044 = vpop.f32.mrb[0].mxu0
      %7045 = vmatprep.mubr.bf16.mxu0 0
      %7046 = vmatmul.mubr.bf16.gmra.mrb[0].mxu0 %v5509
      %v7047 = vpop.f32.mrb[0].mxu0
      %v7048 = vadd.f32 %v6887, %v7047
      %v7049 = vpop.f32.mrb[0].mxu0
      %v7050 = vpop.f32.mrb[0].mxu0
      %v7051 = vadd.f32 %v6890, %v7050
      %v7052 = vpop.f32.mrb[0].mxu0
      %7053 = vmatprep.mubr.bf16.mxu0 0
      %7054 = vmatmul.mubr.bf16.gmra.mrb[0].mxu0 %v5512
      %v7055 = vpop.f32.mrb[0].mxu0
      %v7056 = vadd.f32 %v6895, %v7055
      %v7057 = vpop.f32.mrb[0].mxu0
      %v7058 = vpop.f32.mrb[0].mxu0
      %v7059 = vadd.f32 %v6898, %v7058
      %v7060 = vpop.f32.mrb[0].mxu0
      %7061 = vmatprep.mubr.bf16.mxu0 0
      %7062 = vmatmul.mubr.bf16.gmra.mrb[0].mxu0 %v5515
      %v7063 = vpop.f32.mrb[0].mxu0
      %v7064 = vadd.f32 %v6903, %v7063
      %v7065 = vpop.f32.mrb[0].mxu0
      %v7066 = vpop.f32.mrb[0].mxu0
      %v7067 = vadd.f32 %v6906, %v7066
      %v7068 = vpop.f32.mrb[0].mxu0
      %7069 = vmatprep.mubr.bf16.mxu0 0
      %7070 = vmatmul.mubr.bf16.gmra.mrb[0].mxu0 %v5518
      %v7071 = vpop.f32.mrb[0].mxu0
      %v7072 = vadd.f32 %v6911, %v7071
      %v7073 = vpop.f32.mrb[0].mxu0
      %v7074 = vpop.f32.mrb[0].mxu0
      %v7075 = vadd.f32 %v6914, %v7074
      %v7076 = vpop.f32.mrb[0].mxu0
      %7077 = vmatprep.mubr.bf16.mxu0 0
      %7078 = vmatmul.mubr.bf16.gmra.mrb[0].mxu0 %v5521
      %v7079 = vpop.f32.mrb[0].mxu0
      %v7080 = vadd.f32 %v6919, %v7079
      %v7081 = vpop.f32.mrb[0].mxu0
      %v7082 = vpop.f32.mrb[0].mxu0
      %v7083 = vadd.f32 %v6922, %v7082
      %v7084 = vpop.f32.mrb[0].mxu0
      %7085 = vmatprep.mubr.bf16.mxu0 0
      %7086 = vmatmul.mubr.bf16.gmra.mrb[0].mxu0 %v5524
      %v7087 = vpop.f32.mrb[0].mxu0
      %v7088 = vadd.f32 %v6927, %v7087
      %v7089 = vpop.f32.mrb[0].mxu0
      %v7090 = vpop.f32.mrb[0].mxu0
      %v7091 = vadd.f32 %v6930, %v7090
      %v7092 = vpop.f32.mrb[0].mxu0
      %7093 = vmatprep.mubr.bf16.mxu0 0
      %7094 = vmatmul.mubr.bf16.gmra.mrb[0].mxu0 %v5527
      %v7095 = vpop.f32.mrb[0].mxu0
      %v7096 = vadd.f32 %v6935, %v7095
      %v7097 = vpop.f32.mrb[0].mxu0
      %v7098 = vpop.f32.mrb[0].mxu0
      %v7099 = vadd.f32 %v6938, %v7098
      %v7100 = vpop.f32.mrb[0].mxu0
      %7101 = vdwg.mxu0
      %s7102 = scalar_lea.vmem [#allocation4], 24
      %v7103 = vld [vmem:[%s7102] sm:$0xf]
      %v7104 = vld [vmem:[%s7102 + $0x4] sm:$0xf]
      %v7105 = vld [vmem:[%s7102 + $0xc] sm:$0xf]
      %v7106 = vld [vmem:[%s7102 + $0x10] sm:$0xf]
      %v7107 = vld [vmem:[%s7102 + $0x18] sm:$0xf]
      %v7108 = vld [vmem:[%s7102 + $0x1c] sm:$0xf]
      %v7109 = vld [vmem:[%s7102 + $0x24] sm:$0xf]
      %v7110 = vld [vmem:[%s7102 + $0x28] sm:$0xf]
      %v7111 = vld [vmem:[%s7102 + $0x30] sm:$0xf]
      %v7112 = vld [vmem:[%s7102 + $0x34] sm:$0xf]
      %v7113 = vld [vmem:[%s7102 + $0x3c] sm:$0xf]
      %v7114 = vld [vmem:[%s7102 + $0x40] sm:$0xf]
      %v7115 = vld [vmem:[%s7102 + $0x48] sm:$0xf]
      %v7116 = vld [vmem:[%s7102 + $0x4c] sm:$0xf]
      %v7117 = vld [vmem:[%s7102 + $0x54] sm:$0xf]
      %v7118 = vld [vmem:[%s7102 + $0x58] sm:$0xf]
      %v7119 = vld [vmem:[%s7102 + $0x60] sm:$0xf]
      %v7120 = vld [vmem:[%s7102 + $0x64] sm:$0xf]
      %v7121 = vld [vmem:[%s7102 + $0x6c] sm:$0xf]
      %v7122 = vld [vmem:[%s7102 + $0x70] sm:$0xf]
      %v7123 = vld [vmem:[%s7102 + $0x78] sm:$0xf]
      %v7124 = vld [vmem:[%s7102 + $0x7c] sm:$0xf]
      %v7125 = vld [vmem:[%s7102 + $0x84] sm:$0xf]
      %v7126 = vld [vmem:[%s7102 + $0x88] sm:$0xf]
      %v7127 = vld [vmem:[%s7102 + $0x90] sm:$0xf]
      %v7128 = vld [vmem:[%s7102 + $0x94] sm:$0xf]
      %v7129 = vld [vmem:[%s7102 + $0x9c] sm:$0xf]
      %v7130 = vld [vmem:[%s7102 + $0xa0] sm:$0xf]
      %v7131 = vld [vmem:[%s7102 + $0xa8] sm:$0xf]
      %v7132 = vld [vmem:[%s7102 + $0xac] sm:$0xf]
      %v7133 = vld [vmem:[%s7102 + $0xb4] sm:$0xf]
      %v7134 = vld [vmem:[%s7102 + $0xb8] sm:$0xf]
      %v7135 = vld [vmem:[%s7102 + $0x8] sm:$0x1]
      %v7136 = vld [vmem:[%s7102 + $0x14] sm:$0x1]
      %v7137 = vld [vmem:[%s7102 + $0x20] sm:$0x1]
      %v7138 = vld [vmem:[%s7102 + $0x2c] sm:$0x1]
      %v7139 = vld [vmem:[%s7102 + $0x38] sm:$0x1]
      %v7140 = vld [vmem:[%s7102 + $0x44] sm:$0x1]
      %v7141 = vld [vmem:[%s7102 + $0x50] sm:$0x1]
      %v7142 = vld [vmem:[%s7102 + $0x5c] sm:$0x1]
      %v7143 = vld [vmem:[%s7102 + $0x68] sm:$0x1]
      %v7144 = vld [vmem:[%s7102 + $0x74] sm:$0x1]
      %v7145 = vld [vmem:[%s7102 + $0x80] sm:$0x1]
      %v7146 = vld [vmem:[%s7102 + $0x8c] sm:$0x1]
      %v7147 = vld [vmem:[%s7102 + $0x98] sm:$0x1]
      %v7148 = vld [vmem:[%s7102 + $0xa4] sm:$0x1]
      %v7149 = vld [vmem:[%s7102 + $0xb0] sm:$0x1]
      %v7150 = vld [vmem:[%s7102 + $0xbc] sm:$0x1]
      %v7151 = vld [vmem:[%s7102] sm:$0xe]
      %v7152 = vld [vmem:[%s7102 + $0xc] sm:$0xe]
      %v7153 = vld [vmem:[%s7102 + $0x18] sm:$0xe]
      %v7154 = vld [vmem:[%s7102 + $0x24] sm:$0xe]
      %v7155 = vld [vmem:[%s7102 + $0x30] sm:$0xe]
      %v7156 = vld [vmem:[%s7102 + $0x3c] sm:$0xe]
      %v7157 = vld [vmem:[%s7102 + $0x48] sm:$0xe]
      %v7158 = vld [vmem:[%s7102 + $0x54] sm:$0xe]
      %v7159 = vld [vmem:[%s7102 + $0x60] sm:$0xe]
      %v7160 = vld [vmem:[%s7102 + $0x6c] sm:$0xe]
      %v7161 = vld [vmem:[%s7102 + $0x78] sm:$0xe]
      %v7162 = vld [vmem:[%s7102 + $0x84] sm:$0xe]
      %v7163 = vld [vmem:[%s7102 + $0x90] sm:$0xe]
      %v7164 = vld [vmem:[%s7102 + $0x9c] sm:$0xe]
      %v7165 = vld [vmem:[%s7102 + $0xa8] sm:$0xe]
      %v7166 = vld [vmem:[%s7102 + $0xb4] sm:$0xe]
      %v7199 = vunpack.c.l.b16 %v7103
      %v7200 = vunpack.c.l.b16 %v7104
      %v7201 = vunpack.c.l.b16 %v7105
      %v7202 = vunpack.c.l.b16 %v7106
      %v7203 = vunpack.c.l.b16 %v7107
      %v7204 = vunpack.c.l.b16 %v7108
      %v7205 = vunpack.c.l.b16 %v7109
      %v7206 = vunpack.c.l.b16 %v7110
      %v7207 = vunpack.c.l.b16 %v7111
      %v7208 = vunpack.c.l.b16 %v7112
      %v7209 = vunpack.c.l.b16 %v7113
      %v7210 = vunpack.c.l.b16 %v7114
      %v7211 = vunpack.c.l.b16 %v7115
      %v7212 = vunpack.c.l.b16 %v7116
      %v7213 = vunpack.c.l.b16 %v7117
      %v7214 = vunpack.c.l.b16 %v7118
      %v7215 = vunpack.c.l.b16 %v7119
      %v7216 = vunpack.c.l.b16 %v7120
      %v7217 = vunpack.c.l.b16 %v7121
      %v7218 = vunpack.c.l.b16 %v7122
      %v7219 = vunpack.c.l.b16 %v7123
      %v7220 = vunpack.c.l.b16 %v7124
      %v7221 = vunpack.c.l.b16 %v7125
      %v7222 = vunpack.c.l.b16 %v7126
      %v7223 = vunpack.c.l.b16 %v7127
      %v7224 = vunpack.c.l.b16 %v7128
      %v7225 = vunpack.c.l.b16 %v7129
      %v7226 = vunpack.c.l.b16 %v7130
      %v7227 = vunpack.c.l.b16 %v7131
      %v7228 = vunpack.c.l.b16 %v7132
      %v7229 = vunpack.c.l.b16 %v7133
      %v7230 = vunpack.c.l.b16 %v7134
      %v7231 = vpack.c.b16 %v7200, %v7199
      %v7232 = vpack.c.b16 %v7202, %v7201
      %v7233 = vpack.c.b16 %v7204, %v7203
      %v7234 = vpack.c.b16 %v7206, %v7205
      %v7235 = vpack.c.b16 %v7208, %v7207
      %v7236 = vpack.c.b16 %v7210, %v7209
      %v7237 = vpack.c.b16 %v7212, %v7211
      %v7238 = vpack.c.b16 %v7214, %v7213
      %v7239 = vpack.c.b16 %v7216, %v7215
      %v7240 = vpack.c.b16 %v7218, %v7217
      %v7241 = vpack.c.b16 %v7220, %v7219
      %v7242 = vpack.c.b16 %v7222, %v7221
      %v7243 = vpack.c.b16 %v7224, %v7223
      %v7244 = vpack.c.b16 %v7226, %v7225
      %v7245 = vpack.c.b16 %v7228, %v7227
      %v7246 = vpack.c.b16 %v7230, %v7229
      %v7279 = vunpack.c.l.b16 %v7135
      %v7280 = vunpack.c.l.b16 %v7136
      %v7281 = vunpack.c.l.b16 %v7137
      %v7282 = vunpack.c.l.b16 %v7138
      %v7283 = vunpack.c.l.b16 %v7139
      %v7284 = vunpack.c.l.b16 %v7140
      %v7285 = vunpack.c.l.b16 %v7141
      %v7286 = vunpack.c.l.b16 %v7142
      %v7287 = vunpack.c.l.b16 %v7143
      %v7288 = vunpack.c.l.b16 %v7144
      %v7289 = vunpack.c.l.b16 %v7145
      %v7290 = vunpack.c.l.b16 %v7146
      %v7291 = vunpack.c.l.b16 %v7147
      %v7292 = vunpack.c.l.b16 %v7148
      %v7293 = vunpack.c.l.b16 %v7149
      %v7294 = vunpack.c.l.b16 %v7150
      %v7295 = vpack.c.b16 %v7279, %v7279
      %v7296 = vpack.c.b16 %v7280, %v7280
      %v7297 = vpack.c.b16 %v7281, %v7281
      %v7298 = vpack.c.b16 %v7282, %v7282
      %v7299 = vpack.c.b16 %v7283, %v7283
      %v7300 = vpack.c.b16 %v7284, %v7284
      %v7301 = vpack.c.b16 %v7285, %v7285
      %v7302 = vpack.c.b16 %v7286, %v7286
      %v7303 = vpack.c.b16 %v7287, %v7287
      %v7304 = vpack.c.b16 %v7288, %v7288
      %v7305 = vpack.c.b16 %v7289, %v7289
      %v7306 = vpack.c.b16 %v7290, %v7290
      %v7307 = vpack.c.b16 %v7291, %v7291
      %v7308 = vpack.c.b16 %v7292, %v7292
      %v7309 = vpack.c.b16 %v7293, %v7293
      %v7310 = vpack.c.b16 %v7294, %v7294
      %v7312 = vshrl.u32 %v7231, 16
      %v7314 = vshll.u32 %v7231, 16
      %v7316 = vrot.slane %v7314, 1
      %v7317 = vor.u32 %v7312, %v7316
      %v7319 = vshll.u32 %v7295, 16
      %v7321 = vrot.slane %v7319, 1
      %v7322 = vsel %vm1102, %v7317, %v7321
      %v7324 = vshrl.u32 %v7232, 16
      %v7326 = vshll.u32 %v7232, 16
      %v7328 = vrot.slane %v7326, 1
      %v7329 = vor.u32 %v7324, %v7328
      %v7331 = vshll.u32 %v7296, 16
      %v7333 = vrot.slane %v7331, 1
      %v7334 = vsel %vm1102, %v7329, %v7333
      %v7336 = vshrl.u32 %v7233, 16
      %v7338 = vshll.u32 %v7233, 16
      %v7340 = vrot.slane %v7338, 1
      %v7341 = vor.u32 %v7336, %v7340
      %v7343 = vshll.u32 %v7297, 16
      %v7345 = vrot.slane %v7343, 1
      %v7346 = vsel %vm1102, %v7341, %v7345
      %v7348 = vshrl.u32 %v7234, 16
      %v7350 = vshll.u32 %v7234, 16
      %v7352 = vrot.slane %v7350, 1
      %v7353 = vor.u32 %v7348, %v7352
      %v7355 = vshll.u32 %v7298, 16
      %v7357 = vrot.slane %v7355, 1
      %v7358 = vsel %vm1102, %v7353, %v7357
      %v7360 = vshrl.u32 %v7235, 16
      %v7362 = vshll.u32 %v7235, 16
      %v7364 = vrot.slane %v7362, 1
      %v7365 = vor.u32 %v7360, %v7364
      %v7367 = vshll.u32 %v7299, 16
      %v7369 = vrot.slane %v7367, 1
      %v7370 = vsel %vm1102, %v7365, %v7369
      %v7372 = vshrl.u32 %v7236, 16
      %v7374 = vshll.u32 %v7236, 16
      %v7376 = vrot.slane %v7374, 1
      %v7377 = vor.u32 %v7372, %v7376
      %v7379 = vshll.u32 %v7300, 16
      %v7381 = vrot.slane %v7379, 1
      %v7382 = vsel %vm1102, %v7377, %v7381
      %v7384 = vshrl.u32 %v7237, 16
      %v7386 = vshll.u32 %v7237, 16
      %v7388 = vrot.slane %v7386, 1
      %v7389 = vor.u32 %v7384, %v7388
      %v7391 = vshll.u32 %v7301, 16
      %v7393 = vrot.slane %v7391, 1
      %v7394 = vsel %vm1102, %v7389, %v7393
      %v7396 = vshrl.u32 %v7238, 16
      %v7398 = vshll.u32 %v7238, 16
      %v7400 = vrot.slane %v7398, 1
      %v7401 = vor.u32 %v7396, %v7400
      %v7403 = vshll.u32 %v7302, 16
      %v7405 = vrot.slane %v7403, 1
      %v7406 = vsel %vm1102, %v7401, %v7405
      %v7408 = vshrl.u32 %v7239, 16
      %v7410 = vshll.u32 %v7239, 16
      %v7412 = vrot.slane %v7410, 1
      %v7413 = vor.u32 %v7408, %v7412
      %v7415 = vshll.u32 %v7303, 16
      %v7417 = vrot.slane %v7415, 1
      %v7418 = vsel %vm1102, %v7413, %v7417
      %v7420 = vshrl.u32 %v7240, 16
      %v7422 = vshll.u32 %v7240, 16
      %v7424 = vrot.slane %v7422, 1
      %v7425 = vor.u32 %v7420, %v7424
      %v7427 = vshll.u32 %v7304, 16
      %v7429 = vrot.slane %v7427, 1
      %v7430 = vsel %vm1102, %v7425, %v7429
      %v7432 = vshrl.u32 %v7241, 16
      %v7434 = vshll.u32 %v7241, 16
      %v7436 = vrot.slane %v7434, 1
      %v7437 = vor.u32 %v7432, %v7436
      %v7439 = vshll.u32 %v7305, 16
      %v7441 = vrot.slane %v7439, 1
      %v7442 = vsel %vm1102, %v7437, %v7441
      %v7444 = vshrl.u32 %v7242, 16
      %v7446 = vshll.u32 %v7242, 16
      %v7448 = vrot.slane %v7446, 1
      %v7449 = vor.u32 %v7444, %v7448
      %v7451 = vshll.u32 %v7306, 16
      %v7453 = vrot.slane %v7451, 1
      %v7454 = vsel %vm1102, %v7449, %v7453
      %v7456 = vshrl.u32 %v7243, 16
      %v7458 = vshll.u32 %v7243, 16
      %v7460 = vrot.slane %v7458, 1
      %v7461 = vor.u32 %v7456, %v7460
      %v7463 = vshll.u32 %v7307, 16
      %v7465 = vrot.slane %v7463, 1
      %v7466 = vsel %vm1102, %v7461, %v7465
      %v7468 = vshrl.u32 %v7244, 16
      %v7470 = vshll.u32 %v7244, 16
      %v7472 = vrot.slane %v7470, 1
      %v7473 = vor.u32 %v7468, %v7472
      %v7475 = vshll.u32 %v7308, 16
      %v7477 = vrot.slane %v7475, 1
      %v7478 = vsel %vm1102, %v7473, %v7477
      %v7480 = vshrl.u32 %v7245, 16
      %v7482 = vshll.u32 %v7245, 16
      %v7484 = vrot.slane %v7482, 1
      %v7485 = vor.u32 %v7480, %v7484
      %v7487 = vshll.u32 %v7309, 16
      %v7489 = vrot.slane %v7487, 1
      %v7490 = vsel %vm1102, %v7485, %v7489
      %v7492 = vshrl.u32 %v7246, 16
      %v7494 = vshll.u32 %v7246, 16
      %v7496 = vrot.slane %v7494, 1
      %v7497 = vor.u32 %v7492, %v7496
      %v7499 = vshll.u32 %v7310, 16
      %v7501 = vrot.slane %v7499, 1
      %v7502 = vsel %vm1102, %v7497, %v7501
      %v7535 = vunpack.c.l.b16 %v7151
      %v7536 = vunpack.c.l.b16 %v7152
      %v7537 = vunpack.c.l.b16 %v7153
      %v7538 = vunpack.c.l.b16 %v7154
      %v7539 = vunpack.c.l.b16 %v7155
      %v7540 = vunpack.c.l.b16 %v7156
      %v7541 = vunpack.c.l.b16 %v7157
      %v7542 = vunpack.c.l.b16 %v7158
      %v7543 = vunpack.c.l.b16 %v7159
      %v7544 = vunpack.c.l.b16 %v7160
      %v7545 = vunpack.c.l.b16 %v7161
      %v7546 = vunpack.c.l.b16 %v7162
      %v7547 = vunpack.c.l.b16 %v7163
      %v7548 = vunpack.c.l.b16 %v7164
      %v7549 = vunpack.c.l.b16 %v7165
      %v7550 = vunpack.c.l.b16 %v7166
      %v7551 = vpack.c.b16 %v7200, %v7535
      %v7552 = vpack.c.b16 %v7202, %v7536
      %v7553 = vpack.c.b16 %v7204, %v7537
      %v7554 = vpack.c.b16 %v7206, %v7538
      %v7555 = vpack.c.b16 %v7208, %v7539
      %v7556 = vpack.c.b16 %v7210, %v7540
      %v7557 = vpack.c.b16 %v7212, %v7541
      %v7558 = vpack.c.b16 %v7214, %v7542
      %v7559 = vpack.c.b16 %v7216, %v7543
      %v7560 = vpack.c.b16 %v7218, %v7544
      %v7561 = vpack.c.b16 %v7220, %v7545
      %v7562 = vpack.c.b16 %v7222, %v7546
      %v7563 = vpack.c.b16 %v7224, %v7547
      %v7564 = vpack.c.b16 %v7226, %v7548
      %v7565 = vpack.c.b16 %v7228, %v7549
      %v7566 = vpack.c.b16 %v7230, %v7550
      %v7567 = vrot.slane %v7551, 1
      %v7568 = vrot.slane %v7295, 1
      %v7569 = vsel %vm1391, %v7567, %v7568
      %v7570 = vrot.slane %v7552, 1
      %v7571 = vrot.slane %v7296, 1
      %v7572 = vsel %vm1391, %v7570, %v7571
      %v7573 = vrot.slane %v7553, 1
      %v7574 = vrot.slane %v7297, 1
      %v7575 = vsel %vm1391, %v7573, %v7574
      %v7576 = vrot.slane %v7554, 1
      %v7577 = vrot.slane %v7298, 1
      %v7578 = vsel %vm1391, %v7576, %v7577
      %v7579 = vrot.slane %v7555, 1
      %v7580 = vrot.slane %v7299, 1
      %v7581 = vsel %vm1391, %v7579, %v7580
      %v7582 = vrot.slane %v7556, 1
      %v7583 = vrot.slane %v7300, 1
      %v7584 = vsel %vm1391, %v7582, %v7583
      %v7585 = vrot.slane %v7557, 1
      %v7586 = vrot.slane %v7301, 1
      %v7587 = vsel %vm1391, %v7585, %v7586
      %v7588 = vrot.slane %v7558, 1
      %v7589 = vrot.slane %v7302, 1
      %v7590 = vsel %vm1391, %v7588, %v7589
      %v7591 = vrot.slane %v7559, 1
      %v7592 = vrot.slane %v7303, 1
      %v7593 = vsel %vm1391, %v7591, %v7592
      %v7594 = vrot.slane %v7560, 1
      %v7595 = vrot.slane %v7304, 1
      %v7596 = vsel %vm1391, %v7594, %v7595
      %v7597 = vrot.slane %v7561, 1
      %v7598 = vrot.slane %v7305, 1
      %v7599 = vsel %vm1391, %v7597, %v7598
      %v7600 = vrot.slane %v7562, 1
      %v7601 = vrot.slane %v7306, 1
      %v7602 = vsel %vm1391, %v7600, %v7601
      %v7603 = vrot.slane %v7563, 1
      %v7604 = vrot.slane %v7307, 1
      %v7605 = vsel %vm1391, %v7603, %v7604
      %v7606 = vrot.slane %v7564, 1
      %v7607 = vrot.slane %v7308, 1
      %v7608 = vsel %vm1391, %v7606, %v7607
      %v7609 = vrot.slane %v7565, 1
      %v7610 = vrot.slane %v7309, 1
      %v7611 = vsel %vm1391, %v7609, %v7610
      %v7612 = vrot.slane %v7566, 1
      %v7613 = vrot.slane %v7310, 1
      %v7614 = vsel %vm1391, %v7612, %v7613
      %s7631 = scalar_lea.vmem %s3, 384
      %v7632 = vld [vmem:[%s7631] sm:$0xf]
      %v7633 = vld [vmem:[%s7631 + $0x4] sm:$0xf]
      %v7634 = vld [vmem:[%s7631 + $0x8] sm:$0xf]
      %v7635 = vld [vmem:[%s7631 + $0xc] sm:$0xf]
      %v7636 = vld [vmem:[%s7631 + $0x10] sm:$0xf]
      %v7637 = vld [vmem:[%s7631 + $0x14] sm:$0xf]
      %v7638 = vld [vmem:[%s7631 + $0x18] sm:$0xf]
      %v7639 = vld [vmem:[%s7631 + $0x1c] sm:$0xf]
      %v7640 = vld [vmem:[%s7631 + $0x20] sm:$0xf]
      %v7641 = vld [vmem:[%s7631 + $0x24] sm:$0xf]
      %v7642 = vld [vmem:[%s7631 + $0x28] sm:$0xf]
      %v7643 = vld [vmem:[%s7631 + $0x2c] sm:$0xf]
      %v7644 = vld [vmem:[%s7631 + $0x30] sm:$0xf]
      %v7645 = vld [vmem:[%s7631 + $0x34] sm:$0xf]
      %v7646 = vld [vmem:[%s7631 + $0x38] sm:$0xf]
      %v7647 = vld [vmem:[%s7631 + $0x3c] sm:$0xf]
      %v7648 = vld [vmem:[%s7631 + $0x40] sm:$0xf]
      %v7649 = vld [vmem:[%s7631 + $0x44] sm:$0xf]
      %v7650 = vld [vmem:[%s7631 + $0x48] sm:$0xf]
      %v7651 = vld [vmem:[%s7631 + $0x4c] sm:$0xf]
      %v7652 = vld [vmem:[%s7631 + $0x50] sm:$0xf]
      %v7653 = vld [vmem:[%s7631 + $0x54] sm:$0xf]
      %v7654 = vld [vmem:[%s7631 + $0x58] sm:$0xf]
      %v7655 = vld [vmem:[%s7631 + $0x5c] sm:$0xf]
      %v7656 = vld [vmem:[%s7631 + $0x60] sm:$0xf]
      %v7657 = vld [vmem:[%s7631 + $0x64] sm:$0xf]
      %v7658 = vld [vmem:[%s7631 + $0x68] sm:$0xf]
      %v7659 = vld [vmem:[%s7631 + $0x6c] sm:$0xf]
      %v7660 = vld [vmem:[%s7631 + $0x70] sm:$0xf]
      %v7661 = vld [vmem:[%s7631 + $0x74] sm:$0xf]
      %v7662 = vld [vmem:[%s7631 + $0x78] sm:$0xf]
      %v7663 = vld [vmem:[%s7631 + $0x7c] sm:$0xf]
      %v7664 = vld [vmem:[%s7631 + $0x80] sm:$0xf]
      %v7665 = vld [vmem:[%s7631 + $0x84] sm:$0xf]
      %v7666 = vld [vmem:[%s7631 + $0x88] sm:$0xf]
      %v7667 = vld [vmem:[%s7631 + $0x8c] sm:$0xf]
      %v7668 = vld [vmem:[%s7631 + $0x90] sm:$0xf]
      %v7669 = vld [vmem:[%s7631 + $0x94] sm:$0xf]
      %v7670 = vld [vmem:[%s7631 + $0x98] sm:$0xf]
      %v7671 = vld [vmem:[%s7631 + $0x9c] sm:$0xf]
      %v7672 = vld [vmem:[%s7631 + $0xa0] sm:$0xf]
      %v7673 = vld [vmem:[%s7631 + $0xa4] sm:$0xf]
      %v7674 = vld [vmem:[%s7631 + $0xa8] sm:$0xf]
      %v7675 = vld [vmem:[%s7631 + $0xac] sm:$0xf]
      %v7676 = vld [vmem:[%s7631 + $0xb0] sm:$0xf]
      %v7677 = vld [vmem:[%s7631 + $0xb4] sm:$0xf]
      %v7678 = vld [vmem:[%s7631 + $0xb8] sm:$0xf]
      %v7679 = vld [vmem:[%s7631 + $0xbc] sm:$0xf]
      %v7728 = vunpack.c.l.b16 %v7632
      %v7729 = vunpack.c.l.b16 %v7633
      %v7730 = vunpack.c.l.b16 %v7634
      %v7731 = vunpack.c.l.b16 %v7635
      %v7732 = vunpack.c.l.b16 %v7636
      %v7733 = vunpack.c.l.b16 %v7637
      %v7734 = vunpack.c.l.b16 %v7638
      %v7735 = vunpack.c.l.b16 %v7639
      %v7736 = vunpack.c.l.b16 %v7640
      %v7737 = vunpack.c.l.b16 %v7641
      %v7738 = vunpack.c.l.b16 %v7642
      %v7739 = vunpack.c.l.b16 %v7643
      %v7740 = vunpack.c.l.b16 %v7644
      %v7741 = vunpack.c.l.b16 %v7645
      %v7742 = vunpack.c.l.b16 %v7646
      %v7743 = vunpack.c.l.b16 %v7647
      %v7744 = vunpack.c.l.b16 %v7648
      %v7745 = vunpack.c.l.b16 %v7649
      %v7746 = vunpack.c.l.b16 %v7650
      %v7747 = vunpack.c.l.b16 %v7651
      %v7748 = vunpack.c.l.b16 %v7652
      %v7749 = vunpack.c.l.b16 %v7653
      %v7750 = vunpack.c.l.b16 %v7654
      %v7751 = vunpack.c.l.b16 %v7655
      %v7752 = vunpack.c.l.b16 %v7656
      %v7753 = vunpack.c.l.b16 %v7657
      %v7754 = vunpack.c.l.b16 %v7658
      %v7755 = vunpack.c.l.b16 %v7659
      %v7756 = vunpack.c.l.b16 %v7660
      %v7757 = vunpack.c.l.b16 %v7661
      %v7758 = vunpack.c.l.b16 %v7662
      %v7759 = vunpack.c.l.b16 %v7663
      %v7760 = vunpack.c.l.b16 %v7664
      %v7761 = vunpack.c.l.b16 %v7665
      %v7762 = vunpack.c.l.b16 %v7666
      %v7763 = vunpack.c.l.b16 %v7667
      %v7764 = vunpack.c.l.b16 %v7668
      %v7765 = vunpack.c.l.b16 %v7669
      %v7766 = vunpack.c.l.b16 %v7670
      %v7767 = vunpack.c.l.b16 %v7671
      %v7768 = vunpack.c.l.b16 %v7672
      %v7769 = vunpack.c.l.b16 %v7673
      %v7770 = vunpack.c.l.b16 %v7674
      %v7771 = vunpack.c.l.b16 %v7675
      %v7772 = vunpack.c.l.b16 %v7676
      %v7773 = vunpack.c.l.b16 %v7677
      %v7774 = vunpack.c.l.b16 %v7678
      %v7775 = vunpack.c.l.b16 %v7679
      %v7776 = vpack.c.b16 %v7729, %v7728
      %v7777 = vpack.c.b16 %v7731, %v7730
      %v7778 = vpack.c.b16 %v7733, %v7732
      %v7779 = vpack.c.b16 %v7735, %v7734
      %v7780 = vpack.c.b16 %v7737, %v7736
      %v7781 = vpack.c.b16 %v7739, %v7738
      %v7782 = vpack.c.b16 %v7741, %v7740
      %v7783 = vpack.c.b16 %v7743, %v7742
      %v7784 = vpack.c.b16 %v7745, %v7744
      %v7785 = vpack.c.b16 %v7747, %v7746
      %v7786 = vpack.c.b16 %v7749, %v7748
      %v7787 = vpack.c.b16 %v7751, %v7750
      %v7788 = vpack.c.b16 %v7753, %v7752
      %v7789 = vpack.c.b16 %v7755, %v7754
      %v7790 = vpack.c.b16 %v7757, %v7756
      %v7791 = vpack.c.b16 %v7759, %v7758
      %v7792 = vpack.c.b16 %v7761, %v7760
      %v7793 = vpack.c.b16 %v7763, %v7762
      %v7794 = vpack.c.b16 %v7765, %v7764
      %v7795 = vpack.c.b16 %v7767, %v7766
      %v7796 = vpack.c.b16 %v7769, %v7768
      %v7797 = vpack.c.b16 %v7771, %v7770
      %v7798 = vpack.c.b16 %v7773, %v7772
      %v7799 = vpack.c.b16 %v7775, %v7774
      %7824 = vmatprep.subr.bf16.mxu0 0
      %7825 = vmatpush1.bf16.msra.mxu0 %v7776
      %7826 = vmatprep.subr.bf16.mxu0 0
      %7827 = vmatpush1.bf16.msra.mxu0 %v7777
      %7828 = vmatprep.subr.bf16.mxu0 0
      %7829 = vmatpush1.bf16.msra.mxu0 %v7778
      %7830 = vmatprep.subr.bf16.mxu0 0
      %7831 = vmatpush1.bf16.msra.mxu0 %v7779
      %7832 = vmatprep.subr.bf16.mxu0 0
      %7833 = vmatpush1.bf16.msra.mxu0 %v7780
      %7834 = vmatprep.subr.bf16.mxu0 0
      %7835 = vmatpush1.bf16.msra.mxu0 %v7781
      %7836 = vmatprep.subr.bf16.mxu0 0
      %7837 = vmatpush1.bf16.msra.mxu0 %v7782
      %7838 = vmatprep.subr.bf16.mxu0 0
      %7839 = vmatpush1.bf16.msra.mxu0 %v7783
      %7840 = vmatprep.subr.bf16.mxu0 0
      %7841 = vmatpush1.bf16.msra.mxu0 %v7784
      %7842 = vmatprep.subr.bf16.mxu0 0
      %7843 = vmatpush1.bf16.msra.mxu0 %v7785
      %7844 = vmatprep.subr.bf16.mxu0 0
      %7845 = vmatpush1.bf16.msra.mxu0 %v7786
      %7846 = vmatprep.subr.bf16.mxu0 0
      %7847 = vmatpush1.bf16.msra.mxu0 %v7787
      %7848 = vmatprep.subr.bf16.mxu0 0
      %7849 = vmatpush1.bf16.msra.mxu0 %v7788
      %7850 = vmatprep.subr.bf16.mxu0 0
      %7851 = vmatpush1.bf16.msra.mxu0 %v7789
      %7852 = vmatprep.subr.bf16.mxu0 0
      %7853 = vmatpush1.bf16.msra.mxu0 %v7790
      %7854 = vmatprep.subr.bf16.mxu0 0
      %7855 = vmatpush1.bf16.msra.mxu0 %v7791
      %7856 = vmatprep.mubr.bf16.mxu0 %v7322
      %7857 = vmatmul.mubr.bf16.gmra.mrb[0].mxu0 %v7231
      %v7858 = vpop.f32.mrb[0].mxu0
      %v7859 = vadd.f32 0.0, %v7858
      %v7860 = vpop.f32.mrb[0].mxu0
      %v7861 = vpop.f32.mrb[0].mxu0
      %v7862 = vadd.f32 0.0, %v7861
      %v7863 = vpop.f32.mrb[0].mxu0
      %7864 = vmatprep.mubr.bf16.mxu0 %v7334
      %7865 = vmatmul.mubr.bf16.gmra.mrb[0].mxu0 %v7232
      %v7866 = vpop.f32.mrb[0].mxu0
      %v7867 = vadd.f32 0.0, %v7866
      %v7868 = vpop.f32.mrb[0].mxu0
      %v7869 = vpop.f32.mrb[0].mxu0
      %v7870 = vadd.f32 0.0, %v7869
      %v7871 = vpop.f32.mrb[0].mxu0
      %7872 = vmatprep.mubr.bf16.mxu0 %v7346
      %7873 = vmatmul.mubr.bf16.gmra.mrb[0].mxu0 %v7233
      %v7874 = vpop.f32.mrb[0].mxu0
      %v7875 = vadd.f32 0.0, %v7874
      %v7876 = vpop.f32.mrb[0].mxu0
      %v7877 = vpop.f32.mrb[0].mxu0
      %v7878 = vadd.f32 0.0, %v7877
      %v7879 = vpop.f32.mrb[0].mxu0
      %7880 = vmatprep.mubr.bf16.mxu0 %v7358
      %7881 = vmatmul.mubr.bf16.gmra.mrb[0].mxu0 %v7234
      %v7882 = vpop.f32.mrb[0].mxu0
      %v7883 = vadd.f32 0.0, %v7882
      %v7884 = vpop.f32.mrb[0].mxu0
      %v7885 = vpop.f32.mrb[0].mxu0
      %v7886 = vadd.f32 0.0, %v7885
      %v7887 = vpop.f32.mrb[0].mxu0
      %7888 = vmatprep.mubr.bf16.mxu0 %v7370
      %7889 = vmatmul.mubr.bf16.gmra.mrb[0].mxu0 %v7235
      %v7890 = vpop.f32.mrb[0].mxu0
      %v7891 = vadd.f32 0.0, %v7890
      %v7892 = vpop.f32.mrb[0].mxu0
      %v7893 = vpop.f32.mrb[0].mxu0
      %v7894 = vadd.f32 0.0, %v7893
      %v7895 = vpop.f32.mrb[0].mxu0
      %7896 = vmatprep.mubr.bf16.mxu0 %v7382
      %7897 = vmatmul.mubr.bf16.gmra.mrb[0].mxu0 %v7236
      %v7898 = vpop.f32.mrb[0].mxu0
      %v7899 = vadd.f32 0.0, %v7898
      %v7900 = vpop.f32.mrb[0].mxu0
      %v7901 = vpop.f32.mrb[0].mxu0
      %v7902 = vadd.f32 0.0, %v7901
      %v7903 = vpop.f32.mrb[0].mxu0
      %7904 = vmatprep.mubr.bf16.mxu0 %v7394
      %7905 = vmatmul.mubr.bf16.gmra.mrb[0].mxu0 %v7237
      %v7906 = vpop.f32.mrb[0].mxu0
      %v7907 = vadd.f32 0.0, %v7906
      %v7908 = vpop.f32.mrb[0].mxu0
      %v7909 = vpop.f32.mrb[0].mxu0
      %v7910 = vadd.f32 0.0, %v7909
      %v7911 = vpop.f32.mrb[0].mxu0
      %7912 = vmatprep.mubr.bf16.mxu0 %v7406
      %7913 = vmatmul.mubr.bf16.gmra.mrb[0].mxu0 %v7238
      %v7914 = vpop.f32.mrb[0].mxu0
      %v7915 = vadd.f32 0.0, %v7914
      %v7916 = vpop.f32.mrb[0].mxu0
      %v7917 = vpop.f32.mrb[0].mxu0
      %v7918 = vadd.f32 0.0, %v7917
      %v7919 = vpop.f32.mrb[0].mxu0
      %7920 = vmatprep.mubr.bf16.mxu0 %v7418
      %7921 = vmatmul.mubr.bf16.gmra.mrb[0].mxu0 %v7239
      %v7922 = vpop.f32.mrb[0].mxu0
      %v7923 = vadd.f32 0.0, %v7922
      %v7924 = vpop.f32.mrb[0].mxu0
      %v7925 = vpop.f32.mrb[0].mxu0
      %v7926 = vadd.f32 0.0, %v7925
      %v7927 = vpop.f32.mrb[0].mxu0
      %7928 = vmatprep.mubr.bf16.mxu0 %v7430
      %7929 = vmatmul.mubr.bf16.gmra.mrb[0].mxu0 %v7240
      %v7930 = vpop.f32.mrb[0].mxu0
      %v7931 = vadd.f32 0.0, %v7930
      %v7932 = vpop.f32.mrb[0].mxu0
      %v7933 = vpop.f32.mrb[0].mxu0
      %v7934 = vadd.f32 0.0, %v7933
      %v7935 = vpop.f32.mrb[0].mxu0
      %7936 = vmatprep.mubr.bf16.mxu0 %v7442
      %7937 = vmatmul.mubr.bf16.gmra.mrb[0].mxu0 %v7241
      %v7938 = vpop.f32.mrb[0].mxu0
      %v7939 = vadd.f32 0.0, %v7938
      %v7940 = vpop.f32.mrb[0].mxu0
      %v7941 = vpop.f32.mrb[0].mxu0
      %v7942 = vadd.f32 0.0, %v7941
      %v7943 = vpop.f32.mrb[0].mxu0
      %7944 = vmatprep.mubr.bf16.mxu0 %v7454
      %7945 = vmatmul.mubr.bf16.gmra.mrb[0].mxu0 %v7242
      %v7946 = vpop.f32.mrb[0].mxu0
      %v7947 = vadd.f32 0.0, %v7946
      %v7948 = vpop.f32.mrb[0].mxu0
      %v7949 = vpop.f32.mrb[0].mxu0
      %v7950 = vadd.f32 0.0, %v7949
      %v7951 = vpop.f32.mrb[0].mxu0
      %7952 = vmatprep.mubr.bf16.mxu0 %v7466
      %7953 = vmatmul.mubr.bf16.gmra.mrb[0].mxu0 %v7243
      %v7954 = vpop.f32.mrb[0].mxu0
      %v7955 = vadd.f32 0.0, %v7954
      %v7956 = vpop.f32.mrb[0].mxu0
      %v7957 = vpop.f32.mrb[0].mxu0
      %v7958 = vadd.f32 0.0, %v7957
      %v7959 = vpop.f32.mrb[0].mxu0
      %7960 = vmatprep.mubr.bf16.mxu0 %v7478
      %7961 = vmatmul.mubr.bf16.gmra.mrb[0].mxu0 %v7244
      %v7962 = vpop.f32.mrb[0].mxu0
      %v7963 = vadd.f32 0.0, %v7962
      %v7964 = vpop.f32.mrb[0].mxu0
      %v7965 = vpop.f32.mrb[0].mxu0
      %v7966 = vadd.f32 0.0, %v7965
      %v7967 = vpop.f32.mrb[0].mxu0
      %7968 = vmatprep.mubr.bf16.mxu0 %v7490
      %7969 = vmatmul.mubr.bf16.gmra.mrb[0].mxu0 %v7245
      %v7970 = vpop.f32.mrb[0].mxu0
      %v7971 = vadd.f32 0.0, %v7970
      %v7972 = vpop.f32.mrb[0].mxu0
      %v7973 = vpop.f32.mrb[0].mxu0
      %v7974 = vadd.f32 0.0, %v7973
      %v7975 = vpop.f32.mrb[0].mxu0
      %7976 = vmatprep.mubr.bf16.mxu0 %v7502
      %7977 = vmatmul.mubr.bf16.gmra.mrb[0].mxu0 %v7246
      %v7978 = vpop.f32.mrb[0].mxu0
      %v7979 = vadd.f32 0.0, %v7978
      %v7980 = vpop.f32.mrb[0].mxu0
      %v7981 = vpop.f32.mrb[0].mxu0
      %v7982 = vadd.f32 0.0, %v7981
      %v7983 = vpop.f32.mrb[0].mxu0
      %7984 = vdwg.mxu0
      %7985 = vmatprep.subr.bf16.mxu0 0
      %7986 = vmatpush1.bf16.msra.mxu0 %v7792
      %7987 = vmatprep.subr.bf16.mxu0 0
      %7988 = vmatpush1.bf16.msra.mxu0 %v7793
      %7989 = vmatprep.subr.bf16.mxu0 0
      %7990 = vmatpush1.bf16.msra.mxu0 %v7794
      %7991 = vmatprep.subr.bf16.mxu0 0
      %7992 = vmatpush1.bf16.msra.mxu0 %v7795
      %7993 = vmatprep.subr.bf16.mxu0 0
      %7994 = vmatpush1.bf16.msra.mxu0 %v7796
      %7995 = vmatprep.subr.bf16.mxu0 0
      %7996 = vmatpush1.bf16.msra.mxu0 %v7797
      %7997 = vmatprep.subr.bf16.mxu0 0
      %7998 = vmatpush1.bf16.msra.mxu0 %v7798
      %7999 = vmatprep.subr.bf16.mxu0 0
      %8000 = vmatpush1.bf16.msra.mxu0 %v7799
      %8001 = vmatprep.subr.bf16.mxu0 0
      %8002 = vmatpush1.bf16.msra.mxu0 0
      %8003 = vmatprep.subr.bf16.mxu0 0
      %8004 = vmatpush1.bf16.msra.mxu0 0
      %8005 = vmatprep.subr.bf16.mxu0 0
      %8006 = vmatpush1.bf16.msra.mxu0 0
      %8007 = vmatprep.subr.bf16.mxu0 0
      %8008 = vmatpush1.bf16.msra.mxu0 0
      %8009 = vmatprep.subr.bf16.mxu0 0
      %8010 = vmatpush1.bf16.msra.mxu0 0
      %8011 = vmatprep.subr.bf16.mxu0 0
      %8012 = vmatpush1.bf16.msra.mxu0 0
      %8013 = vmatprep.subr.bf16.mxu0 0
      %8014 = vmatpush1.bf16.msra.mxu0 0
      %8015 = vmatprep.subr.bf16.mxu0 0
      %8016 = vmatpush1.bf16.msra.mxu0 0
      %8017 = vmatprep.mubr.bf16.mxu0 0
      %8018 = vmatmul.mubr.bf16.gmra.mrb[0].mxu0 %v7569
      %v8019 = vpop.f32.mrb[0].mxu0
      %v8020 = vadd.f32 %v7859, %v8019
      %v8021 = vpop.f32.mrb[0].mxu0
      %v8022 = vpop.f32.mrb[0].mxu0
      %v8023 = vadd.f32 %v7862, %v8022
      %v8024 = vpop.f32.mrb[0].mxu0
      %8025 = vmatprep.mubr.bf16.mxu0 0
      %8026 = vmatmul.mubr.bf16.gmra.mrb[0].mxu0 %v7572
      %v8027 = vpop.f32.mrb[0].mxu0
      %v8028 = vadd.f32 %v7867, %v8027
      %v8029 = vpop.f32.mrb[0].mxu0
      %v8030 = vpop.f32.mrb[0].mxu0
      %v8031 = vadd.f32 %v7870, %v8030
      %v8032 = vpop.f32.mrb[0].mxu0
      %8033 = vmatprep.mubr.bf16.mxu0 0
      %8034 = vmatmul.mubr.bf16.gmra.mrb[0].mxu0 %v7575
      %v8035 = vpop.f32.mrb[0].mxu0
      %v8036 = vadd.f32 %v7875, %v8035
      %v8037 = vpop.f32.mrb[0].mxu0
      %v8038 = vpop.f32.mrb[0].mxu0
      %v8039 = vadd.f32 %v7878, %v8038
      %v8040 = vpop.f32.mrb[0].mxu0
      %8041 = vmatprep.mubr.bf16.mxu0 0
      %8042 = vmatmul.mubr.bf16.gmra.mrb[0].mxu0 %v7578
      %v8043 = vpop.f32.mrb[0].mxu0
      %v8044 = vadd.f32 %v7883, %v8043
      %v8045 = vpop.f32.mrb[0].mxu0
      %v8046 = vpop.f32.mrb[0].mxu0
      %v8047 = vadd.f32 %v7886, %v8046
      %v8048 = vpop.f32.mrb[0].mxu0
      %8049 = vmatprep.mubr.bf16.mxu0 0
      %8050 = vmatmul.mubr.bf16.gmra.mrb[0].mxu0 %v7581
      %v8051 = vpop.f32.mrb[0].mxu0
      %v8052 = vadd.f32 %v7891, %v8051
      %v8053 = vpop.f32.mrb[0].mxu0
      %v8054 = vpop.f32.mrb[0].mxu0
      %v8055 = vadd.f32 %v7894, %v8054
      %v8056 = vpop.f32.mrb[0].mxu0
      %8057 = vmatprep.mubr.bf16.mxu0 0
      %8058 = vmatmul.mubr.bf16.gmra.mrb[0].mxu0 %v7584
      %v8059 = vpop.f32.mrb[0].mxu0
      %v8060 = vadd.f32 %v7899, %v8059
      %v8061 = vpop.f32.mrb[0].mxu0
      %v8062 = vpop.f32.mrb[0].mxu0
      %v8063 = vadd.f32 %v7902, %v8062
      %v8064 = vpop.f32.mrb[0].mxu0
      %8065 = vmatprep.mubr.bf16.mxu0 0
      %8066 = vmatmul.mubr.bf16.gmra.mrb[0].mxu0 %v7587
      %v8067 = vpop.f32.mrb[0].mxu0
      %v8068 = vadd.f32 %v7907, %v8067
      %v8069 = vpop.f32.mrb[0].mxu0
      %v8070 = vpop.f32.mrb[0].mxu0
      %v8071 = vadd.f32 %v7910, %v8070
      %v8072 = vpop.f32.mrb[0].mxu0
      %8073 = vmatprep.mubr.bf16.mxu0 0
      %8074 = vmatmul.mubr.bf16.gmra.mrb[0].mxu0 %v7590
      %v8075 = vpop.f32.mrb[0].mxu0
      %v8076 = vadd.f32 %v7915, %v8075
      %v8077 = vpop.f32.mrb[0].mxu0
      %v8078 = vpop.f32.mrb[0].mxu0
      %v8079 = vadd.f32 %v7918, %v8078
      %v8080 = vpop.f32.mrb[0].mxu0
      %8081 = vmatprep.mubr.bf16.mxu0 0
      %8082 = vmatmul.mubr.bf16.gmra.mrb[0].mxu0 %v7593
      %v8083 = vpop.f32.mrb[0].mxu0
      %v8084 = vadd.f32 %v7923, %v8083
      %v8085 = vpop.f32.mrb[0].mxu0
      %v8086 = vpop.f32.mrb[0].mxu0
      %v8087 = vadd.f32 %v7926, %v8086
      %v8088 = vpop.f32.mrb[0].mxu0
      %8089 = vmatprep.mubr.bf16.mxu0 0
      %8090 = vmatmul.mubr.bf16.gmra.mrb[0].mxu0 %v7596
      %v8091 = vpop.f32.mrb[0].mxu0
      %v8092 = vadd.f32 %v7931, %v8091
      %v8093 = vpop.f32.mrb[0].mxu0
      %v8094 = vpop.f32.mrb[0].mxu0
      %v8095 = vadd.f32 %v7934, %v8094
      %v8096 = vpop.f32.mrb[0].mxu0
      %8097 = vmatprep.mubr.bf16.mxu0 0
      %8098 = vmatmul.mubr.bf16.gmra.mrb[0].mxu0 %v7599
      %v8099 = vpop.f32.mrb[0].mxu0
      %v8100 = vadd.f32 %v7939, %v8099
      %v8101 = vpop.f32.mrb[0].mxu0
      %v8102 = vpop.f32.mrb[0].mxu0
      %v8103 = vadd.f32 %v7942, %v8102
      %v8104 = vpop.f32.mrb[0].mxu0
      %8105 = vmatprep.mubr.bf16.mxu0 0
      %8106 = vmatmul.mubr.bf16.gmra.mrb[0].mxu0 %v7602
      %v8107 = vpop.f32.mrb[0].mxu0
      %v8108 = vadd.f32 %v7947, %v8107
      %v8109 = vpop.f32.mrb[0].mxu0
      %v8110 = vpop.f32.mrb[0].mxu0
      %v8111 = vadd.f32 %v7950, %v8110
      %v8112 = vpop.f32.mrb[0].mxu0
      %8113 = vmatprep.mubr.bf16.mxu0 0
      %8114 = vmatmul.mubr.bf16.gmra.mrb[0].mxu0 %v7605
      %v8115 = vpop.f32.mrb[0].mxu0
      %v8116 = vadd.f32 %v7955, %v8115
      %v8117 = vpop.f32.mrb[0].mxu0
      %v8118 = vpop.f32.mrb[0].mxu0
      %v8119 = vadd.f32 %v7958, %v8118
      %v8120 = vpop.f32.mrb[0].mxu0
      %8121 = vmatprep.mubr.bf16.mxu0 0
      %8122 = vmatmul.mubr.bf16.gmra.mrb[0].mxu0 %v7608
      %v8123 = vpop.f32.mrb[0].mxu0
      %v8124 = vadd.f32 %v7963, %v8123
      %v8125 = vpop.f32.mrb[0].mxu0
      %v8126 = vpop.f32.mrb[0].mxu0
      %v8127 = vadd.f32 %v7966, %v8126
      %v8128 = vpop.f32.mrb[0].mxu0
      %8129 = vmatprep.mubr.bf16.mxu0 0
      %8130 = vmatmul.mubr.bf16.gmra.mrb[0].mxu0 %v7611
      %v8131 = vpop.f32.mrb[0].mxu0
      %v8132 = vadd.f32 %v7971, %v8131
      %v8133 = vpop.f32.mrb[0].mxu0
      %v8134 = vpop.f32.mrb[0].mxu0
      %v8135 = vadd.f32 %v7974, %v8134
      %v8136 = vpop.f32.mrb[0].mxu0
      %8137 = vmatprep.mubr.bf16.mxu0 0
      %8138 = vmatmul.mubr.bf16.gmra.mrb[0].mxu0 %v7614
      %v8139 = vpop.f32.mrb[0].mxu0
      %v8140 = vadd.f32 %v7979, %v8139
      %v8141 = vpop.f32.mrb[0].mxu0
      %v8142 = vpop.f32.mrb[0].mxu0
      %v8143 = vadd.f32 %v7982, %v8142
      %v8144 = vpop.f32.mrb[0].mxu0
      %8145 = vdwg.mxu0
      %v8146 = vadd.f32 %v6976, %v8020
      %v8147 = vadd.f32 %v6979, %v8023
      %v8148 = vadd.f32 %v6984, %v8028
      %v8149 = vadd.f32 %v6987, %v8031
      %v8150 = vadd.f32 %v6992, %v8036
      %v8151 = vadd.f32 %v6995, %v8039
      %v8152 = vadd.f32 %v7000, %v8044
      %v8153 = vadd.f32 %v7003, %v8047
      %v8154 = vadd.f32 %v7008, %v8052
      %v8155 = vadd.f32 %v7011, %v8055
      %v8156 = vadd.f32 %v7016, %v8060
      %v8157 = vadd.f32 %v7019, %v8063
      %v8158 = vadd.f32 %v7024, %v8068
      %v8159 = vadd.f32 %v7027, %v8071
      %v8160 = vadd.f32 %v7032, %v8076
      %v8161 = vadd.f32 %v7035, %v8079
      %v8162 = vadd.f32 %v7040, %v8084
      %v8163 = vadd.f32 %v7043, %v8087
      %v8164 = vadd.f32 %v7048, %v8092
      %v8165 = vadd.f32 %v7051, %v8095
      %v8166 = vadd.f32 %v7056, %v8100
      %v8167 = vadd.f32 %v7059, %v8103
      %v8168 = vadd.f32 %v7064, %v8108
      %v8169 = vadd.f32 %v7067, %v8111
      %v8170 = vadd.f32 %v7072, %v8116
      %v8171 = vadd.f32 %v7075, %v8119
      %v8172 = vadd.f32 %v7080, %v8124
      %v8173 = vadd.f32 %v7083, %v8127
      %v8174 = vadd.f32 %v7088, %v8132
      %v8175 = vadd.f32 %v7091, %v8135
      %v8176 = vadd.f32 %v7096, %v8140
      %v8177 = vadd.f32 %v7099, %v8143
      %s8178 = scalar_lea.vmem [#allocation2], 48
      %v8179 = vld [vmem:[%s8178 + $0x1] sm:$0xff]
      %v8180 = vld [vmem:[%s8178 + $0x9] sm:$0xff]
      %v8181 = vld [vmem:[%s8178 + $0x19] sm:$0xff]
      %v8182 = vld [vmem:[%s8178 + $0x21] sm:$0xff]
      %v8183 = vld [vmem:[%s8178 + $0x31] sm:$0xff]
      %v8184 = vld [vmem:[%s8178 + $0x39] sm:$0xff]
      %v8185 = vld [vmem:[%s8178 + $0x49] sm:$0xff]
      %v8186 = vld [vmem:[%s8178 + $0x51] sm:$0xff]
      %v8187 = vld [vmem:[%s8178 + $0x61] sm:$0xff]
      %v8188 = vld [vmem:[%s8178 + $0x69] sm:$0xff]
      %v8189 = vld [vmem:[%s8178 + $0x79] sm:$0xff]
      %v8190 = vld [vmem:[%s8178 + $0x81] sm:$0xff]
      %v8191 = vld [vmem:[%s8178 + $0x91] sm:$0xff]
      %v8192 = vld [vmem:[%s8178 + $0x99] sm:$0xff]
      %v8193 = vld [vmem:[%s8178 + $0xa9] sm:$0xff]
      %v8194 = vld [vmem:[%s8178 + $0xb1] sm:$0xff]
      %v8195 = vld [vmem:[%s8178 + $0xc1] sm:$0xff]
      %v8196 = vld [vmem:[%s8178 + $0xc9] sm:$0xff]
      %v8197 = vld [vmem:[%s8178 + $0xd9] sm:$0xff]
      %v8198 = vld [vmem:[%s8178 + $0xe1] sm:$0xff]
      %v8199 = vld [vmem:[%s8178 + $0xf1] sm:$0xff]
      %v8200 = vld [vmem:[%s8178 + $0xf9] sm:$0xff]
      %v8201 = vld [vmem:[%s8178 + $0x109] sm:$0xff]
      %v8202 = vld [vmem:[%s8178 + $0x111] sm:$0xff]
      %v8203 = vld [vmem:[%s8178 + $0x121] sm:$0xff]
      %v8204 = vld [vmem:[%s8178 + $0x129] sm:$0xff]
      %v8205 = vld [vmem:[%s8178 + $0x139] sm:$0xff]
      %v8206 = vld [vmem:[%s8178 + $0x141] sm:$0xff]
      %v8207 = vld [vmem:[%s8178 + $0x151] sm:$0xff]
      %v8208 = vld [vmem:[%s8178 + $0x159] sm:$0xff]
      %v8209 = vld [vmem:[%s8178 + $0x169] sm:$0xff]
      %v8210 = vld [vmem:[%s8178 + $0x171] sm:$0xff]
      %v8211 = vld [vmem:[%s4] sm:$0x1]
      %v8213 = vlaneseq
      %v8214 = vshrl.u32 %v8213, 7
      %v8215 = vsub.s32 0, %v8214
      %v8216 = vrot.slane %v8211, %v8215
      %v8218 = vadd.f32 %v8146, %v8216
      %v8219 = vadd.f32 %v8147, %v8216
      %v8220 = vadd.f32 %v8148, %v8216
      %v8221 = vadd.f32 %v8149, %v8216
      %v8222 = vadd.f32 %v8150, %v8216
      %v8223 = vadd.f32 %v8151, %v8216
      %v8224 = vadd.f32 %v8152, %v8216
      %v8225 = vadd.f32 %v8153, %v8216
      %v8226 = vadd.f32 %v8154, %v8216
      %v8227 = vadd.f32 %v8155, %v8216
      %v8228 = vadd.f32 %v8156, %v8216
      %v8229 = vadd.f32 %v8157, %v8216
      %v8230 = vadd.f32 %v8158, %v8216
      %v8231 = vadd.f32 %v8159, %v8216
      %v8232 = vadd.f32 %v8160, %v8216
      %v8233 = vadd.f32 %v8161, %v8216
      %v8234 = vadd.f32 %v8162, %v8216
      %v8235 = vadd.f32 %v8163, %v8216
      %v8236 = vadd.f32 %v8164, %v8216
      %v8237 = vadd.f32 %v8165, %v8216
      %v8238 = vadd.f32 %v8166, %v8216
      %v8239 = vadd.f32 %v8167, %v8216
      %v8240 = vadd.f32 %v8168, %v8216
      %v8241 = vadd.f32 %v8169, %v8216
      %v8242 = vadd.f32 %v8170, %v8216
      %v8243 = vadd.f32 %v8171, %v8216
      %v8244 = vadd.f32 %v8172, %v8216
      %v8245 = vadd.f32 %v8173, %v8216
      %v8246 = vadd.f32 %v8174, %v8216
      %v8247 = vadd.f32 %v8175, %v8216
      %v8248 = vadd.f32 %v8176, %v8216
      %v8249 = vadd.f32 %v8177, %v8216
      %v8250 = vadd.f32 %v8218, %v8179
      %v8251 = vadd.f32 %v8219, %v8180
      %v8252 = vadd.f32 %v8220, %v8181
      %v8253 = vadd.f32 %v8221, %v8182
      %v8254 = vadd.f32 %v8222, %v8183
      %v8255 = vadd.f32 %v8223, %v8184
      %v8256 = vadd.f32 %v8224, %v8185
      %v8257 = vadd.f32 %v8225, %v8186
      %v8258 = vadd.f32 %v8226, %v8187
      %v8259 = vadd.f32 %v8227, %v8188
      %v8260 = vadd.f32 %v8228, %v8189
      %v8261 = vadd.f32 %v8229, %v8190
      %v8262 = vadd.f32 %v8230, %v8191
      %v8263 = vadd.f32 %v8231, %v8192
      %v8264 = vadd.f32 %v8232, %v8193
      %v8265 = vadd.f32 %v8233, %v8194
      %v8266 = vadd.f32 %v8234, %v8195
      %v8267 = vadd.f32 %v8235, %v8196
      %v8268 = vadd.f32 %v8236, %v8197
      %v8269 = vadd.f32 %v8237, %v8198
      %v8270 = vadd.f32 %v8238, %v8199
      %v8271 = vadd.f32 %v8239, %v8200
      %v8272 = vadd.f32 %v8240, %v8201
      %v8273 = vadd.f32 %v8241, %v8202
      %v8274 = vadd.f32 %v8242, %v8203
      %v8275 = vadd.f32 %v8243, %v8204
      %v8276 = vadd.f32 %v8244, %v8205
      %v8277 = vadd.f32 %v8245, %v8206
      %v8278 = vadd.f32 %v8246, %v8207
      %v8279 = vadd.f32 %v8247, %v8208
      %v8280 = vadd.f32 %v8248, %v8209
      %v8281 = vadd.f32 %v8249, %v8210
      %v8282 = vmax.f32 %v8250, 0.0
      %v8283 = vmax.f32 %v8251, 0.0
      %v8284 = vmax.f32 %v8252, 0.0
      %v8285 = vmax.f32 %v8253, 0.0
      %v8286 = vmax.f32 %v8254, 0.0
      %v8287 = vmax.f32 %v8255, 0.0
      %v8288 = vmax.f32 %v8256, 0.0
      %v8289 = vmax.f32 %v8257, 0.0
      %v8290 = vmax.f32 %v8258, 0.0
      %v8291 = vmax.f32 %v8259, 0.0
      %v8292 = vmax.f32 %v8260, 0.0
      %v8293 = vmax.f32 %v8261, 0.0
      %v8294 = vmax.f32 %v8262, 0.0
      %v8295 = vmax.f32 %v8263, 0.0
      %v8296 = vmax.f32 %v8264, 0.0
      %v8297 = vmax.f32 %v8265, 0.0
      %v8298 = vmax.f32 %v8266, 0.0
      %v8299 = vmax.f32 %v8267, 0.0
      %v8300 = vmax.f32 %v8268, 0.0
      %v8301 = vmax.f32 %v8269, 0.0
      %v8302 = vmax.f32 %v8270, 0.0
      %v8303 = vmax.f32 %v8271, 0.0
      %v8304 = vmax.f32 %v8272, 0.0
      %v8305 = vmax.f32 %v8273, 0.0
      %v8306 = vmax.f32 %v8274, 0.0
      %v8307 = vmax.f32 %v8275, 0.0
      %v8308 = vmax.f32 %v8276, 0.0
      %v8309 = vmax.f32 %v8277, 0.0
      %v8310 = vmax.f32 %v8278, 0.0
      %v8311 = vmax.f32 %v8279, 0.0
      %v8312 = vmax.f32 %v8280, 0.0
      %v8313 = vmax.f32 %v8281, 0.0
      %v8314 = vpack.c.bf16 %v8283, %v8282
      %v8315 = vpack.c.bf16 %v8285, %v8284
      %v8316 = vpack.c.bf16 %v8287, %v8286
      %v8317 = vpack.c.bf16 %v8289, %v8288
      %v8318 = vpack.c.bf16 %v8291, %v8290
      %v8319 = vpack.c.bf16 %v8293, %v8292
      %v8320 = vpack.c.bf16 %v8295, %v8294
      %v8321 = vpack.c.bf16 %v8297, %v8296
      %v8322 = vpack.c.bf16 %v8299, %v8298
      %v8323 = vpack.c.bf16 %v8301, %v8300
      %v8324 = vpack.c.bf16 %v8303, %v8302
      %v8325 = vpack.c.bf16 %v8305, %v8304
      %v8326 = vpack.c.bf16 %v8307, %v8306
      %v8327 = vpack.c.bf16 %v8309, %v8308
      %v8328 = vpack.c.bf16 %v8311, %v8310
      %v8329 = vpack.c.bf16 %v8313, %v8312
      %v8346 = vunpack.c.l.b16 %v8314
      %v8347 = vunpack.c.h.b16 %v8314
      %v8348 = vunpack.c.l.b16 %v8315
      %v8349 = vunpack.c.h.b16 %v8315
      %v8350 = vunpack.c.l.b16 %v8316
      %v8351 = vunpack.c.h.b16 %v8316
      %v8352 = vunpack.c.l.b16 %v8317
      %v8353 = vunpack.c.h.b16 %v8317
      %v8354 = vunpack.c.l.b16 %v8318
      %v8355 = vunpack.c.h.b16 %v8318
      %v8356 = vunpack.c.l.b16 %v8319
      %v8357 = vunpack.c.h.b16 %v8319
      %v8358 = vunpack.c.l.b16 %v8320
      %v8359 = vunpack.c.h.b16 %v8320
      %v8360 = vunpack.c.l.b16 %v8321
      %v8361 = vunpack.c.h.b16 %v8321
      %v8362 = vunpack.c.l.b16 %v8322
      %v8363 = vunpack.c.h.b16 %v8322
      %v8364 = vunpack.c.l.b16 %v8323
      %v8365 = vunpack.c.h.b16 %v8323
      %v8366 = vunpack.c.l.b16 %v8324
      %v8367 = vunpack.c.h.b16 %v8324
      %v8368 = vunpack.c.l.b16 %v8325
      %v8369 = vunpack.c.h.b16 %v8325
      %v8370 = vunpack.c.l.b16 %v8326
      %v8371 = vunpack.c.h.b16 %v8326
      %v8372 = vunpack.c.l.b16 %v8327
      %v8373 = vunpack.c.h.b16 %v8327
      %v8374 = vunpack.c.l.b16 %v8328
      %v8375 = vunpack.c.h.b16 %v8328
      %v8376 = vunpack.c.l.b16 %v8329
      %v8377 = vunpack.c.h.b16 %v8329
      %v8378 = vpack.c.b16 %v8346, %v8346
      %v8379 = vpack.c.b16 %v8347, %v8347
      %v8380 = vpack.c.b16 %v8348, %v8348
      %v8381 = vpack.c.b16 %v8349, %v8349
      %v8382 = vpack.c.b16 %v8350, %v8350
      %v8383 = vpack.c.b16 %v8351, %v8351
      %v8384 = vpack.c.b16 %v8352, %v8352
      %v8385 = vpack.c.b16 %v8353, %v8353
      %v8386 = vpack.c.b16 %v8354, %v8354
      %v8387 = vpack.c.b16 %v8355, %v8355
      %v8388 = vpack.c.b16 %v8356, %v8356
      %v8389 = vpack.c.b16 %v8357, %v8357
      %v8390 = vpack.c.b16 %v8358, %v8358
      %v8391 = vpack.c.b16 %v8359, %v8359
      %v8392 = vpack.c.b16 %v8360, %v8360
      %v8393 = vpack.c.b16 %v8361, %v8361
      %v8394 = vpack.c.b16 %v8362, %v8362
      %v8395 = vpack.c.b16 %v8363, %v8363
      %v8396 = vpack.c.b16 %v8364, %v8364
      %v8397 = vpack.c.b16 %v8365, %v8365
      %v8398 = vpack.c.b16 %v8366, %v8366
      %v8399 = vpack.c.b16 %v8367, %v8367
      %v8400 = vpack.c.b16 %v8368, %v8368
      %v8401 = vpack.c.b16 %v8369, %v8369
      %v8402 = vpack.c.b16 %v8370, %v8370
      %v8403 = vpack.c.b16 %v8371, %v8371
      %v8404 = vpack.c.b16 %v8372, %v8372
      %v8405 = vpack.c.b16 %v8373, %v8373
      %v8406 = vpack.c.b16 %v8374, %v8374
      %v8407 = vpack.c.b16 %v8375, %v8375
      %v8408 = vpack.c.b16 %v8376, %v8376
      %v8409 = vpack.c.b16 %v8377, %v8377
      %8442 = vst [vmem:[%s202] sm:$0xf] %v8378
      %8443 = vst [vmem:[%s202 + $0x4] sm:$0xf] %v8379
      %8444 = vst [vmem:[%s202 + $0x8] sm:$0xf] %v8380
      %8445 = vst [vmem:[%s202 + $0xc] sm:$0xf] %v8381
      %8446 = vst [vmem:[%s202 + $0x10] sm:$0xf] %v8382
      %8447 = vst [vmem:[%s202 + $0x14] sm:$0xf] %v8383
      %8448 = vst [vmem:[%s202 + $0x18] sm:$0xf] %v8384
      %8449 = vst [vmem:[%s202 + $0x1c] sm:$0xf] %v8385
      %8450 = vst [vmem:[%s202 + $0x20] sm:$0xf] %v8386
      %8451 = vst [vmem:[%s202 + $0x24] sm:$0xf] %v8387
      %8452 = vst [vmem:[%s202 + $0x28] sm:$0xf] %v8388
      %8453 = vst [vmem:[%s202 + $0x2c] sm:$0xf] %v8389
      %8454 = vst [vmem:[%s202 + $0x30] sm:$0xf] %v8390
      %8455 = vst [vmem:[%s202 + $0x34] sm:$0xf] %v8391
      %8456 = vst [vmem:[%s202 + $0x38] sm:$0xf] %v8392
      %8457 = vst [vmem:[%s202 + $0x3c] sm:$0xf] %v8393
      %8458 = vst [vmem:[%s202 + $0x40] sm:$0xf] %v8394
      %8459 = vst [vmem:[%s202 + $0x44] sm:$0xf] %v8395
      %8460 = vst [vmem:[%s202 + $0x48] sm:$0xf] %v8396
      %8461 = vst [vmem:[%s202 + $0x4c] sm:$0xf] %v8397
      %8462 = vst [vmem:[%s202 + $0x50] sm:$0xf] %v8398
      %8463 = vst [vmem:[%s202 + $0x54] sm:$0xf] %v8399
      %8464 = vst [vmem:[%s202 + $0x58] sm:$0xf] %v8400
      %8465 = vst [vmem:[%s202 + $0x5c] sm:$0xf] %v8401
      %8466 = vst [vmem:[%s202 + $0x60] sm:$0xf] %v8402
      %8467 = vst [vmem:[%s202 + $0x64] sm:$0xf] %v8403
      %8468 = vst [vmem:[%s202 + $0x68] sm:$0xf] %v8404
      %8469 = vst [vmem:[%s202 + $0x6c] sm:$0xf] %v8405
      %8470 = vst [vmem:[%s202 + $0x70] sm:$0xf] %v8406
      %8471 = vst [vmem:[%s202 + $0x74] sm:$0xf] %v8407
      %8472 = vst [vmem:[%s202 + $0x78] sm:$0xf] %v8408
      %8473 = vst [vmem:[%s202 + $0x7c] sm:$0xf] %v8409
      %s8474 = smul.u32 16, %s21
      %p8475 = scmp.lt.s32.totalorder %s20, 1
      %s8476 = scalar_select %p8475, %s20, 1
      %p8477 = scmp.lt.s32.totalorder %s8474, 15
      %s8478 = scalar_select %p8477, %s8474, 15
      %s8479 = smul.addr %s8478, 2
      %s8480 = smul.addr %s8476, 32
      %s8481 = sadd.s32 %s8479, %s8480
      %s8482 = smul.addr %s8481, 4
      %s8483 = scalar_lea.vmem %s5, %s8482
      // Predicated region
      $region75: #{basic_block_forward.1} parent=35 // pred_check
        %p8484 = pneg %p132
      $region76: #{basic_block_forward.1} parent=35 // pred_check_branch
        %8486 = sbr.rel (%p8484) target = $region78
      $region77: #{basic_block_forward.1} parent=35 // pred_region
        %s8487 = smul.u32 16, %s21
      $region78: #{basic_block_forward.1} parent=35 // pred_fallthru
        _
    $region36: #{basic_block_forward.1} parent=5 // pred_fallthru
      _
    %p8488 = scmp.le.s32.totalorder 2, %s11
    // Predicated region
    $region79: #{basic_block_forward.1} parent=5 // pred_check
      %p8489 = pneg %p8488
    $region80: #{basic_block_forward.1} parent=5 // pred_check_branch
      %8491 = sbr.rel (%p8489) target = $region82
    $region81: #{basic_block_forward.1} parent=5 // pred_region
      %s8492 = ssub.s32 %s11, 2
      // Predicated region
      $region83: #{basic_block_forward.1} parent=81 // pred_check
        %p8493 = pneg %p138
      $region84: #{basic_block_forward.1} parent=81 // pred_check_branch
        %8495 = sbr.rel (%p8493) target = $region86
      $region85: #{basic_block_forward.1} parent=81 // pred_region
        %s8496 = smul.u32 16, %s23
        %p8497 = scmp.lt.s32.totalorder %s22, 1
        %s8498 = scalar_select %p8497, %s22, 1
        %p8499 = scmp.lt.s32.totalorder %s8496, 15
        %s8500 = scalar_select %p8499, %s8496, 15
        %s8501 = smul.addr %s8500, 2
        %s8502 = smul.addr %s8498, 32
        %s8503 = sadd.s32 %s8501, %s8502
        %s8504 = smul.addr %s8503, 4
        %s8505 = scalar_lea.vmem %s5, %s8504
      $region86: #{basic_block_forward.1} parent=81 // pred_fallthru
        _
    $region82: #{basic_block_forward.1} parent=5 // pred_fallthru
      _
  $region6: #{basic_block_forward.1} parent=0 // loop_footer
    %s15 = sadd.s32 1, %s11
  $region7: #{basic_block_forward.1} parent=0 // loop_footer_branch
    %10 = sbr.rel target = $region3
  $region8: #{basic_block_forward.1} parent=0 // loop_exit
    _
  %8506 = vsyncmov [#allocation5]
  %s8507 = vpop.sfrf %8506
  %p8508 = scmp.eq.s32.totalorder %s8507, 0
  %p8509 = pneg %p8508
  %8511 = shalt.err (%p8509)

</llo_original>
